<compile_context>
chip_gen: v5e
topology: v5e:2x2
jax: 0.10.0
libtpu: 0.0.40
codegen_flags: <defaults>
</compile_context>

<pallas_src>
import functools

import jax
import jax.numpy as jnp
import numpy as np
from jax.experimental import pallas as pl
from jax.experimental.pallas import tpu as pltpu


# ----------------------------------------------------------------------------
# Fused ResidualGroup kernel
# ----------------------------------------------------------------------------
def _residual_group_kernel(x_ref, w1_ref, b1_ref, w2_ref, b2_ref,
                           caw1_ref, cab1_ref, caw2_ref, cab2_ref,
                           out_ref, pad1_ref, pad2_ref,
                           *, H, W, C, XOFF):
    """One grid step = (batch element n, block index g).

    g < n_resblocks : run RCAB block g, update the VMEM-resident residual.
    g == n_resblocks: run the group-tail conv + group skip, write the output.

    INVARIANT (documented per review): pad1_ref/pad2_ref carry state across
    the g axis.  g must remain the innermost ("arbitrary") grid axis and is
    re-initialized at g == 0 for every n; the batch axis may be megacore-
    sharded because the halo zeroing is done per batch element.

    x_ref   : (1, H, W, C)        input image (also the group skip)
    w1_ref  : (1, 9C, C)  bf16    conv1 weights for block g (tail conv in last slot)
    b1_ref  : (1, 1, C)   f32
    w2_ref  : (1, 9C, C)  bf16    conv2 weights (index clamped on the tail step)
    b2_ref  : (1, 1, C)   f32
    caw1/cab1/caw2/cab2 : channel-attention FC params for block g
    out_ref : (1, H, W, C)
    pad1_ref: (H+2, W+2*XOFF, C) f32  padded residual activation (persistent)
    pad2_ref: (H+2, W+2*XOFF, C) f32  padded conv1 output
    """
    g = pl.program_id(1)
    g_last = pl.num_programs(1) - 1
    W_pad = W + 2 * XOFF
    f32 = jnp.float32
    bf16 = jnp.bfloat16

    def conv3x3(pad_ref, w_ref, b_ref):
        # Direct 9-tap accumulation: nine (H*W, C) x (C, C) bf16 MXU dots into
        # an f32 accumulator.  No im2col scratch and no lane-offset stores;
        # interior data is read from a sublane-aligned padded buffer (only the
        # kx = 0/2 taps are offset by one column, on the load side only).
        acc = jnp.zeros((H * W, C), f32)
        for ky in range(3):
            for kx in range(3):
                t = ky * 3 + kx
                tap = pad_ref[ky:ky + H, XOFF - 1 + kx:XOFF - 1 + kx + W, :]
                tap = tap.reshape(H * W, C).astype(bf16)
                acc = acc + jnp.dot(tap, w_ref[0, t * C:(t + 1) * C, :],
                                    preferred_element_type=f32)
        return acc + b_ref[0].astype(f32)                     # (H*W, C) f32

    @pl.when(g == 0)
    def _init():
        # Zero only the 1-px halo strips (aligned 8-wide column slabs + top and
        # bottom rows); interiors are always fully overwritten before being
        # read.  Done per batch element (cheap) so the kernel stays correct if
        # the "parallel" batch axis is sharded across TensorCores, each with
        # its own scratch.
        for p in (pad1_ref, pad2_ref):
            p[0:1, :, :] = jnp.zeros((1, W_pad, C), f32)
            p[H + 1:H + 2, :, :] = jnp.zeros((1, W_pad, C), f32)
            p[:, 0:XOFF, :] = jnp.zeros((H + 2, XOFF, C), f32)
            p[:, XOFF + W:W_pad, :] = jnp.zeros((H + 2, XOFF, C), f32)
        # Sublane-aligned interior write (column offset XOFF is a multiple of 8).
        pad1_ref[1:H + 1, XOFF:XOFF + W, :] = x_ref[0].astype(f32)

    @pl.when(g < g_last)
    def _rcab():
        # conv1 -> ReLU
        h1 = jnp.maximum(conv3x3(pad1_ref, w1_ref, b1_ref), 0.0)
        pad2_ref[1:H + 1, XOFF:XOFF + W, :] = h1.reshape(H, W, C)
        # conv2
        h2 = conv3x3(pad2_ref, w2_ref, b2_ref)                       # (H*W, C)
        # channel attention: global avg-pool -> FC -> ReLU -> FC -> sigmoid
        pooled = jnp.sum(h2, axis=0, keepdims=True) * (1.0 / (H * W))   # (1, C)
        z = jnp.maximum(
            jnp.dot(pooled.astype(bf16), caw1_ref[0],
                    preferred_element_type=f32) + cab1_ref[0], 0.0)     # (1, Cr)
        s = jax.nn.sigmoid(
            jnp.dot(z.astype(bf16), caw2_ref[0],
                    preferred_element_type=f32) + cab2_ref[0])          # (1, C)
        # scale + RCAB residual; keep the result VMEM-resident (padded form)
        res = pad1_ref[1:H + 1, XOFF:XOFF + W, :].reshape(H * W, C)
        pad1_ref[1:H + 1, XOFF:XOFF + W, :] = (h2 * s + res).reshape(H, W, C)

    @pl.when(g == g_last)
    def _final():
        # group-tail conv (weights live in the last slot of w1/b1 stacks)
        y = conv3x3(pad1_ref, w1_ref, b1_ref)
        out = y + x_ref[0].reshape(H * W, C).astype(f32)
        out_ref[0] = out.reshape(H, W, C).astype(out_ref.dtype)


# ----------------------------------------------------------------------------
# Wrapper: stack per-block weights, single pallas_call for the whole group
# ----------------------------------------------------------------------------
def residual_group(x, params):
    """ResidualGroup forward, NHWC input (N, H, W, C)."""
    N, H, W, C = x.shape
    blocks = params["blocks"]
    nrb = len(blocks)
    assert nrb >= 1, "n_resblocks must be >= 1"
    G = nrb + 1                              # n_resblocks RCABs + tail conv
    Cr = blocks[0]["caw1"].shape[1]
    XOFF = 8                                 # sublane-aligned interior offset
    W_pad = W + 2 * XOFF
    f32, bf16 = jnp.float32, jnp.bfloat16

    # bf16 conv / CA weights: halves the per-block HBM weight DMA and its VMEM
    # double-buffer, and feeds the native bf16 MXU path.  Biases stay f32.
    def flat_w(w):                            # (3,3,Cin,Cout) HWIO -> (9C, C)
        return w.reshape(9 * C, C).astype(bf16)

    w1s = jnp.stack([flat_w(b["w1"]) for b in blocks] + [flat_w(params["wf"])])
    b1s = jnp.stack([b["b1"].reshape(1, C).astype(f32) for b in blocks]
                    + [params["bf"].reshape(1, C).astype(f32)])
    w2s = jnp.stack([flat_w(b["w2"]) for b in blocks])
    b2s = jnp.stack([b["b2"].reshape(1, C).astype(f32) for b in blocks])
    caw1s = jnp.stack([b["caw1"].astype(bf16) for b in blocks])
    cab1s = jnp.stack([b["cab1"].reshape(1, Cr).astype(f32) for b in blocks])
    caw2s = jnp.stack([b["caw2"].astype(bf16) for b in blocks])
    cab2s = jnp.stack([b["cab2"].reshape(1, C).astype(f32) for b in blocks])

    # Per-block tensors never read by the tail-conv step are index-clamped to
    # the last RCAB slot: no zero-filled dummy slot, no extra DMA at g==G-1.
    def blk_idx(g):
        return jnp.minimum(g, nrb - 1)

    # Explicit scoped-VMEM budget: pads + double-buffered x/out/weight blocks,
    # with headroom.  Minor dims < 128 lanes are padded to 128 in VMEM.
    lane = max(C, 128)
    pads_bytes = 2 * (H + 2) * W_pad * lane * 4
    io_bytes = 2 * 2 * H * W * lane * 4              # x + out, double-buffered
    w_bytes = 2 * 2 * 9 * C * lane * 2               # w1 + w2, double-buffered
    vmem_limit = int(1.25 * (pads_bytes + io_bytes + w_bytes)) + (8 << 20)
    vmem_limit = max(min(vmem_limit, 100 << 20), 32 << 20)

    kernel = functools.partial(_residual_group_kernel, H=H, W=W, C=C, XOFF=XOFF)

    # NOTE: x/out block indices only change with n; Pallas still double-buffers
    # them (2x H*W*C each).  For very large images on v7x, move x to a
    # memory_space=pl.ANY ref + one manual DMA per n (see review item 11).
    return pl.pallas_call(
        kernel,
        out_shape=jax.ShapeDtypeStruct((N, H, W, C), x.dtype),
        grid=(N, G),
        in_specs=[
            pl.BlockSpec((1, H, W, C), lambda n, g: (n, 0, 0, 0)),        # x
            pl.BlockSpec((1, 9 * C, C), lambda n, g: (g, 0, 0)),          # w1 / wf
            pl.BlockSpec((1, 1, C), lambda n, g: (g, 0, 0)),              # b1 / bf
            pl.BlockSpec((1, 9 * C, C), lambda n, g: (blk_idx(g), 0, 0)),  # w2
            pl.BlockSpec((1, 1, C), lambda n, g: (blk_idx(g), 0, 0)),      # b2
            pl.BlockSpec((1, C, Cr), lambda n, g: (blk_idx(g), 0, 0)),     # ca w1
            pl.BlockSpec((1, 1, Cr), lambda n, g: (blk_idx(g), 0, 0)),     # ca b1
            pl.BlockSpec((1, Cr, C), lambda n, g: (blk_idx(g), 0, 0)),     # ca w2
            pl.BlockSpec((1, 1, C), lambda n, g: (blk_idx(g), 0, 0)),      # ca b2
        ],
        out_specs=pl.BlockSpec((1, H, W, C), lambda n, g: (n, 0, 0, 0)),
        scratch_shapes=[
            pltpu.VMEM((H + 2, W_pad, C), jnp.float32),   # padded residual
            pltpu.VMEM((H + 2, W_pad, C), jnp.float32),   # padded conv1 output
        ],
        compiler_params=pltpu.CompilerParams(
            dimension_semantics=("parallel", "arbitrary"),
            vmem_limit_bytes=vmem_limit),
    )(x, w1s, b1s, w2s, b2s, caw1s, cab1s, caw2s, cab2s)


# ----------------------------------------------------------------------------
# Pure-JAX reference (for correctness check)
# ----------------------------------------------------------------------------
def _conv3x3_ref(x, w, b):
    y = jax.lax.conv_general_dilated(
        x, w, (1, 1), "SAME",
        dimension_numbers=("NHWC", "HWIO", "NHWC"),
        precision=jax.lax.Precision.HIGHEST)
    return y + b.reshape(1, 1, 1, -1)


def residual_group_ref(x, params):
    res = x
    for blk in params["blocks"]:
        inp = res
        h = jax.nn.relu(_conv3x3_ref(res, blk["w1"], blk["b1"]))
        h = _conv3x3_ref(h, blk["w2"], blk["b2"])
        pooled = jnp.mean(h, axis=(1, 2), keepdims=True)                  # (N,1,1,C)
        z = jax.nn.relu(jnp.einsum("nxyc,cr->nxyr", pooled, blk["caw1"]) + blk["cab1"])
        s = jax.nn.sigmoid(jnp.einsum("nxyr,rc->nxyc", z, blk["caw2"]) + blk["cab2"])
        res = h * s + inp
    return _conv3x3_ref(res, params["wf"], params["bf"]) + x


# ----------------------------------------------------------------------------
# Deterministic parameter init (synthetic weights, shapes match the nn.Module)
# ----------------------------------------------------------------------------
def init_params(key, n_feat, reduction, n_resblocks, scale=0.05):
    Cr = n_feat // reduction
    blocks = []
    for i in range(n_resblocks):
        ks = jax.random.split(jax.random.fold_in(key, i), 6)
        blocks.append(dict(
            w1=scale * jax.random.normal(ks[0], (3, 3, n_feat, n_feat), jnp.float32),
            b1=scale * jax.random.normal(ks[1], (n_feat,), jnp.float32),
            w2=scale * jax.random.normal(ks[2], (3, 3, n_feat, n_feat), jnp.float32),
            b2=scale * jax.random.normal(ks[3], (n_feat,), jnp.float32),
            caw1=scale * jax.random.normal(ks[4], (n_feat, Cr), jnp.float32),
            cab1=jnp.zeros((Cr,), jnp.float32),
            caw2=scale * jax.random.normal(ks[5], (Cr, n_feat), jnp.float32),
            cab2=jnp.zeros((n_feat,), jnp.float32),
        ))
    kf = jax.random.split(jax.random.fold_in(key, 10_000), 2)
    return dict(
        blocks=blocks,
        wf=scale * jax.random.normal(kf[0], (3, 3, n_feat, n_feat), jnp.float32),
        bf=scale * jax.random.normal(kf[1], (n_feat,), jnp.float32),
    )


if __name__ == "__main__":
    N, n_feat, H, W = 2, 32, 16, 16
    reduction, n_resblocks = 16, 2

    key = jax.random.PRNGKey(0)
    kx, kp = jax.random.split(key)
    x = jax.random.normal(kx, (N, H, W, n_feat), jnp.float32)   # NHWC
    params = init_params(kp, n_feat, reduction, n_resblocks)

    out = jax.block_until_ready(residual_group(x, params))
    ref = jax.block_until_ready(residual_group_ref(x, params))

    assert out.shape == (N, H, W, n_feat) and out.dtype == jnp.float32
    # bf16 weights/taps vs the HIGHEST-precision f32 reference: same effective
    # precision as the previously-passing default-precision MXU path.
    np.testing.assert_allclose(np.asarray(out), np.asarray(ref),
                               rtol=3e-2, atol=3e-2)
    print("KERNEL_OK")
</pallas_src>

<mosaic_0001>
module attributes {stable_mosaic.version = 11 : i64} {
  func.func @_residual_group_kernel(%arg0: i32, %arg1: i32, %arg2: memref<1x16x16x32xf32, #tpu.memory_space<vmem>>, %arg3: memref<1x288x32xbf16, #tpu.memory_space<vmem>>, %arg4: memref<1x1x32xf32, #tpu.memory_space<vmem>>, %arg5: memref<1x288x32xbf16, #tpu.memory_space<vmem>>, %arg6: memref<1x1x32xf32, #tpu.memory_space<vmem>>, %arg7: memref<1x32x2xbf16, #tpu.memory_space<vmem>>, %arg8: memref<1x1x2xf32, #tpu.memory_space<vmem>>, %arg9: memref<1x2x32xbf16, #tpu.memory_space<vmem>>, %arg10: memref<1x1x32xf32, #tpu.memory_space<vmem>>, %arg11: memref<1x16x16x32xf32, #tpu.memory_space<vmem>>, %arg12: memref<18x32x32xf32, #tpu.memory_space<vmem>>, %arg13: memref<18x32x32xf32, #tpu.memory_space<vmem>>) attributes {dimension_semantics = [#tpu.dimension_semantics<parallel>, #tpu.dimension_semantics<arbitrary>], iteration_bounds = array<i64: 2, 3>, scalar_prefetch = 0 : i64, scratch_operands = 2 : i64, tpu.core_type = #tpu.core_type<tc>, window_params = [{transform_indices = @transform_0, window_bounds = array<i64: 1, 16, 16, 32>}, {transform_indices = @transform_1, window_bounds = array<i64: 1, 288, 32>}, {transform_indices = @transform_2, window_bounds = array<i64: 1, 1, 32>}, {transform_indices = @transform_3, window_bounds = array<i64: 1, 288, 32>}, {transform_indices = @transform_4, window_bounds = array<i64: 1, 1, 32>}, {transform_indices = @transform_5, window_bounds = array<i64: 1, 32, 2>}, {transform_indices = @transform_6, window_bounds = array<i64: 1, 1, 2>}, {transform_indices = @transform_7, window_bounds = array<i64: 1, 2, 32>}, {transform_indices = @transform_8, window_bounds = array<i64: 1, 1, 32>}, {transform_indices = @transform_9, window_bounds = array<i64: 1, 16, 16, 32>}]} {
    %c0_i32 = arith.constant 0 : i32
    %0 = arith.cmpi eq, %arg1, %c0_i32 : i32
    %1 = arith.extui %0 : i1 to i32
    %c0_i32_0 = arith.constant 0 : i32
    %2 = arith.cmpi ne, %1, %c0_i32_0 : i32
    scf.if %2 {
      %cst = arith.constant 0.000000e+00 : f32
      %9 = vector.broadcast %cst : f32 to vector<1x32x32xf32>
      %c0 = arith.constant 0 : index
      %c0_4 = arith.constant 0 : index
      %c0_5 = arith.constant 0 : index
      %10 = vector.load %arg12[%c0, %c0_4, %c0_5] : memref<18x32x32xf32, #tpu.memory_space<vmem>>, vector<1x32x32xf32>
      tpu.vector_store %arg12[%c0, %c0_4, %c0_5], %9 {strides = array<i32>} : memref<18x32x32xf32, #tpu.memory_space<vmem>>, vector<1x32x32xf32>,
      %cst_6 = arith.constant 0.000000e+00 : f32
      %11 = vector.broadcast %cst_6 : f32 to vector<1x32x32xf32>
      %c17 = arith.constant 17 : index
      %c0_7 = arith.constant 0 : index
      %c0_8 = arith.constant 0 : index
      %12 = vector.load %arg12[%c17, %c0_7, %c0_8] : memref<18x32x32xf32, #tpu.memory_space<vmem>>, vector<1x32x32xf32>
      tpu.vector_store %arg12[%c17, %c0_7, %c0_8], %11 {strides = array<i32>} : memref<18x32x32xf32, #tpu.memory_space<vmem>>, vector<1x32x32xf32>,
      %cst_9 = arith.constant 0.000000e+00 : f32
      %13 = vector.broadcast %cst_9 : f32 to vector<18x8x32xf32>
      %c0_10 = arith.constant 0 : index
      %c0_11 = arith.constant 0 : index
      %c0_12 = arith.constant 0 : index
      %14 = vector.load %arg12[%c0_10, %c0_11, %c0_12] : memref<18x32x32xf32, #tpu.memory_space<vmem>>, vector<18x8x32xf32>
      tpu.vector_store %arg12[%c0_10, %c0_11, %c0_12], %13 {strides = array<i32>} : memref<18x32x32xf32, #tpu.memory_space<vmem>>, vector<18x8x32xf32>,
      %cst_13 = arith.constant 0.000000e+00 : f32
      %15 = vector.broadcast %cst_13 : f32 to vector<18x8x32xf32>
      %c0_14 = arith.constant 0 : index
      %c24 = arith.constant 24 : index
      %c0_15 = arith.constant 0 : index
      %16 = vector.load %arg12[%c0_14, %c24, %c0_15] : memref<18x32x32xf32, #tpu.memory_space<vmem>>, vector<18x8x32xf32>
      tpu.vector_store %arg12[%c0_14, %c24, %c0_15], %15 {strides = array<i32>} : memref<18x32x32xf32, #tpu.memory_space<vmem>>, vector<18x8x32xf32>,
      %cst_16 = arith.constant 0.000000e+00 : f32
      %17 = vector.broadcast %cst_16 : f32 to vector<1x32x32xf32>
      %c0_17 = arith.constant 0 : index
      %c0_18 = arith.constant 0 : index
      %c0_19 = arith.constant 0 : index
      %18 = vector.load %arg13[%c0_17, %c0_18, %c0_19] : memref<18x32x32xf32, #tpu.memory_space<vmem>>, vector<1x32x32xf32>
      tpu.vector_store %arg13[%c0_17, %c0_18, %c0_19], %17 {strides = array<i32>} : memref<18x32x32xf32, #tpu.memory_space<vmem>>, vector<1x32x32xf32>,
      %cst_20 = arith.constant 0.000000e+00 : f32
      %19 = vector.broadcast %cst_20 : f32 to vector<1x32x32xf32>
      %c17_21 = arith.constant 17 : index
      %c0_22 = arith.constant 0 : index
      %c0_23 = arith.constant 0 : index
      %20 = vector.load %arg13[%c17_21, %c0_22, %c0_23] : memref<18x32x32xf32, #tpu.memory_space<vmem>>, vector<1x32x32xf32>
      tpu.vector_store %arg13[%c17_21, %c0_22, %c0_23], %19 {strides = array<i32>} : memref<18x32x32xf32, #tpu.memory_space<vmem>>, vector<1x32x32xf32>,
      %cst_24 = arith.constant 0.000000e+00 : f32
      %21 = vector.broadcast %cst_24 : f32 to vector<18x8x32xf32>
      %c0_25 = arith.constant 0 : index
      %c0_26 = arith.constant 0 : index
      %c0_27 = arith.constant 0 : index
      %22 = vector.load %arg13[%c0_25, %c0_26, %c0_27] : memref<18x32x32xf32, #tpu.memory_space<vmem>>, vector<18x8x32xf32>
      tpu.vector_store %arg13[%c0_25, %c0_26, %c0_27], %21 {strides = array<i32>} : memref<18x32x32xf32, #tpu.memory_space<vmem>>, vector<18x8x32xf32>,
      %cst_28 = arith.constant 0.000000e+00 : f32
      %23 = vector.broadcast %cst_28 : f32 to vector<18x8x32xf32>
      %c0_29 = arith.constant 0 : index
      %c24_30 = arith.constant 24 : index
      %c0_31 = arith.constant 0 : index
      %24 = vector.load %arg13[%c0_29, %c24_30, %c0_31] : memref<18x32x32xf32, #tpu.memory_space<vmem>>, vector<18x8x32xf32>
      tpu.vector_store %arg13[%c0_29, %c24_30, %c0_31], %23 {strides = array<i32>} : memref<18x32x32xf32, #tpu.memory_space<vmem>>, vector<18x8x32xf32>,
      %c0_32 = arith.constant 0 : index
      %c0_33 = arith.constant 0 : index
      %c0_34 = arith.constant 0 : index
      %c0_35 = arith.constant 0 : index
      %25 = vector.load %arg2[%c0_32, %c0_33, %c0_34, %c0_35] : memref<1x16x16x32xf32, #tpu.memory_space<vmem>>, vector<1x16x16x32xf32>
      %26 = vector.shape_cast %25 : vector<1x16x16x32xf32> to vector<16x16x32xf32>
      %c1 = arith.constant 1 : index
      %c8 = arith.constant 8 : index
      %c0_36 = arith.constant 0 : index
      %27 = vector.load %arg12[%c1, %c8, %c0_36] : memref<18x32x32xf32, #tpu.memory_space<vmem>>, vector<16x16x32xf32>
      tpu.vector_store %arg12[%c1, %c8, %c0_36], %26 {strides = array<i32>} : memref<18x32x32xf32, #tpu.memory_space<vmem>>, vector<16x16x32xf32>,
    } else {
    }
    %c2_i32 = arith.constant 2 : i32
    %3 = arith.cmpi slt, %arg1, %c2_i32 : i32
    %4 = arith.extui %3 : i1 to i32
    %c0_i32_1 = arith.constant 0 : i32
    %5 = arith.cmpi ne, %4, %c0_i32_1 : i32
    scf.if %5 {
      %cst = arith.constant 0.000000e+00 : f32
      %9 = vector.broadcast %cst : f32 to vector<256x32xf32>
      %c0 = arith.constant 0 : index
      %c7 = arith.constant 7 : index
      %c0_4 = arith.constant 0 : index
      %10 = vector.load %arg12[%c0, %c7, %c0_4] : memref<18x32x32xf32, #tpu.memory_space<vmem>>, vector<16x16x32xf32>
      %11 = vector.shape_cast %10 : vector<16x16x32xf32> to vector<256x32xf32>
      %12 = arith.truncf %11 : vector<256x32xf32> to vector<256x32xbf16>
      %c0_5 = arith.constant 0 : index
      %c0_6 = arith.constant 0 : index
      %c0_7 = arith.constant 0 : index
      %13 = vector.load %arg3[%c0_5, %c0_6, %c0_7] : memref<1x288x32xbf16, #tpu.memory_space<vmem>>, vector<1x32x32xbf16>
      %14 = vector.shape_cast %13 : vector<1x32x32xbf16> to vector<32x32xbf16>
      %cst_8 = arith.constant dense<0.000000e+00> : vector<256x32xf32>
      %15 = tpu.matmul %12, %14, %cst_8 {dimension_numbers = #tpu.dot_dimension_numbers<[1], [0], [0], [1], [0, 0, 1, 1], [], []>} : vector<256x32xbf16>, vector<32x32xbf16>, vector<256x32xf32> -> vector<256x32xf32>
      %16 = arith.addf %9, %15 : vector<256x32xf32>
      %c0_9 = arith.constant 0 : index
      %c8 = arith.constant 8 : index
      %c0_10 = arith.constant 0 : index
      %17 = vector.load %arg12[%c0_9, %c8, %c0_10] : memref<18x32x32xf32, #tpu.memory_space<vmem>>, vector<16x16x32xf32>
      %18 = vector.shape_cast %17 : vector<16x16x32xf32> to vector<256x32xf32>
      %19 = arith.truncf %18 : vector<256x32xf32> to vector<256x32xbf16>
      %c0_11 = arith.constant 0 : index
      %c32 = arith.constant 32 : index
      %c0_12 = arith.constant 0 : index
      %20 = vector.load %arg3[%c0_11, %c32, %c0_12] : memref<1x288x32xbf16, #tpu.memory_space<vmem>>, vector<1x32x32xbf16>
      %21 = vector.shape_cast %20 : vector<1x32x32xbf16> to vector<32x32xbf16>
      %cst_13 = arith.constant dense<0.000000e+00> : vector<256x32xf32>
      %22 = tpu.matmul %19, %21, %cst_13 {dimension_numbers = #tpu.dot_dimension_numbers<[1], [0], [0], [1], [0, 0, 1, 1], [], []>} : vector<256x32xbf16>, vector<32x32xbf16>, vector<256x32xf32> -> vector<256x32xf32>
      %23 = arith.addf %16, %22 : vector<256x32xf32>
      %c0_14 = arith.constant 0 : index
      %c9 = arith.constant 9 : index
      %c0_15 = arith.constant 0 : index
      %24 = vector.load %arg12[%c0_14, %c9, %c0_15] : memref<18x32x32xf32, #tpu.memory_space<vmem>>, vector<16x16x32xf32>
      %25 = vector.shape_cast %24 : vector<16x16x32xf32> to vector<256x32xf32>
      %26 = arith.truncf %25 : vector<256x32xf32> to vector<256x32xbf16>
      %c0_16 = arith.constant 0 : index
      %c64 = arith.constant 64 : index
      %c0_17 = arith.constant 0 : index
      %27 = vector.load %arg3[%c0_16, %c64, %c0_17] : memref<1x288x32xbf16, #tpu.memory_space<vmem>>, vector<1x32x32xbf16>
      %28 = vector.shape_cast %27 : vector<1x32x32xbf16> to vector<32x32xbf16>
      %cst_18 = arith.constant dense<0.000000e+00> : vector<256x32xf32>
      %29 = tpu.matmul %26, %28, %cst_18 {dimension_numbers = #tpu.dot_dimension_numbers<[1], [0], [0], [1], [0, 0, 1, 1], [], []>} : vector<256x32xbf16>, vector<32x32xbf16>, vector<256x32xf32> -> vector<256x32xf32>
      %30 = arith.addf %23, %29 : vector<256x32xf32>
      %c1 = arith.constant 1 : index
      %c7_19 = arith.constant 7 : index
      %c0_20 = arith.constant 0 : index
      %31 = vector.load %arg12[%c1, %c7_19, %c0_20] : memref<18x32x32xf32, #tpu.memory_space<vmem>>, vector<16x16x32xf32>
      %32 = vector.shape_cast %31 : vector<16x16x32xf32> to vector<256x32xf32>
      %33 = arith.truncf %32 : vector<256x32xf32> to vector<256x32xbf16>
      %c0_21 = arith.constant 0 : index
      %c96 = arith.constant 96 : index
      %c0_22 = arith.constant 0 : index
      %34 = vector.load %arg3[%c0_21, %c96, %c0_22] : memref<1x288x32xbf16, #tpu.memory_space<vmem>>, vector<1x32x32xbf16>
      %35 = vector.shape_cast %34 : vector<1x32x32xbf16> to vector<32x32xbf16>
      %cst_23 = arith.constant dense<0.000000e+00> : vector<256x32xf32>
      %36 = tpu.matmul %33, %35, %cst_23 {dimension_numbers = #tpu.dot_dimension_numbers<[1], [0], [0], [1], [0, 0, 1, 1], [], []>} : vector<256x32xbf16>, vector<32x32xbf16>, vector<256x32xf32> -> vector<256x32xf32>
      %37 = arith.addf %30, %36 : vector<256x32xf32>
      %c1_24 = arith.constant 1 : index
      %c8_25 = arith.constant 8 : index
      %c0_26 = arith.constant 0 : index
      %38 = vector.load %arg12[%c1_24, %c8_25, %c0_26] : memref<18x32x32xf32, #tpu.memory_space<vmem>>, vector<16x16x32xf32>
      %39 = vector.shape_cast %38 : vector<16x16x32xf32> to vector<256x32xf32>
      %40 = arith.truncf %39 : vector<256x32xf32> to vector<256x32xbf16>
      %c0_27 = arith.constant 0 : index
      %c128 = arith.constant 128 : index
      %c0_28 = arith.constant 0 : index
      %41 = vector.load %arg3[%c0_27, %c128, %c0_28] : memref<1x288x32xbf16, #tpu.memory_space<vmem>>, vector<1x32x32xbf16>
      %42 = vector.shape_cast %41 : vector<1x32x32xbf16> to vector<32x32xbf16>
      %cst_29 = arith.constant dense<0.000000e+00> : vector<256x32xf32>
      %43 = tpu.matmul %40, %42, %cst_29 {dimension_numbers = #tpu.dot_dimension_numbers<[1], [0], [0], [1], [0, 0, 1, 1], [], []>} : vector<256x32xbf16>, vector<32x32xbf16>, vector<256x32xf32> -> vector<256x32xf32>
      %44 = arith.addf %37, %43 : vector<256x32xf32>
      %c1_30 = arith.constant 1 : index
      %c9_31 = arith.constant 9 : index
      %c0_32 = arith.constant 0 : index
      %45 = vector.load %arg12[%c1_30, %c9_31, %c0_32] : memref<18x32x32xf32, #tpu.memory_space<vmem>>, vector<16x16x32xf32>
      %46 = vector.shape_cast %45 : vector<16x16x32xf32> to vector<256x32xf32>
      %47 = arith.truncf %46 : vector<256x32xf32> to vector<256x32xbf16>
      %c0_33 = arith.constant 0 : index
      %c160 = arith.constant 160 : index
      %c0_34 = arith.constant 0 : index
      %48 = vector.load %arg3[%c0_33, %c160, %c0_34] : memref<1x288x32xbf16, #tpu.memory_space<vmem>>, vector<1x32x32xbf16>
      %49 = vector.shape_cast %48 : vector<1x32x32xbf16> to vector<32x32xbf16>
      %cst_35 = arith.constant dense<0.000000e+00> : vector<256x32xf32>
      %50 = tpu.matmul %47, %49, %cst_35 {dimension_numbers = #tpu.dot_dimension_numbers<[1], [0], [0], [1], [0, 0, 1, 1], [], []>} : vector<256x32xbf16>, vector<32x32xbf16>, vector<256x32xf32> -> vector<256x32xf32>
      %51 = arith.addf %44, %50 : vector<256x32xf32>
      %c2 = arith.constant 2 : index
      %c7_36 = arith.constant 7 : index
      %c0_37 = arith.constant 0 : index
      %52 = vector.load %arg12[%c2, %c7_36, %c0_37] : memref<18x32x32xf32, #tpu.memory_space<vmem>>, vector<16x16x32xf32>
      %53 = vector.shape_cast %52 : vector<16x16x32xf32> to vector<256x32xf32>
      %54 = arith.truncf %53 : vector<256x32xf32> to vector<256x32xbf16>
      %c0_38 = arith.constant 0 : index
      %c192 = arith.constant 192 : index
      %c0_39 = arith.constant 0 : index
      %55 = vector.load %arg3[%c0_38, %c192, %c0_39] : memref<1x288x32xbf16, #tpu.memory_space<vmem>>, vector<1x32x32xbf16>
      %56 = vector.shape_cast %55 : vector<1x32x32xbf16> to vector<32x32xbf16>
      %cst_40 = arith.constant dense<0.000000e+00> : vector<256x32xf32>
      %57 = tpu.matmul %54, %56, %cst_40 {dimension_numbers = #tpu.dot_dimension_numbers<[1], [0], [0], [1], [0, 0, 1, 1], [], []>} : vector<256x32xbf16>, vector<32x32xbf16>, vector<256x32xf32> -> vector<256x32xf32>
      %58 = arith.addf %51, %57 : vector<256x32xf32>
      %c2_41 = arith.constant 2 : index
      %c8_42 = arith.constant 8 : index
      %c0_43 = arith.constant 0 : index
      %59 = vector.load %arg12[%c2_41, %c8_42, %c0_43] : memref<18x32x32xf32, #tpu.memory_space<vmem>>, vector<16x16x32xf32>
      %60 = vector.shape_cast %59 : vector<16x16x32xf32> to vector<256x32xf32>
      %61 = arith.truncf %60 : vector<256x32xf32> to vector<256x32xbf16>
      %c0_44 = arith.constant 0 : index
      %c224 = arith.constant 224 : index
      %c0_45 = arith.constant 0 : index
      %62 = vector.load %arg3[%c0_44, %c224, %c0_45] : memref<1x288x32xbf16, #tpu.memory_space<vmem>>, vector<1x32x32xbf16>
      %63 = vector.shape_cast %62 : vector<1x32x32xbf16> to vector<32x32xbf16>
      %cst_46 = arith.constant dense<0.000000e+00> : vector<256x32xf32>
      %64 = tpu.matmul %61, %63, %cst_46 {dimension_numbers = #tpu.dot_dimension_numbers<[1], [0], [0], [1], [0, 0, 1, 1], [], []>} : vector<256x32xbf16>, vector<32x32xbf16>, vector<256x32xf32> -> vector<256x32xf32>
      %65 = arith.addf %58, %64 : vector<256x32xf32>
      %c2_47 = arith.constant 2 : index
      %c9_48 = arith.constant 9 : index
      %c0_49 = arith.constant 0 : index
      %66 = vector.load %arg12[%c2_47, %c9_48, %c0_49] : memref<18x32x32xf32, #tpu.memory_space<vmem>>, vector<16x16x32xf32>
      %67 = vector.shape_cast %66 : vector<16x16x32xf32> to vector<256x32xf32>
      %68 = arith.truncf %67 : vector<256x32xf32> to vector<256x32xbf16>
      %c0_50 = arith.constant 0 : index
      %c256 = arith.constant 256 : index
      %c0_51 = arith.constant 0 : index
      %69 = vector.load %arg3[%c0_50, %c256, %c0_51] : memref<1x288x32xbf16, #tpu.memory_space<vmem>>, vector<1x32x32xbf16>
      %70 = vector.shape_cast %69 : vector<1x32x32xbf16> to vector<32x32xbf16>
      %cst_52 = arith.constant dense<0.000000e+00> : vector<256x32xf32>
      %71 = tpu.matmul %68, %70, %cst_52 {dimension_numbers = #tpu.dot_dimension_numbers<[1], [0], [0], [1], [0, 0, 1, 1], [], []>} : vector<256x32xbf16>, vector<32x32xbf16>, vector<256x32xf32> -> vector<256x32xf32>
      %72 = arith.addf %65, %71 : vector<256x32xf32>
      %c0_53 = arith.constant 0 : index
      %c0_54 = arith.constant 0 : index
      %c0_55 = arith.constant 0 : index
      %73 = vector.load %arg4[%c0_53, %c0_54, %c0_55] : memref<1x1x32xf32, #tpu.memory_space<vmem>>, vector<1x1x32xf32>
      %74 = vector.shape_cast %73 : vector<1x1x32xf32> to vector<1x32xf32>
      %75 = vector.broadcast %74 : vector<1x32xf32> to vector<256x32xf32>
      %76 = arith.addf %72, %75 : vector<256x32xf32>
      %cst_56 = arith.constant 0.000000e+00 : f32
      %77 = vector.broadcast %cst_56 : f32 to vector<256x32xf32>
      %78 = arith.maximumf %76, %77 : vector<256x32xf32>
      %79 = vector.shape_cast %78 : vector<256x32xf32> to vector<16x16x32xf32>
      %c1_57 = arith.constant 1 : index
      %c8_58 = arith.constant 8 : index
      %c0_59 = arith.constant 0 : index
      %80 = vector.load %arg13[%c1_57, %c8_58, %c0_59] : memref<18x32x32xf32, #tpu.memory_space<vmem>>, vector<16x16x32xf32>
      tpu.vector_store %arg13[%c1_57, %c8_58, %c0_59], %79 {strides = array<i32>} : memref<18x32x32xf32, #tpu.memory_space<vmem>>, vector<16x16x32xf32>,
      %cst_60 = arith.constant 0.000000e+00 : f32
      %81 = vector.broadcast %cst_60 : f32 to vector<256x32xf32>
      %c0_61 = arith.constant 0 : index
      %c7_62 = arith.constant 7 : index
      %c0_63 = arith.constant 0 : index
      %82 = vector.load %arg13[%c0_61, %c7_62, %c0_63] : memref<18x32x32xf32, #tpu.memory_space<vmem>>, vector<16x16x32xf32>
      %83 = vector.shape_cast %82 : vector<16x16x32xf32> to vector<256x32xf32>
      %84 = arith.truncf %83 : vector<256x32xf32> to vector<256x32xbf16>
      %c0_64 = arith.constant 0 : index
      %c0_65 = arith.constant 0 : index
      %c0_66 = arith.constant 0 : index
      %85 = vector.load %arg5[%c0_64, %c0_65, %c0_66] : memref<1x288x32xbf16, #tpu.memory_space<vmem>>, vector<1x32x32xbf16>
      %86 = vector.shape_cast %85 : vector<1x32x32xbf16> to vector<32x32xbf16>
      %cst_67 = arith.constant dense<0.000000e+00> : vector<256x32xf32>
      %87 = tpu.matmul %84, %86, %cst_67 {dimension_numbers = #tpu.dot_dimension_numbers<[1], [0], [0], [1], [0, 0, 1, 1], [], []>} : vector<256x32xbf16>, vector<32x32xbf16>, vector<256x32xf32> -> vector<256x32xf32>
      %88 = arith.addf %81, %87 : vector<256x32xf32>
      %c0_68 = arith.constant 0 : index
      %c8_69 = arith.constant 8 : index
      %c0_70 = arith.constant 0 : index
      %89 = vector.load %arg13[%c0_68, %c8_69, %c0_70] : memref<18x32x32xf32, #tpu.memory_space<vmem>>, vector<16x16x32xf32>
      %90 = vector.shape_cast %89 : vector<16x16x32xf32> to vector<256x32xf32>
      %91 = arith.truncf %90 : vector<256x32xf32> to vector<256x32xbf16>
      %c0_71 = arith.constant 0 : index
      %c32_72 = arith.constant 32 : index
      %c0_73 = arith.constant 0 : index
      %92 = vector.load %arg5[%c0_71, %c32_72, %c0_73] : memref<1x288x32xbf16, #tpu.memory_space<vmem>>, vector<1x32x32xbf16>
      %93 = vector.shape_cast %92 : vector<1x32x32xbf16> to vector<32x32xbf16>
      %cst_74 = arith.constant dense<0.000000e+00> : vector<256x32xf32>
      %94 = tpu.matmul %91, %93, %cst_74 {dimension_numbers = #tpu.dot_dimension_numbers<[1], [0], [0], [1], [0, 0, 1, 1], [], []>} : vector<256x32xbf16>, vector<32x32xbf16>, vector<256x32xf32> -> vector<256x32xf32>
      %95 = arith.addf %88, %94 : vector<256x32xf32>
      %c0_75 = arith.constant 0 : index
      %c9_76 = arith.constant 9 : index
      %c0_77 = arith.constant 0 : index
      %96 = vector.load %arg13[%c0_75, %c9_76, %c0_77] : memref<18x32x32xf32, #tpu.memory_space<vmem>>, vector<16x16x32xf32>
      %97 = vector.shape_cast %96 : vector<16x16x32xf32> to vector<256x32xf32>
      %98 = arith.truncf %97 : vector<256x32xf32> to vector<256x32xbf16>
      %c0_78 = arith.constant 0 : index
      %c64_79 = arith.constant 64 : index
      %c0_80 = arith.constant 0 : index
      %99 = vector.load %arg5[%c0_78, %c64_79, %c0_80] : memref<1x288x32xbf16, #tpu.memory_space<vmem>>, vector<1x32x32xbf16>
      %100 = vector.shape_cast %99 : vector<1x32x32xbf16> to vector<32x32xbf16>
      %cst_81 = arith.constant dense<0.000000e+00> : vector<256x32xf32>
      %101 = tpu.matmul %98, %100, %cst_81 {dimension_numbers = #tpu.dot_dimension_numbers<[1], [0], [0], [1], [0, 0, 1, 1], [], []>} : vector<256x32xbf16>, vector<32x32xbf16>, vector<256x32xf32> -> vector<256x32xf32>
      %102 = arith.addf %95, %101 : vector<256x32xf32>
      %c1_82 = arith.constant 1 : index
      %c7_83 = arith.constant 7 : index
      %c0_84 = arith.constant 0 : index
      %103 = vector.load %arg13[%c1_82, %c7_83, %c0_84] : memref<18x32x32xf32, #tpu.memory_space<vmem>>, vector<16x16x32xf32>
      %104 = vector.shape_cast %103 : vector<16x16x32xf32> to vector<256x32xf32>
      %105 = arith.truncf %104 : vector<256x32xf32> to vector<256x32xbf16>
      %c0_85 = arith.constant 0 : index
      %c96_86 = arith.constant 96 : index
      %c0_87 = arith.constant 0 : index
      %106 = vector.load %arg5[%c0_85, %c96_86, %c0_87] : memref<1x288x32xbf16, #tpu.memory_space<vmem>>, vector<1x32x32xbf16>
      %107 = vector.shape_cast %106 : vector<1x32x32xbf16> to vector<32x32xbf16>
      %cst_88 = arith.constant dense<0.000000e+00> : vector<256x32xf32>
      %108 = tpu.matmul %105, %107, %cst_88 {dimension_numbers = #tpu.dot_dimension_numbers<[1], [0], [0], [1], [0, 0, 1, 1], [], []>} : vector<256x32xbf16>, vector<32x32xbf16>, vector<256x32xf32> -> vector<256x32xf32>
      %109 = arith.addf %102, %108 : vector<256x32xf32>
      %c1_89 = arith.constant 1 : index
      %c8_90 = arith.constant 8 : index
      %c0_91 = arith.constant 0 : index
      %110 = vector.load %arg13[%c1_89, %c8_90, %c0_91] : memref<18x32x32xf32, #tpu.memory_space<vmem>>, vector<16x16x32xf32>
      %111 = vector.shape_cast %110 : vector<16x16x32xf32> to vector<256x32xf32>
      %112 = arith.truncf %111 : vector<256x32xf32> to vector<256x32xbf16>
      %c0_92 = arith.constant 0 : index
      %c128_93 = arith.constant 128 : index
      %c0_94 = arith.constant 0 : index
      %113 = vector.load %arg5[%c0_92, %c128_93, %c0_94] : memref<1x288x32xbf16, #tpu.memory_space<vmem>>, vector<1x32x32xbf16>
      %114 = vector.shape_cast %113 : vector<1x32x32xbf16> to vector<32x32xbf16>
      %cst_95 = arith.constant dense<0.000000e+00> : vector<256x32xf32>
      %115 = tpu.matmul %112, %114, %cst_95 {dimension_numbers = #tpu.dot_dimension_numbers<[1], [0], [0], [1], [0, 0, 1, 1], [], []>} : vector<256x32xbf16>, vector<32x32xbf16>, vector<256x32xf32> -> vector<256x32xf32>
      %116 = arith.addf %109, %115 : vector<256x32xf32>
      %c1_96 = arith.constant 1 : index
      %c9_97 = arith.constant 9 : index
      %c0_98 = arith.constant 0 : index
      %117 = vector.load %arg13[%c1_96, %c9_97, %c0_98] : memref<18x32x32xf32, #tpu.memory_space<vmem>>, vector<16x16x32xf32>
      %118 = vector.shape_cast %117 : vector<16x16x32xf32> to vector<256x32xf32>
      %119 = arith.truncf %118 : vector<256x32xf32> to vector<256x32xbf16>
      %c0_99 = arith.constant 0 : index
      %c160_100 = arith.constant 160 : index
      %c0_101 = arith.constant 0 : index
      %120 = vector.load %arg5[%c0_99, %c160_100, %c0_101] : memref<1x288x32xbf16, #tpu.memory_space<vmem>>, vector<1x32x32xbf16>
      %121 = vector.shape_cast %120 : vector<1x32x32xbf16> to vector<32x32xbf16>
      %cst_102 = arith.constant dense<0.000000e+00> : vector<256x32xf32>
      %122 = tpu.matmul %119, %121, %cst_102 {dimension_numbers = #tpu.dot_dimension_numbers<[1], [0], [0], [1], [0, 0, 1, 1], [], []>} : vector<256x32xbf16>, vector<32x32xbf16>, vector<256x32xf32> -> vector<256x32xf32>
      %123 = arith.addf %116, %122 : vector<256x32xf32>
      %c2_103 = arith.constant 2 : index
      %c7_104 = arith.constant 7 : index
      %c0_105 = arith.constant 0 : index
      %124 = vector.load %arg13[%c2_103, %c7_104, %c0_105] : memref<18x32x32xf32, #tpu.memory_space<vmem>>, vector<16x16x32xf32>
      %125 = vector.shape_cast %124 : vector<16x16x32xf32> to vector<256x32xf32>
      %126 = arith.truncf %125 : vector<256x32xf32> to vector<256x32xbf16>
      %c0_106 = arith.constant 0 : index
      %c192_107 = arith.constant 192 : index
      %c0_108 = arith.constant 0 : index
      %127 = vector.load %arg5[%c0_106, %c192_107, %c0_108] : memref<1x288x32xbf16, #tpu.memory_space<vmem>>, vector<1x32x32xbf16>
      %128 = vector.shape_cast %127 : vector<1x32x32xbf16> to vector<32x32xbf16>
      %cst_109 = arith.constant dense<0.000000e+00> : vector<256x32xf32>
      %129 = tpu.matmul %126, %128, %cst_109 {dimension_numbers = #tpu.dot_dimension_numbers<[1], [0], [0], [1], [0, 0, 1, 1], [], []>} : vector<256x32xbf16>, vector<32x32xbf16>, vector<256x32xf32> -> vector<256x32xf32>
      %130 = arith.addf %123, %129 : vector<256x32xf32>
      %c2_110 = arith.constant 2 : index
      %c8_111 = arith.constant 8 : index
      %c0_112 = arith.constant 0 : index
      %131 = vector.load %arg13[%c2_110, %c8_111, %c0_112] : memref<18x32x32xf32, #tpu.memory_space<vmem>>, vector<16x16x32xf32>
      %132 = vector.shape_cast %131 : vector<16x16x32xf32> to vector<256x32xf32>
      %133 = arith.truncf %132 : vector<256x32xf32> to vector<256x32xbf16>
      %c0_113 = arith.constant 0 : index
      %c224_114 = arith.constant 224 : index
      %c0_115 = arith.constant 0 : index
      %134 = vector.load %arg5[%c0_113, %c224_114, %c0_115] : memref<1x288x32xbf16, #tpu.memory_space<vmem>>, vector<1x32x32xbf16>
      %135 = vector.shape_cast %134 : vector<1x32x32xbf16> to vector<32x32xbf16>
      %cst_116 = arith.constant dense<0.000000e+00> : vector<256x32xf32>
      %136 = tpu.matmul %133, %135, %cst_116 {dimension_numbers = #tpu.dot_dimension_numbers<[1], [0], [0], [1], [0, 0, 1, 1], [], []>} : vector<256x32xbf16>, vector<32x32xbf16>, vector<256x32xf32> -> vector<256x32xf32>
      %137 = arith.addf %130, %136 : vector<256x32xf32>
      %c2_117 = arith.constant 2 : index
      %c9_118 = arith.constant 9 : index
      %c0_119 = arith.constant 0 : index
      %138 = vector.load %arg13[%c2_117, %c9_118, %c0_119] : memref<18x32x32xf32, #tpu.memory_space<vmem>>, vector<16x16x32xf32>
      %139 = vector.shape_cast %138 : vector<16x16x32xf32> to vector<256x32xf32>
      %140 = arith.truncf %139 : vector<256x32xf32> to vector<256x32xbf16>
      %c0_120 = arith.constant 0 : index
      %c256_121 = arith.constant 256 : index
      %c0_122 = arith.constant 0 : index
      %141 = vector.load %arg5[%c0_120, %c256_121, %c0_122] : memref<1x288x32xbf16, #tpu.memory_space<vmem>>, vector<1x32x32xbf16>
      %142 = vector.shape_cast %141 : vector<1x32x32xbf16> to vector<32x32xbf16>
      %cst_123 = arith.constant dense<0.000000e+00> : vector<256x32xf32>
      %143 = tpu.matmul %140, %142, %cst_123 {dimension_numbers = #tpu.dot_dimension_numbers<[1], [0], [0], [1], [0, 0, 1, 1], [], []>} : vector<256x32xbf16>, vector<32x32xbf16>, vector<256x32xf32> -> vector<256x32xf32>
      %144 = arith.addf %137, %143 : vector<256x32xf32>
      %c0_124 = arith.constant 0 : index
      %c0_125 = arith.constant 0 : index
      %c0_126 = arith.constant 0 : index
      %145 = vector.load %arg6[%c0_124, %c0_125, %c0_126] : memref<1x1x32xf32, #tpu.memory_space<vmem>>, vector<1x1x32xf32>
      %146 = vector.shape_cast %145 : vector<1x1x32xf32> to vector<1x32xf32>
      %147 = vector.broadcast %146 : vector<1x32xf32> to vector<256x32xf32>
      %148 = arith.addf %144, %147 : vector<256x32xf32>
      %cst_127 = arith.constant dense<0.000000e+00> : vector<32xf32>
      %149 = vector.multi_reduction <add>, %148, %cst_127 [0] : vector<256x32xf32> to vector<32xf32>
      %150 = vector.shape_cast %149 : vector<32xf32> to vector<1x32xf32>
      %cst_128 = arith.constant 3.906250e-03 : f32
      %151 = vector.broadcast %cst_128 : f32 to vector<1x32xf32>
      %152 = arith.mulf %150, %151 : vector<1x32xf32>
      %153 = arith.truncf %152 : vector<1x32xf32> to vector<1x32xbf16>
      %c0_129 = arith.constant 0 : index
      %c0_130 = arith.constant 0 : index
      %c0_131 = arith.constant 0 : index
      %154 = vector.load %arg7[%c0_129, %c0_130, %c0_131] : memref<1x32x2xbf16, #tpu.memory_space<vmem>>, vector<1x32x2xbf16>
      %155 = vector.shape_cast %154 : vector<1x32x2xbf16> to vector<32x2xbf16>
      %cst_132 = arith.constant dense<0.000000e+00> : vector<1x2xf32>
      %156 = tpu.matmul %153, %155, %cst_132 {dimension_numbers = #tpu.dot_dimension_numbers<[1], [0], [0], [1], [0, 0, 1, 1], [], []>} : vector<1x32xbf16>, vector<32x2xbf16>, vector<1x2xf32> -> vector<1x2xf32>
      %c0_133 = arith.constant 0 : index
      %c0_134 = arith.constant 0 : index
      %c0_135 = arith.constant 0 : index
      %157 = vector.load %arg8[%c0_133, %c0_134, %c0_135] : memref<1x1x2xf32, #tpu.memory_space<vmem>>, vector<1x1x2xf32>
      %158 = vector.shape_cast %157 : vector<1x1x2xf32> to vector<1x2xf32>
      %159 = arith.addf %156, %158 : vector<1x2xf32>
      %cst_136 = arith.constant 0.000000e+00 : f32
      %160 = vector.broadcast %cst_136 : f32 to vector<1x2xf32>
      %161 = arith.maximumf %159, %160 : vector<1x2xf32>
      %162 = arith.truncf %161 : vector<1x2xf32> to vector<1x2xbf16>
      %c0_137 = arith.constant 0 : index
      %c0_138 = arith.constant 0 : index
      %c0_139 = arith.constant 0 : index
      %163 = vector.load %arg9[%c0_137, %c0_138, %c0_139] : memref<1x2x32xbf16, #tpu.memory_space<vmem>>, vector<1x2x32xbf16>
      %164 = vector.shape_cast %163 : vector<1x2x32xbf16> to vector<2x32xbf16>
      %cst_140 = arith.constant dense<0.000000e+00> : vector<1x32xf32>
      %165 = tpu.matmul %162, %164, %cst_140 {dimension_numbers = #tpu.dot_dimension_numbers<[1], [0], [0], [1], [0, 0, 1, 1], [], []>} : vector<1x2xbf16>, vector<2x32xbf16>, vector<1x32xf32> -> vector<1x32xf32>
      %c0_141 = arith.constant 0 : index
      %c0_142 = arith.constant 0 : index
      %c0_143 = arith.constant 0 : index
      %166 = vector.load %arg10[%c0_141, %c0_142, %c0_143] : memref<1x1x32xf32, #tpu.memory_space<vmem>>, vector<1x1x32xf32>
      %167 = vector.shape_cast %166 : vector<1x1x32xf32> to vector<1x32xf32>
      %168 = arith.addf %165, %167 : vector<1x32xf32>
      %169 = arith.negf %168 : vector<1x32xf32>
      %170 = math.exp %169 : vector<1x32xf32>
      %cst_144 = arith.constant 1.000000e+00 : f32
      %171 = vector.broadcast %cst_144 : f32 to vector<1x32xf32>
      %172 = arith.addf %171, %170 : vector<1x32xf32>
      %173 = arith.divf %171, %172 : vector<1x32xf32>
      %c1_145 = arith.constant 1 : index
      %c8_146 = arith.constant 8 : index
      %c0_147 = arith.constant 0 : index
      %174 = vector.load %arg12[%c1_145, %c8_146, %c0_147] : memref<18x32x32xf32, #tpu.memory_space<vmem>>, vector<16x16x32xf32>
      %175 = vector.shape_cast %174 : vector<16x16x32xf32> to vector<256x32xf32>
      %176 = vector.broadcast %173 : vector<1x32xf32> to vector<256x32xf32>
      %177 = arith.mulf %148, %176 : vector<256x32xf32>
      %178 = arith.addf %177, %175 : vector<256x32xf32>
      %179 = vector.shape_cast %178 : vector<256x32xf32> to vector<16x16x32xf32>
      %c1_148 = arith.constant 1 : index
      %c8_149 = arith.constant 8 : index
      %c0_150 = arith.constant 0 : index
      %180 = vector.load %arg12[%c1_148, %c8_149, %c0_150] : memref<18x32x32xf32, #tpu.memory_space<vmem>>, vector<16x16x32xf32>
      tpu.vector_store %arg12[%c1_148, %c8_149, %c0_150], %179 {strides = array<i32>} : memref<18x32x32xf32, #tpu.memory_space<vmem>>, vector<16x16x32xf32>,
    } else {
    }
    %c2_i32_2 = arith.constant 2 : i32
    %6 = arith.cmpi eq, %arg1, %c2_i32_2 : i32
    %7 = arith.extui %6 : i1 to i32
    %c0_i32_3 = arith.constant 0 : i32
    %8 = arith.cmpi ne, %7, %c0_i32_3 : i32
    scf.if %8 {
      %cst = arith.constant 0.000000e+00 : f32
      %9 = vector.broadcast %cst : f32 to vector<256x32xf32>
      %c0 = arith.constant 0 : index
      %c7 = arith.constant 7 : index
      %c0_4 = arith.constant 0 : index
      %10 = vector.load %arg12[%c0, %c7, %c0_4] : memref<18x32x32xf32, #tpu.memory_space<vmem>>, vector<16x16x32xf32>
      %11 = vector.shape_cast %10 : vector<16x16x32xf32> to vector<256x32xf32>
      %12 = arith.truncf %11 : vector<256x32xf32> to vector<256x32xbf16>
      %c0_5 = arith.constant 0 : index
      %c0_6 = arith.constant 0 : index
      %c0_7 = arith.constant 0 : index
      %13 = vector.load %arg3[%c0_5, %c0_6, %c0_7] : memref<1x288x32xbf16, #tpu.memory_space<vmem>>, vector<1x32x32xbf16>
      %14 = vector.shape_cast %13 : vector<1x32x32xbf16> to vector<32x32xbf16>
      %cst_8 = arith.constant dense<0.000000e+00> : vector<256x32xf32>
      %15 = tpu.matmul %12, %14, %cst_8 {dimension_numbers = #tpu.dot_dimension_numbers<[1], [0], [0], [1], [0, 0, 1, 1], [], []>} : vector<256x32xbf16>, vector<32x32xbf16>, vector<256x32xf32> -> vector<256x32xf32>
      %16 = arith.addf %9, %15 : vector<256x32xf32>
      %c0_9 = arith.constant 0 : index
      %c8 = arith.constant 8 : index
      %c0_10 = arith.constant 0 : index
      %17 = vector.load %arg12[%c0_9, %c8, %c0_10] : memref<18x32x32xf32, #tpu.memory_space<vmem>>, vector<16x16x32xf32>
      %18 = vector.shape_cast %17 : vector<16x16x32xf32> to vector<256x32xf32>
      %19 = arith.truncf %18 : vector<256x32xf32> to vector<256x32xbf16>
      %c0_11 = arith.constant 0 : index
      %c32 = arith.constant 32 : index
      %c0_12 = arith.constant 0 : index
      %20 = vector.load %arg3[%c0_11, %c32, %c0_12] : memref<1x288x32xbf16, #tpu.memory_space<vmem>>, vector<1x32x32xbf16>
      %21 = vector.shape_cast %20 : vector<1x32x32xbf16> to vector<32x32xbf16>
      %cst_13 = arith.constant dense<0.000000e+00> : vector<256x32xf32>
      %22 = tpu.matmul %19, %21, %cst_13 {dimension_numbers = #tpu.dot_dimension_numbers<[1], [0], [0], [1], [0, 0, 1, 1], [], []>} : vector<256x32xbf16>, vector<32x32xbf16>, vector<256x32xf32> -> vector<256x32xf32>
      %23 = arith.addf %16, %22 : vector<256x32xf32>
      %c0_14 = arith.constant 0 : index
      %c9 = arith.constant 9 : index
      %c0_15 = arith.constant 0 : index
      %24 = vector.load %arg12[%c0_14, %c9, %c0_15] : memref<18x32x32xf32, #tpu.memory_space<vmem>>, vector<16x16x32xf32>
      %25 = vector.shape_cast %24 : vector<16x16x32xf32> to vector<256x32xf32>
      %26 = arith.truncf %25 : vector<256x32xf32> to vector<256x32xbf16>
      %c0_16 = arith.constant 0 : index
      %c64 = arith.constant 64 : index
      %c0_17 = arith.constant 0 : index
      %27 = vector.load %arg3[%c0_16, %c64, %c0_17] : memref<1x288x32xbf16, #tpu.memory_space<vmem>>, vector<1x32x32xbf16>
      %28 = vector.shape_cast %27 : vector<1x32x32xbf16> to vector<32x32xbf16>
      %cst_18 = arith.constant dense<0.000000e+00> : vector<256x32xf32>
      %29 = tpu.matmul %26, %28, %cst_18 {dimension_numbers = #tpu.dot_dimension_numbers<[1], [0], [0], [1], [0, 0, 1, 1], [], []>} : vector<256x32xbf16>, vector<32x32xbf16>, vector<256x32xf32> -> vector<256x32xf32>
      %30 = arith.addf %23, %29 : vector<256x32xf32>
      %c1 = arith.constant 1 : index
      %c7_19 = arith.constant 7 : index
      %c0_20 = arith.constant 0 : index
      %31 = vector.load %arg12[%c1, %c7_19, %c0_20] : memref<18x32x32xf32, #tpu.memory_space<vmem>>, vector<16x16x32xf32>
      %32 = vector.shape_cast %31 : vector<16x16x32xf32> to vector<256x32xf32>
      %33 = arith.truncf %32 : vector<256x32xf32> to vector<256x32xbf16>
      %c0_21 = arith.constant 0 : index
      %c96 = arith.constant 96 : index
      %c0_22 = arith.constant 0 : index
      %34 = vector.load %arg3[%c0_21, %c96, %c0_22] : memref<1x288x32xbf16, #tpu.memory_space<vmem>>, vector<1x32x32xbf16>
      %35 = vector.shape_cast %34 : vector<1x32x32xbf16> to vector<32x32xbf16>
      %cst_23 = arith.constant dense<0.000000e+00> : vector<256x32xf32>
      %36 = tpu.matmul %33, %35, %cst_23 {dimension_numbers = #tpu.dot_dimension_numbers<[1], [0], [0], [1], [0, 0, 1, 1], [], []>} : vector<256x32xbf16>, vector<32x32xbf16>, vector<256x32xf32> -> vector<256x32xf32>
      %37 = arith.addf %30, %36 : vector<256x32xf32>
      %c1_24 = arith.constant 1 : index
      %c8_25 = arith.constant 8 : index
      %c0_26 = arith.constant 0 : index
      %38 = vector.load %arg12[%c1_24, %c8_25, %c0_26] : memref<18x32x32xf32, #tpu.memory_space<vmem>>, vector<16x16x32xf32>
      %39 = vector.shape_cast %38 : vector<16x16x32xf32> to vector<256x32xf32>
      %40 = arith.truncf %39 : vector<256x32xf32> to vector<256x32xbf16>
      %c0_27 = arith.constant 0 : index
      %c128 = arith.constant 128 : index
      %c0_28 = arith.constant 0 : index
      %41 = vector.load %arg3[%c0_27, %c128, %c0_28] : memref<1x288x32xbf16, #tpu.memory_space<vmem>>, vector<1x32x32xbf16>
      %42 = vector.shape_cast %41 : vector<1x32x32xbf16> to vector<32x32xbf16>
      %cst_29 = arith.constant dense<0.000000e+00> : vector<256x32xf32>
      %43 = tpu.matmul %40, %42, %cst_29 {dimension_numbers = #tpu.dot_dimension_numbers<[1], [0], [0], [1], [0, 0, 1, 1], [], []>} : vector<256x32xbf16>, vector<32x32xbf16>, vector<256x32xf32> -> vector<256x32xf32>
      %44 = arith.addf %37, %43 : vector<256x32xf32>
      %c1_30 = arith.constant 1 : index
      %c9_31 = arith.constant 9 : index
      %c0_32 = arith.constant 0 : index
      %45 = vector.load %arg12[%c1_30, %c9_31, %c0_32] : memref<18x32x32xf32, #tpu.memory_space<vmem>>, vector<16x16x32xf32>
      %46 = vector.shape_cast %45 : vector<16x16x32xf32> to vector<256x32xf32>
      %47 = arith.truncf %46 : vector<256x32xf32> to vector<256x32xbf16>
      %c0_33 = arith.constant 0 : index
      %c160 = arith.constant 160 : index
      %c0_34 = arith.constant 0 : index
      %48 = vector.load %arg3[%c0_33, %c160, %c0_34] : memref<1x288x32xbf16, #tpu.memory_space<vmem>>, vector<1x32x32xbf16>
      %49 = vector.shape_cast %48 : vector<1x32x32xbf16> to vector<32x32xbf16>
      %cst_35 = arith.constant dense<0.000000e+00> : vector<256x32xf32>
      %50 = tpu.matmul %47, %49, %cst_35 {dimension_numbers = #tpu.dot_dimension_numbers<[1], [0], [0], [1], [0, 0, 1, 1], [], []>} : vector<256x32xbf16>, vector<32x32xbf16>, vector<256x32xf32> -> vector<256x32xf32>
      %51 = arith.addf %44, %50 : vector<256x32xf32>
      %c2 = arith.constant 2 : index
      %c7_36 = arith.constant 7 : index
      %c0_37 = arith.constant 0 : index
      %52 = vector.load %arg12[%c2, %c7_36, %c0_37] : memref<18x32x32xf32, #tpu.memory_space<vmem>>, vector<16x16x32xf32>
      %53 = vector.shape_cast %52 : vector<16x16x32xf32> to vector<256x32xf32>
      %54 = arith.truncf %53 : vector<256x32xf32> to vector<256x32xbf16>
      %c0_38 = arith.constant 0 : index
      %c192 = arith.constant 192 : index
      %c0_39 = arith.constant 0 : index
      %55 = vector.load %arg3[%c0_38, %c192, %c0_39] : memref<1x288x32xbf16, #tpu.memory_space<vmem>>, vector<1x32x32xbf16>
      %56 = vector.shape_cast %55 : vector<1x32x32xbf16> to vector<32x32xbf16>
      %cst_40 = arith.constant dense<0.000000e+00> : vector<256x32xf32>
      %57 = tpu.matmul %54, %56, %cst_40 {dimension_numbers = #tpu.dot_dimension_numbers<[1], [0], [0], [1], [0, 0, 1, 1], [], []>} : vector<256x32xbf16>, vector<32x32xbf16>, vector<256x32xf32> -> vector<256x32xf32>
      %58 = arith.addf %51, %57 : vector<256x32xf32>
      %c2_41 = arith.constant 2 : index
      %c8_42 = arith.constant 8 : index
      %c0_43 = arith.constant 0 : index
      %59 = vector.load %arg12[%c2_41, %c8_42, %c0_43] : memref<18x32x32xf32, #tpu.memory_space<vmem>>, vector<16x16x32xf32>
      %60 = vector.shape_cast %59 : vector<16x16x32xf32> to vector<256x32xf32>
      %61 = arith.truncf %60 : vector<256x32xf32> to vector<256x32xbf16>
      %c0_44 = arith.constant 0 : index
      %c224 = arith.constant 224 : index
      %c0_45 = arith.constant 0 : index
      %62 = vector.load %arg3[%c0_44, %c224, %c0_45] : memref<1x288x32xbf16, #tpu.memory_space<vmem>>, vector<1x32x32xbf16>
      %63 = vector.shape_cast %62 : vector<1x32x32xbf16> to vector<32x32xbf16>
      %cst_46 = arith.constant dense<0.000000e+00> : vector<256x32xf32>
      %64 = tpu.matmul %61, %63, %cst_46 {dimension_numbers = #tpu.dot_dimension_numbers<[1], [0], [0], [1], [0, 0, 1, 1], [], []>} : vector<256x32xbf16>, vector<32x32xbf16>, vector<256x32xf32> -> vector<256x32xf32>
      %65 = arith.addf %58, %64 : vector<256x32xf32>
      %c2_47 = arith.constant 2 : index
      %c9_48 = arith.constant 9 : index
      %c0_49 = arith.constant 0 : index
      %66 = vector.load %arg12[%c2_47, %c9_48, %c0_49] : memref<18x32x32xf32, #tpu.memory_space<vmem>>, vector<16x16x32xf32>
      %67 = vector.shape_cast %66 : vector<16x16x32xf32> to vector<256x32xf32>
      %68 = arith.truncf %67 : vector<256x32xf32> to vector<256x32xbf16>
      %c0_50 = arith.constant 0 : index
      %c256 = arith.constant 256 : index
      %c0_51 = arith.constant 0 : index
      %69 = vector.load %arg3[%c0_50, %c256, %c0_51] : memref<1x288x32xbf16, #tpu.memory_space<vmem>>, vector<1x32x32xbf16>
      %70 = vector.shape_cast %69 : vector<1x32x32xbf16> to vector<32x32xbf16>
      %cst_52 = arith.constant dense<0.000000e+00> : vector<256x32xf32>
      %71 = tpu.matmul %68, %70, %cst_52 {dimension_numbers = #tpu.dot_dimension_numbers<[1], [0], [0], [1], [0, 0, 1, 1], [], []>} : vector<256x32xbf16>, vector<32x32xbf16>, vector<256x32xf32> -> vector<256x32xf32>
      %72 = arith.addf %65, %71 : vector<256x32xf32>
      %c0_53 = arith.constant 0 : index
      %c0_54 = arith.constant 0 : index
      %c0_55 = arith.constant 0 : index
      %73 = vector.load %arg4[%c0_53, %c0_54, %c0_55] : memref<1x1x32xf32, #tpu.memory_space<vmem>>, vector<1x1x32xf32>
      %74 = vector.shape_cast %73 : vector<1x1x32xf32> to vector<1x32xf32>
      %75 = vector.broadcast %74 : vector<1x32xf32> to vector<256x32xf32>
      %76 = arith.addf %72, %75 : vector<256x32xf32>
      %c0_56 = arith.constant 0 : index
      %c0_57 = arith.constant 0 : index
      %c0_58 = arith.constant 0 : index
      %c0_59 = arith.constant 0 : index
      %77 = vector.load %arg2[%c0_56, %c0_57, %c0_58, %c0_59] : memref<1x16x16x32xf32, #tpu.memory_space<vmem>>, vector<1x16x16x32xf32>
      %78 = vector.shape_cast %77 : vector<1x16x16x32xf32> to vector<16x16x32xf32>
      %79 = vector.shape_cast %78 : vector<16x16x32xf32> to vector<256x32xf32>
      %80 = arith.addf %76, %79 : vector<256x32xf32>
      %81 = vector.shape_cast %80 : vector<256x32xf32> to vector<16x16x32xf32>
      %c0_60 = arith.constant 0 : index
      %c0_61 = arith.constant 0 : index
      %c0_62 = arith.constant 0 : index
      %c0_63 = arith.constant 0 : index
      %82 = vector.load %arg11[%c0_60, %c0_61, %c0_62, %c0_63] : memref<1x16x16x32xf32, #tpu.memory_space<vmem>>, vector<1x16x16x32xf32>
      %83 = vector.shape_cast %82 : vector<1x16x16x32xf32> to vector<16x16x32xf32>
      %84 = vector.shape_cast %81 : vector<16x16x32xf32> to vector<1x16x16x32xf32>
      tpu.vector_store %arg11[%c0_60, %c0_61, %c0_62, %c0_63], %84 {strides = array<i32>} : memref<1x16x16x32xf32, #tpu.memory_space<vmem>>, vector<1x16x16x32xf32>,
    } else {
    }
    return
  }
  func.func @transform_0(%arg0: i32, %arg1: i32) -> (i32, i32, i32, i32) {
    %c0_i32 = arith.constant 0 : i32
    %c0_i32_0 = arith.constant 0 : i32
    %c0_i32_1 = arith.constant 0 : i32
    %c0_i32_2 = arith.constant 0 : i32
    return %arg0, %c0_i32, %c0_i32_0, %c0_i32_1 : i32, i32, i32, i32
  }
  func.func @transform_1(%arg0: i32, %arg1: i32) -> (i32, i32, i32) {
    %c0_i32 = arith.constant 0 : i32
    %c0_i32_0 = arith.constant 0 : i32
    %c0_i32_1 = arith.constant 0 : i32
    return %arg1, %c0_i32, %c0_i32_0 : i32, i32, i32
  }
  func.func @transform_2(%arg0: i32, %arg1: i32) -> (i32, i32, i32) {
    %c0_i32 = arith.constant 0 : i32
    %c0_i32_0 = arith.constant 0 : i32
    %c0_i32_1 = arith.constant 0 : i32
    return %arg1, %c0_i32, %c0_i32_0 : i32, i32, i32
  }
  func.func @transform_3(%arg0: i32, %arg1: i32) -> (i32, i32, i32) {
    %c1_i32 = arith.constant 1 : i32
    %0 = arith.minsi %arg1, %c1_i32 : i32
    %c0_i32 = arith.constant 0 : i32
    %c0_i32_0 = arith.constant 0 : i32
    %c0_i32_1 = arith.constant 0 : i32
    return %0, %c0_i32, %c0_i32_0 : i32, i32, i32
  }
  func.func @transform_4(%arg0: i32, %arg1: i32) -> (i32, i32, i32) {
    %c1_i32 = arith.constant 1 : i32
    %0 = arith.minsi %arg1, %c1_i32 : i32
    %c0_i32 = arith.constant 0 : i32
    %c0_i32_0 = arith.constant 0 : i32
    %c0_i32_1 = arith.constant 0 : i32
    return %0, %c0_i32, %c0_i32_0 : i32, i32, i32
  }
  func.func @transform_5(%arg0: i32, %arg1: i32) -> (i32, i32, i32) {
    %c1_i32 = arith.constant 1 : i32
    %0 = arith.minsi %arg1, %c1_i32 : i32
    %c0_i32 = arith.constant 0 : i32
    %c0_i32_0 = arith.constant 0 : i32
    %c0_i32_1 = arith.constant 0 : i32
    return %0, %c0_i32, %c0_i32_0 : i32, i32, i32
  }
  func.func @transform_6(%arg0: i32, %arg1: i32) -> (i32, i32, i32) {
    %c1_i32 = arith.constant 1 : i32
    %0 = arith.minsi %arg1, %c1_i32 : i32
    %c0_i32 = arith.constant 0 : i32
    %c0_i32_0 = arith.constant 0 : i32
    %c0_i32_1 = arith.constant 0 : i32
    return %0, %c0_i32, %c0_i32_0 : i32, i32, i32
  }
  func.func @transform_7(%arg0: i32, %arg1: i32) -> (i32, i32, i32) {
    %c1_i32 = arith.constant 1 : i32
    %0 = arith.minsi %arg1, %c1_i32 : i32
    %c0_i32 = arith.constant 0 : i32
    %c0_i32_0 = arith.constant 0 : i32
    %c0_i32_1 = arith.constant 0 : i32
    return %0, %c0_i32, %c0_i32_0 : i32, i32, i32
  }
  func.func @transform_8(%arg0: i32, %arg1: i32) -> (i32, i32, i32) {
    %c1_i32 = arith.constant 1 : i32
    %0 = arith.minsi %arg1, %c1_i32 : i32
    %c0_i32 = arith.constant 0 : i32
    %c0_i32_0 = arith.constant 0 : i32
    %c0_i32_1 = arith.constant 0 : i32
    return %0, %c0_i32, %c0_i32_0 : i32, i32, i32
  }
  func.func @transform_9(%arg0: i32, %arg1: i32) -> (i32, i32, i32, i32) {
    %c0_i32 = arith.constant 0 : i32
    %c0_i32_0 = arith.constant 0 : i32
    %c0_i32_1 = arith.constant 0 : i32
    %c0_i32_2 = arith.constant 0 : i32
    return %arg0, %c0_i32, %c0_i32_0, %c0_i32_1 : i32, i32, i32, i32
  }
}

</mosaic_0001>

<llo_original>
// kernel: tpu_custom_call.1
$region0: #{tpu_custom_call.1}
  #allocation0 [shape = 'u32[]', space=smem, size = 0x4, offset = 0x4, fixed_abs, tag = 'smem constant byte address 0x4 - core index']
  #allocation1 [shape = 'u32[72,128]{1,0:T(1,128)}', space=vmem, size = 0x9000, scoped, tag = 'internal scratch']
  #allocation2 [shape = 'f32[18,32,32]{2,1,0:T(8,128)}', space=vmem, size = 0x48000, scoped, tag = 'scratch operand']
  #allocation3 [shape = 'f32[18,32,32]{2,1,0:T(8,128)}', space=vmem, size = 0x48000, scoped, tag = 'scratch operand']
  %s0 = inlined_call_operand.vmem [shape: f32[2,16,16,32], index: 0, kind: input, shape index: {}]
  %s1 = inlined_call_operand.vmem [shape: bf16[3,288,32], index: 1, kind: input, shape index: {}]
  %s2 = inlined_call_operand.vmem [shape: f32[3,1,32], index: 2, kind: input, shape index: {}]
  %s3 = inlined_call_operand.vmem [shape: bf16[2,288,32], index: 3, kind: input, shape index: {}]
  %s4 = inlined_call_operand.vmem [shape: f32[2,1,32], index: 4, kind: input, shape index: {}]
  %s5 = inlined_call_operand.vmem [shape: bf16[2,32,2], index: 5, kind: input, shape index: {}]
  %s6 = inlined_call_operand.vmem [shape: f32[2,1,2], index: 6, kind: input, shape index: {}]
  %s7 = inlined_call_operand.vmem [shape: bf16[2,2,32], index: 7, kind: input, shape index: {}]
  %s8 = inlined_call_operand.vmem [shape: f32[2,1,32], index: 8, kind: input, shape index: {}]
  %s9 = inlined_call_operand.hbm [shape: f32[2,16,16,32], index: 9, kind: output, shape index: {}]
  %s10 = sld [smem:[#allocation0]]
  $region81: #{tpu_custom_call.1} parent=0
    _
  %s12 = ssub.s32 1, %s10
  %s13 = scalar_select 0, %s12, %s10
  $region1: #{tpu_custom_call.1} parent=0
    #allocation4 [shape = 'u8[262144]{0}', space=vmem, size = 0x40000, scoped, tag = 'output window, operand 0']
    #allocation5 [shape = 's32[2]{0}', space=sflag, size = 0x8, scoped, tag = 'scoped memory for tpu_custom_call.1']
    %14 = vsyncpa [#allocation5], 0
    %s15 = scalar_lea.sflag [#allocation5], 1
    %16 = vsyncpa %s15, 0
    loop: start=0, step=1, limit=8
    $region2: #{tpu_custom_call.1} parent=1 // loop_pre_header
      _
    $region3: #{tpu_custom_call.1} parent=1 // loop_header
      %s18 = sphi 0, %s22
      %p19 = scmp.ge.s32.totalorder %s18, 8
      %s25 = sphi 0, %s37
      %s26 = sphi 0, %s33
      %s27 = sphi 0, %s25
      %s28 = sphi 0, %s26
      %s29 = sphi 0, %s27
      %s30 = sphi 0, %s28
      %s40 = sphi 0, %s42
      %s43 = sphi 0, %s40
      %s44 = sphi 0, %s43
      %s60 = sphi 0, %s44
      %s66 = sphi 0, %s68
      %s69 = sphi 0, %s66
      %s70 = sphi 0, %s69
      %s86 = sphi 0, %s70
      %s92 = sphi 0, %s94
      %s95 = sphi 0, %s92
      %s96 = sphi 0, %s95
      %s112 = sphi 0, %s96
      %s122 = sphi 0, %s124
      %s125 = sphi 0, %s122
      %s126 = sphi 0, %s125
      %s142 = sphi 0, %s126
      %s152 = sphi 0, %s154
      %s155 = sphi 0, %s152
      %s156 = sphi 0, %s155
      %s172 = sphi 0, %s156
      %s182 = sphi 0, %s184
      %s185 = sphi 0, %s182
      %s186 = sphi 0, %s185
      %s202 = sphi 0, %s186
      %s212 = sphi 0, %s214
      %s215 = sphi 0, %s212
      %s216 = sphi 0, %s215
      %s232 = sphi 0, %s216
      %s242 = sphi 0, %s244
      %s245 = sphi 0, %s242
      %s246 = sphi 0, %s245
      %s262 = sphi 0, %s246
      %s272 = sphi 0, %s274
      %s275 = sphi 0, %s272
      %s276 = sphi 0, %s275
      %s292 = sphi 0, %s276
      %s298 = sphi 0, %s300
      %s301 = sphi 0, %s298
      %s302 = sphi 0, %s301
      %s318 = sphi 0, %s302
    $region4: #{tpu_custom_call.1} parent=1 // loop_header_branch
      %21 = sbr.rel (%p19) target = $region8
    $region5: #{tpu_custom_call.1} parent=1 // loop_body
      %s23 = ssub.s32 %s18, 1
      %s24 = ssub.s32 %s18, 2
      %s31 = sadd.s32 1, %s26
      %p32 = scmp.ge.s32.totalorder %s31, 3
      %s33 = scalar_select %p32, 0, %s31
      %s34 = sadd.s32 1, %s25
      %s35 = scalar_select %p32, %s34, %s25
      %p36 = scmp.ge.s32.totalorder %s35, 2
      %s37 = scalar_select %p36, 0, %s35
      %s38 = ssub.s32 %s25, %s37
      %p39 = scmp.eq.s32.totalorder %s38, 0
      %s41 = sadd.s32 %s40, 1
      %s42 = scalar_select %p39, %s40, %s41
      %p45 = pneg %p39
      %p46 = scmp.eq.s32.totalorder %s18, 5
      %p47 = por %p45, %p46
      %p48 = scmp.ne.s32.totalorder %s40, %s43
      %p49 = scmp.eq.s32.totalorder %s18, 0
      %p50 = por %p48, %p49
      %p51 = scmp.ne.s32.totalorder %s40, %s43
      %p52 = scmp.eq.s32.totalorder %s23, 5
      %p53 = por %p51, %p52
      %p54 = scmp.ne.s32.totalorder %s43, %s44
      %p55 = scmp.eq.s32.totalorder %s23, 0
      %p56 = por %p54, %p55
      %p57 = scmp.ne.s32.totalorder %s43, %s44
      %p58 = scmp.eq.s32.totalorder %s24, 5
      %p59 = por %p57, %p58
      %p61 = scmp.ne.s32.totalorder %s44, %s60
      %p62 = scmp.eq.s32.totalorder %s24, 0
      %p63 = por %p61, %p62
      %s64 = ssub.s32 %s26, %s33
      %p65 = scmp.eq.s32.totalorder %s64, 0
      %s67 = sadd.s32 %s66, 1
      %s68 = scalar_select %p65, %s66, %s67
      %p71 = pneg %p65
      %p72 = scmp.eq.s32.totalorder %s18, 5
      %p73 = por %p71, %p72
      %p74 = scmp.ne.s32.totalorder %s66, %s69
      %p75 = scmp.eq.s32.totalorder %s18, 0
      %p76 = por %p74, %p75
      %p77 = scmp.ne.s32.totalorder %s66, %s69
      %p78 = scmp.eq.s32.totalorder %s23, 5
      %p79 = por %p77, %p78
      %p80 = scmp.ne.s32.totalorder %s69, %s70
      %p81 = scmp.eq.s32.totalorder %s23, 0
      %p82 = por %p80, %p81
      %p83 = scmp.ne.s32.totalorder %s69, %s70
      %p84 = scmp.eq.s32.totalorder %s24, 5
      %p85 = por %p83, %p84
      %p87 = scmp.ne.s32.totalorder %s70, %s86
      %p88 = scmp.eq.s32.totalorder %s24, 0
      %p89 = por %p87, %p88
      %s90 = ssub.s32 %s26, %s33
      %p91 = scmp.eq.s32.totalorder %s90, 0
      %s93 = sadd.s32 %s92, 1
      %s94 = scalar_select %p91, %s92, %s93
      %p97 = pneg %p91
      %p98 = scmp.eq.s32.totalorder %s18, 5
      %p99 = por %p97, %p98
      %p100 = scmp.ne.s32.totalorder %s92, %s95
      %p101 = scmp.eq.s32.totalorder %s18, 0
      %p102 = por %p100, %p101
      %p103 = scmp.ne.s32.totalorder %s92, %s95
      %p104 = scmp.eq.s32.totalorder %s23, 5
      %p105 = por %p103, %p104
      %p106 = scmp.ne.s32.totalorder %s95, %s96
      %p107 = scmp.eq.s32.totalorder %s23, 0
      %p108 = por %p106, %p107
      %p109 = scmp.ne.s32.totalorder %s95, %s96
      %p110 = scmp.eq.s32.totalorder %s24, 5
      %p111 = por %p109, %p110
      %p113 = scmp.ne.s32.totalorder %s96, %s112
      %p114 = scmp.eq.s32.totalorder %s24, 0
      %p115 = por %p113, %p114
      %p116 = scmp.lt.s32.totalorder %s26, 1
      %s117 = scalar_select %p116, %s26, 1
      %p118 = scmp.lt.s32.totalorder %s33, 1
      %s119 = scalar_select %p118, %s33, 1
      %s120 = ssub.s32 %s117, %s119
      %p121 = scmp.eq.s32.totalorder %s120, 0
      %s123 = sadd.s32 %s122, 1
      %s124 = scalar_select %p121, %s122, %s123
      %p127 = pneg %p121
      %p128 = scmp.eq.s32.totalorder %s18, 5
      %p129 = por %p127, %p128
      %p130 = scmp.ne.s32.totalorder %s122, %s125
      %p131 = scmp.eq.s32.totalorder %s18, 0
      %p132 = por %p130, %p131
      %p133 = scmp.ne.s32.totalorder %s122, %s125
      %p134 = scmp.eq.s32.totalorder %s23, 5
      %p135 = por %p133, %p134
      %p136 = scmp.ne.s32.totalorder %s125, %s126
      %p137 = scmp.eq.s32.totalorder %s23, 0
      %p138 = por %p136, %p137
      %p139 = scmp.ne.s32.totalorder %s125, %s126
      %p140 = scmp.eq.s32.totalorder %s24, 5
      %p141 = por %p139, %p140
      %p143 = scmp.ne.s32.totalorder %s126, %s142
      %p144 = scmp.eq.s32.totalorder %s24, 0
      %p145 = por %p143, %p144
      %p146 = scmp.lt.s32.totalorder %s26, 1
      %s147 = scalar_select %p146, %s26, 1
      %p148 = scmp.lt.s32.totalorder %s33, 1
      %s149 = scalar_select %p148, %s33, 1
      %s150 = ssub.s32 %s147, %s149
      %p151 = scmp.eq.s32.totalorder %s150, 0
      %s153 = sadd.s32 %s152, 1
      %s154 = scalar_select %p151, %s152, %s153
      %p157 = pneg %p151
      %p158 = scmp.eq.s32.totalorder %s18, 5
      %p159 = por %p157, %p158
      %p160 = scmp.ne.s32.totalorder %s152, %s155
      %p161 = scmp.eq.s32.totalorder %s18, 0
      %p162 = por %p160, %p161
      %p163 = scmp.ne.s32.totalorder %s152, %s155
      %p164 = scmp.eq.s32.totalorder %s23, 5
      %p165 = por %p163, %p164
      %p166 = scmp.ne.s32.totalorder %s155, %s156
      %p167 = scmp.eq.s32.totalorder %s23, 0
      %p168 = por %p166, %p167
      %p169 = scmp.ne.s32.totalorder %s155, %s156
      %p170 = scmp.eq.s32.totalorder %s24, 5
      %p171 = por %p169, %p170
      %p173 = scmp.ne.s32.totalorder %s156, %s172
      %p174 = scmp.eq.s32.totalorder %s24, 0
      %p175 = por %p173, %p174
      %p176 = scmp.lt.s32.totalorder %s26, 1
      %s177 = scalar_select %p176, %s26, 1
      %p178 = scmp.lt.s32.totalorder %s33, 1
      %s179 = scalar_select %p178, %s33, 1
      %s180 = ssub.s32 %s177, %s179
      %p181 = scmp.eq.s32.totalorder %s180, 0
      %s183 = sadd.s32 %s182, 1
      %s184 = scalar_select %p181, %s182, %s183
      %p187 = pneg %p181
      %p188 = scmp.eq.s32.totalorder %s18, 5
      %p189 = por %p187, %p188
      %p190 = scmp.ne.s32.totalorder %s182, %s185
      %p191 = scmp.eq.s32.totalorder %s18, 0
      %p192 = por %p190, %p191
      %p193 = scmp.ne.s32.totalorder %s182, %s185
      %p194 = scmp.eq.s32.totalorder %s23, 5
      %p195 = por %p193, %p194
      %p196 = scmp.ne.s32.totalorder %s185, %s186
      %p197 = scmp.eq.s32.totalorder %s23, 0
      %p198 = por %p196, %p197
      %p199 = scmp.ne.s32.totalorder %s185, %s186
      %p200 = scmp.eq.s32.totalorder %s24, 5
      %p201 = por %p199, %p200
      %p203 = scmp.ne.s32.totalorder %s186, %s202
      %p204 = scmp.eq.s32.totalorder %s24, 0
      %p205 = por %p203, %p204
      %p206 = scmp.lt.s32.totalorder %s26, 1
      %s207 = scalar_select %p206, %s26, 1
      %p208 = scmp.lt.s32.totalorder %s33, 1
      %s209 = scalar_select %p208, %s33, 1
      %s210 = ssub.s32 %s207, %s209
      %p211 = scmp.eq.s32.totalorder %s210, 0
      %s213 = sadd.s32 %s212, 1
      %s214 = scalar_select %p211, %s212, %s213
      %p217 = pneg %p211
      %p218 = scmp.eq.s32.totalorder %s18, 5
      %p219 = por %p217, %p218
      %p220 = scmp.ne.s32.totalorder %s212, %s215
      %p221 = scmp.eq.s32.totalorder %s18, 0
      %p222 = por %p220, %p221
      %p223 = scmp.ne.s32.totalorder %s212, %s215
      %p224 = scmp.eq.s32.totalorder %s23, 5
      %p225 = por %p223, %p224
      %p226 = scmp.ne.s32.totalorder %s215, %s216
      %p227 = scmp.eq.s32.totalorder %s23, 0
      %p228 = por %p226, %p227
      %p229 = scmp.ne.s32.totalorder %s215, %s216
      %p230 = scmp.eq.s32.totalorder %s24, 5
      %p231 = por %p229, %p230
      %p233 = scmp.ne.s32.totalorder %s216, %s232
      %p234 = scmp.eq.s32.totalorder %s24, 0
      %p235 = por %p233, %p234
      %p236 = scmp.lt.s32.totalorder %s26, 1
      %s237 = scalar_select %p236, %s26, 1
      %p238 = scmp.lt.s32.totalorder %s33, 1
      %s239 = scalar_select %p238, %s33, 1
      %s240 = ssub.s32 %s237, %s239
      %p241 = scmp.eq.s32.totalorder %s240, 0
      %s243 = sadd.s32 %s242, 1
      %s244 = scalar_select %p241, %s242, %s243
      %p247 = pneg %p241
      %p248 = scmp.eq.s32.totalorder %s18, 5
      %p249 = por %p247, %p248
      %p250 = scmp.ne.s32.totalorder %s242, %s245
      %p251 = scmp.eq.s32.totalorder %s18, 0
      %p252 = por %p250, %p251
      %p253 = scmp.ne.s32.totalorder %s242, %s245
      %p254 = scmp.eq.s32.totalorder %s23, 5
      %p255 = por %p253, %p254
      %p256 = scmp.ne.s32.totalorder %s245, %s246
      %p257 = scmp.eq.s32.totalorder %s23, 0
      %p258 = por %p256, %p257
      %p259 = scmp.ne.s32.totalorder %s245, %s246
      %p260 = scmp.eq.s32.totalorder %s24, 5
      %p261 = por %p259, %p260
      %p263 = scmp.ne.s32.totalorder %s246, %s262
      %p264 = scmp.eq.s32.totalorder %s24, 0
      %p265 = por %p263, %p264
      %p266 = scmp.lt.s32.totalorder %s26, 1
      %s267 = scalar_select %p266, %s26, 1
      %p268 = scmp.lt.s32.totalorder %s33, 1
      %s269 = scalar_select %p268, %s33, 1
      %s270 = ssub.s32 %s267, %s269
      %p271 = scmp.eq.s32.totalorder %s270, 0
      %s273 = sadd.s32 %s272, 1
      %s274 = scalar_select %p271, %s272, %s273
      %p277 = pneg %p271
      %p278 = scmp.eq.s32.totalorder %s18, 5
      %p279 = por %p277, %p278
      %p280 = scmp.ne.s32.totalorder %s272, %s275
      %p281 = scmp.eq.s32.totalorder %s18, 0
      %p282 = por %p280, %p281
      %p283 = scmp.ne.s32.totalorder %s272, %s275
      %p284 = scmp.eq.s32.totalorder %s23, 5
      %p285 = por %p283, %p284
      %p286 = scmp.ne.s32.totalorder %s275, %s276
      %p287 = scmp.eq.s32.totalorder %s23, 0
      %p288 = por %p286, %p287
      %p289 = scmp.ne.s32.totalorder %s275, %s276
      %p290 = scmp.eq.s32.totalorder %s24, 5
      %p291 = por %p289, %p290
      %p293 = scmp.ne.s32.totalorder %s276, %s292
      %p294 = scmp.eq.s32.totalorder %s24, 0
      %p295 = por %p293, %p294
      %s296 = ssub.s32 %s25, %s37
      %p297 = scmp.eq.s32.totalorder %s296, 0
      %s299 = sadd.s32 %s298, 1
      %s300 = scalar_select %p297, %s298, %s299
      %p303 = pneg %p297
      %p304 = scmp.eq.s32.totalorder %s18, 5
      %p305 = por %p303, %p304
      %p306 = scmp.ne.s32.totalorder %s298, %s301
      %p307 = scmp.eq.s32.totalorder %s18, 0
      %p308 = por %p306, %p307
      %p309 = scmp.ne.s32.totalorder %s298, %s301
      %p310 = scmp.eq.s32.totalorder %s23, 5
      %p311 = por %p309, %p310
      %p312 = scmp.ne.s32.totalorder %s301, %s302
      %p313 = scmp.eq.s32.totalorder %s23, 0
      %p314 = por %p312, %p313
      %p315 = scmp.ne.s32.totalorder %s301, %s302
      %p316 = scmp.eq.s32.totalorder %s24, 5
      %p317 = por %p315, %p316
      %p319 = scmp.ne.s32.totalorder %s302, %s318
      %p320 = scmp.eq.s32.totalorder %s24, 0
      %p321 = por %p319, %p320
      %p322 = scmp.le.s32.totalorder 1, %s18
      %p323 = scmp.lt.s32.totalorder %s18, 7
      %p324 = pnand %p322, %p323
      %p325 = pneg %p324
      // Predicated region
      $region9: #{tpu_custom_call.1} parent=5 // pred_check
        _
      $region10: #{tpu_custom_call.1} parent=5 // pred_check_branch
        %327 = sbr.rel (%p324) target = $region12
      $region11: #{tpu_custom_call.1} parent=5 // pred_region
        %s328 = ssub.s32 %s18, 1
      $region12: #{tpu_custom_call.1} parent=5 // pred_fallthru
        _
      %p329 = scmp.lt.s32.totalorder %s18, 6
      // Predicated region
      $region13: #{tpu_custom_call.1} parent=5 // pred_check
        %p330 = pneg %p329
      $region14: #{tpu_custom_call.1} parent=5 // pred_check_branch
        %332 = sbr.rel (%p330) target = $region16
      $region15: #{tpu_custom_call.1} parent=5 // pred_region
        // Predicated region
        $region17: #{tpu_custom_call.1} parent=15 // pred_check
          %p333 = pneg %p50
        $region18: #{tpu_custom_call.1} parent=15 // pred_check_branch
          %335 = sbr.rel (%p333) target = $region20
        $region19: #{tpu_custom_call.1} parent=15 // pred_region
          %p336 = scmp.lt.s32.totalorder %s25, 1
          %s337 = scalar_select %p336, %s25, 1
          %s338 = smul.addr %s337, 32
          %s339 = smul.addr %s338, 8
          %s340 = scalar_lea.vmem %s0, %s339
        $region20: #{tpu_custom_call.1} parent=15 // pred_fallthru
          _
        // Predicated region
        $region21: #{tpu_custom_call.1} parent=15 // pred_check
          %p341 = pneg %p76
        $region22: #{tpu_custom_call.1} parent=15 // pred_check_branch
          %343 = sbr.rel (%p341) target = $region24
        $region23: #{tpu_custom_call.1} parent=15 // pred_region
          %p344 = scmp.lt.s32.totalorder %s26, 2
          %s345 = scalar_select %p344, %s26, 2
          %s346 = smul.addr %s345, 36
          %s347 = smul.addr %s346, 4
          %s348 = scalar_lea.vmem %s1, %s347
        $region24: #{tpu_custom_call.1} parent=15 // pred_fallthru
          _
        // Predicated region
        $region25: #{tpu_custom_call.1} parent=15 // pred_check
          %p349 = pneg %p102
        $region26: #{tpu_custom_call.1} parent=15 // pred_check_branch
          %351 = sbr.rel (%p349) target = $region28
        $region27: #{tpu_custom_call.1} parent=15 // pred_region
          %p352 = scmp.lt.s32.totalorder %s26, 2
          %s353 = scalar_select %p352, %s26, 2
          %s354 = scalar_lea.vmem %s2, %s353
        $region28: #{tpu_custom_call.1} parent=15 // pred_fallthru
          _
        // Predicated region
        $region29: #{tpu_custom_call.1} parent=15 // pred_check
          %p355 = pneg %p132
        $region30: #{tpu_custom_call.1} parent=15 // pred_check_branch
          %357 = sbr.rel (%p355) target = $region32
        $region31: #{tpu_custom_call.1} parent=15 // pred_region
          %p358 = scmp.lt.s32.totalorder %s26, 1
          %s359 = scalar_select %p358, %s26, 1
          %p360 = scmp.lt.s32.totalorder %s359, 1
          %s361 = scalar_select %p360, %s359, 1
          %s362 = smul.addr %s361, 36
          %s363 = smul.addr %s362, 4
          %s364 = scalar_lea.vmem %s3, %s363
          %p365 = scmp.lt.s32.totalorder %s26, 1
          %s366 = scalar_select %p365, %s26, 1
        $region32: #{tpu_custom_call.1} parent=15 // pred_fallthru
          _
        // Predicated region
        $region33: #{tpu_custom_call.1} parent=15 // pred_check
          %p367 = pneg %p162
        $region34: #{tpu_custom_call.1} parent=15 // pred_check_branch
          %369 = sbr.rel (%p367) target = $region36
        $region35: #{tpu_custom_call.1} parent=15 // pred_region
          %p370 = scmp.lt.s32.totalorder %s26, 1
          %s371 = scalar_select %p370, %s26, 1
          %p372 = scmp.lt.s32.totalorder %s371, 1
          %s373 = scalar_select %p372, %s371, 1
          %s374 = scalar_lea.vmem %s4, %s373
          %p375 = scmp.lt.s32.totalorder %s26, 1
          %s376 = scalar_select %p375, %s26, 1
        $region36: #{tpu_custom_call.1} parent=15 // pred_fallthru
          _
        // Predicated region
        $region37: #{tpu_custom_call.1} parent=15 // pred_check
          %p377 = pneg %p192
        $region38: #{tpu_custom_call.1} parent=15 // pred_check_branch
          %379 = sbr.rel (%p377) target = $region40
        $region39: #{tpu_custom_call.1} parent=15 // pred_region
          %p380 = scmp.lt.s32.totalorder %s26, 1
          %s381 = scalar_select %p380, %s26, 1
          %p382 = scmp.lt.s32.totalorder %s381, 1
          %s383 = scalar_select %p382, %s381, 1
          %s384 = smul.addr %s383, 4
          %s385 = smul.addr %s384, 4
          %s386 = scalar_lea.vmem %s5, %s385
          %p387 = scmp.lt.s32.totalorder %s26, 1
          %s388 = scalar_select %p387, %s26, 1
        $region40: #{tpu_custom_call.1} parent=15 // pred_fallthru
          _
        // Predicated region
        $region41: #{tpu_custom_call.1} parent=15 // pred_check
          %p389 = pneg %p222
        $region42: #{tpu_custom_call.1} parent=15 // pred_check_branch
          %391 = sbr.rel (%p389) target = $region44
        $region43: #{tpu_custom_call.1} parent=15 // pred_region
          %p392 = scmp.lt.s32.totalorder %s26, 1
          %s393 = scalar_select %p392, %s26, 1
          %p394 = scmp.lt.s32.totalorder %s393, 1
          %s395 = scalar_select %p394, %s393, 1
          %s396 = scalar_lea.vmem %s6, %s395
          %p397 = scmp.lt.s32.totalorder %s26, 1
          %s398 = scalar_select %p397, %s26, 1
        $region44: #{tpu_custom_call.1} parent=15 // pred_fallthru
          _
        // Predicated region
        $region45: #{tpu_custom_call.1} parent=15 // pred_check
          %p399 = pneg %p252
        $region46: #{tpu_custom_call.1} parent=15 // pred_check_branch
          %401 = sbr.rel (%p399) target = $region48
        $region47: #{tpu_custom_call.1} parent=15 // pred_region
          %p402 = scmp.lt.s32.totalorder %s26, 1
          %s403 = scalar_select %p402, %s26, 1
          %p404 = scmp.lt.s32.totalorder %s403, 1
          %s405 = scalar_select %p404, %s403, 1
          %s406 = scalar_lea.vmem %s7, %s405
          %p407 = scmp.lt.s32.totalorder %s26, 1
          %s408 = scalar_select %p407, %s26, 1
        $region48: #{tpu_custom_call.1} parent=15 // pred_fallthru
          _
        // Predicated region
        $region49: #{tpu_custom_call.1} parent=15 // pred_check
          %p409 = pneg %p282
        $region50: #{tpu_custom_call.1} parent=15 // pred_check_branch
          %411 = sbr.rel (%p409) target = $region52
        $region51: #{tpu_custom_call.1} parent=15 // pred_region
          %p412 = scmp.lt.s32.totalorder %s26, 1
          %s413 = scalar_select %p412, %s26, 1
          %p414 = scmp.lt.s32.totalorder %s413, 1
          %s415 = scalar_select %p414, %s413, 1
          %s416 = scalar_lea.vmem %s8, %s415
          %p417 = scmp.lt.s32.totalorder %s26, 1
          %s418 = scalar_select %p417, %s26, 1
        $region52: #{tpu_custom_call.1} parent=15 // pred_fallthru
          _
      $region16: #{tpu_custom_call.1} parent=5 // pred_fallthru
        _
      %p419 = scmp.le.s32.totalorder 1, %s18
      %p420 = scmp.lt.s32.totalorder %s18, 7
      %p421 = pnand %p419, %p420
      %p422 = pneg %p421
      // Predicated region
      $region53: #{tpu_custom_call.1} parent=5 // pred_check
        _
      $region54: #{tpu_custom_call.1} parent=5 // pred_check_branch
        %424 = sbr.rel (%p421) target = $region56
      $region55: #{tpu_custom_call.1} parent=5 // pred_region
        %s425 = ssub.s32 %s18, 1
        %p426 = scmp.lt.s32.totalorder %s27, 1
        %s427 = scalar_select %p426, %s27, 1
        %s428 = smul.addr %s427, 32
        %s429 = smul.addr %s428, 8
        %s430 = scalar_lea.vmem %s0, %s429
        %p431 = pneg %p56
        %p432 = pneg %p53
        %p433 = scmp.lt.s32.totalorder %s28, 2
        %s434 = scalar_select %p433, %s28, 2
        %s435 = smul.addr %s434, 36
        %s436 = smul.addr %s435, 4
        %s437 = scalar_lea.vmem %s1, %s436
        %p438 = pneg %p82
        %p439 = pneg %p79
        %p440 = scmp.lt.s32.totalorder %s28, 2
        %s441 = scalar_select %p440, %s28, 2
        %s442 = scalar_lea.vmem %s2, %s441
        %p443 = pneg %p108
        %p444 = pneg %p105
        %p445 = scmp.lt.s32.totalorder %s28, 1
        %s446 = scalar_select %p445, %s28, 1
        %p447 = scmp.lt.s32.totalorder %s446, 1
        %s448 = scalar_select %p447, %s446, 1
        %s449 = smul.addr %s448, 36
        %s450 = smul.addr %s449, 4
        %s451 = scalar_lea.vmem %s3, %s450
        %p452 = pneg %p138
        %p453 = pneg %p135
        %p454 = scmp.lt.s32.totalorder %s28, 1
        %s455 = scalar_select %p454, %s28, 1
        %p456 = scmp.lt.s32.totalorder %s455, 1
        %s457 = scalar_select %p456, %s455, 1
        %s458 = scalar_lea.vmem %s4, %s457
        %p459 = pneg %p168
        %p460 = pneg %p165
        %p461 = scmp.lt.s32.totalorder %s28, 1
        %s462 = scalar_select %p461, %s28, 1
        %p463 = scmp.lt.s32.totalorder %s462, 1
        %s464 = scalar_select %p463, %s462, 1
        %s465 = smul.addr %s464, 4
        %s466 = smul.addr %s465, 4
        %s467 = scalar_lea.vmem %s5, %s466
        %p468 = pneg %p198
        %p469 = pneg %p195
        %p470 = scmp.lt.s32.totalorder %s28, 1
        %s471 = scalar_select %p470, %s28, 1
        %p472 = scmp.lt.s32.totalorder %s471, 1
        %s473 = scalar_select %p472, %s471, 1
        %s474 = scalar_lea.vmem %s6, %s473
        %p475 = pneg %p228
        %p476 = pneg %p225
        %p477 = scmp.lt.s32.totalorder %s28, 1
        %s478 = scalar_select %p477, %s28, 1
        %p479 = scmp.lt.s32.totalorder %s478, 1
        %s480 = scalar_select %p479, %s478, 1
        %s481 = scalar_lea.vmem %s7, %s480
        %p482 = pneg %p258
        %p483 = pneg %p255
        %p484 = scmp.lt.s32.totalorder %s28, 1
        %s485 = scalar_select %p484, %s28, 1
        %p486 = scmp.lt.s32.totalorder %s485, 1
        %s487 = scalar_select %p486, %s485, 1
        %s488 = scalar_lea.vmem %s8, %s487
        %p489 = pneg %p288
        %p490 = pneg %p285
        %p491 = pneg %p314
        %p492 = pneg %p311
        %s493 = sand.u32 %s301, 1
        %s494 = scalar_lea.sflag [#allocation5], %s493
        %s495 = sand.u32 %s301, 1
        %s496 = smul.addr %s495, 256
        %s497 = scalar_lea.vmem [#allocation4], %s496
        %p498 = scmp.lt.s32.totalorder %s27, 1
        %s499 = scalar_select %p498, %s27, 1
        %s500 = smul.addr %s499, 32
        %s501 = smul.addr %s500, 8
        %s502 = scalar_lea.vmem %s0, %s501
        %p503 = scmp.lt.s32.totalorder %s28, 2
        %s504 = scalar_select %p503, %s28, 2
        %s505 = smul.addr %s504, 36
        %s506 = smul.addr %s505, 4
        %s507 = scalar_lea.vmem %s1, %s506
        %p508 = scmp.lt.s32.totalorder %s28, 2
        %s509 = scalar_select %p508, %s28, 2
        %s510 = scalar_lea.vmem %s2, %s509
        %p511 = scmp.lt.s32.totalorder %s28, 1
        %s512 = scalar_select %p511, %s28, 1
        %p513 = scmp.lt.s32.totalorder %s512, 1
        %s514 = scalar_select %p513, %s512, 1
        %s515 = smul.addr %s514, 36
        %s516 = smul.addr %s515, 4
        %s517 = scalar_lea.vmem %s3, %s516
        %p518 = scmp.lt.s32.totalorder %s28, 1
        %s519 = scalar_select %p518, %s28, 1
        %p520 = scmp.lt.s32.totalorder %s28, 1
        %s521 = scalar_select %p520, %s28, 1
        %p522 = scmp.lt.s32.totalorder %s521, 1
        %s523 = scalar_select %p522, %s521, 1
        %s524 = scalar_lea.vmem %s4, %s523
        %p525 = scmp.lt.s32.totalorder %s28, 1
        %s526 = scalar_select %p525, %s28, 1
        %p527 = scmp.lt.s32.totalorder %s28, 1
        %s528 = scalar_select %p527, %s28, 1
        %p529 = scmp.lt.s32.totalorder %s528, 1
        %s530 = scalar_select %p529, %s528, 1
        %s531 = smul.addr %s530, 4
        %s532 = smul.addr %s531, 4
        %s533 = scalar_lea.vmem %s5, %s532
        %p534 = scmp.lt.s32.totalorder %s28, 1
        %s535 = scalar_select %p534, %s28, 1
        %p536 = scmp.lt.s32.totalorder %s28, 1
        %s537 = scalar_select %p536, %s28, 1
        %p538 = scmp.lt.s32.totalorder %s537, 1
        %s539 = scalar_select %p538, %s537, 1
        %s540 = scalar_lea.vmem %s6, %s539
        %p541 = scmp.lt.s32.totalorder %s28, 1
        %s542 = scalar_select %p541, %s28, 1
        %p543 = scmp.lt.s32.totalorder %s28, 1
        %s544 = scalar_select %p543, %s28, 1
        %p545 = scmp.lt.s32.totalorder %s544, 1
        %s546 = scalar_select %p545, %s544, 1
        %s547 = scalar_lea.vmem %s7, %s546
        %p548 = scmp.lt.s32.totalorder %s28, 1
        %s549 = scalar_select %p548, %s28, 1
        %p550 = scmp.lt.s32.totalorder %s28, 1
        %s551 = scalar_select %p550, %s28, 1
        %p552 = scmp.lt.s32.totalorder %s551, 1
        %s553 = scalar_select %p552, %s551, 1
        %s554 = scalar_lea.vmem %s8, %s553
        %p555 = scmp.lt.s32.totalorder %s28, 1
        %s556 = scalar_select %p555, %s28, 1
        %p558 = scmp.eq.s32.totalorder %s28, 0
        // Predicated region
        $region57: #{tpu_custom_call.1} parent=55 // pred_check
          %p559 = pneg %p558
        $region58: #{tpu_custom_call.1} parent=55 // pred_check_branch
          %561 = sbr.rel (%p559) target = $region60
        $region59: #{tpu_custom_call.1} parent=55 // pred_region
          %vm562 = vcmask 261120
          %563 = vst.msk [vmem:[#allocation2] sm:$0xff] %vm562, 0.0
          %564 = vst.msk [vmem:[#allocation2 + $0x8] sm:$0xff] %vm562, 0.0
          %565 = vst.msk [vmem:[#allocation2 + $0x10] sm:$0xff] %vm562, 0.0
          %566 = vst.msk [vmem:[#allocation2 + $0x18] sm:$0xff] %vm562, 0.0
          %s567 = scalar_lea.vmem [#allocation2], 544
          %568 = vst.msk [vmem:[%s567] sm:$0xff] %vm562, 0.0
          %569 = vst.msk [vmem:[%s567 + $0x8] sm:$0xff] %vm562, 0.0
          %570 = vst.msk [vmem:[%s567 + $0x10] sm:$0xff] %vm562, 0.0
          %571 = vst.msk [vmem:[%s567 + $0x18] sm:$0xff] %vm562, 0.0
          %572 = vst.msk [vmem:[#allocation2] sm:$0xff] %vm562, 0.0
          %573 = vst.msk [vmem:[#allocation2 + $0x20] sm:$0xff] %vm562, 0.0
          %574 = vst.msk [vmem:[#allocation2 + $0x40] sm:$0xff] %vm562, 0.0
          %575 = vst.msk [vmem:[#allocation2 + $0x60] sm:$0xff] %vm562, 0.0
          %576 = vst.msk [vmem:[#allocation2 + $0x80] sm:$0xff] %vm562, 0.0
          %577 = vst.msk [vmem:[#allocation2 + $0xa0] sm:$0xff] %vm562, 0.0
          %578 = vst.msk [vmem:[#allocation2 + $0xc0] sm:$0xff] %vm562, 0.0
          %579 = vst.msk [vmem:[#allocation2 + $0xe0] sm:$0xff] %vm562, 0.0
          %580 = vst.msk [vmem:[#allocation2 + $0x100] sm:$0xff] %vm562, 0.0
          %581 = vst.msk [vmem:[#allocation2 + $0x120] sm:$0xff] %vm562, 0.0
          %582 = vst.msk [vmem:[#allocation2 + $0x140] sm:$0xff] %vm562, 0.0
          %583 = vst.msk [vmem:[#allocation2 + $0x160] sm:$0xff] %vm562, 0.0
          %584 = vst.msk [vmem:[#allocation2 + $0x180] sm:$0xff] %vm562, 0.0
          %585 = vst.msk [vmem:[#allocation2 + $0x1a0] sm:$0xff] %vm562, 0.0
          %586 = vst.msk [vmem:[#allocation2 + $0x1c0] sm:$0xff] %vm562, 0.0
          %587 = vst.msk [vmem:[#allocation2 + $0x1e0] sm:$0xff] %vm562, 0.0
          %588 = vst.msk [vmem:[#allocation2 + $0x200] sm:$0xff] %vm562, 0.0
          %589 = vst.msk [vmem:[#allocation2 + $0x220] sm:$0xff] %vm562, 0.0
          %590 = vst.msk [vmem:[#allocation2 + $0x18] sm:$0xff] %vm562, 0.0
          %591 = vst.msk [vmem:[#allocation2 + $0x38] sm:$0xff] %vm562, 0.0
          %592 = vst.msk [vmem:[#allocation2 + $0x58] sm:$0xff] %vm562, 0.0
          %593 = vst.msk [vmem:[#allocation2 + $0x78] sm:$0xff] %vm562, 0.0
          %594 = vst.msk [vmem:[#allocation2 + $0x98] sm:$0xff] %vm562, 0.0
          %595 = vst.msk [vmem:[#allocation2 + $0xb8] sm:$0xff] %vm562, 0.0
          %596 = vst.msk [vmem:[#allocation2 + $0xd8] sm:$0xff] %vm562, 0.0
          %597 = vst.msk [vmem:[#allocation2 + $0xf8] sm:$0xff] %vm562, 0.0
          %598 = vst.msk [vmem:[#allocation2 + $0x118] sm:$0xff] %vm562, 0.0
          %599 = vst.msk [vmem:[#allocation2 + $0x138] sm:$0xff] %vm562, 0.0
          %600 = vst.msk [vmem:[#allocation2 + $0x158] sm:$0xff] %vm562, 0.0
          %601 = vst.msk [vmem:[#allocation2 + $0x178] sm:$0xff] %vm562, 0.0
          %602 = vst.msk [vmem:[#allocation2 + $0x198] sm:$0xff] %vm562, 0.0
          %603 = vst.msk [vmem:[#allocation2 + $0x1b8] sm:$0xff] %vm562, 0.0
          %604 = vst.msk [vmem:[#allocation2 + $0x1d8] sm:$0xff] %vm562, 0.0
          %605 = vst.msk [vmem:[#allocation2 + $0x1f8] sm:$0xff] %vm562, 0.0
          %606 = vst.msk [vmem:[#allocation2 + $0x218] sm:$0xff] %vm562, 0.0
          %607 = vst.msk [vmem:[#allocation2 + $0x238] sm:$0xff] %vm562, 0.0
          %608 = vst.msk [vmem:[#allocation3] sm:$0xff] %vm562, 0.0
          %609 = vst.msk [vmem:[#allocation3 + $0x8] sm:$0xff] %vm562, 0.0
          %610 = vst.msk [vmem:[#allocation3 + $0x10] sm:$0xff] %vm562, 0.0
          %611 = vst.msk [vmem:[#allocation3 + $0x18] sm:$0xff] %vm562, 0.0
          %s612 = scalar_lea.vmem [#allocation3], 544
          %613 = vst.msk [vmem:[%s612] sm:$0xff] %vm562, 0.0
          %614 = vst.msk [vmem:[%s612 + $0x8] sm:$0xff] %vm562, 0.0
          %615 = vst.msk [vmem:[%s612 + $0x10] sm:$0xff] %vm562, 0.0
          %616 = vst.msk [vmem:[%s612 + $0x18] sm:$0xff] %vm562, 0.0
          %617 = vst.msk [vmem:[#allocation3] sm:$0xff] %vm562, 0.0
          %618 = vst.msk [vmem:[#allocation3 + $0x20] sm:$0xff] %vm562, 0.0
          %619 = vst.msk [vmem:[#allocation3 + $0x40] sm:$0xff] %vm562, 0.0
          %620 = vst.msk [vmem:[#allocation3 + $0x60] sm:$0xff] %vm562, 0.0
          %621 = vst.msk [vmem:[#allocation3 + $0x80] sm:$0xff] %vm562, 0.0
          %622 = vst.msk [vmem:[#allocation3 + $0xa0] sm:$0xff] %vm562, 0.0
          %623 = vst.msk [vmem:[#allocation3 + $0xc0] sm:$0xff] %vm562, 0.0
          %624 = vst.msk [vmem:[#allocation3 + $0xe0] sm:$0xff] %vm562, 0.0
          %625 = vst.msk [vmem:[#allocation3 + $0x100] sm:$0xff] %vm562, 0.0
          %626 = vst.msk [vmem:[#allocation3 + $0x120] sm:$0xff] %vm562, 0.0
          %627 = vst.msk [vmem:[#allocation3 + $0x140] sm:$0xff] %vm562, 0.0
          %628 = vst.msk [vmem:[#allocation3 + $0x160] sm:$0xff] %vm562, 0.0
          %629 = vst.msk [vmem:[#allocation3 + $0x180] sm:$0xff] %vm562, 0.0
          %630 = vst.msk [vmem:[#allocation3 + $0x1a0] sm:$0xff] %vm562, 0.0
          %631 = vst.msk [vmem:[#allocation3 + $0x1c0] sm:$0xff] %vm562, 0.0
          %632 = vst.msk [vmem:[#allocation3 + $0x1e0] sm:$0xff] %vm562, 0.0
          %633 = vst.msk [vmem:[#allocation3 + $0x200] sm:$0xff] %vm562, 0.0
          %634 = vst.msk [vmem:[#allocation3 + $0x220] sm:$0xff] %vm562, 0.0
          %635 = vst.msk [vmem:[#allocation3 + $0x18] sm:$0xff] %vm562, 0.0
          %636 = vst.msk [vmem:[#allocation3 + $0x38] sm:$0xff] %vm562, 0.0
          %637 = vst.msk [vmem:[#allocation3 + $0x58] sm:$0xff] %vm562, 0.0
          %638 = vst.msk [vmem:[#allocation3 + $0x78] sm:$0xff] %vm562, 0.0
          %639 = vst.msk [vmem:[#allocation3 + $0x98] sm:$0xff] %vm562, 0.0
          %640 = vst.msk [vmem:[#allocation3 + $0xb8] sm:$0xff] %vm562, 0.0
          %641 = vst.msk [vmem:[#allocation3 + $0xd8] sm:$0xff] %vm562, 0.0
          %642 = vst.msk [vmem:[#allocation3 + $0xf8] sm:$0xff] %vm562, 0.0
          %643 = vst.msk [vmem:[#allocation3 + $0x118] sm:$0xff] %vm562, 0.0
          %644 = vst.msk [vmem:[#allocation3 + $0x138] sm:$0xff] %vm562, 0.0
          %645 = vst.msk [vmem:[#allocation3 + $0x158] sm:$0xff] %vm562, 0.0
          %646 = vst.msk [vmem:[#allocation3 + $0x178] sm:$0xff] %vm562, 0.0
          %647 = vst.msk [vmem:[#allocation3 + $0x198] sm:$0xff] %vm562, 0.0
          %648 = vst.msk [vmem:[#allocation3 + $0x1b8] sm:$0xff] %vm562, 0.0
          %649 = vst.msk [vmem:[#allocation3 + $0x1d8] sm:$0xff] %vm562, 0.0
          %650 = vst.msk [vmem:[#allocation3 + $0x1f8] sm:$0xff] %vm562, 0.0
          %651 = vst.msk [vmem:[#allocation3 + $0x218] sm:$0xff] %vm562, 0.0
          %652 = vst.msk [vmem:[#allocation3 + $0x238] sm:$0xff] %vm562, 0.0
          %v653 = vld [vmem:[%s502] sm:$0xff]
          %v654 = vld [vmem:[%s502 + $0x8] sm:$0xff]
          %v655 = vld [vmem:[%s502 + $0x10] sm:$0xff]
          %v656 = vld [vmem:[%s502 + $0x18] sm:$0xff]
          %v657 = vld [vmem:[%s502 + $0x20] sm:$0xff]
          %v658 = vld [vmem:[%s502 + $0x28] sm:$0xff]
          %v659 = vld [vmem:[%s502 + $0x30] sm:$0xff]
          %v660 = vld [vmem:[%s502 + $0x38] sm:$0xff]
          %v661 = vld [vmem:[%s502 + $0x40] sm:$0xff]
          %v662 = vld [vmem:[%s502 + $0x48] sm:$0xff]
          %v663 = vld [vmem:[%s502 + $0x50] sm:$0xff]
          %v664 = vld [vmem:[%s502 + $0x58] sm:$0xff]
          %v665 = vld [vmem:[%s502 + $0x60] sm:$0xff]
          %v666 = vld [vmem:[%s502 + $0x68] sm:$0xff]
          %v667 = vld [vmem:[%s502 + $0x70] sm:$0xff]
          %v668 = vld [vmem:[%s502 + $0x78] sm:$0xff]
          %v669 = vld [vmem:[%s502 + $0x80] sm:$0xff]
          %v670 = vld [vmem:[%s502 + $0x88] sm:$0xff]
          %v671 = vld [vmem:[%s502 + $0x90] sm:$0xff]
          %v672 = vld [vmem:[%s502 + $0x98] sm:$0xff]
          %v673 = vld [vmem:[%s502 + $0xa0] sm:$0xff]
          %v674 = vld [vmem:[%s502 + $0xa8] sm:$0xff]
          %v675 = vld [vmem:[%s502 + $0xb0] sm:$0xff]
          %v676 = vld [vmem:[%s502 + $0xb8] sm:$0xff]
          %v677 = vld [vmem:[%s502 + $0xc0] sm:$0xff]
          %v678 = vld [vmem:[%s502 + $0xc8] sm:$0xff]
          %v679 = vld [vmem:[%s502 + $0xd0] sm:$0xff]
          %v680 = vld [vmem:[%s502 + $0xd8] sm:$0xff]
          %v681 = vld [vmem:[%s502 + $0xe0] sm:$0xff]
          %v682 = vld [vmem:[%s502 + $0xe8] sm:$0xff]
          %v683 = vld [vmem:[%s502 + $0xf0] sm:$0xff]
          %v684 = vld [vmem:[%s502 + $0xf8] sm:$0xff]
          %s685 = scalar_lea.vmem [#allocation2], 32
          %686 = vst.msk [vmem:[%s685 + $0x8] sm:$0xff] %vm562, %v653
          %687 = vst.msk [vmem:[%s685 + $0x10] sm:$0xff] %vm562, %v654
          %688 = vst.msk [vmem:[%s685 + $0x28] sm:$0xff] %vm562, %v655
          %689 = vst.msk [vmem:[%s685 + $0x30] sm:$0xff] %vm562, %v656
          %690 = vst.msk [vmem:[%s685 + $0x48] sm:$0xff] %vm562, %v657
          %691 = vst.msk [vmem:[%s685 + $0x50] sm:$0xff] %vm562, %v658
          %692 = vst.msk [vmem:[%s685 + $0x68] sm:$0xff] %vm562, %v659
          %693 = vst.msk [vmem:[%s685 + $0x70] sm:$0xff] %vm562, %v660
          %694 = vst.msk [vmem:[%s685 + $0x88] sm:$0xff] %vm562, %v661
          %695 = vst.msk [vmem:[%s685 + $0x90] sm:$0xff] %vm562, %v662
          %696 = vst.msk [vmem:[%s685 + $0xa8] sm:$0xff] %vm562, %v663
          %697 = vst.msk [vmem:[%s685 + $0xb0] sm:$0xff] %vm562, %v664
          %698 = vst.msk [vmem:[%s685 + $0xc8] sm:$0xff] %vm562, %v665
          %699 = vst.msk [vmem:[%s685 + $0xd0] sm:$0xff] %vm562, %v666
          %700 = vst.msk [vmem:[%s685 + $0xe8] sm:$0xff] %vm562, %v667
          %701 = vst.msk [vmem:[%s685 + $0xf0] sm:$0xff] %vm562, %v668
          %702 = vst.msk [vmem:[%s685 + $0x108] sm:$0xff] %vm562, %v669
          %703 = vst.msk [vmem:[%s685 + $0x110] sm:$0xff] %vm562, %v670
          %704 = vst.msk [vmem:[%s685 + $0x128] sm:$0xff] %vm562, %v671
          %705 = vst.msk [vmem:[%s685 + $0x130] sm:$0xff] %vm562, %v672
          %706 = vst.msk [vmem:[%s685 + $0x148] sm:$0xff] %vm562, %v673
          %707 = vst.msk [vmem:[%s685 + $0x150] sm:$0xff] %vm562, %v674
          %708 = vst.msk [vmem:[%s685 + $0x168] sm:$0xff] %vm562, %v675
          %709 = vst.msk [vmem:[%s685 + $0x170] sm:$0xff] %vm562, %v676
          %710 = vst.msk [vmem:[%s685 + $0x188] sm:$0xff] %vm562, %v677
          %711 = vst.msk [vmem:[%s685 + $0x190] sm:$0xff] %vm562, %v678
          %712 = vst.msk [vmem:[%s685 + $0x1a8] sm:$0xff] %vm562, %v679
          %713 = vst.msk [vmem:[%s685 + $0x1b0] sm:$0xff] %vm562, %v680
          %714 = vst.msk [vmem:[%s685 + $0x1c8] sm:$0xff] %vm562, %v681
          %715 = vst.msk [vmem:[%s685 + $0x1d0] sm:$0xff] %vm562, %v682
          %716 = vst.msk [vmem:[%s685 + $0x1e8] sm:$0xff] %vm562, %v683
          %717 = vst.msk [vmem:[%s685 + $0x1f0] sm:$0xff] %vm562, %v684
        $region60: #{tpu_custom_call.1} parent=55 // pred_fallthru
          _
        %p718 = scmp.lt.s32.totalorder %s28, 2
        // Predicated region
        $region61: #{tpu_custom_call.1} parent=55 // pred_check
          %p719 = pneg %p718
        $region62: #{tpu_custom_call.1} parent=55 // pred_check_branch
          %721 = sbr.rel (%p719) target = $region64
        $region63: #{tpu_custom_call.1} parent=55 // pred_region
          %v722 = vld [vmem:[#allocation2 + $0x7] sm:$0xff]
          %v723 = vld [vmem:[#allocation2 + $0xf] sm:$0xff]
          %v724 = vld [vmem:[#allocation2 + $0x27] sm:$0xff]
          %v725 = vld [vmem:[#allocation2 + $0x2f] sm:$0xff]
          %v726 = vld [vmem:[#allocation2 + $0x47] sm:$0xff]
          %v727 = vld [vmem:[#allocation2 + $0x4f] sm:$0xff]
          %v728 = vld [vmem:[#allocation2 + $0x67] sm:$0xff]
          %v729 = vld [vmem:[#allocation2 + $0x6f] sm:$0xff]
          %v730 = vld [vmem:[#allocation2 + $0x87] sm:$0xff]
          %v731 = vld [vmem:[#allocation2 + $0x8f] sm:$0xff]
          %v732 = vld [vmem:[#allocation2 + $0xa7] sm:$0xff]
          %v733 = vld [vmem:[#allocation2 + $0xaf] sm:$0xff]
          %v734 = vld [vmem:[#allocation2 + $0xc7] sm:$0xff]
          %v735 = vld [vmem:[#allocation2 + $0xcf] sm:$0xff]
          %v736 = vld [vmem:[#allocation2 + $0xe7] sm:$0xff]
          %v737 = vld [vmem:[#allocation2 + $0xef] sm:$0xff]
          %v738 = vld [vmem:[#allocation2 + $0x107] sm:$0xff]
          %v739 = vld [vmem:[#allocation2 + $0x10f] sm:$0xff]
          %v740 = vld [vmem:[#allocation2 + $0x127] sm:$0xff]
          %v741 = vld [vmem:[#allocation2 + $0x12f] sm:$0xff]
          %v742 = vld [vmem:[#allocation2 + $0x147] sm:$0xff]
          %v743 = vld [vmem:[#allocation2 + $0x14f] sm:$0xff]
          %v744 = vld [vmem:[#allocation2 + $0x167] sm:$0xff]
          %v745 = vld [vmem:[#allocation2 + $0x16f] sm:$0xff]
          %v746 = vld [vmem:[#allocation2 + $0x187] sm:$0xff]
          %v747 = vld [vmem:[#allocation2 + $0x18f] sm:$0xff]
          %v748 = vld [vmem:[#allocation2 + $0x1a7] sm:$0xff]
          %v749 = vld [vmem:[#allocation2 + $0x1af] sm:$0xff]
          %v750 = vld [vmem:[#allocation2 + $0x1c7] sm:$0xff]
          %v751 = vld [vmem:[#allocation2 + $0x1cf] sm:$0xff]
          %v752 = vld [vmem:[#allocation2 + $0x1e7] sm:$0xff]
          %v753 = vld [vmem:[#allocation2 + $0x1ef] sm:$0xff]
          %v754 = vpack.c.bf16 %v723, %v722
          %v755 = vpack.c.bf16 %v725, %v724
          %v756 = vpack.c.bf16 %v727, %v726
          %v757 = vpack.c.bf16 %v729, %v728
          %v758 = vpack.c.bf16 %v731, %v730
          %v759 = vpack.c.bf16 %v733, %v732
          %v760 = vpack.c.bf16 %v735, %v734
          %v761 = vpack.c.bf16 %v737, %v736
          %v762 = vpack.c.bf16 %v739, %v738
          %v763 = vpack.c.bf16 %v741, %v740
          %v764 = vpack.c.bf16 %v743, %v742
          %v765 = vpack.c.bf16 %v745, %v744
          %v766 = vpack.c.bf16 %v747, %v746
          %v767 = vpack.c.bf16 %v749, %v748
          %v768 = vpack.c.bf16 %v751, %v750
          %v769 = vpack.c.bf16 %v753, %v752
          %v770 = vld [vmem:[%s507] sm:$0xf]
          %v771 = vld [vmem:[%s507 + $0x4] sm:$0xf]
          %v772 = vld [vmem:[%s507 + $0x8] sm:$0xf]
          %v773 = vld [vmem:[%s507 + $0xc] sm:$0xf]
          %v774 = vld [vmem:[#allocation2 + $0x8] sm:$0xff]
          %v775 = vld [vmem:[#allocation2 + $0x10] sm:$0xff]
          %v776 = vld [vmem:[#allocation2 + $0x28] sm:$0xff]
          %v777 = vld [vmem:[#allocation2 + $0x30] sm:$0xff]
          %v778 = vld [vmem:[#allocation2 + $0x48] sm:$0xff]
          %v779 = vld [vmem:[#allocation2 + $0x50] sm:$0xff]
          %v780 = vld [vmem:[#allocation2 + $0x68] sm:$0xff]
          %v781 = vld [vmem:[#allocation2 + $0x70] sm:$0xff]
          %v782 = vld [vmem:[#allocation2 + $0x88] sm:$0xff]
          %v783 = vld [vmem:[#allocation2 + $0x90] sm:$0xff]
          %v784 = vld [vmem:[#allocation2 + $0xa8] sm:$0xff]
          %v785 = vld [vmem:[#allocation2 + $0xb0] sm:$0xff]
          %v786 = vld [vmem:[#allocation2 + $0xc8] sm:$0xff]
          %v787 = vld [vmem:[#allocation2 + $0xd0] sm:$0xff]
          %v788 = vld [vmem:[#allocation2 + $0xe8] sm:$0xff]
          %v789 = vld [vmem:[#allocation2 + $0xf0] sm:$0xff]
          %v790 = vld [vmem:[#allocation2 + $0x108] sm:$0xff]
          %v791 = vld [vmem:[#allocation2 + $0x110] sm:$0xff]
          %v792 = vld [vmem:[#allocation2 + $0x128] sm:$0xff]
          %v793 = vld [vmem:[#allocation2 + $0x130] sm:$0xff]
          %v794 = vld [vmem:[#allocation2 + $0x148] sm:$0xff]
          %v795 = vld [vmem:[#allocation2 + $0x150] sm:$0xff]
          %v796 = vld [vmem:[#allocation2 + $0x168] sm:$0xff]
          %v797 = vld [vmem:[#allocation2 + $0x170] sm:$0xff]
          %v798 = vld [vmem:[#allocation2 + $0x188] sm:$0xff]
          %v799 = vld [vmem:[#allocation2 + $0x190] sm:$0xff]
          %v800 = vld [vmem:[#allocation2 + $0x1a8] sm:$0xff]
          %v801 = vld [vmem:[#allocation2 + $0x1b0] sm:$0xff]
          %v802 = vld [vmem:[#allocation2 + $0x1c8] sm:$0xff]
          %v803 = vld [vmem:[#allocation2 + $0x1d0] sm:$0xff]
          %v804 = vld [vmem:[#allocation2 + $0x1e8] sm:$0xff]
          %v805 = vld [vmem:[#allocation2 + $0x1f0] sm:$0xff]
          %v806 = vpack.c.bf16 %v775, %v774
          %v807 = vpack.c.bf16 %v777, %v776
          %v808 = vpack.c.bf16 %v779, %v778
          %v809 = vpack.c.bf16 %v781, %v780
          %v810 = vpack.c.bf16 %v783, %v782
          %v811 = vpack.c.bf16 %v785, %v784
          %v812 = vpack.c.bf16 %v787, %v786
          %v813 = vpack.c.bf16 %v789, %v788
          %v814 = vpack.c.bf16 %v791, %v790
          %v815 = vpack.c.bf16 %v793, %v792
          %v816 = vpack.c.bf16 %v795, %v794
          %v817 = vpack.c.bf16 %v797, %v796
          %v818 = vpack.c.bf16 %v799, %v798
          %v819 = vpack.c.bf16 %v801, %v800
          %v820 = vpack.c.bf16 %v803, %v802
          %v821 = vpack.c.bf16 %v805, %v804
          %v822 = vld [vmem:[%s507 + $0x10] sm:$0xf]
          %v823 = vld [vmem:[%s507 + $0x14] sm:$0xf]
          %v824 = vld [vmem:[%s507 + $0x18] sm:$0xf]
          %v825 = vld [vmem:[%s507 + $0x1c] sm:$0xf]
          %v830 = vunpack.c.l.b16 %v822
          %v831 = vunpack.c.l.b16 %v823
          %v832 = vunpack.c.l.b16 %v824
          %v833 = vunpack.c.l.b16 %v825
          %v834 = vpack.c.b16 %v831, %v830
          %v835 = vpack.c.b16 %v833, %v832
          %vm838 = vcmask 261120
          %v840 = vsel %vm838, %v806, 0
          %v843 = vsel %vm838, %v807, 0
          %v846 = vsel %vm838, %v808, 0
          %v849 = vsel %vm838, %v809, 0
          %v852 = vsel %vm838, %v810, 0
          %v855 = vsel %vm838, %v811, 0
          %v858 = vsel %vm838, %v812, 0
          %v861 = vsel %vm838, %v813, 0
          %v864 = vsel %vm838, %v814, 0
          %v867 = vsel %vm838, %v815, 0
          %v870 = vsel %vm838, %v816, 0
          %v873 = vsel %vm838, %v817, 0
          %v876 = vsel %vm838, %v818, 0
          %v879 = vsel %vm838, %v819, 0
          %v882 = vsel %vm838, %v820, 0
          %v885 = vsel %vm838, %v821, 0
          %887 = vmatpush.bf16.msra.mxu0 0
          %888 = vmatpush.bf16.msra.mxu0 0
          %889 = vmatpush.bf16.msra.mxu0 0
          %890 = vmatpush.bf16.msra.mxu0 0
          %891 = vmatpush.bf16.msra.mxu0 0
          %892 = vmatpush.bf16.msra.mxu0 0
          %893 = vmatpush.bf16.msra.mxu0 %v835
          %894 = vmatpush.bf16.msra.mxu0 %v834
          %895 = vmatmul.bf16.gmra.mxu0 %v840
          %v896 = vpop.f32.mrf.mxu0
          %v897 = vadd.f32 0.0, %v896
          %v898 = vpop.f32.mrf.mxu0
          %v899 = vadd.f32 0.0, %v898
          %900 = vmatmul.bf16.gmra.mxu0 %v843
          %v901 = vpop.f32.mrf.mxu0
          %v902 = vadd.f32 0.0, %v901
          %v903 = vpop.f32.mrf.mxu0
          %v904 = vadd.f32 0.0, %v903
          %905 = vmatmul.bf16.gmra.mxu0 %v846
          %v906 = vpop.f32.mrf.mxu0
          %v907 = vadd.f32 0.0, %v906
          %v908 = vpop.f32.mrf.mxu0
          %v909 = vadd.f32 0.0, %v908
          %910 = vmatmul.bf16.gmra.mxu0 %v849
          %v911 = vpop.f32.mrf.mxu0
          %v912 = vadd.f32 0.0, %v911
          %v913 = vpop.f32.mrf.mxu0
          %v914 = vadd.f32 0.0, %v913
          %915 = vmatmul.bf16.gmra.mxu0 %v852
          %v916 = vpop.f32.mrf.mxu0
          %v917 = vadd.f32 0.0, %v916
          %v918 = vpop.f32.mrf.mxu0
          %v919 = vadd.f32 0.0, %v918
          %920 = vmatmul.bf16.gmra.mxu0 %v855
          %v921 = vpop.f32.mrf.mxu0
          %v922 = vadd.f32 0.0, %v921
          %v923 = vpop.f32.mrf.mxu0
          %v924 = vadd.f32 0.0, %v923
          %925 = vmatmul.bf16.gmra.mxu0 %v858
          %v926 = vpop.f32.mrf.mxu0
          %v927 = vadd.f32 0.0, %v926
          %v928 = vpop.f32.mrf.mxu0
          %v929 = vadd.f32 0.0, %v928
          %930 = vmatmul.bf16.gmra.mxu0 %v861
          %v931 = vpop.f32.mrf.mxu0
          %v932 = vadd.f32 0.0, %v931
          %v933 = vpop.f32.mrf.mxu0
          %v934 = vadd.f32 0.0, %v933
          %935 = vmatmul.bf16.gmra.mxu0 %v864
          %v936 = vpop.f32.mrf.mxu0
          %v937 = vadd.f32 0.0, %v936
          %v938 = vpop.f32.mrf.mxu0
          %v939 = vadd.f32 0.0, %v938
          %940 = vmatmul.bf16.gmra.mxu0 %v867
          %v941 = vpop.f32.mrf.mxu0
          %v942 = vadd.f32 0.0, %v941
          %v943 = vpop.f32.mrf.mxu0
          %v944 = vadd.f32 0.0, %v943
          %945 = vmatmul.bf16.gmra.mxu0 %v870
          %v946 = vpop.f32.mrf.mxu0
          %v947 = vadd.f32 0.0, %v946
          %v948 = vpop.f32.mrf.mxu0
          %v949 = vadd.f32 0.0, %v948
          %950 = vmatmul.bf16.gmra.mxu0 %v873
          %v951 = vpop.f32.mrf.mxu0
          %v952 = vadd.f32 0.0, %v951
          %v953 = vpop.f32.mrf.mxu0
          %v954 = vadd.f32 0.0, %v953
          %955 = vmatmul.bf16.gmra.mxu0 %v876
          %v956 = vpop.f32.mrf.mxu0
          %v957 = vadd.f32 0.0, %v956
          %v958 = vpop.f32.mrf.mxu0
          %v959 = vadd.f32 0.0, %v958
          %960 = vmatmul.bf16.gmra.mxu0 %v879
          %v961 = vpop.f32.mrf.mxu0
          %v962 = vadd.f32 0.0, %v961
          %v963 = vpop.f32.mrf.mxu0
          %v964 = vadd.f32 0.0, %v963
          %965 = vmatmul.bf16.gmra.mxu0 %v882
          %v966 = vpop.f32.mrf.mxu0
          %v967 = vadd.f32 0.0, %v966
          %v968 = vpop.f32.mrf.mxu0
          %v969 = vadd.f32 0.0, %v968
          %970 = vmatmul.bf16.gmra.mxu0 %v885
          %v971 = vpop.f32.mrf.mxu0
          %v972 = vadd.f32 0.0, %v971
          %v973 = vpop.f32.mrf.mxu0
          %v974 = vadd.f32 0.0, %v973
          %975 = vdwg.mxu0
          %v980 = vunpack.c.l.b16 %v770
          %v981 = vunpack.c.l.b16 %v771
          %v982 = vunpack.c.l.b16 %v772
          %v983 = vunpack.c.l.b16 %v773
          %v984 = vpack.c.b16 %v981, %v980
          %v985 = vpack.c.b16 %v983, %v982
          %v989 = vsel %vm838, %v754, 0
          %v992 = vsel %vm838, %v755, 0
          %v995 = vsel %vm838, %v756, 0
          %v998 = vsel %vm838, %v757, 0
          %v1001 = vsel %vm838, %v758, 0
          %v1004 = vsel %vm838, %v759, 0
          %v1007 = vsel %vm838, %v760, 0
          %v1010 = vsel %vm838, %v761, 0
          %v1013 = vsel %vm838, %v762, 0
          %v1016 = vsel %vm838, %v763, 0
          %v1019 = vsel %vm838, %v764, 0
          %v1022 = vsel %vm838, %v765, 0
          %v1025 = vsel %vm838, %v766, 0
          %v1028 = vsel %vm838, %v767, 0
          %v1031 = vsel %vm838, %v768, 0
          %v1034 = vsel %vm838, %v769, 0
          %1036 = vmatpush.bf16.msra.mxu0 0
          %1037 = vmatpush.bf16.msra.mxu0 0
          %1038 = vmatpush.bf16.msra.mxu0 0
          %1039 = vmatpush.bf16.msra.mxu0 0
          %1040 = vmatpush.bf16.msra.mxu0 0
          %1041 = vmatpush.bf16.msra.mxu0 0
          %1042 = vmatpush.bf16.msra.mxu0 %v985
          %1043 = vmatpush.bf16.msra.mxu0 %v984
          %1044 = vmatmul.bf16.gmra.mxu0 %v989
          %v1045 = vpop.f32.mrf.mxu0
          %v1046 = vadd.f32 %v897, %v1045
          %v1047 = vpop.f32.mrf.mxu0
          %v1048 = vadd.f32 %v899, %v1047
          %1049 = vmatmul.bf16.gmra.mxu0 %v992
          %v1050 = vpop.f32.mrf.mxu0
          %v1051 = vadd.f32 %v902, %v1050
          %v1052 = vpop.f32.mrf.mxu0
          %v1053 = vadd.f32 %v904, %v1052
          %1054 = vmatmul.bf16.gmra.mxu0 %v995
          %v1055 = vpop.f32.mrf.mxu0
          %v1056 = vadd.f32 %v907, %v1055
          %v1057 = vpop.f32.mrf.mxu0
          %v1058 = vadd.f32 %v909, %v1057
          %1059 = vmatmul.bf16.gmra.mxu0 %v998
          %v1060 = vpop.f32.mrf.mxu0
          %v1061 = vadd.f32 %v912, %v1060
          %v1062 = vpop.f32.mrf.mxu0
          %v1063 = vadd.f32 %v914, %v1062
          %1064 = vmatmul.bf16.gmra.mxu0 %v1001
          %v1065 = vpop.f32.mrf.mxu0
          %v1066 = vadd.f32 %v917, %v1065
          %v1067 = vpop.f32.mrf.mxu0
          %v1068 = vadd.f32 %v919, %v1067
          %1069 = vmatmul.bf16.gmra.mxu0 %v1004
          %v1070 = vpop.f32.mrf.mxu0
          %v1071 = vadd.f32 %v922, %v1070
          %v1072 = vpop.f32.mrf.mxu0
          %v1073 = vadd.f32 %v924, %v1072
          %1074 = vmatmul.bf16.gmra.mxu0 %v1007
          %v1075 = vpop.f32.mrf.mxu0
          %v1076 = vadd.f32 %v927, %v1075
          %v1077 = vpop.f32.mrf.mxu0
          %v1078 = vadd.f32 %v929, %v1077
          %1079 = vmatmul.bf16.gmra.mxu0 %v1010
          %v1080 = vpop.f32.mrf.mxu0
          %v1081 = vadd.f32 %v932, %v1080
          %v1082 = vpop.f32.mrf.mxu0
          %v1083 = vadd.f32 %v934, %v1082
          %1084 = vmatmul.bf16.gmra.mxu0 %v1013
          %v1085 = vpop.f32.mrf.mxu0
          %v1086 = vadd.f32 %v937, %v1085
          %v1087 = vpop.f32.mrf.mxu0
          %v1088 = vadd.f32 %v939, %v1087
          %1089 = vmatmul.bf16.gmra.mxu0 %v1016
          %v1090 = vpop.f32.mrf.mxu0
          %v1091 = vadd.f32 %v942, %v1090
          %v1092 = vpop.f32.mrf.mxu0
          %v1093 = vadd.f32 %v944, %v1092
          %1094 = vmatmul.bf16.gmra.mxu0 %v1019
          %v1095 = vpop.f32.mrf.mxu0
          %v1096 = vadd.f32 %v947, %v1095
          %v1097 = vpop.f32.mrf.mxu0
          %v1098 = vadd.f32 %v949, %v1097
          %1099 = vmatmul.bf16.gmra.mxu0 %v1022
          %v1100 = vpop.f32.mrf.mxu0
          %v1101 = vadd.f32 %v952, %v1100
          %v1102 = vpop.f32.mrf.mxu0
          %v1103 = vadd.f32 %v954, %v1102
          %1104 = vmatmul.bf16.gmra.mxu0 %v1025
          %v1105 = vpop.f32.mrf.mxu0
          %v1106 = vadd.f32 %v957, %v1105
          %v1107 = vpop.f32.mrf.mxu0
          %v1108 = vadd.f32 %v959, %v1107
          %1109 = vmatmul.bf16.gmra.mxu0 %v1028
          %v1110 = vpop.f32.mrf.mxu0
          %v1111 = vadd.f32 %v962, %v1110
          %v1112 = vpop.f32.mrf.mxu0
          %v1113 = vadd.f32 %v964, %v1112
          %1114 = vmatmul.bf16.gmra.mxu0 %v1031
          %v1115 = vpop.f32.mrf.mxu0
          %v1116 = vadd.f32 %v967, %v1115
          %v1117 = vpop.f32.mrf.mxu0
          %v1118 = vadd.f32 %v969, %v1117
          %1119 = vmatmul.bf16.gmra.mxu0 %v1034
          %v1120 = vpop.f32.mrf.mxu0
          %v1121 = vadd.f32 %v972, %v1120
          %v1122 = vpop.f32.mrf.mxu0
          %v1123 = vadd.f32 %v974, %v1122
          %1124 = vdwg.mxu0
          %v1125 = vld [vmem:[#allocation2 + $0x9] sm:$0xff]
          %v1126 = vld [vmem:[#allocation2 + $0x11] sm:$0xff]
          %v1127 = vld [vmem:[#allocation2 + $0x29] sm:$0xff]
          %v1128 = vld [vmem:[#allocation2 + $0x31] sm:$0xff]
          %v1129 = vld [vmem:[#allocation2 + $0x49] sm:$0xff]
          %v1130 = vld [vmem:[#allocation2 + $0x51] sm:$0xff]
          %v1131 = vld [vmem:[#allocation2 + $0x69] sm:$0xff]
          %v1132 = vld [vmem:[#allocation2 + $0x71] sm:$0xff]
          %v1133 = vld [vmem:[#allocation2 + $0x89] sm:$0xff]
          %v1134 = vld [vmem:[#allocation2 + $0x91] sm:$0xff]
          %v1135 = vld [vmem:[#allocation2 + $0xa9] sm:$0xff]
          %v1136 = vld [vmem:[#allocation2 + $0xb1] sm:$0xff]
          %v1137 = vld [vmem:[#allocation2 + $0xc9] sm:$0xff]
          %v1138 = vld [vmem:[#allocation2 + $0xd1] sm:$0xff]
          %v1139 = vld [vmem:[#allocation2 + $0xe9] sm:$0xff]
          %v1140 = vld [vmem:[#allocation2 + $0xf1] sm:$0xff]
          %v1141 = vld [vmem:[#allocation2 + $0x109] sm:$0xff]
          %v1142 = vld [vmem:[#allocation2 + $0x111] sm:$0xff]
          %v1143 = vld [vmem:[#allocation2 + $0x129] sm:$0xff]
          %v1144 = vld [vmem:[#allocation2 + $0x131] sm:$0xff]
          %v1145 = vld [vmem:[#allocation2 + $0x149] sm:$0xff]
          %v1146 = vld [vmem:[#allocation2 + $0x151] sm:$0xff]
          %v1147 = vld [vmem:[#allocation2 + $0x169] sm:$0xff]
          %v1148 = vld [vmem:[#allocation2 + $0x171] sm:$0xff]
          %v1149 = vld [vmem:[#allocation2 + $0x189] sm:$0xff]
          %v1150 = vld [vmem:[#allocation2 + $0x191] sm:$0xff]
          %v1151 = vld [vmem:[#allocation2 + $0x1a9] sm:$0xff]
          %v1152 = vld [vmem:[#allocation2 + $0x1b1] sm:$0xff]
          %v1153 = vld [vmem:[#allocation2 + $0x1c9] sm:$0xff]
          %v1154 = vld [vmem:[#allocation2 + $0x1d1] sm:$0xff]
          %v1155 = vld [vmem:[#allocation2 + $0x1e9] sm:$0xff]
          %v1156 = vld [vmem:[#allocation2 + $0x1f1] sm:$0xff]
          %v1157 = vpack.c.bf16 %v1126, %v1125
          %v1158 = vpack.c.bf16 %v1128, %v1127
          %v1159 = vpack.c.bf16 %v1130, %v1129
          %v1160 = vpack.c.bf16 %v1132, %v1131
          %v1161 = vpack.c.bf16 %v1134, %v1133
          %v1162 = vpack.c.bf16 %v1136, %v1135
          %v1163 = vpack.c.bf16 %v1138, %v1137
          %v1164 = vpack.c.bf16 %v1140, %v1139
          %v1165 = vpack.c.bf16 %v1142, %v1141
          %v1166 = vpack.c.bf16 %v1144, %v1143
          %v1167 = vpack.c.bf16 %v1146, %v1145
          %v1168 = vpack.c.bf16 %v1148, %v1147
          %v1169 = vpack.c.bf16 %v1150, %v1149
          %v1170 = vpack.c.bf16 %v1152, %v1151
          %v1171 = vpack.c.bf16 %v1154, %v1153
          %v1172 = vpack.c.bf16 %v1156, %v1155
          %v1173 = vld [vmem:[%s507 + $0x20] sm:$0xf]
          %v1174 = vld [vmem:[%s507 + $0x24] sm:$0xf]
          %v1175 = vld [vmem:[%s507 + $0x28] sm:$0xf]
          %v1176 = vld [vmem:[%s507 + $0x2c] sm:$0xf]
          %v1181 = vunpack.c.l.b16 %v1173
          %v1182 = vunpack.c.l.b16 %v1174
          %v1183 = vunpack.c.l.b16 %v1175
          %v1184 = vunpack.c.l.b16 %v1176
          %v1185 = vpack.c.b16 %v1182, %v1181
          %v1186 = vpack.c.b16 %v1184, %v1183
          %v1190 = vsel %vm838, %v1157, 0
          %v1193 = vsel %vm838, %v1158, 0
          %v1196 = vsel %vm838, %v1159, 0
          %v1199 = vsel %vm838, %v1160, 0
          %v1202 = vsel %vm838, %v1161, 0
          %v1205 = vsel %vm838, %v1162, 0
          %v1208 = vsel %vm838, %v1163, 0
          %v1211 = vsel %vm838, %v1164, 0
          %v1214 = vsel %vm838, %v1165, 0
          %v1217 = vsel %vm838, %v1166, 0
          %v1220 = vsel %vm838, %v1167, 0
          %v1223 = vsel %vm838, %v1168, 0
          %v1226 = vsel %vm838, %v1169, 0
          %v1229 = vsel %vm838, %v1170, 0
          %v1232 = vsel %vm838, %v1171, 0
          %v1235 = vsel %vm838, %v1172, 0
          %1237 = vmatpush.bf16.msra.mxu0 0
          %1238 = vmatpush.bf16.msra.mxu0 0
          %1239 = vmatpush.bf16.msra.mxu0 0
          %1240 = vmatpush.bf16.msra.mxu0 0
          %1241 = vmatpush.bf16.msra.mxu0 0
          %1242 = vmatpush.bf16.msra.mxu0 0
          %1243 = vmatpush.bf16.msra.mxu0 %v1186
          %1244 = vmatpush.bf16.msra.mxu0 %v1185
          %1245 = vmatmul.bf16.gmra.mxu0 %v1190
          %v1246 = vpop.f32.mrf.mxu0
          %v1247 = vadd.f32 0.0, %v1246
          %v1248 = vpop.f32.mrf.mxu0
          %v1249 = vadd.f32 0.0, %v1248
          %1250 = vmatmul.bf16.gmra.mxu0 %v1193
          %v1251 = vpop.f32.mrf.mxu0
          %v1252 = vadd.f32 0.0, %v1251
          %v1253 = vpop.f32.mrf.mxu0
          %v1254 = vadd.f32 0.0, %v1253
          %1255 = vmatmul.bf16.gmra.mxu0 %v1196
          %v1256 = vpop.f32.mrf.mxu0
          %v1257 = vadd.f32 0.0, %v1256
          %v1258 = vpop.f32.mrf.mxu0
          %v1259 = vadd.f32 0.0, %v1258
          %1260 = vmatmul.bf16.gmra.mxu0 %v1199
          %v1261 = vpop.f32.mrf.mxu0
          %v1262 = vadd.f32 0.0, %v1261
          %v1263 = vpop.f32.mrf.mxu0
          %v1264 = vadd.f32 0.0, %v1263
          %1265 = vmatmul.bf16.gmra.mxu0 %v1202
          %v1266 = vpop.f32.mrf.mxu0
          %v1267 = vadd.f32 0.0, %v1266
          %v1268 = vpop.f32.mrf.mxu0
          %v1269 = vadd.f32 0.0, %v1268
          %1270 = vmatmul.bf16.gmra.mxu0 %v1205
          %v1271 = vpop.f32.mrf.mxu0
          %v1272 = vadd.f32 0.0, %v1271
          %v1273 = vpop.f32.mrf.mxu0
          %v1274 = vadd.f32 0.0, %v1273
          %1275 = vmatmul.bf16.gmra.mxu0 %v1208
          %v1276 = vpop.f32.mrf.mxu0
          %v1277 = vadd.f32 0.0, %v1276
          %v1278 = vpop.f32.mrf.mxu0
          %v1279 = vadd.f32 0.0, %v1278
          %1280 = vmatmul.bf16.gmra.mxu0 %v1211
          %v1281 = vpop.f32.mrf.mxu0
          %v1282 = vadd.f32 0.0, %v1281
          %v1283 = vpop.f32.mrf.mxu0
          %v1284 = vadd.f32 0.0, %v1283
          %1285 = vmatmul.bf16.gmra.mxu0 %v1214
          %v1286 = vpop.f32.mrf.mxu0
          %v1287 = vadd.f32 0.0, %v1286
          %v1288 = vpop.f32.mrf.mxu0
          %v1289 = vadd.f32 0.0, %v1288
          %1290 = vmatmul.bf16.gmra.mxu0 %v1217
          %v1291 = vpop.f32.mrf.mxu0
          %v1292 = vadd.f32 0.0, %v1291
          %v1293 = vpop.f32.mrf.mxu0
          %v1294 = vadd.f32 0.0, %v1293
          %1295 = vmatmul.bf16.gmra.mxu0 %v1220
          %v1296 = vpop.f32.mrf.mxu0
          %v1297 = vadd.f32 0.0, %v1296
          %v1298 = vpop.f32.mrf.mxu0
          %v1299 = vadd.f32 0.0, %v1298
          %1300 = vmatmul.bf16.gmra.mxu0 %v1223
          %v1301 = vpop.f32.mrf.mxu0
          %v1302 = vadd.f32 0.0, %v1301
          %v1303 = vpop.f32.mrf.mxu0
          %v1304 = vadd.f32 0.0, %v1303
          %1305 = vmatmul.bf16.gmra.mxu0 %v1226
          %v1306 = vpop.f32.mrf.mxu0
          %v1307 = vadd.f32 0.0, %v1306
          %v1308 = vpop.f32.mrf.mxu0
          %v1309 = vadd.f32 0.0, %v1308
          %1310 = vmatmul.bf16.gmra.mxu0 %v1229
          %v1311 = vpop.f32.mrf.mxu0
          %v1312 = vadd.f32 0.0, %v1311
          %v1313 = vpop.f32.mrf.mxu0
          %v1314 = vadd.f32 0.0, %v1313
          %1315 = vmatmul.bf16.gmra.mxu0 %v1232
          %v1316 = vpop.f32.mrf.mxu0
          %v1317 = vadd.f32 0.0, %v1316
          %v1318 = vpop.f32.mrf.mxu0
          %v1319 = vadd.f32 0.0, %v1318
          %1320 = vmatmul.bf16.gmra.mxu0 %v1235
          %v1321 = vpop.f32.mrf.mxu0
          %v1322 = vadd.f32 0.0, %v1321
          %v1323 = vpop.f32.mrf.mxu0
          %v1324 = vadd.f32 0.0, %v1323
          %1325 = vdwg.mxu0
          %v1326 = vadd.f32 %v1046, %v1247
          %v1327 = vadd.f32 %v1048, %v1249
          %v1328 = vadd.f32 %v1051, %v1252
          %v1329 = vadd.f32 %v1053, %v1254
          %v1330 = vadd.f32 %v1056, %v1257
          %v1331 = vadd.f32 %v1058, %v1259
          %v1332 = vadd.f32 %v1061, %v1262
          %v1333 = vadd.f32 %v1063, %v1264
          %v1334 = vadd.f32 %v1066, %v1267
          %v1335 = vadd.f32 %v1068, %v1269
          %v1336 = vadd.f32 %v1071, %v1272
          %v1337 = vadd.f32 %v1073, %v1274
          %v1338 = vadd.f32 %v1076, %v1277
          %v1339 = vadd.f32 %v1078, %v1279
          %v1340 = vadd.f32 %v1081, %v1282
          %v1341 = vadd.f32 %v1083, %v1284
          %v1342 = vadd.f32 %v1086, %v1287
          %v1343 = vadd.f32 %v1088, %v1289
          %v1344 = vadd.f32 %v1091, %v1292
          %v1345 = vadd.f32 %v1093, %v1294
          %v1346 = vadd.f32 %v1096, %v1297
          %v1347 = vadd.f32 %v1098, %v1299
          %v1348 = vadd.f32 %v1101, %v1302
          %v1349 = vadd.f32 %v1103, %v1304
          %v1350 = vadd.f32 %v1106, %v1307
          %v1351 = vadd.f32 %v1108, %v1309
          %v1352 = vadd.f32 %v1111, %v1312
          %v1353 = vadd.f32 %v1113, %v1314
          %v1354 = vadd.f32 %v1116, %v1317
          %v1355 = vadd.f32 %v1118, %v1319
          %v1356 = vadd.f32 %v1121, %v1322
          %v1357 = vadd.f32 %v1123, %v1324
          %s1358 = scalar_lea.vmem [#allocation2], 32
          %v1359 = vld [vmem:[%s1358 + $0x7] sm:$0xff]
          %v1360 = vld [vmem:[%s1358 + $0xf] sm:$0xff]
          %v1361 = vld [vmem:[%s1358 + $0x27] sm:$0xff]
          %v1362 = vld [vmem:[%s1358 + $0x2f] sm:$0xff]
          %v1363 = vld [vmem:[%s1358 + $0x47] sm:$0xff]
          %v1364 = vld [vmem:[%s1358 + $0x4f] sm:$0xff]
          %v1365 = vld [vmem:[%s1358 + $0x67] sm:$0xff]
          %v1366 = vld [vmem:[%s1358 + $0x6f] sm:$0xff]
          %v1367 = vld [vmem:[%s1358 + $0x87] sm:$0xff]
          %v1368 = vld [vmem:[%s1358 + $0x8f] sm:$0xff]
          %v1369 = vld [vmem:[%s1358 + $0xa7] sm:$0xff]
          %v1370 = vld [vmem:[%s1358 + $0xaf] sm:$0xff]
          %v1371 = vld [vmem:[%s1358 + $0xc7] sm:$0xff]
          %v1372 = vld [vmem:[%s1358 + $0xcf] sm:$0xff]
          %v1373 = vld [vmem:[%s1358 + $0xe7] sm:$0xff]
          %v1374 = vld [vmem:[%s1358 + $0xef] sm:$0xff]
          %v1375 = vld [vmem:[%s1358 + $0x107] sm:$0xff]
          %v1376 = vld [vmem:[%s1358 + $0x10f] sm:$0xff]
          %v1377 = vld [vmem:[%s1358 + $0x127] sm:$0xff]
          %v1378 = vld [vmem:[%s1358 + $0x12f] sm:$0xff]
          %v1379 = vld [vmem:[%s1358 + $0x147] sm:$0xff]
          %v1380 = vld [vmem:[%s1358 + $0x14f] sm:$0xff]
          %v1381 = vld [vmem:[%s1358 + $0x167] sm:$0xff]
          %v1382 = vld [vmem:[%s1358 + $0x16f] sm:$0xff]
          %v1383 = vld [vmem:[%s1358 + $0x187] sm:$0xff]
          %v1384 = vld [vmem:[%s1358 + $0x18f] sm:$0xff]
          %v1385 = vld [vmem:[%s1358 + $0x1a7] sm:$0xff]
          %v1386 = vld [vmem:[%s1358 + $0x1af] sm:$0xff]
          %v1387 = vld [vmem:[%s1358 + $0x1c7] sm:$0xff]
          %v1388 = vld [vmem:[%s1358 + $0x1cf] sm:$0xff]
          %v1389 = vld [vmem:[%s1358 + $0x1e7] sm:$0xff]
          %v1390 = vld [vmem:[%s1358 + $0x1ef] sm:$0xff]
          %v1391 = vpack.c.bf16 %v1360, %v1359
          %v1392 = vpack.c.bf16 %v1362, %v1361
          %v1393 = vpack.c.bf16 %v1364, %v1363
          %v1394 = vpack.c.bf16 %v1366, %v1365
          %v1395 = vpack.c.bf16 %v1368, %v1367
          %v1396 = vpack.c.bf16 %v1370, %v1369
          %v1397 = vpack.c.bf16 %v1372, %v1371
          %v1398 = vpack.c.bf16 %v1374, %v1373
          %v1399 = vpack.c.bf16 %v1376, %v1375
          %v1400 = vpack.c.bf16 %v1378, %v1377
          %v1401 = vpack.c.bf16 %v1380, %v1379
          %v1402 = vpack.c.bf16 %v1382, %v1381
          %v1403 = vpack.c.bf16 %v1384, %v1383
          %v1404 = vpack.c.bf16 %v1386, %v1385
          %v1405 = vpack.c.bf16 %v1388, %v1387
          %v1406 = vpack.c.bf16 %v1390, %v1389
          %v1407 = vld [vmem:[%s507 + $0x30] sm:$0xf]
          %v1408 = vld [vmem:[%s507 + $0x34] sm:$0xf]
          %v1409 = vld [vmem:[%s507 + $0x38] sm:$0xf]
          %v1410 = vld [vmem:[%s507 + $0x3c] sm:$0xf]
          %v1415 = vunpack.c.l.b16 %v1407
          %v1416 = vunpack.c.l.b16 %v1408
          %v1417 = vunpack.c.l.b16 %v1409
          %v1418 = vunpack.c.l.b16 %v1410
          %v1419 = vpack.c.b16 %v1416, %v1415
          %v1420 = vpack.c.b16 %v1418, %v1417
          %v1424 = vsel %vm838, %v1391, 0
          %v1427 = vsel %vm838, %v1392, 0
          %v1430 = vsel %vm838, %v1393, 0
          %v1433 = vsel %vm838, %v1394, 0
          %v1436 = vsel %vm838, %v1395, 0
          %v1439 = vsel %vm838, %v1396, 0
          %v1442 = vsel %vm838, %v1397, 0
          %v1445 = vsel %vm838, %v1398, 0
          %v1448 = vsel %vm838, %v1399, 0
          %v1451 = vsel %vm838, %v1400, 0
          %v1454 = vsel %vm838, %v1401, 0
          %v1457 = vsel %vm838, %v1402, 0
          %v1460 = vsel %vm838, %v1403, 0
          %v1463 = vsel %vm838, %v1404, 0
          %v1466 = vsel %vm838, %v1405, 0
          %v1469 = vsel %vm838, %v1406, 0
          %1471 = vmatpush.bf16.msra.mxu0 0
          %1472 = vmatpush.bf16.msra.mxu0 0
          %1473 = vmatpush.bf16.msra.mxu0 0
          %1474 = vmatpush.bf16.msra.mxu0 0
          %1475 = vmatpush.bf16.msra.mxu0 0
          %1476 = vmatpush.bf16.msra.mxu0 0
          %1477 = vmatpush.bf16.msra.mxu0 %v1420
          %1478 = vmatpush.bf16.msra.mxu0 %v1419
          %1479 = vmatmul.bf16.gmra.mxu0 %v1424
          %v1480 = vpop.f32.mrf.mxu0
          %v1481 = vadd.f32 0.0, %v1480
          %v1482 = vpop.f32.mrf.mxu0
          %v1483 = vadd.f32 0.0, %v1482
          %1484 = vmatmul.bf16.gmra.mxu0 %v1427
          %v1485 = vpop.f32.mrf.mxu0
          %v1486 = vadd.f32 0.0, %v1485
          %v1487 = vpop.f32.mrf.mxu0
          %v1488 = vadd.f32 0.0, %v1487
          %1489 = vmatmul.bf16.gmra.mxu0 %v1430
          %v1490 = vpop.f32.mrf.mxu0
          %v1491 = vadd.f32 0.0, %v1490
          %v1492 = vpop.f32.mrf.mxu0
          %v1493 = vadd.f32 0.0, %v1492
          %1494 = vmatmul.bf16.gmra.mxu0 %v1433
          %v1495 = vpop.f32.mrf.mxu0
          %v1496 = vadd.f32 0.0, %v1495
          %v1497 = vpop.f32.mrf.mxu0
          %v1498 = vadd.f32 0.0, %v1497
          %1499 = vmatmul.bf16.gmra.mxu0 %v1436
          %v1500 = vpop.f32.mrf.mxu0
          %v1501 = vadd.f32 0.0, %v1500
          %v1502 = vpop.f32.mrf.mxu0
          %v1503 = vadd.f32 0.0, %v1502
          %1504 = vmatmul.bf16.gmra.mxu0 %v1439
          %v1505 = vpop.f32.mrf.mxu0
          %v1506 = vadd.f32 0.0, %v1505
          %v1507 = vpop.f32.mrf.mxu0
          %v1508 = vadd.f32 0.0, %v1507
          %1509 = vmatmul.bf16.gmra.mxu0 %v1442
          %v1510 = vpop.f32.mrf.mxu0
          %v1511 = vadd.f32 0.0, %v1510
          %v1512 = vpop.f32.mrf.mxu0
          %v1513 = vadd.f32 0.0, %v1512
          %1514 = vmatmul.bf16.gmra.mxu0 %v1445
          %v1515 = vpop.f32.mrf.mxu0
          %v1516 = vadd.f32 0.0, %v1515
          %v1517 = vpop.f32.mrf.mxu0
          %v1518 = vadd.f32 0.0, %v1517
          %1519 = vmatmul.bf16.gmra.mxu0 %v1448
          %v1520 = vpop.f32.mrf.mxu0
          %v1521 = vadd.f32 0.0, %v1520
          %v1522 = vpop.f32.mrf.mxu0
          %v1523 = vadd.f32 0.0, %v1522
          %1524 = vmatmul.bf16.gmra.mxu0 %v1451
          %v1525 = vpop.f32.mrf.mxu0
          %v1526 = vadd.f32 0.0, %v1525
          %v1527 = vpop.f32.mrf.mxu0
          %v1528 = vadd.f32 0.0, %v1527
          %1529 = vmatmul.bf16.gmra.mxu0 %v1454
          %v1530 = vpop.f32.mrf.mxu0
          %v1531 = vadd.f32 0.0, %v1530
          %v1532 = vpop.f32.mrf.mxu0
          %v1533 = vadd.f32 0.0, %v1532
          %1534 = vmatmul.bf16.gmra.mxu0 %v1457
          %v1535 = vpop.f32.mrf.mxu0
          %v1536 = vadd.f32 0.0, %v1535
          %v1537 = vpop.f32.mrf.mxu0
          %v1538 = vadd.f32 0.0, %v1537
          %1539 = vmatmul.bf16.gmra.mxu0 %v1460
          %v1540 = vpop.f32.mrf.mxu0
          %v1541 = vadd.f32 0.0, %v1540
          %v1542 = vpop.f32.mrf.mxu0
          %v1543 = vadd.f32 0.0, %v1542
          %1544 = vmatmul.bf16.gmra.mxu0 %v1463
          %v1545 = vpop.f32.mrf.mxu0
          %v1546 = vadd.f32 0.0, %v1545
          %v1547 = vpop.f32.mrf.mxu0
          %v1548 = vadd.f32 0.0, %v1547
          %1549 = vmatmul.bf16.gmra.mxu0 %v1466
          %v1550 = vpop.f32.mrf.mxu0
          %v1551 = vadd.f32 0.0, %v1550
          %v1552 = vpop.f32.mrf.mxu0
          %v1553 = vadd.f32 0.0, %v1552
          %1554 = vmatmul.bf16.gmra.mxu0 %v1469
          %v1555 = vpop.f32.mrf.mxu0
          %v1556 = vadd.f32 0.0, %v1555
          %v1557 = vpop.f32.mrf.mxu0
          %v1558 = vadd.f32 0.0, %v1557
          %1559 = vdwg.mxu0
          %v1560 = vadd.f32 %v1326, %v1481
          %v1561 = vadd.f32 %v1327, %v1483
          %v1562 = vadd.f32 %v1328, %v1486
          %v1563 = vadd.f32 %v1329, %v1488
          %v1564 = vadd.f32 %v1330, %v1491
          %v1565 = vadd.f32 %v1331, %v1493
          %v1566 = vadd.f32 %v1332, %v1496
          %v1567 = vadd.f32 %v1333, %v1498
          %v1568 = vadd.f32 %v1334, %v1501
          %v1569 = vadd.f32 %v1335, %v1503
          %v1570 = vadd.f32 %v1336, %v1506
          %v1571 = vadd.f32 %v1337, %v1508
          %v1572 = vadd.f32 %v1338, %v1511
          %v1573 = vadd.f32 %v1339, %v1513
          %v1574 = vadd.f32 %v1340, %v1516
          %v1575 = vadd.f32 %v1341, %v1518
          %v1576 = vadd.f32 %v1342, %v1521
          %v1577 = vadd.f32 %v1343, %v1523
          %v1578 = vadd.f32 %v1344, %v1526
          %v1579 = vadd.f32 %v1345, %v1528
          %v1580 = vadd.f32 %v1346, %v1531
          %v1581 = vadd.f32 %v1347, %v1533
          %v1582 = vadd.f32 %v1348, %v1536
          %v1583 = vadd.f32 %v1349, %v1538
          %v1584 = vadd.f32 %v1350, %v1541
          %v1585 = vadd.f32 %v1351, %v1543
          %v1586 = vadd.f32 %v1352, %v1546
          %v1587 = vadd.f32 %v1353, %v1548
          %v1588 = vadd.f32 %v1354, %v1551
          %v1589 = vadd.f32 %v1355, %v1553
          %v1590 = vadd.f32 %v1356, %v1556
          %v1591 = vadd.f32 %v1357, %v1558
          %v1592 = vld [vmem:[%s1358 + $0x8] sm:$0xff]
          %v1593 = vld [vmem:[%s1358 + $0x10] sm:$0xff]
          %v1594 = vld [vmem:[%s1358 + $0x28] sm:$0xff]
          %v1595 = vld [vmem:[%s1358 + $0x30] sm:$0xff]
          %v1596 = vld [vmem:[%s1358 + $0x48] sm:$0xff]
          %v1597 = vld [vmem:[%s1358 + $0x50] sm:$0xff]
          %v1598 = vld [vmem:[%s1358 + $0x68] sm:$0xff]
          %v1599 = vld [vmem:[%s1358 + $0x70] sm:$0xff]
          %v1600 = vld [vmem:[%s1358 + $0x88] sm:$0xff]
          %v1601 = vld [vmem:[%s1358 + $0x90] sm:$0xff]
          %v1602 = vld [vmem:[%s1358 + $0xa8] sm:$0xff]
          %v1603 = vld [vmem:[%s1358 + $0xb0] sm:$0xff]
          %v1604 = vld [vmem:[%s1358 + $0xc8] sm:$0xff]
          %v1605 = vld [vmem:[%s1358 + $0xd0] sm:$0xff]
          %v1606 = vld [vmem:[%s1358 + $0xe8] sm:$0xff]
          %v1607 = vld [vmem:[%s1358 + $0xf0] sm:$0xff]
          %v1608 = vld [vmem:[%s1358 + $0x108] sm:$0xff]
          %v1609 = vld [vmem:[%s1358 + $0x110] sm:$0xff]
          %v1610 = vld [vmem:[%s1358 + $0x128] sm:$0xff]
          %v1611 = vld [vmem:[%s1358 + $0x130] sm:$0xff]
          %v1612 = vld [vmem:[%s1358 + $0x148] sm:$0xff]
          %v1613 = vld [vmem:[%s1358 + $0x150] sm:$0xff]
          %v1614 = vld [vmem:[%s1358 + $0x168] sm:$0xff]
          %v1615 = vld [vmem:[%s1358 + $0x170] sm:$0xff]
          %v1616 = vld [vmem:[%s1358 + $0x188] sm:$0xff]
          %v1617 = vld [vmem:[%s1358 + $0x190] sm:$0xff]
          %v1618 = vld [vmem:[%s1358 + $0x1a8] sm:$0xff]
          %v1619 = vld [vmem:[%s1358 + $0x1b0] sm:$0xff]
          %v1620 = vld [vmem:[%s1358 + $0x1c8] sm:$0xff]
          %v1621 = vld [vmem:[%s1358 + $0x1d0] sm:$0xff]
          %v1622 = vld [vmem:[%s1358 + $0x1e8] sm:$0xff]
          %v1623 = vld [vmem:[%s1358 + $0x1f0] sm:$0xff]
          %v1624 = vpack.c.bf16 %v1593, %v1592
          %v1625 = vpack.c.bf16 %v1595, %v1594
          %v1626 = vpack.c.bf16 %v1597, %v1596
          %v1627 = vpack.c.bf16 %v1599, %v1598
          %v1628 = vpack.c.bf16 %v1601, %v1600
          %v1629 = vpack.c.bf16 %v1603, %v1602
          %v1630 = vpack.c.bf16 %v1605, %v1604
          %v1631 = vpack.c.bf16 %v1607, %v1606
          %v1632 = vpack.c.bf16 %v1609, %v1608
          %v1633 = vpack.c.bf16 %v1611, %v1610
          %v1634 = vpack.c.bf16 %v1613, %v1612
          %v1635 = vpack.c.bf16 %v1615, %v1614
          %v1636 = vpack.c.bf16 %v1617, %v1616
          %v1637 = vpack.c.bf16 %v1619, %v1618
          %v1638 = vpack.c.bf16 %v1621, %v1620
          %v1639 = vpack.c.bf16 %v1623, %v1622
          %v1640 = vld [vmem:[%s507 + $0x40] sm:$0xf]
          %v1641 = vld [vmem:[%s507 + $0x44] sm:$0xf]
          %v1642 = vld [vmem:[%s507 + $0x48] sm:$0xf]
          %v1643 = vld [vmem:[%s507 + $0x4c] sm:$0xf]
          %v1648 = vunpack.c.l.b16 %v1640
          %v1649 = vunpack.c.l.b16 %v1641
          %v1650 = vunpack.c.l.b16 %v1642
          %v1651 = vunpack.c.l.b16 %v1643
          %v1652 = vpack.c.b16 %v1649, %v1648
          %v1653 = vpack.c.b16 %v1651, %v1650
          %v1657 = vsel %vm838, %v1624, 0
          %v1660 = vsel %vm838, %v1625, 0
          %v1663 = vsel %vm838, %v1626, 0
          %v1666 = vsel %vm838, %v1627, 0
          %v1669 = vsel %vm838, %v1628, 0
          %v1672 = vsel %vm838, %v1629, 0
          %v1675 = vsel %vm838, %v1630, 0
          %v1678 = vsel %vm838, %v1631, 0
          %v1681 = vsel %vm838, %v1632, 0
          %v1684 = vsel %vm838, %v1633, 0
          %v1687 = vsel %vm838, %v1634, 0
          %v1690 = vsel %vm838, %v1635, 0
          %v1693 = vsel %vm838, %v1636, 0
          %v1696 = vsel %vm838, %v1637, 0
          %v1699 = vsel %vm838, %v1638, 0
          %v1702 = vsel %vm838, %v1639, 0
          %1704 = vmatpush.bf16.msra.mxu0 0
          %1705 = vmatpush.bf16.msra.mxu0 0
          %1706 = vmatpush.bf16.msra.mxu0 0
          %1707 = vmatpush.bf16.msra.mxu0 0
          %1708 = vmatpush.bf16.msra.mxu0 0
          %1709 = vmatpush.bf16.msra.mxu0 0
          %1710 = vmatpush.bf16.msra.mxu0 %v1653
          %1711 = vmatpush.bf16.msra.mxu0 %v1652
          %1712 = vmatmul.bf16.gmra.mxu0 %v1657
          %v1713 = vpop.f32.mrf.mxu0
          %v1714 = vadd.f32 0.0, %v1713
          %v1715 = vpop.f32.mrf.mxu0
          %v1716 = vadd.f32 0.0, %v1715
          %1717 = vmatmul.bf16.gmra.mxu0 %v1660
          %v1718 = vpop.f32.mrf.mxu0
          %v1719 = vadd.f32 0.0, %v1718
          %v1720 = vpop.f32.mrf.mxu0
          %v1721 = vadd.f32 0.0, %v1720
          %1722 = vmatmul.bf16.gmra.mxu0 %v1663
          %v1723 = vpop.f32.mrf.mxu0
          %v1724 = vadd.f32 0.0, %v1723
          %v1725 = vpop.f32.mrf.mxu0
          %v1726 = vadd.f32 0.0, %v1725
          %1727 = vmatmul.bf16.gmra.mxu0 %v1666
          %v1728 = vpop.f32.mrf.mxu0
          %v1729 = vadd.f32 0.0, %v1728
          %v1730 = vpop.f32.mrf.mxu0
          %v1731 = vadd.f32 0.0, %v1730
          %1732 = vmatmul.bf16.gmra.mxu0 %v1669
          %v1733 = vpop.f32.mrf.mxu0
          %v1734 = vadd.f32 0.0, %v1733
          %v1735 = vpop.f32.mrf.mxu0
          %v1736 = vadd.f32 0.0, %v1735
          %1737 = vmatmul.bf16.gmra.mxu0 %v1672
          %v1738 = vpop.f32.mrf.mxu0
          %v1739 = vadd.f32 0.0, %v1738
          %v1740 = vpop.f32.mrf.mxu0
          %v1741 = vadd.f32 0.0, %v1740
          %1742 = vmatmul.bf16.gmra.mxu0 %v1675
          %v1743 = vpop.f32.mrf.mxu0
          %v1744 = vadd.f32 0.0, %v1743
          %v1745 = vpop.f32.mrf.mxu0
          %v1746 = vadd.f32 0.0, %v1745
          %1747 = vmatmul.bf16.gmra.mxu0 %v1678
          %v1748 = vpop.f32.mrf.mxu0
          %v1749 = vadd.f32 0.0, %v1748
          %v1750 = vpop.f32.mrf.mxu0
          %v1751 = vadd.f32 0.0, %v1750
          %1752 = vmatmul.bf16.gmra.mxu0 %v1681
          %v1753 = vpop.f32.mrf.mxu0
          %v1754 = vadd.f32 0.0, %v1753
          %v1755 = vpop.f32.mrf.mxu0
          %v1756 = vadd.f32 0.0, %v1755
          %1757 = vmatmul.bf16.gmra.mxu0 %v1684
          %v1758 = vpop.f32.mrf.mxu0
          %v1759 = vadd.f32 0.0, %v1758
          %v1760 = vpop.f32.mrf.mxu0
          %v1761 = vadd.f32 0.0, %v1760
          %1762 = vmatmul.bf16.gmra.mxu0 %v1687
          %v1763 = vpop.f32.mrf.mxu0
          %v1764 = vadd.f32 0.0, %v1763
          %v1765 = vpop.f32.mrf.mxu0
          %v1766 = vadd.f32 0.0, %v1765
          %1767 = vmatmul.bf16.gmra.mxu0 %v1690
          %v1768 = vpop.f32.mrf.mxu0
          %v1769 = vadd.f32 0.0, %v1768
          %v1770 = vpop.f32.mrf.mxu0
          %v1771 = vadd.f32 0.0, %v1770
          %1772 = vmatmul.bf16.gmra.mxu0 %v1693
          %v1773 = vpop.f32.mrf.mxu0
          %v1774 = vadd.f32 0.0, %v1773
          %v1775 = vpop.f32.mrf.mxu0
          %v1776 = vadd.f32 0.0, %v1775
          %1777 = vmatmul.bf16.gmra.mxu0 %v1696
          %v1778 = vpop.f32.mrf.mxu0
          %v1779 = vadd.f32 0.0, %v1778
          %v1780 = vpop.f32.mrf.mxu0
          %v1781 = vadd.f32 0.0, %v1780
          %1782 = vmatmul.bf16.gmra.mxu0 %v1699
          %v1783 = vpop.f32.mrf.mxu0
          %v1784 = vadd.f32 0.0, %v1783
          %v1785 = vpop.f32.mrf.mxu0
          %v1786 = vadd.f32 0.0, %v1785
          %1787 = vmatmul.bf16.gmra.mxu0 %v1702
          %v1788 = vpop.f32.mrf.mxu0
          %v1789 = vadd.f32 0.0, %v1788
          %v1790 = vpop.f32.mrf.mxu0
          %v1791 = vadd.f32 0.0, %v1790
          %1792 = vdwg.mxu0
          %v1793 = vadd.f32 %v1560, %v1714
          %v1794 = vadd.f32 %v1561, %v1716
          %v1795 = vadd.f32 %v1562, %v1719
          %v1796 = vadd.f32 %v1563, %v1721
          %v1797 = vadd.f32 %v1564, %v1724
          %v1798 = vadd.f32 %v1565, %v1726
          %v1799 = vadd.f32 %v1566, %v1729
          %v1800 = vadd.f32 %v1567, %v1731
          %v1801 = vadd.f32 %v1568, %v1734
          %v1802 = vadd.f32 %v1569, %v1736
          %v1803 = vadd.f32 %v1570, %v1739
          %v1804 = vadd.f32 %v1571, %v1741
          %v1805 = vadd.f32 %v1572, %v1744
          %v1806 = vadd.f32 %v1573, %v1746
          %v1807 = vadd.f32 %v1574, %v1749
          %v1808 = vadd.f32 %v1575, %v1751
          %v1809 = vadd.f32 %v1576, %v1754
          %v1810 = vadd.f32 %v1577, %v1756
          %v1811 = vadd.f32 %v1578, %v1759
          %v1812 = vadd.f32 %v1579, %v1761
          %v1813 = vadd.f32 %v1580, %v1764
          %v1814 = vadd.f32 %v1581, %v1766
          %v1815 = vadd.f32 %v1582, %v1769
          %v1816 = vadd.f32 %v1583, %v1771
          %v1817 = vadd.f32 %v1584, %v1774
          %v1818 = vadd.f32 %v1585, %v1776
          %v1819 = vadd.f32 %v1586, %v1779
          %v1820 = vadd.f32 %v1587, %v1781
          %v1821 = vadd.f32 %v1588, %v1784
          %v1822 = vadd.f32 %v1589, %v1786
          %v1823 = vadd.f32 %v1590, %v1789
          %v1824 = vadd.f32 %v1591, %v1791
          %v1825 = vld [vmem:[%s1358 + $0x9] sm:$0xff]
          %v1826 = vld [vmem:[%s1358 + $0x11] sm:$0xff]
          %v1827 = vld [vmem:[%s1358 + $0x29] sm:$0xff]
          %v1828 = vld [vmem:[%s1358 + $0x31] sm:$0xff]
          %v1829 = vld [vmem:[%s1358 + $0x49] sm:$0xff]
          %v1830 = vld [vmem:[%s1358 + $0x51] sm:$0xff]
          %v1831 = vld [vmem:[%s1358 + $0x69] sm:$0xff]
          %v1832 = vld [vmem:[%s1358 + $0x71] sm:$0xff]
          %v1833 = vld [vmem:[%s1358 + $0x89] sm:$0xff]
          %v1834 = vld [vmem:[%s1358 + $0x91] sm:$0xff]
          %v1835 = vld [vmem:[%s1358 + $0xa9] sm:$0xff]
          %v1836 = vld [vmem:[%s1358 + $0xb1] sm:$0xff]
          %v1837 = vld [vmem:[%s1358 + $0xc9] sm:$0xff]
          %v1838 = vld [vmem:[%s1358 + $0xd1] sm:$0xff]
          %v1839 = vld [vmem:[%s1358 + $0xe9] sm:$0xff]
          %v1840 = vld [vmem:[%s1358 + $0xf1] sm:$0xff]
          %v1841 = vld [vmem:[%s1358 + $0x109] sm:$0xff]
          %v1842 = vld [vmem:[%s1358 + $0x111] sm:$0xff]
          %v1843 = vld [vmem:[%s1358 + $0x129] sm:$0xff]
          %v1844 = vld [vmem:[%s1358 + $0x131] sm:$0xff]
          %v1845 = vld [vmem:[%s1358 + $0x149] sm:$0xff]
          %v1846 = vld [vmem:[%s1358 + $0x151] sm:$0xff]
          %v1847 = vld [vmem:[%s1358 + $0x169] sm:$0xff]
          %v1848 = vld [vmem:[%s1358 + $0x171] sm:$0xff]
          %v1849 = vld [vmem:[%s1358 + $0x189] sm:$0xff]
          %v1850 = vld [vmem:[%s1358 + $0x191] sm:$0xff]
          %v1851 = vld [vmem:[%s1358 + $0x1a9] sm:$0xff]
          %v1852 = vld [vmem:[%s1358 + $0x1b1] sm:$0xff]
          %v1853 = vld [vmem:[%s1358 + $0x1c9] sm:$0xff]
          %v1854 = vld [vmem:[%s1358 + $0x1d1] sm:$0xff]
          %v1855 = vld [vmem:[%s1358 + $0x1e9] sm:$0xff]
          %v1856 = vld [vmem:[%s1358 + $0x1f1] sm:$0xff]
          %v1857 = vpack.c.bf16 %v1826, %v1825
          %v1858 = vpack.c.bf16 %v1828, %v1827
          %v1859 = vpack.c.bf16 %v1830, %v1829
          %v1860 = vpack.c.bf16 %v1832, %v1831
          %v1861 = vpack.c.bf16 %v1834, %v1833
          %v1862 = vpack.c.bf16 %v1836, %v1835
          %v1863 = vpack.c.bf16 %v1838, %v1837
          %v1864 = vpack.c.bf16 %v1840, %v1839
          %v1865 = vpack.c.bf16 %v1842, %v1841
          %v1866 = vpack.c.bf16 %v1844, %v1843
          %v1867 = vpack.c.bf16 %v1846, %v1845
          %v1868 = vpack.c.bf16 %v1848, %v1847
          %v1869 = vpack.c.bf16 %v1850, %v1849
          %v1870 = vpack.c.bf16 %v1852, %v1851
          %v1871 = vpack.c.bf16 %v1854, %v1853
          %v1872 = vpack.c.bf16 %v1856, %v1855
          %v1873 = vld [vmem:[%s507 + $0x50] sm:$0xf]
          %v1874 = vld [vmem:[%s507 + $0x54] sm:$0xf]
          %v1875 = vld [vmem:[%s507 + $0x58] sm:$0xf]
          %v1876 = vld [vmem:[%s507 + $0x5c] sm:$0xf]
          %v1881 = vunpack.c.l.b16 %v1873
          %v1882 = vunpack.c.l.b16 %v1874
          %v1883 = vunpack.c.l.b16 %v1875
          %v1884 = vunpack.c.l.b16 %v1876
          %v1885 = vpack.c.b16 %v1882, %v1881
          %v1886 = vpack.c.b16 %v1884, %v1883
          %v1890 = vsel %vm838, %v1857, 0
          %v1893 = vsel %vm838, %v1858, 0
          %v1896 = vsel %vm838, %v1859, 0
          %v1899 = vsel %vm838, %v1860, 0
          %v1902 = vsel %vm838, %v1861, 0
          %v1905 = vsel %vm838, %v1862, 0
          %v1908 = vsel %vm838, %v1863, 0
          %v1911 = vsel %vm838, %v1864, 0
          %v1914 = vsel %vm838, %v1865, 0
          %v1917 = vsel %vm838, %v1866, 0
          %v1920 = vsel %vm838, %v1867, 0
          %v1923 = vsel %vm838, %v1868, 0
          %v1926 = vsel %vm838, %v1869, 0
          %v1929 = vsel %vm838, %v1870, 0
          %v1932 = vsel %vm838, %v1871, 0
          %v1935 = vsel %vm838, %v1872, 0
          %1937 = vmatpush.bf16.msra.mxu0 0
          %1938 = vmatpush.bf16.msra.mxu0 0
          %1939 = vmatpush.bf16.msra.mxu0 0
          %1940 = vmatpush.bf16.msra.mxu0 0
          %1941 = vmatpush.bf16.msra.mxu0 0
          %1942 = vmatpush.bf16.msra.mxu0 0
          %1943 = vmatpush.bf16.msra.mxu0 %v1886
          %1944 = vmatpush.bf16.msra.mxu0 %v1885
          %1945 = vmatmul.bf16.gmra.mxu0 %v1890
          %v1946 = vpop.f32.mrf.mxu0
          %v1947 = vadd.f32 0.0, %v1946
          %v1948 = vpop.f32.mrf.mxu0
          %v1949 = vadd.f32 0.0, %v1948
          %1950 = vmatmul.bf16.gmra.mxu0 %v1893
          %v1951 = vpop.f32.mrf.mxu0
          %v1952 = vadd.f32 0.0, %v1951
          %v1953 = vpop.f32.mrf.mxu0
          %v1954 = vadd.f32 0.0, %v1953
          %1955 = vmatmul.bf16.gmra.mxu0 %v1896
          %v1956 = vpop.f32.mrf.mxu0
          %v1957 = vadd.f32 0.0, %v1956
          %v1958 = vpop.f32.mrf.mxu0
          %v1959 = vadd.f32 0.0, %v1958
          %1960 = vmatmul.bf16.gmra.mxu0 %v1899
          %v1961 = vpop.f32.mrf.mxu0
          %v1962 = vadd.f32 0.0, %v1961
          %v1963 = vpop.f32.mrf.mxu0
          %v1964 = vadd.f32 0.0, %v1963
          %1965 = vmatmul.bf16.gmra.mxu0 %v1902
          %v1966 = vpop.f32.mrf.mxu0
          %v1967 = vadd.f32 0.0, %v1966
          %v1968 = vpop.f32.mrf.mxu0
          %v1969 = vadd.f32 0.0, %v1968
          %1970 = vmatmul.bf16.gmra.mxu0 %v1905
          %v1971 = vpop.f32.mrf.mxu0
          %v1972 = vadd.f32 0.0, %v1971
          %v1973 = vpop.f32.mrf.mxu0
          %v1974 = vadd.f32 0.0, %v1973
          %1975 = vmatmul.bf16.gmra.mxu0 %v1908
          %v1976 = vpop.f32.mrf.mxu0
          %v1977 = vadd.f32 0.0, %v1976
          %v1978 = vpop.f32.mrf.mxu0
          %v1979 = vadd.f32 0.0, %v1978
          %1980 = vmatmul.bf16.gmra.mxu0 %v1911
          %v1981 = vpop.f32.mrf.mxu0
          %v1982 = vadd.f32 0.0, %v1981
          %v1983 = vpop.f32.mrf.mxu0
          %v1984 = vadd.f32 0.0, %v1983
          %1985 = vmatmul.bf16.gmra.mxu0 %v1914
          %v1986 = vpop.f32.mrf.mxu0
          %v1987 = vadd.f32 0.0, %v1986
          %v1988 = vpop.f32.mrf.mxu0
          %v1989 = vadd.f32 0.0, %v1988
          %1990 = vmatmul.bf16.gmra.mxu0 %v1917
          %v1991 = vpop.f32.mrf.mxu0
          %v1992 = vadd.f32 0.0, %v1991
          %v1993 = vpop.f32.mrf.mxu0
          %v1994 = vadd.f32 0.0, %v1993
          %1995 = vmatmul.bf16.gmra.mxu0 %v1920
          %v1996 = vpop.f32.mrf.mxu0
          %v1997 = vadd.f32 0.0, %v1996
          %v1998 = vpop.f32.mrf.mxu0
          %v1999 = vadd.f32 0.0, %v1998
          %2000 = vmatmul.bf16.gmra.mxu0 %v1923
          %v2001 = vpop.f32.mrf.mxu0
          %v2002 = vadd.f32 0.0, %v2001
          %v2003 = vpop.f32.mrf.mxu0
          %v2004 = vadd.f32 0.0, %v2003
          %2005 = vmatmul.bf16.gmra.mxu0 %v1926
          %v2006 = vpop.f32.mrf.mxu0
          %v2007 = vadd.f32 0.0, %v2006
          %v2008 = vpop.f32.mrf.mxu0
          %v2009 = vadd.f32 0.0, %v2008
          %2010 = vmatmul.bf16.gmra.mxu0 %v1929
          %v2011 = vpop.f32.mrf.mxu0
          %v2012 = vadd.f32 0.0, %v2011
          %v2013 = vpop.f32.mrf.mxu0
          %v2014 = vadd.f32 0.0, %v2013
          %2015 = vmatmul.bf16.gmra.mxu0 %v1932
          %v2016 = vpop.f32.mrf.mxu0
          %v2017 = vadd.f32 0.0, %v2016
          %v2018 = vpop.f32.mrf.mxu0
          %v2019 = vadd.f32 0.0, %v2018
          %2020 = vmatmul.bf16.gmra.mxu0 %v1935
          %v2021 = vpop.f32.mrf.mxu0
          %v2022 = vadd.f32 0.0, %v2021
          %v2023 = vpop.f32.mrf.mxu0
          %v2024 = vadd.f32 0.0, %v2023
          %2025 = vdwg.mxu0
          %v2026 = vadd.f32 %v1793, %v1947
          %v2027 = vadd.f32 %v1794, %v1949
          %v2028 = vadd.f32 %v1795, %v1952
          %v2029 = vadd.f32 %v1796, %v1954
          %v2030 = vadd.f32 %v1797, %v1957
          %v2031 = vadd.f32 %v1798, %v1959
          %v2032 = vadd.f32 %v1799, %v1962
          %v2033 = vadd.f32 %v1800, %v1964
          %v2034 = vadd.f32 %v1801, %v1967
          %v2035 = vadd.f32 %v1802, %v1969
          %v2036 = vadd.f32 %v1803, %v1972
          %v2037 = vadd.f32 %v1804, %v1974
          %v2038 = vadd.f32 %v1805, %v1977
          %v2039 = vadd.f32 %v1806, %v1979
          %v2040 = vadd.f32 %v1807, %v1982
          %v2041 = vadd.f32 %v1808, %v1984
          %v2042 = vadd.f32 %v1809, %v1987
          %v2043 = vadd.f32 %v1810, %v1989
          %v2044 = vadd.f32 %v1811, %v1992
          %v2045 = vadd.f32 %v1812, %v1994
          %v2046 = vadd.f32 %v1813, %v1997
          %v2047 = vadd.f32 %v1814, %v1999
          %v2048 = vadd.f32 %v1815, %v2002
          %v2049 = vadd.f32 %v1816, %v2004
          %v2050 = vadd.f32 %v1817, %v2007
          %v2051 = vadd.f32 %v1818, %v2009
          %v2052 = vadd.f32 %v1819, %v2012
          %v2053 = vadd.f32 %v1820, %v2014
          %v2054 = vadd.f32 %v1821, %v2017
          %v2055 = vadd.f32 %v1822, %v2019
          %v2056 = vadd.f32 %v1823, %v2022
          %v2057 = vadd.f32 %v1824, %v2024
          %s2058 = scalar_lea.vmem [#allocation2], 64
          %v2059 = vld [vmem:[%s2058 + $0x7] sm:$0xff]
          %v2060 = vld [vmem:[%s2058 + $0xf] sm:$0xff]
          %v2061 = vld [vmem:[%s2058 + $0x27] sm:$0xff]
          %v2062 = vld [vmem:[%s2058 + $0x2f] sm:$0xff]
          %v2063 = vld [vmem:[%s2058 + $0x47] sm:$0xff]
          %v2064 = vld [vmem:[%s2058 + $0x4f] sm:$0xff]
          %v2065 = vld [vmem:[%s2058 + $0x67] sm:$0xff]
          %v2066 = vld [vmem:[%s2058 + $0x6f] sm:$0xff]
          %v2067 = vld [vmem:[%s2058 + $0x87] sm:$0xff]
          %v2068 = vld [vmem:[%s2058 + $0x8f] sm:$0xff]
          %v2069 = vld [vmem:[%s2058 + $0xa7] sm:$0xff]
          %v2070 = vld [vmem:[%s2058 + $0xaf] sm:$0xff]
          %v2071 = vld [vmem:[%s2058 + $0xc7] sm:$0xff]
          %v2072 = vld [vmem:[%s2058 + $0xcf] sm:$0xff]
          %v2073 = vld [vmem:[%s2058 + $0xe7] sm:$0xff]
          %v2074 = vld [vmem:[%s2058 + $0xef] sm:$0xff]
          %v2075 = vld [vmem:[%s2058 + $0x107] sm:$0xff]
          %v2076 = vld [vmem:[%s2058 + $0x10f] sm:$0xff]
          %v2077 = vld [vmem:[%s2058 + $0x127] sm:$0xff]
          %v2078 = vld [vmem:[%s2058 + $0x12f] sm:$0xff]
          %v2079 = vld [vmem:[%s2058 + $0x147] sm:$0xff]
          %v2080 = vld [vmem:[%s2058 + $0x14f] sm:$0xff]
          %v2081 = vld [vmem:[%s2058 + $0x167] sm:$0xff]
          %v2082 = vld [vmem:[%s2058 + $0x16f] sm:$0xff]
          %v2083 = vld [vmem:[%s2058 + $0x187] sm:$0xff]
          %v2084 = vld [vmem:[%s2058 + $0x18f] sm:$0xff]
          %v2085 = vld [vmem:[%s2058 + $0x1a7] sm:$0xff]
          %v2086 = vld [vmem:[%s2058 + $0x1af] sm:$0xff]
          %v2087 = vld [vmem:[%s2058 + $0x1c7] sm:$0xff]
          %v2088 = vld [vmem:[%s2058 + $0x1cf] sm:$0xff]
          %v2089 = vld [vmem:[%s2058 + $0x1e7] sm:$0xff]
          %v2090 = vld [vmem:[%s2058 + $0x1ef] sm:$0xff]
          %v2091 = vpack.c.bf16 %v2060, %v2059
          %v2092 = vpack.c.bf16 %v2062, %v2061
          %v2093 = vpack.c.bf16 %v2064, %v2063
          %v2094 = vpack.c.bf16 %v2066, %v2065
          %v2095 = vpack.c.bf16 %v2068, %v2067
          %v2096 = vpack.c.bf16 %v2070, %v2069
          %v2097 = vpack.c.bf16 %v2072, %v2071
          %v2098 = vpack.c.bf16 %v2074, %v2073
          %v2099 = vpack.c.bf16 %v2076, %v2075
          %v2100 = vpack.c.bf16 %v2078, %v2077
          %v2101 = vpack.c.bf16 %v2080, %v2079
          %v2102 = vpack.c.bf16 %v2082, %v2081
          %v2103 = vpack.c.bf16 %v2084, %v2083
          %v2104 = vpack.c.bf16 %v2086, %v2085
          %v2105 = vpack.c.bf16 %v2088, %v2087
          %v2106 = vpack.c.bf16 %v2090, %v2089
          %v2107 = vld [vmem:[%s507 + $0x60] sm:$0xf]
          %v2108 = vld [vmem:[%s507 + $0x64] sm:$0xf]
          %v2109 = vld [vmem:[%s507 + $0x68] sm:$0xf]
          %v2110 = vld [vmem:[%s507 + $0x6c] sm:$0xf]
          %v2115 = vunpack.c.l.b16 %v2107
          %v2116 = vunpack.c.l.b16 %v2108
          %v2117 = vunpack.c.l.b16 %v2109
          %v2118 = vunpack.c.l.b16 %v2110
          %v2119 = vpack.c.b16 %v2116, %v2115
          %v2120 = vpack.c.b16 %v2118, %v2117
          %v2124 = vsel %vm838, %v2091, 0
          %v2127 = vsel %vm838, %v2092, 0
          %v2130 = vsel %vm838, %v2093, 0
          %v2133 = vsel %vm838, %v2094, 0
          %v2136 = vsel %vm838, %v2095, 0
          %v2139 = vsel %vm838, %v2096, 0
          %v2142 = vsel %vm838, %v2097, 0
          %v2145 = vsel %vm838, %v2098, 0
          %v2148 = vsel %vm838, %v2099, 0
          %v2151 = vsel %vm838, %v2100, 0
          %v2154 = vsel %vm838, %v2101, 0
          %v2157 = vsel %vm838, %v2102, 0
          %v2160 = vsel %vm838, %v2103, 0
          %v2163 = vsel %vm838, %v2104, 0
          %v2166 = vsel %vm838, %v2105, 0
          %v2169 = vsel %vm838, %v2106, 0
          %2171 = vmatpush.bf16.msra.mxu0 0
          %2172 = vmatpush.bf16.msra.mxu0 0
          %2173 = vmatpush.bf16.msra.mxu0 0
          %2174 = vmatpush.bf16.msra.mxu0 0
          %2175 = vmatpush.bf16.msra.mxu0 0
          %2176 = vmatpush.bf16.msra.mxu0 0
          %2177 = vmatpush.bf16.msra.mxu0 %v2120
          %2178 = vmatpush.bf16.msra.mxu0 %v2119
          %2179 = vmatmul.bf16.gmra.mxu0 %v2124
          %v2180 = vpop.f32.mrf.mxu0
          %v2181 = vadd.f32 0.0, %v2180
          %v2182 = vpop.f32.mrf.mxu0
          %v2183 = vadd.f32 0.0, %v2182
          %2184 = vmatmul.bf16.gmra.mxu0 %v2127
          %v2185 = vpop.f32.mrf.mxu0
          %v2186 = vadd.f32 0.0, %v2185
          %v2187 = vpop.f32.mrf.mxu0
          %v2188 = vadd.f32 0.0, %v2187
          %2189 = vmatmul.bf16.gmra.mxu0 %v2130
          %v2190 = vpop.f32.mrf.mxu0
          %v2191 = vadd.f32 0.0, %v2190
          %v2192 = vpop.f32.mrf.mxu0
          %v2193 = vadd.f32 0.0, %v2192
          %2194 = vmatmul.bf16.gmra.mxu0 %v2133
          %v2195 = vpop.f32.mrf.mxu0
          %v2196 = vadd.f32 0.0, %v2195
          %v2197 = vpop.f32.mrf.mxu0
          %v2198 = vadd.f32 0.0, %v2197
          %2199 = vmatmul.bf16.gmra.mxu0 %v2136
          %v2200 = vpop.f32.mrf.mxu0
          %v2201 = vadd.f32 0.0, %v2200
          %v2202 = vpop.f32.mrf.mxu0
          %v2203 = vadd.f32 0.0, %v2202
          %2204 = vmatmul.bf16.gmra.mxu0 %v2139
          %v2205 = vpop.f32.mrf.mxu0
          %v2206 = vadd.f32 0.0, %v2205
          %v2207 = vpop.f32.mrf.mxu0
          %v2208 = vadd.f32 0.0, %v2207
          %2209 = vmatmul.bf16.gmra.mxu0 %v2142
          %v2210 = vpop.f32.mrf.mxu0
          %v2211 = vadd.f32 0.0, %v2210
          %v2212 = vpop.f32.mrf.mxu0
          %v2213 = vadd.f32 0.0, %v2212
          %2214 = vmatmul.bf16.gmra.mxu0 %v2145
          %v2215 = vpop.f32.mrf.mxu0
          %v2216 = vadd.f32 0.0, %v2215
          %v2217 = vpop.f32.mrf.mxu0
          %v2218 = vadd.f32 0.0, %v2217
          %2219 = vmatmul.bf16.gmra.mxu0 %v2148
          %v2220 = vpop.f32.mrf.mxu0
          %v2221 = vadd.f32 0.0, %v2220
          %v2222 = vpop.f32.mrf.mxu0
          %v2223 = vadd.f32 0.0, %v2222
          %2224 = vmatmul.bf16.gmra.mxu0 %v2151
          %v2225 = vpop.f32.mrf.mxu0
          %v2226 = vadd.f32 0.0, %v2225
          %v2227 = vpop.f32.mrf.mxu0
          %v2228 = vadd.f32 0.0, %v2227
          %2229 = vmatmul.bf16.gmra.mxu0 %v2154
          %v2230 = vpop.f32.mrf.mxu0
          %v2231 = vadd.f32 0.0, %v2230
          %v2232 = vpop.f32.mrf.mxu0
          %v2233 = vadd.f32 0.0, %v2232
          %2234 = vmatmul.bf16.gmra.mxu0 %v2157
          %v2235 = vpop.f32.mrf.mxu0
          %v2236 = vadd.f32 0.0, %v2235
          %v2237 = vpop.f32.mrf.mxu0
          %v2238 = vadd.f32 0.0, %v2237
          %2239 = vmatmul.bf16.gmra.mxu0 %v2160
          %v2240 = vpop.f32.mrf.mxu0
          %v2241 = vadd.f32 0.0, %v2240
          %v2242 = vpop.f32.mrf.mxu0
          %v2243 = vadd.f32 0.0, %v2242
          %2244 = vmatmul.bf16.gmra.mxu0 %v2163
          %v2245 = vpop.f32.mrf.mxu0
          %v2246 = vadd.f32 0.0, %v2245
          %v2247 = vpop.f32.mrf.mxu0
          %v2248 = vadd.f32 0.0, %v2247
          %2249 = vmatmul.bf16.gmra.mxu0 %v2166
          %v2250 = vpop.f32.mrf.mxu0
          %v2251 = vadd.f32 0.0, %v2250
          %v2252 = vpop.f32.mrf.mxu0
          %v2253 = vadd.f32 0.0, %v2252
          %2254 = vmatmul.bf16.gmra.mxu0 %v2169
          %v2255 = vpop.f32.mrf.mxu0
          %v2256 = vadd.f32 0.0, %v2255
          %v2257 = vpop.f32.mrf.mxu0
          %v2258 = vadd.f32 0.0, %v2257
          %2259 = vdwg.mxu0
          %v2260 = vadd.f32 %v2026, %v2181
          %v2261 = vadd.f32 %v2027, %v2183
          %v2262 = vadd.f32 %v2028, %v2186
          %v2263 = vadd.f32 %v2029, %v2188
          %v2264 = vadd.f32 %v2030, %v2191
          %v2265 = vadd.f32 %v2031, %v2193
          %v2266 = vadd.f32 %v2032, %v2196
          %v2267 = vadd.f32 %v2033, %v2198
          %v2268 = vadd.f32 %v2034, %v2201
          %v2269 = vadd.f32 %v2035, %v2203
          %v2270 = vadd.f32 %v2036, %v2206
          %v2271 = vadd.f32 %v2037, %v2208
          %v2272 = vadd.f32 %v2038, %v2211
          %v2273 = vadd.f32 %v2039, %v2213
          %v2274 = vadd.f32 %v2040, %v2216
          %v2275 = vadd.f32 %v2041, %v2218
          %v2276 = vadd.f32 %v2042, %v2221
          %v2277 = vadd.f32 %v2043, %v2223
          %v2278 = vadd.f32 %v2044, %v2226
          %v2279 = vadd.f32 %v2045, %v2228
          %v2280 = vadd.f32 %v2046, %v2231
          %v2281 = vadd.f32 %v2047, %v2233
          %v2282 = vadd.f32 %v2048, %v2236
          %v2283 = vadd.f32 %v2049, %v2238
          %v2284 = vadd.f32 %v2050, %v2241
          %v2285 = vadd.f32 %v2051, %v2243
          %v2286 = vadd.f32 %v2052, %v2246
          %v2287 = vadd.f32 %v2053, %v2248
          %v2288 = vadd.f32 %v2054, %v2251
          %v2289 = vadd.f32 %v2055, %v2253
          %v2290 = vadd.f32 %v2056, %v2256
          %v2291 = vadd.f32 %v2057, %v2258
          %v2292 = vld [vmem:[%s2058 + $0x8] sm:$0xff]
          %v2293 = vld [vmem:[%s2058 + $0x10] sm:$0xff]
          %v2294 = vld [vmem:[%s2058 + $0x28] sm:$0xff]
          %v2295 = vld [vmem:[%s2058 + $0x30] sm:$0xff]
          %v2296 = vld [vmem:[%s2058 + $0x48] sm:$0xff]
          %v2297 = vld [vmem:[%s2058 + $0x50] sm:$0xff]
          %v2298 = vld [vmem:[%s2058 + $0x68] sm:$0xff]
          %v2299 = vld [vmem:[%s2058 + $0x70] sm:$0xff]
          %v2300 = vld [vmem:[%s2058 + $0x88] sm:$0xff]
          %v2301 = vld [vmem:[%s2058 + $0x90] sm:$0xff]
          %v2302 = vld [vmem:[%s2058 + $0xa8] sm:$0xff]
          %v2303 = vld [vmem:[%s2058 + $0xb0] sm:$0xff]
          %v2304 = vld [vmem:[%s2058 + $0xc8] sm:$0xff]
          %v2305 = vld [vmem:[%s2058 + $0xd0] sm:$0xff]
          %v2306 = vld [vmem:[%s2058 + $0xe8] sm:$0xff]
          %v2307 = vld [vmem:[%s2058 + $0xf0] sm:$0xff]
          %v2308 = vld [vmem:[%s2058 + $0x108] sm:$0xff]
          %v2309 = vld [vmem:[%s2058 + $0x110] sm:$0xff]
          %v2310 = vld [vmem:[%s2058 + $0x128] sm:$0xff]
          %v2311 = vld [vmem:[%s2058 + $0x130] sm:$0xff]
          %v2312 = vld [vmem:[%s2058 + $0x148] sm:$0xff]
          %v2313 = vld [vmem:[%s2058 + $0x150] sm:$0xff]
          %v2314 = vld [vmem:[%s2058 + $0x168] sm:$0xff]
          %v2315 = vld [vmem:[%s2058 + $0x170] sm:$0xff]
          %v2316 = vld [vmem:[%s2058 + $0x188] sm:$0xff]
          %v2317 = vld [vmem:[%s2058 + $0x190] sm:$0xff]
          %v2318 = vld [vmem:[%s2058 + $0x1a8] sm:$0xff]
          %v2319 = vld [vmem:[%s2058 + $0x1b0] sm:$0xff]
          %v2320 = vld [vmem:[%s2058 + $0x1c8] sm:$0xff]
          %v2321 = vld [vmem:[%s2058 + $0x1d0] sm:$0xff]
          %v2322 = vld [vmem:[%s2058 + $0x1e8] sm:$0xff]
          %v2323 = vld [vmem:[%s2058 + $0x1f0] sm:$0xff]
          %v2324 = vpack.c.bf16 %v2293, %v2292
          %v2325 = vpack.c.bf16 %v2295, %v2294
          %v2326 = vpack.c.bf16 %v2297, %v2296
          %v2327 = vpack.c.bf16 %v2299, %v2298
          %v2328 = vpack.c.bf16 %v2301, %v2300
          %v2329 = vpack.c.bf16 %v2303, %v2302
          %v2330 = vpack.c.bf16 %v2305, %v2304
          %v2331 = vpack.c.bf16 %v2307, %v2306
          %v2332 = vpack.c.bf16 %v2309, %v2308
          %v2333 = vpack.c.bf16 %v2311, %v2310
          %v2334 = vpack.c.bf16 %v2313, %v2312
          %v2335 = vpack.c.bf16 %v2315, %v2314
          %v2336 = vpack.c.bf16 %v2317, %v2316
          %v2337 = vpack.c.bf16 %v2319, %v2318
          %v2338 = vpack.c.bf16 %v2321, %v2320
          %v2339 = vpack.c.bf16 %v2323, %v2322
          %v2340 = vld [vmem:[%s507 + $0x70] sm:$0xf]
          %v2341 = vld [vmem:[%s507 + $0x74] sm:$0xf]
          %v2342 = vld [vmem:[%s507 + $0x78] sm:$0xf]
          %v2343 = vld [vmem:[%s507 + $0x7c] sm:$0xf]
          %v2348 = vunpack.c.l.b16 %v2340
          %v2349 = vunpack.c.l.b16 %v2341
          %v2350 = vunpack.c.l.b16 %v2342
          %v2351 = vunpack.c.l.b16 %v2343
          %v2352 = vpack.c.b16 %v2349, %v2348
          %v2353 = vpack.c.b16 %v2351, %v2350
          %v2357 = vsel %vm838, %v2324, 0
          %v2360 = vsel %vm838, %v2325, 0
          %v2363 = vsel %vm838, %v2326, 0
          %v2366 = vsel %vm838, %v2327, 0
          %v2369 = vsel %vm838, %v2328, 0
          %v2372 = vsel %vm838, %v2329, 0
          %v2375 = vsel %vm838, %v2330, 0
          %v2378 = vsel %vm838, %v2331, 0
          %v2381 = vsel %vm838, %v2332, 0
          %v2384 = vsel %vm838, %v2333, 0
          %v2387 = vsel %vm838, %v2334, 0
          %v2390 = vsel %vm838, %v2335, 0
          %v2393 = vsel %vm838, %v2336, 0
          %v2396 = vsel %vm838, %v2337, 0
          %v2399 = vsel %vm838, %v2338, 0
          %v2402 = vsel %vm838, %v2339, 0
          %2404 = vmatpush.bf16.msra.mxu0 0
          %2405 = vmatpush.bf16.msra.mxu0 0
          %2406 = vmatpush.bf16.msra.mxu0 0
          %2407 = vmatpush.bf16.msra.mxu0 0
          %2408 = vmatpush.bf16.msra.mxu0 0
          %2409 = vmatpush.bf16.msra.mxu0 0
          %2410 = vmatpush.bf16.msra.mxu0 %v2353
          %2411 = vmatpush.bf16.msra.mxu0 %v2352
          %2412 = vmatmul.bf16.gmra.mxu0 %v2357
          %v2413 = vpop.f32.mrf.mxu0
          %v2414 = vadd.f32 0.0, %v2413
          %v2415 = vpop.f32.mrf.mxu0
          %v2416 = vadd.f32 0.0, %v2415
          %2417 = vmatmul.bf16.gmra.mxu0 %v2360
          %v2418 = vpop.f32.mrf.mxu0
          %v2419 = vadd.f32 0.0, %v2418
          %v2420 = vpop.f32.mrf.mxu0
          %v2421 = vadd.f32 0.0, %v2420
          %2422 = vmatmul.bf16.gmra.mxu0 %v2363
          %v2423 = vpop.f32.mrf.mxu0
          %v2424 = vadd.f32 0.0, %v2423
          %v2425 = vpop.f32.mrf.mxu0
          %v2426 = vadd.f32 0.0, %v2425
          %2427 = vmatmul.bf16.gmra.mxu0 %v2366
          %v2428 = vpop.f32.mrf.mxu0
          %v2429 = vadd.f32 0.0, %v2428
          %v2430 = vpop.f32.mrf.mxu0
          %v2431 = vadd.f32 0.0, %v2430
          %2432 = vmatmul.bf16.gmra.mxu0 %v2369
          %v2433 = vpop.f32.mrf.mxu0
          %v2434 = vadd.f32 0.0, %v2433
          %v2435 = vpop.f32.mrf.mxu0
          %v2436 = vadd.f32 0.0, %v2435
          %2437 = vmatmul.bf16.gmra.mxu0 %v2372
          %v2438 = vpop.f32.mrf.mxu0
          %v2439 = vadd.f32 0.0, %v2438
          %v2440 = vpop.f32.mrf.mxu0
          %v2441 = vadd.f32 0.0, %v2440
          %2442 = vmatmul.bf16.gmra.mxu0 %v2375
          %v2443 = vpop.f32.mrf.mxu0
          %v2444 = vadd.f32 0.0, %v2443
          %v2445 = vpop.f32.mrf.mxu0
          %v2446 = vadd.f32 0.0, %v2445
          %2447 = vmatmul.bf16.gmra.mxu0 %v2378
          %v2448 = vpop.f32.mrf.mxu0
          %v2449 = vadd.f32 0.0, %v2448
          %v2450 = vpop.f32.mrf.mxu0
          %v2451 = vadd.f32 0.0, %v2450
          %2452 = vmatmul.bf16.gmra.mxu0 %v2381
          %v2453 = vpop.f32.mrf.mxu0
          %v2454 = vadd.f32 0.0, %v2453
          %v2455 = vpop.f32.mrf.mxu0
          %v2456 = vadd.f32 0.0, %v2455
          %2457 = vmatmul.bf16.gmra.mxu0 %v2384
          %v2458 = vpop.f32.mrf.mxu0
          %v2459 = vadd.f32 0.0, %v2458
          %v2460 = vpop.f32.mrf.mxu0
          %v2461 = vadd.f32 0.0, %v2460
          %2462 = vmatmul.bf16.gmra.mxu0 %v2387
          %v2463 = vpop.f32.mrf.mxu0
          %v2464 = vadd.f32 0.0, %v2463
          %v2465 = vpop.f32.mrf.mxu0
          %v2466 = vadd.f32 0.0, %v2465
          %2467 = vmatmul.bf16.gmra.mxu0 %v2390
          %v2468 = vpop.f32.mrf.mxu0
          %v2469 = vadd.f32 0.0, %v2468
          %v2470 = vpop.f32.mrf.mxu0
          %v2471 = vadd.f32 0.0, %v2470
          %2472 = vmatmul.bf16.gmra.mxu0 %v2393
          %v2473 = vpop.f32.mrf.mxu0
          %v2474 = vadd.f32 0.0, %v2473
          %v2475 = vpop.f32.mrf.mxu0
          %v2476 = vadd.f32 0.0, %v2475
          %2477 = vmatmul.bf16.gmra.mxu0 %v2396
          %v2478 = vpop.f32.mrf.mxu0
          %v2479 = vadd.f32 0.0, %v2478
          %v2480 = vpop.f32.mrf.mxu0
          %v2481 = vadd.f32 0.0, %v2480
          %2482 = vmatmul.bf16.gmra.mxu0 %v2399
          %v2483 = vpop.f32.mrf.mxu0
          %v2484 = vadd.f32 0.0, %v2483
          %v2485 = vpop.f32.mrf.mxu0
          %v2486 = vadd.f32 0.0, %v2485
          %2487 = vmatmul.bf16.gmra.mxu0 %v2402
          %v2488 = vpop.f32.mrf.mxu0
          %v2489 = vadd.f32 0.0, %v2488
          %v2490 = vpop.f32.mrf.mxu0
          %v2491 = vadd.f32 0.0, %v2490
          %2492 = vdwg.mxu0
          %v2493 = vadd.f32 %v2260, %v2414
          %v2494 = vadd.f32 %v2261, %v2416
          %v2495 = vadd.f32 %v2262, %v2419
          %v2496 = vadd.f32 %v2263, %v2421
          %v2497 = vadd.f32 %v2264, %v2424
          %v2498 = vadd.f32 %v2265, %v2426
          %v2499 = vadd.f32 %v2266, %v2429
          %v2500 = vadd.f32 %v2267, %v2431
          %v2501 = vadd.f32 %v2268, %v2434
          %v2502 = vadd.f32 %v2269, %v2436
          %v2503 = vadd.f32 %v2270, %v2439
          %v2504 = vadd.f32 %v2271, %v2441
          %v2505 = vadd.f32 %v2272, %v2444
          %v2506 = vadd.f32 %v2273, %v2446
          %v2507 = vadd.f32 %v2274, %v2449
          %v2508 = vadd.f32 %v2275, %v2451
          %v2509 = vadd.f32 %v2276, %v2454
          %v2510 = vadd.f32 %v2277, %v2456
          %v2511 = vadd.f32 %v2278, %v2459
          %v2512 = vadd.f32 %v2279, %v2461
          %v2513 = vadd.f32 %v2280, %v2464
          %v2514 = vadd.f32 %v2281, %v2466
          %v2515 = vadd.f32 %v2282, %v2469
          %v2516 = vadd.f32 %v2283, %v2471
          %v2517 = vadd.f32 %v2284, %v2474
          %v2518 = vadd.f32 %v2285, %v2476
          %v2519 = vadd.f32 %v2286, %v2479
          %v2520 = vadd.f32 %v2287, %v2481
          %v2521 = vadd.f32 %v2288, %v2484
          %v2522 = vadd.f32 %v2289, %v2486
          %v2523 = vadd.f32 %v2290, %v2489
          %v2524 = vadd.f32 %v2291, %v2491
          %v2525 = vld [vmem:[%s2058 + $0x9] sm:$0xff]
          %v2526 = vld [vmem:[%s2058 + $0x11] sm:$0xff]
          %v2527 = vld [vmem:[%s2058 + $0x29] sm:$0xff]
          %v2528 = vld [vmem:[%s2058 + $0x31] sm:$0xff]
          %v2529 = vld [vmem:[%s2058 + $0x49] sm:$0xff]
          %v2530 = vld [vmem:[%s2058 + $0x51] sm:$0xff]
          %v2531 = vld [vmem:[%s2058 + $0x69] sm:$0xff]
          %v2532 = vld [vmem:[%s2058 + $0x71] sm:$0xff]
          %v2533 = vld [vmem:[%s2058 + $0x89] sm:$0xff]
          %v2534 = vld [vmem:[%s2058 + $0x91] sm:$0xff]
          %v2535 = vld [vmem:[%s2058 + $0xa9] sm:$0xff]
          %v2536 = vld [vmem:[%s2058 + $0xb1] sm:$0xff]
          %v2537 = vld [vmem:[%s2058 + $0xc9] sm:$0xff]
          %v2538 = vld [vmem:[%s2058 + $0xd1] sm:$0xff]
          %v2539 = vld [vmem:[%s2058 + $0xe9] sm:$0xff]
          %v2540 = vld [vmem:[%s2058 + $0xf1] sm:$0xff]
          %v2541 = vld [vmem:[%s2058 + $0x109] sm:$0xff]
          %v2542 = vld [vmem:[%s2058 + $0x111] sm:$0xff]
          %v2543 = vld [vmem:[%s2058 + $0x129] sm:$0xff]
          %v2544 = vld [vmem:[%s2058 + $0x131] sm:$0xff]
          %v2545 = vld [vmem:[%s2058 + $0x149] sm:$0xff]
          %v2546 = vld [vmem:[%s2058 + $0x151] sm:$0xff]
          %v2547 = vld [vmem:[%s2058 + $0x169] sm:$0xff]
          %v2548 = vld [vmem:[%s2058 + $0x171] sm:$0xff]
          %v2549 = vld [vmem:[%s2058 + $0x189] sm:$0xff]
          %v2550 = vld [vmem:[%s2058 + $0x191] sm:$0xff]
          %v2551 = vld [vmem:[%s2058 + $0x1a9] sm:$0xff]
          %v2552 = vld [vmem:[%s2058 + $0x1b1] sm:$0xff]
          %v2553 = vld [vmem:[%s2058 + $0x1c9] sm:$0xff]
          %v2554 = vld [vmem:[%s2058 + $0x1d1] sm:$0xff]
          %v2555 = vld [vmem:[%s2058 + $0x1e9] sm:$0xff]
          %v2556 = vld [vmem:[%s2058 + $0x1f1] sm:$0xff]
          %v2557 = vpack.c.bf16 %v2526, %v2525
          %v2558 = vpack.c.bf16 %v2528, %v2527
          %v2559 = vpack.c.bf16 %v2530, %v2529
          %v2560 = vpack.c.bf16 %v2532, %v2531
          %v2561 = vpack.c.bf16 %v2534, %v2533
          %v2562 = vpack.c.bf16 %v2536, %v2535
          %v2563 = vpack.c.bf16 %v2538, %v2537
          %v2564 = vpack.c.bf16 %v2540, %v2539
          %v2565 = vpack.c.bf16 %v2542, %v2541
          %v2566 = vpack.c.bf16 %v2544, %v2543
          %v2567 = vpack.c.bf16 %v2546, %v2545
          %v2568 = vpack.c.bf16 %v2548, %v2547
          %v2569 = vpack.c.bf16 %v2550, %v2549
          %v2570 = vpack.c.bf16 %v2552, %v2551
          %v2571 = vpack.c.bf16 %v2554, %v2553
          %v2572 = vpack.c.bf16 %v2556, %v2555
          %v2573 = vld [vmem:[%s507 + $0x80] sm:$0xf]
          %v2574 = vld [vmem:[%s507 + $0x84] sm:$0xf]
          %v2575 = vld [vmem:[%s507 + $0x88] sm:$0xf]
          %v2576 = vld [vmem:[%s507 + $0x8c] sm:$0xf]
          %v2581 = vunpack.c.l.b16 %v2573
          %v2582 = vunpack.c.l.b16 %v2574
          %v2583 = vunpack.c.l.b16 %v2575
          %v2584 = vunpack.c.l.b16 %v2576
          %v2585 = vpack.c.b16 %v2582, %v2581
          %v2586 = vpack.c.b16 %v2584, %v2583
          %v2590 = vsel %vm838, %v2557, 0
          %v2593 = vsel %vm838, %v2558, 0
          %v2596 = vsel %vm838, %v2559, 0
          %v2599 = vsel %vm838, %v2560, 0
          %v2602 = vsel %vm838, %v2561, 0
          %v2605 = vsel %vm838, %v2562, 0
          %v2608 = vsel %vm838, %v2563, 0
          %v2611 = vsel %vm838, %v2564, 0
          %v2614 = vsel %vm838, %v2565, 0
          %v2617 = vsel %vm838, %v2566, 0
          %v2620 = vsel %vm838, %v2567, 0
          %v2623 = vsel %vm838, %v2568, 0
          %v2626 = vsel %vm838, %v2569, 0
          %v2629 = vsel %vm838, %v2570, 0
          %v2632 = vsel %vm838, %v2571, 0
          %v2635 = vsel %vm838, %v2572, 0
          %2637 = vmatpush.bf16.msra.mxu0 0
          %2638 = vmatpush.bf16.msra.mxu0 0
          %2639 = vmatpush.bf16.msra.mxu0 0
          %2640 = vmatpush.bf16.msra.mxu0 0
          %2641 = vmatpush.bf16.msra.mxu0 0
          %2642 = vmatpush.bf16.msra.mxu0 0
          %2643 = vmatpush.bf16.msra.mxu0 %v2586
          %2644 = vmatpush.bf16.msra.mxu0 %v2585
          %2645 = vmatmul.bf16.gmra.mxu0 %v2590
          %v2646 = vpop.f32.mrf.mxu0
          %v2647 = vadd.f32 0.0, %v2646
          %v2648 = vpop.f32.mrf.mxu0
          %v2649 = vadd.f32 0.0, %v2648
          %2650 = vmatmul.bf16.gmra.mxu0 %v2593
          %v2651 = vpop.f32.mrf.mxu0
          %v2652 = vadd.f32 0.0, %v2651
          %v2653 = vpop.f32.mrf.mxu0
          %v2654 = vadd.f32 0.0, %v2653
          %2655 = vmatmul.bf16.gmra.mxu0 %v2596
          %v2656 = vpop.f32.mrf.mxu0
          %v2657 = vadd.f32 0.0, %v2656
          %v2658 = vpop.f32.mrf.mxu0
          %v2659 = vadd.f32 0.0, %v2658
          %2660 = vmatmul.bf16.gmra.mxu0 %v2599
          %v2661 = vpop.f32.mrf.mxu0
          %v2662 = vadd.f32 0.0, %v2661
          %v2663 = vpop.f32.mrf.mxu0
          %v2664 = vadd.f32 0.0, %v2663
          %2665 = vmatmul.bf16.gmra.mxu0 %v2602
          %v2666 = vpop.f32.mrf.mxu0
          %v2667 = vadd.f32 0.0, %v2666
          %v2668 = vpop.f32.mrf.mxu0
          %v2669 = vadd.f32 0.0, %v2668
          %2670 = vmatmul.bf16.gmra.mxu0 %v2605
          %v2671 = vpop.f32.mrf.mxu0
          %v2672 = vadd.f32 0.0, %v2671
          %v2673 = vpop.f32.mrf.mxu0
          %v2674 = vadd.f32 0.0, %v2673
          %2675 = vmatmul.bf16.gmra.mxu0 %v2608
          %v2676 = vpop.f32.mrf.mxu0
          %v2677 = vadd.f32 0.0, %v2676
          %v2678 = vpop.f32.mrf.mxu0
          %v2679 = vadd.f32 0.0, %v2678
          %2680 = vmatmul.bf16.gmra.mxu0 %v2611
          %v2681 = vpop.f32.mrf.mxu0
          %v2682 = vadd.f32 0.0, %v2681
          %v2683 = vpop.f32.mrf.mxu0
          %v2684 = vadd.f32 0.0, %v2683
          %2685 = vmatmul.bf16.gmra.mxu0 %v2614
          %v2686 = vpop.f32.mrf.mxu0
          %v2687 = vadd.f32 0.0, %v2686
          %v2688 = vpop.f32.mrf.mxu0
          %v2689 = vadd.f32 0.0, %v2688
          %2690 = vmatmul.bf16.gmra.mxu0 %v2617
          %v2691 = vpop.f32.mrf.mxu0
          %v2692 = vadd.f32 0.0, %v2691
          %v2693 = vpop.f32.mrf.mxu0
          %v2694 = vadd.f32 0.0, %v2693
          %2695 = vmatmul.bf16.gmra.mxu0 %v2620
          %v2696 = vpop.f32.mrf.mxu0
          %v2697 = vadd.f32 0.0, %v2696
          %v2698 = vpop.f32.mrf.mxu0
          %v2699 = vadd.f32 0.0, %v2698
          %2700 = vmatmul.bf16.gmra.mxu0 %v2623
          %v2701 = vpop.f32.mrf.mxu0
          %v2702 = vadd.f32 0.0, %v2701
          %v2703 = vpop.f32.mrf.mxu0
          %v2704 = vadd.f32 0.0, %v2703
          %2705 = vmatmul.bf16.gmra.mxu0 %v2626
          %v2706 = vpop.f32.mrf.mxu0
          %v2707 = vadd.f32 0.0, %v2706
          %v2708 = vpop.f32.mrf.mxu0
          %v2709 = vadd.f32 0.0, %v2708
          %2710 = vmatmul.bf16.gmra.mxu0 %v2629
          %v2711 = vpop.f32.mrf.mxu0
          %v2712 = vadd.f32 0.0, %v2711
          %v2713 = vpop.f32.mrf.mxu0
          %v2714 = vadd.f32 0.0, %v2713
          %2715 = vmatmul.bf16.gmra.mxu0 %v2632
          %v2716 = vpop.f32.mrf.mxu0
          %v2717 = vadd.f32 0.0, %v2716
          %v2718 = vpop.f32.mrf.mxu0
          %v2719 = vadd.f32 0.0, %v2718
          %2720 = vmatmul.bf16.gmra.mxu0 %v2635
          %v2721 = vpop.f32.mrf.mxu0
          %v2722 = vadd.f32 0.0, %v2721
          %v2723 = vpop.f32.mrf.mxu0
          %v2724 = vadd.f32 0.0, %v2723
          %2725 = vdwg.mxu0
          %v2726 = vadd.f32 %v2493, %v2647
          %v2727 = vadd.f32 %v2494, %v2649
          %v2728 = vadd.f32 %v2495, %v2652
          %v2729 = vadd.f32 %v2496, %v2654
          %v2730 = vadd.f32 %v2497, %v2657
          %v2731 = vadd.f32 %v2498, %v2659
          %v2732 = vadd.f32 %v2499, %v2662
          %v2733 = vadd.f32 %v2500, %v2664
          %v2734 = vadd.f32 %v2501, %v2667
          %v2735 = vadd.f32 %v2502, %v2669
          %v2736 = vadd.f32 %v2503, %v2672
          %v2737 = vadd.f32 %v2504, %v2674
          %v2738 = vadd.f32 %v2505, %v2677
          %v2739 = vadd.f32 %v2506, %v2679
          %v2740 = vadd.f32 %v2507, %v2682
          %v2741 = vadd.f32 %v2508, %v2684
          %v2742 = vadd.f32 %v2509, %v2687
          %v2743 = vadd.f32 %v2510, %v2689
          %v2744 = vadd.f32 %v2511, %v2692
          %v2745 = vadd.f32 %v2512, %v2694
          %v2746 = vadd.f32 %v2513, %v2697
          %v2747 = vadd.f32 %v2514, %v2699
          %v2748 = vadd.f32 %v2515, %v2702
          %v2749 = vadd.f32 %v2516, %v2704
          %v2750 = vadd.f32 %v2517, %v2707
          %v2751 = vadd.f32 %v2518, %v2709
          %v2752 = vadd.f32 %v2519, %v2712
          %v2753 = vadd.f32 %v2520, %v2714
          %v2754 = vadd.f32 %v2521, %v2717
          %v2755 = vadd.f32 %v2522, %v2719
          %v2756 = vadd.f32 %v2523, %v2722
          %v2757 = vadd.f32 %v2524, %v2724
          %v2758 = vld [vmem:[%s510] sm:$0x1]
          %v2760 = vperm.slane %v2758, 0
          %v2762 = vadd.f32 %v2726, %v2760
          %v2763 = vadd.f32 %v2727, %v2760
          %v2764 = vadd.f32 %v2728, %v2760
          %v2765 = vadd.f32 %v2729, %v2760
          %v2766 = vadd.f32 %v2730, %v2760
          %v2767 = vadd.f32 %v2731, %v2760
          %v2768 = vadd.f32 %v2732, %v2760
          %v2769 = vadd.f32 %v2733, %v2760
          %v2770 = vadd.f32 %v2734, %v2760
          %v2771 = vadd.f32 %v2735, %v2760
          %v2772 = vadd.f32 %v2736, %v2760
          %v2773 = vadd.f32 %v2737, %v2760
          %v2774 = vadd.f32 %v2738, %v2760
          %v2775 = vadd.f32 %v2739, %v2760
          %v2776 = vadd.f32 %v2740, %v2760
          %v2777 = vadd.f32 %v2741, %v2760
          %v2778 = vadd.f32 %v2742, %v2760
          %v2779 = vadd.f32 %v2743, %v2760
          %v2780 = vadd.f32 %v2744, %v2760
          %v2781 = vadd.f32 %v2745, %v2760
          %v2782 = vadd.f32 %v2746, %v2760
          %v2783 = vadd.f32 %v2747, %v2760
          %v2784 = vadd.f32 %v2748, %v2760
          %v2785 = vadd.f32 %v2749, %v2760
          %v2786 = vadd.f32 %v2750, %v2760
          %v2787 = vadd.f32 %v2751, %v2760
          %v2788 = vadd.f32 %v2752, %v2760
          %v2789 = vadd.f32 %v2753, %v2760
          %v2790 = vadd.f32 %v2754, %v2760
          %v2791 = vadd.f32 %v2755, %v2760
          %v2792 = vadd.f32 %v2756, %v2760
          %v2793 = vadd.f32 %v2757, %v2760
          %v2794 = vmax.f32 %v2762, 0.0
          %v2795 = vmax.f32 %v2763, 0.0
          %v2796 = vmax.f32 %v2764, 0.0
          %v2797 = vmax.f32 %v2765, 0.0
          %v2798 = vmax.f32 %v2766, 0.0
          %v2799 = vmax.f32 %v2767, 0.0
          %v2800 = vmax.f32 %v2768, 0.0
          %v2801 = vmax.f32 %v2769, 0.0
          %v2802 = vmax.f32 %v2770, 0.0
          %v2803 = vmax.f32 %v2771, 0.0
          %v2804 = vmax.f32 %v2772, 0.0
          %v2805 = vmax.f32 %v2773, 0.0
          %v2806 = vmax.f32 %v2774, 0.0
          %v2807 = vmax.f32 %v2775, 0.0
          %v2808 = vmax.f32 %v2776, 0.0
          %v2809 = vmax.f32 %v2777, 0.0
          %v2810 = vmax.f32 %v2778, 0.0
          %v2811 = vmax.f32 %v2779, 0.0
          %v2812 = vmax.f32 %v2780, 0.0
          %v2813 = vmax.f32 %v2781, 0.0
          %v2814 = vmax.f32 %v2782, 0.0
          %v2815 = vmax.f32 %v2783, 0.0
          %v2816 = vmax.f32 %v2784, 0.0
          %v2817 = vmax.f32 %v2785, 0.0
          %v2818 = vmax.f32 %v2786, 0.0
          %v2819 = vmax.f32 %v2787, 0.0
          %v2820 = vmax.f32 %v2788, 0.0
          %v2821 = vmax.f32 %v2789, 0.0
          %v2822 = vmax.f32 %v2790, 0.0
          %v2823 = vmax.f32 %v2791, 0.0
          %v2824 = vmax.f32 %v2792, 0.0
          %v2825 = vmax.f32 %v2793, 0.0
          %s2826 = scalar_lea.vmem [#allocation3], 32
          %2827 = vst.msk [vmem:[%s2826 + $0x8] sm:$0xff] %vm838, %v2794
          %2828 = vst.msk [vmem:[%s2826 + $0x10] sm:$0xff] %vm838, %v2795
          %2829 = vst.msk [vmem:[%s2826 + $0x28] sm:$0xff] %vm838, %v2796
          %2830 = vst.msk [vmem:[%s2826 + $0x30] sm:$0xff] %vm838, %v2797
          %2831 = vst.msk [vmem:[%s2826 + $0x48] sm:$0xff] %vm838, %v2798
          %2832 = vst.msk [vmem:[%s2826 + $0x50] sm:$0xff] %vm838, %v2799
          %2833 = vst.msk [vmem:[%s2826 + $0x68] sm:$0xff] %vm838, %v2800
          %2834 = vst.msk [vmem:[%s2826 + $0x70] sm:$0xff] %vm838, %v2801
          %2835 = vst.msk [vmem:[%s2826 + $0x88] sm:$0xff] %vm838, %v2802
          %2836 = vst.msk [vmem:[%s2826 + $0x90] sm:$0xff] %vm838, %v2803
          %2837 = vst.msk [vmem:[%s2826 + $0xa8] sm:$0xff] %vm838, %v2804
          %2838 = vst.msk [vmem:[%s2826 + $0xb0] sm:$0xff] %vm838, %v2805
          %2839 = vst.msk [vmem:[%s2826 + $0xc8] sm:$0xff] %vm838, %v2806
          %2840 = vst.msk [vmem:[%s2826 + $0xd0] sm:$0xff] %vm838, %v2807
          %2841 = vst.msk [vmem:[%s2826 + $0xe8] sm:$0xff] %vm838, %v2808
          %2842 = vst.msk [vmem:[%s2826 + $0xf0] sm:$0xff] %vm838, %v2809
          %2843 = vst.msk [vmem:[%s2826 + $0x108] sm:$0xff] %vm838, %v2810
          %2844 = vst.msk [vmem:[%s2826 + $0x110] sm:$0xff] %vm838, %v2811
          %2845 = vst.msk [vmem:[%s2826 + $0x128] sm:$0xff] %vm838, %v2812
          %2846 = vst.msk [vmem:[%s2826 + $0x130] sm:$0xff] %vm838, %v2813
          %2847 = vst.msk [vmem:[%s2826 + $0x148] sm:$0xff] %vm838, %v2814
          %2848 = vst.msk [vmem:[%s2826 + $0x150] sm:$0xff] %vm838, %v2815
          %2849 = vst.msk [vmem:[%s2826 + $0x168] sm:$0xff] %vm838, %v2816
          %2850 = vst.msk [vmem:[%s2826 + $0x170] sm:$0xff] %vm838, %v2817
          %2851 = vst.msk [vmem:[%s2826 + $0x188] sm:$0xff] %vm838, %v2818
          %2852 = vst.msk [vmem:[%s2826 + $0x190] sm:$0xff] %vm838, %v2819
          %2853 = vst.msk [vmem:[%s2826 + $0x1a8] sm:$0xff] %vm838, %v2820
          %2854 = vst.msk [vmem:[%s2826 + $0x1b0] sm:$0xff] %vm838, %v2821
          %2855 = vst.msk [vmem:[%s2826 + $0x1c8] sm:$0xff] %vm838, %v2822
          %2856 = vst.msk [vmem:[%s2826 + $0x1d0] sm:$0xff] %vm838, %v2823
          %2857 = vst.msk [vmem:[%s2826 + $0x1e8] sm:$0xff] %vm838, %v2824
          %2858 = vst.msk [vmem:[%s2826 + $0x1f0] sm:$0xff] %vm838, %v2825
          %v2859 = vld [vmem:[#allocation3 + $0x7] sm:$0xff]
          %v2860 = vld [vmem:[#allocation3 + $0xf] sm:$0xff]
          %v2861 = vld [vmem:[#allocation3 + $0x27] sm:$0xff]
          %v2862 = vld [vmem:[#allocation3 + $0x2f] sm:$0xff]
          %v2863 = vld [vmem:[#allocation3 + $0x47] sm:$0xff]
          %v2864 = vld [vmem:[#allocation3 + $0x4f] sm:$0xff]
          %v2865 = vld [vmem:[#allocation3 + $0x67] sm:$0xff]
          %v2866 = vld [vmem:[#allocation3 + $0x6f] sm:$0xff]
          %v2867 = vld [vmem:[#allocation3 + $0x87] sm:$0xff]
          %v2868 = vld [vmem:[#allocation3 + $0x8f] sm:$0xff]
          %v2869 = vld [vmem:[#allocation3 + $0xa7] sm:$0xff]
          %v2870 = vld [vmem:[#allocation3 + $0xaf] sm:$0xff]
          %v2871 = vld [vmem:[#allocation3 + $0xc7] sm:$0xff]
          %v2872 = vld [vmem:[#allocation3 + $0xcf] sm:$0xff]
          %v2873 = vld [vmem:[#allocation3 + $0xe7] sm:$0xff]
          %v2874 = vld [vmem:[#allocation3 + $0xef] sm:$0xff]
          %v2875 = vld [vmem:[#allocation3 + $0x107] sm:$0xff]
          %v2876 = vld [vmem:[#allocation3 + $0x10f] sm:$0xff]
          %v2877 = vld [vmem:[#allocation3 + $0x127] sm:$0xff]
          %v2878 = vld [vmem:[#allocation3 + $0x12f] sm:$0xff]
          %v2879 = vld [vmem:[#allocation3 + $0x147] sm:$0xff]
          %v2880 = vld [vmem:[#allocation3 + $0x14f] sm:$0xff]
          %v2881 = vld [vmem:[#allocation3 + $0x167] sm:$0xff]
          %v2882 = vld [vmem:[#allocation3 + $0x16f] sm:$0xff]
          %v2883 = vld [vmem:[#allocation3 + $0x187] sm:$0xff]
          %v2884 = vld [vmem:[#allocation3 + $0x18f] sm:$0xff]
          %v2885 = vld [vmem:[#allocation3 + $0x1a7] sm:$0xff]
          %v2886 = vld [vmem:[#allocation3 + $0x1af] sm:$0xff]
          %v2887 = vld [vmem:[#allocation3 + $0x1c7] sm:$0xff]
          %v2888 = vld [vmem:[#allocation3 + $0x1cf] sm:$0xff]
          %v2889 = vld [vmem:[#allocation3 + $0x1e7] sm:$0xff]
          %v2890 = vld [vmem:[#allocation3 + $0x1ef] sm:$0xff]
          %v2891 = vpack.c.bf16 %v2860, %v2859
          %v2892 = vpack.c.bf16 %v2862, %v2861
          %v2893 = vpack.c.bf16 %v2864, %v2863
          %v2894 = vpack.c.bf16 %v2866, %v2865
          %v2895 = vpack.c.bf16 %v2868, %v2867
          %v2896 = vpack.c.bf16 %v2870, %v2869
          %v2897 = vpack.c.bf16 %v2872, %v2871
          %v2898 = vpack.c.bf16 %v2874, %v2873
          %v2899 = vpack.c.bf16 %v2876, %v2875
          %v2900 = vpack.c.bf16 %v2878, %v2877
          %v2901 = vpack.c.bf16 %v2880, %v2879
          %v2902 = vpack.c.bf16 %v2882, %v2881
          %v2903 = vpack.c.bf16 %v2884, %v2883
          %v2904 = vpack.c.bf16 %v2886, %v2885
          %v2905 = vpack.c.bf16 %v2888, %v2887
          %v2906 = vpack.c.bf16 %v2890, %v2889
          %v2907 = vld [vmem:[%s517] sm:$0xf]
          %v2908 = vld [vmem:[%s517 + $0x4] sm:$0xf]
          %v2909 = vld [vmem:[%s517 + $0x8] sm:$0xf]
          %v2910 = vld [vmem:[%s517 + $0xc] sm:$0xf]
          %v2911 = vld [vmem:[#allocation3 + $0x8] sm:$0xff]
          %v2912 = vld [vmem:[#allocation3 + $0x10] sm:$0xff]
          %v2913 = vld [vmem:[#allocation3 + $0x28] sm:$0xff]
          %v2914 = vld [vmem:[#allocation3 + $0x30] sm:$0xff]
          %v2915 = vld [vmem:[#allocation3 + $0x48] sm:$0xff]
          %v2916 = vld [vmem:[#allocation3 + $0x50] sm:$0xff]
          %v2917 = vld [vmem:[#allocation3 + $0x68] sm:$0xff]
          %v2918 = vld [vmem:[#allocation3 + $0x70] sm:$0xff]
          %v2919 = vld [vmem:[#allocation3 + $0x88] sm:$0xff]
          %v2920 = vld [vmem:[#allocation3 + $0x90] sm:$0xff]
          %v2921 = vld [vmem:[#allocation3 + $0xa8] sm:$0xff]
          %v2922 = vld [vmem:[#allocation3 + $0xb0] sm:$0xff]
          %v2923 = vld [vmem:[#allocation3 + $0xc8] sm:$0xff]
          %v2924 = vld [vmem:[#allocation3 + $0xd0] sm:$0xff]
          %v2925 = vld [vmem:[#allocation3 + $0xe8] sm:$0xff]
          %v2926 = vld [vmem:[#allocation3 + $0xf0] sm:$0xff]
          %v2927 = vld [vmem:[#allocation3 + $0x108] sm:$0xff]
          %v2928 = vld [vmem:[#allocation3 + $0x110] sm:$0xff]
          %v2929 = vld [vmem:[#allocation3 + $0x128] sm:$0xff]
          %v2930 = vld [vmem:[#allocation3 + $0x130] sm:$0xff]
          %v2931 = vld [vmem:[#allocation3 + $0x148] sm:$0xff]
          %v2932 = vld [vmem:[#allocation3 + $0x150] sm:$0xff]
          %v2933 = vld [vmem:[#allocation3 + $0x168] sm:$0xff]
          %v2934 = vld [vmem:[#allocation3 + $0x170] sm:$0xff]
          %v2935 = vld [vmem:[#allocation3 + $0x188] sm:$0xff]
          %v2936 = vld [vmem:[#allocation3 + $0x190] sm:$0xff]
          %v2937 = vld [vmem:[#allocation3 + $0x1a8] sm:$0xff]
          %v2938 = vld [vmem:[#allocation3 + $0x1b0] sm:$0xff]
          %v2939 = vld [vmem:[#allocation3 + $0x1c8] sm:$0xff]
          %v2940 = vld [vmem:[#allocation3 + $0x1d0] sm:$0xff]
          %v2941 = vld [vmem:[#allocation3 + $0x1e8] sm:$0xff]
          %v2942 = vld [vmem:[#allocation3 + $0x1f0] sm:$0xff]
          %v2943 = vpack.c.bf16 %v2912, %v2911
          %v2944 = vpack.c.bf16 %v2914, %v2913
          %v2945 = vpack.c.bf16 %v2916, %v2915
          %v2946 = vpack.c.bf16 %v2918, %v2917
          %v2947 = vpack.c.bf16 %v2920, %v2919
          %v2948 = vpack.c.bf16 %v2922, %v2921
          %v2949 = vpack.c.bf16 %v2924, %v2923
          %v2950 = vpack.c.bf16 %v2926, %v2925
          %v2951 = vpack.c.bf16 %v2928, %v2927
          %v2952 = vpack.c.bf16 %v2930, %v2929
          %v2953 = vpack.c.bf16 %v2932, %v2931
          %v2954 = vpack.c.bf16 %v2934, %v2933
          %v2955 = vpack.c.bf16 %v2936, %v2935
          %v2956 = vpack.c.bf16 %v2938, %v2937
          %v2957 = vpack.c.bf16 %v2940, %v2939
          %v2958 = vpack.c.bf16 %v2942, %v2941
          %v2959 = vld [vmem:[%s517 + $0x10] sm:$0xf]
          %v2960 = vld [vmem:[%s517 + $0x14] sm:$0xf]
          %v2961 = vld [vmem:[%s517 + $0x18] sm:$0xf]
          %v2962 = vld [vmem:[%s517 + $0x1c] sm:$0xf]
          %v2967 = vunpack.c.l.b16 %v2959
          %v2968 = vunpack.c.l.b16 %v2960
          %v2969 = vunpack.c.l.b16 %v2961
          %v2970 = vunpack.c.l.b16 %v2962
          %v2971 = vpack.c.b16 %v2968, %v2967
          %v2972 = vpack.c.b16 %v2970, %v2969
          %v2976 = vsel %vm838, %v2943, 0
          %v2979 = vsel %vm838, %v2944, 0
          %v2982 = vsel %vm838, %v2945, 0
          %v2985 = vsel %vm838, %v2946, 0
          %v2988 = vsel %vm838, %v2947, 0
          %v2991 = vsel %vm838, %v2948, 0
          %v2994 = vsel %vm838, %v2949, 0
          %v2997 = vsel %vm838, %v2950, 0
          %v3000 = vsel %vm838, %v2951, 0
          %v3003 = vsel %vm838, %v2952, 0
          %v3006 = vsel %vm838, %v2953, 0
          %v3009 = vsel %vm838, %v2954, 0
          %v3012 = vsel %vm838, %v2955, 0
          %v3015 = vsel %vm838, %v2956, 0
          %v3018 = vsel %vm838, %v2957, 0
          %v3021 = vsel %vm838, %v2958, 0
          %3023 = vmatpush.bf16.msra.mxu0 0
          %3024 = vmatpush.bf16.msra.mxu0 0
          %3025 = vmatpush.bf16.msra.mxu0 0
          %3026 = vmatpush.bf16.msra.mxu0 0
          %3027 = vmatpush.bf16.msra.mxu0 0
          %3028 = vmatpush.bf16.msra.mxu0 0
          %3029 = vmatpush.bf16.msra.mxu0 %v2972
          %3030 = vmatpush.bf16.msra.mxu0 %v2971
          %3031 = vmatmul.bf16.gmra.mxu0 %v2976
          %v3032 = vpop.f32.mrf.mxu0
          %v3033 = vadd.f32 0.0, %v3032
          %v3034 = vpop.f32.mrf.mxu0
          %v3035 = vadd.f32 0.0, %v3034
          %3036 = vmatmul.bf16.gmra.mxu0 %v2979
          %v3037 = vpop.f32.mrf.mxu0
          %v3038 = vadd.f32 0.0, %v3037
          %v3039 = vpop.f32.mrf.mxu0
          %v3040 = vadd.f32 0.0, %v3039
          %3041 = vmatmul.bf16.gmra.mxu0 %v2982
          %v3042 = vpop.f32.mrf.mxu0
          %v3043 = vadd.f32 0.0, %v3042
          %v3044 = vpop.f32.mrf.mxu0
          %v3045 = vadd.f32 0.0, %v3044
          %3046 = vmatmul.bf16.gmra.mxu0 %v2985
          %v3047 = vpop.f32.mrf.mxu0
          %v3048 = vadd.f32 0.0, %v3047
          %v3049 = vpop.f32.mrf.mxu0
          %v3050 = vadd.f32 0.0, %v3049
          %3051 = vmatmul.bf16.gmra.mxu0 %v2988
          %v3052 = vpop.f32.mrf.mxu0
          %v3053 = vadd.f32 0.0, %v3052
          %v3054 = vpop.f32.mrf.mxu0
          %v3055 = vadd.f32 0.0, %v3054
          %3056 = vmatmul.bf16.gmra.mxu0 %v2991
          %v3057 = vpop.f32.mrf.mxu0
          %v3058 = vadd.f32 0.0, %v3057
          %v3059 = vpop.f32.mrf.mxu0
          %v3060 = vadd.f32 0.0, %v3059
          %3061 = vmatmul.bf16.gmra.mxu0 %v2994
          %v3062 = vpop.f32.mrf.mxu0
          %v3063 = vadd.f32 0.0, %v3062
          %v3064 = vpop.f32.mrf.mxu0
          %v3065 = vadd.f32 0.0, %v3064
          %3066 = vmatmul.bf16.gmra.mxu0 %v2997
          %v3067 = vpop.f32.mrf.mxu0
          %v3068 = vadd.f32 0.0, %v3067
          %v3069 = vpop.f32.mrf.mxu0
          %v3070 = vadd.f32 0.0, %v3069
          %3071 = vmatmul.bf16.gmra.mxu0 %v3000
          %v3072 = vpop.f32.mrf.mxu0
          %v3073 = vadd.f32 0.0, %v3072
          %v3074 = vpop.f32.mrf.mxu0
          %v3075 = vadd.f32 0.0, %v3074
          %3076 = vmatmul.bf16.gmra.mxu0 %v3003
          %v3077 = vpop.f32.mrf.mxu0
          %v3078 = vadd.f32 0.0, %v3077
          %v3079 = vpop.f32.mrf.mxu0
          %v3080 = vadd.f32 0.0, %v3079
          %3081 = vmatmul.bf16.gmra.mxu0 %v3006
          %v3082 = vpop.f32.mrf.mxu0
          %v3083 = vadd.f32 0.0, %v3082
          %v3084 = vpop.f32.mrf.mxu0
          %v3085 = vadd.f32 0.0, %v3084
          %3086 = vmatmul.bf16.gmra.mxu0 %v3009
          %v3087 = vpop.f32.mrf.mxu0
          %v3088 = vadd.f32 0.0, %v3087
          %v3089 = vpop.f32.mrf.mxu0
          %v3090 = vadd.f32 0.0, %v3089
          %3091 = vmatmul.bf16.gmra.mxu0 %v3012
          %v3092 = vpop.f32.mrf.mxu0
          %v3093 = vadd.f32 0.0, %v3092
          %v3094 = vpop.f32.mrf.mxu0
          %v3095 = vadd.f32 0.0, %v3094
          %3096 = vmatmul.bf16.gmra.mxu0 %v3015
          %v3097 = vpop.f32.mrf.mxu0
          %v3098 = vadd.f32 0.0, %v3097
          %v3099 = vpop.f32.mrf.mxu0
          %v3100 = vadd.f32 0.0, %v3099
          %3101 = vmatmul.bf16.gmra.mxu0 %v3018
          %v3102 = vpop.f32.mrf.mxu0
          %v3103 = vadd.f32 0.0, %v3102
          %v3104 = vpop.f32.mrf.mxu0
          %v3105 = vadd.f32 0.0, %v3104
          %3106 = vmatmul.bf16.gmra.mxu0 %v3021
          %v3107 = vpop.f32.mrf.mxu0
          %v3108 = vadd.f32 0.0, %v3107
          %v3109 = vpop.f32.mrf.mxu0
          %v3110 = vadd.f32 0.0, %v3109
          %3111 = vdwg.mxu0
          %v3116 = vunpack.c.l.b16 %v2907
          %v3117 = vunpack.c.l.b16 %v2908
          %v3118 = vunpack.c.l.b16 %v2909
          %v3119 = vunpack.c.l.b16 %v2910
          %v3120 = vpack.c.b16 %v3117, %v3116
          %v3121 = vpack.c.b16 %v3119, %v3118
          %v3125 = vsel %vm838, %v2891, 0
          %v3128 = vsel %vm838, %v2892, 0
          %v3131 = vsel %vm838, %v2893, 0
          %v3134 = vsel %vm838, %v2894, 0
          %v3137 = vsel %vm838, %v2895, 0
          %v3140 = vsel %vm838, %v2896, 0
          %v3143 = vsel %vm838, %v2897, 0
          %v3146 = vsel %vm838, %v2898, 0
          %v3149 = vsel %vm838, %v2899, 0
          %v3152 = vsel %vm838, %v2900, 0
          %v3155 = vsel %vm838, %v2901, 0
          %v3158 = vsel %vm838, %v2902, 0
          %v3161 = vsel %vm838, %v2903, 0
          %v3164 = vsel %vm838, %v2904, 0
          %v3167 = vsel %vm838, %v2905, 0
          %v3170 = vsel %vm838, %v2906, 0
          %3172 = vmatpush.bf16.msra.mxu0 0
          %3173 = vmatpush.bf16.msra.mxu0 0
          %3174 = vmatpush.bf16.msra.mxu0 0
          %3175 = vmatpush.bf16.msra.mxu0 0
          %3176 = vmatpush.bf16.msra.mxu0 0
          %3177 = vmatpush.bf16.msra.mxu0 0
          %3178 = vmatpush.bf16.msra.mxu0 %v3121
          %3179 = vmatpush.bf16.msra.mxu0 %v3120
          %3180 = vmatmul.bf16.gmra.mxu0 %v3125
          %v3181 = vpop.f32.mrf.mxu0
          %v3182 = vadd.f32 %v3033, %v3181
          %v3183 = vpop.f32.mrf.mxu0
          %v3184 = vadd.f32 %v3035, %v3183
          %3185 = vmatmul.bf16.gmra.mxu0 %v3128
          %v3186 = vpop.f32.mrf.mxu0
          %v3187 = vadd.f32 %v3038, %v3186
          %v3188 = vpop.f32.mrf.mxu0
          %v3189 = vadd.f32 %v3040, %v3188
          %3190 = vmatmul.bf16.gmra.mxu0 %v3131
          %v3191 = vpop.f32.mrf.mxu0
          %v3192 = vadd.f32 %v3043, %v3191
          %v3193 = vpop.f32.mrf.mxu0
          %v3194 = vadd.f32 %v3045, %v3193
          %3195 = vmatmul.bf16.gmra.mxu0 %v3134
          %v3196 = vpop.f32.mrf.mxu0
          %v3197 = vadd.f32 %v3048, %v3196
          %v3198 = vpop.f32.mrf.mxu0
          %v3199 = vadd.f32 %v3050, %v3198
          %3200 = vmatmul.bf16.gmra.mxu0 %v3137
          %v3201 = vpop.f32.mrf.mxu0
          %v3202 = vadd.f32 %v3053, %v3201
          %v3203 = vpop.f32.mrf.mxu0
          %v3204 = vadd.f32 %v3055, %v3203
          %3205 = vmatmul.bf16.gmra.mxu0 %v3140
          %v3206 = vpop.f32.mrf.mxu0
          %v3207 = vadd.f32 %v3058, %v3206
          %v3208 = vpop.f32.mrf.mxu0
          %v3209 = vadd.f32 %v3060, %v3208
          %3210 = vmatmul.bf16.gmra.mxu0 %v3143
          %v3211 = vpop.f32.mrf.mxu0
          %v3212 = vadd.f32 %v3063, %v3211
          %v3213 = vpop.f32.mrf.mxu0
          %v3214 = vadd.f32 %v3065, %v3213
          %3215 = vmatmul.bf16.gmra.mxu0 %v3146
          %v3216 = vpop.f32.mrf.mxu0
          %v3217 = vadd.f32 %v3068, %v3216
          %v3218 = vpop.f32.mrf.mxu0
          %v3219 = vadd.f32 %v3070, %v3218
          %3220 = vmatmul.bf16.gmra.mxu0 %v3149
          %v3221 = vpop.f32.mrf.mxu0
          %v3222 = vadd.f32 %v3073, %v3221
          %v3223 = vpop.f32.mrf.mxu0
          %v3224 = vadd.f32 %v3075, %v3223
          %3225 = vmatmul.bf16.gmra.mxu0 %v3152
          %v3226 = vpop.f32.mrf.mxu0
          %v3227 = vadd.f32 %v3078, %v3226
          %v3228 = vpop.f32.mrf.mxu0
          %v3229 = vadd.f32 %v3080, %v3228
          %3230 = vmatmul.bf16.gmra.mxu0 %v3155
          %v3231 = vpop.f32.mrf.mxu0
          %v3232 = vadd.f32 %v3083, %v3231
          %v3233 = vpop.f32.mrf.mxu0
          %v3234 = vadd.f32 %v3085, %v3233
          %3235 = vmatmul.bf16.gmra.mxu0 %v3158
          %v3236 = vpop.f32.mrf.mxu0
          %v3237 = vadd.f32 %v3088, %v3236
          %v3238 = vpop.f32.mrf.mxu0
          %v3239 = vadd.f32 %v3090, %v3238
          %3240 = vmatmul.bf16.gmra.mxu0 %v3161
          %v3241 = vpop.f32.mrf.mxu0
          %v3242 = vadd.f32 %v3093, %v3241
          %v3243 = vpop.f32.mrf.mxu0
          %v3244 = vadd.f32 %v3095, %v3243
          %3245 = vmatmul.bf16.gmra.mxu0 %v3164
          %v3246 = vpop.f32.mrf.mxu0
          %v3247 = vadd.f32 %v3098, %v3246
          %v3248 = vpop.f32.mrf.mxu0
          %v3249 = vadd.f32 %v3100, %v3248
          %3250 = vmatmul.bf16.gmra.mxu0 %v3167
          %v3251 = vpop.f32.mrf.mxu0
          %v3252 = vadd.f32 %v3103, %v3251
          %v3253 = vpop.f32.mrf.mxu0
          %v3254 = vadd.f32 %v3105, %v3253
          %3255 = vmatmul.bf16.gmra.mxu0 %v3170
          %v3256 = vpop.f32.mrf.mxu0
          %v3257 = vadd.f32 %v3108, %v3256
          %v3258 = vpop.f32.mrf.mxu0
          %v3259 = vadd.f32 %v3110, %v3258
          %3260 = vdwg.mxu0
          %v3261 = vld [vmem:[#allocation3 + $0x9] sm:$0xff]
          %v3262 = vld [vmem:[#allocation3 + $0x11] sm:$0xff]
          %v3263 = vld [vmem:[#allocation3 + $0x29] sm:$0xff]
          %v3264 = vld [vmem:[#allocation3 + $0x31] sm:$0xff]
          %v3265 = vld [vmem:[#allocation3 + $0x49] sm:$0xff]
          %v3266 = vld [vmem:[#allocation3 + $0x51] sm:$0xff]
          %v3267 = vld [vmem:[#allocation3 + $0x69] sm:$0xff]
          %v3268 = vld [vmem:[#allocation3 + $0x71] sm:$0xff]
          %v3269 = vld [vmem:[#allocation3 + $0x89] sm:$0xff]
          %v3270 = vld [vmem:[#allocation3 + $0x91] sm:$0xff]
          %v3271 = vld [vmem:[#allocation3 + $0xa9] sm:$0xff]
          %v3272 = vld [vmem:[#allocation3 + $0xb1] sm:$0xff]
          %v3273 = vld [vmem:[#allocation3 + $0xc9] sm:$0xff]
          %v3274 = vld [vmem:[#allocation3 + $0xd1] sm:$0xff]
          %v3275 = vld [vmem:[#allocation3 + $0xe9] sm:$0xff]
          %v3276 = vld [vmem:[#allocation3 + $0xf1] sm:$0xff]
          %v3277 = vld [vmem:[#allocation3 + $0x109] sm:$0xff]
          %v3278 = vld [vmem:[#allocation3 + $0x111] sm:$0xff]
          %v3279 = vld [vmem:[#allocation3 + $0x129] sm:$0xff]
          %v3280 = vld [vmem:[#allocation3 + $0x131] sm:$0xff]
          %v3281 = vld [vmem:[#allocation3 + $0x149] sm:$0xff]
          %v3282 = vld [vmem:[#allocation3 + $0x151] sm:$0xff]
          %v3283 = vld [vmem:[#allocation3 + $0x169] sm:$0xff]
          %v3284 = vld [vmem:[#allocation3 + $0x171] sm:$0xff]
          %v3285 = vld [vmem:[#allocation3 + $0x189] sm:$0xff]
          %v3286 = vld [vmem:[#allocation3 + $0x191] sm:$0xff]
          %v3287 = vld [vmem:[#allocation3 + $0x1a9] sm:$0xff]
          %v3288 = vld [vmem:[#allocation3 + $0x1b1] sm:$0xff]
          %v3289 = vld [vmem:[#allocation3 + $0x1c9] sm:$0xff]
          %v3290 = vld [vmem:[#allocation3 + $0x1d1] sm:$0xff]
          %v3291 = vld [vmem:[#allocation3 + $0x1e9] sm:$0xff]
          %v3292 = vld [vmem:[#allocation3 + $0x1f1] sm:$0xff]
          %v3293 = vpack.c.bf16 %v3262, %v3261
          %v3294 = vpack.c.bf16 %v3264, %v3263
          %v3295 = vpack.c.bf16 %v3266, %v3265
          %v3296 = vpack.c.bf16 %v3268, %v3267
          %v3297 = vpack.c.bf16 %v3270, %v3269
          %v3298 = vpack.c.bf16 %v3272, %v3271
          %v3299 = vpack.c.bf16 %v3274, %v3273
          %v3300 = vpack.c.bf16 %v3276, %v3275
          %v3301 = vpack.c.bf16 %v3278, %v3277
          %v3302 = vpack.c.bf16 %v3280, %v3279
          %v3303 = vpack.c.bf16 %v3282, %v3281
          %v3304 = vpack.c.bf16 %v3284, %v3283
          %v3305 = vpack.c.bf16 %v3286, %v3285
          %v3306 = vpack.c.bf16 %v3288, %v3287
          %v3307 = vpack.c.bf16 %v3290, %v3289
          %v3308 = vpack.c.bf16 %v3292, %v3291
          %v3309 = vld [vmem:[%s517 + $0x20] sm:$0xf]
          %v3310 = vld [vmem:[%s517 + $0x24] sm:$0xf]
          %v3311 = vld [vmem:[%s517 + $0x28] sm:$0xf]
          %v3312 = vld [vmem:[%s517 + $0x2c] sm:$0xf]
          %v3317 = vunpack.c.l.b16 %v3309
          %v3318 = vunpack.c.l.b16 %v3310
          %v3319 = vunpack.c.l.b16 %v3311
          %v3320 = vunpack.c.l.b16 %v3312
          %v3321 = vpack.c.b16 %v3318, %v3317
          %v3322 = vpack.c.b16 %v3320, %v3319
          %v3326 = vsel %vm838, %v3293, 0
          %v3329 = vsel %vm838, %v3294, 0
          %v3332 = vsel %vm838, %v3295, 0
          %v3335 = vsel %vm838, %v3296, 0
          %v3338 = vsel %vm838, %v3297, 0
          %v3341 = vsel %vm838, %v3298, 0
          %v3344 = vsel %vm838, %v3299, 0
          %v3347 = vsel %vm838, %v3300, 0
          %v3350 = vsel %vm838, %v3301, 0
          %v3353 = vsel %vm838, %v3302, 0
          %v3356 = vsel %vm838, %v3303, 0
          %v3359 = vsel %vm838, %v3304, 0
          %v3362 = vsel %vm838, %v3305, 0
          %v3365 = vsel %vm838, %v3306, 0
          %v3368 = vsel %vm838, %v3307, 0
          %v3371 = vsel %vm838, %v3308, 0
          %3373 = vmatpush.bf16.msra.mxu0 0
          %3374 = vmatpush.bf16.msra.mxu0 0
          %3375 = vmatpush.bf16.msra.mxu0 0
          %3376 = vmatpush.bf16.msra.mxu0 0
          %3377 = vmatpush.bf16.msra.mxu0 0
          %3378 = vmatpush.bf16.msra.mxu0 0
          %3379 = vmatpush.bf16.msra.mxu0 %v3322
          %3380 = vmatpush.bf16.msra.mxu0 %v3321
          %3381 = vmatmul.bf16.gmra.mxu0 %v3326
          %v3382 = vpop.f32.mrf.mxu0
          %v3383 = vadd.f32 0.0, %v3382
          %v3384 = vpop.f32.mrf.mxu0
          %v3385 = vadd.f32 0.0, %v3384
          %3386 = vmatmul.bf16.gmra.mxu0 %v3329
          %v3387 = vpop.f32.mrf.mxu0
          %v3388 = vadd.f32 0.0, %v3387
          %v3389 = vpop.f32.mrf.mxu0
          %v3390 = vadd.f32 0.0, %v3389
          %3391 = vmatmul.bf16.gmra.mxu0 %v3332
          %v3392 = vpop.f32.mrf.mxu0
          %v3393 = vadd.f32 0.0, %v3392
          %v3394 = vpop.f32.mrf.mxu0
          %v3395 = vadd.f32 0.0, %v3394
          %3396 = vmatmul.bf16.gmra.mxu0 %v3335
          %v3397 = vpop.f32.mrf.mxu0
          %v3398 = vadd.f32 0.0, %v3397
          %v3399 = vpop.f32.mrf.mxu0
          %v3400 = vadd.f32 0.0, %v3399
          %3401 = vmatmul.bf16.gmra.mxu0 %v3338
          %v3402 = vpop.f32.mrf.mxu0
          %v3403 = vadd.f32 0.0, %v3402
          %v3404 = vpop.f32.mrf.mxu0
          %v3405 = vadd.f32 0.0, %v3404
          %3406 = vmatmul.bf16.gmra.mxu0 %v3341
          %v3407 = vpop.f32.mrf.mxu0
          %v3408 = vadd.f32 0.0, %v3407
          %v3409 = vpop.f32.mrf.mxu0
          %v3410 = vadd.f32 0.0, %v3409
          %3411 = vmatmul.bf16.gmra.mxu0 %v3344
          %v3412 = vpop.f32.mrf.mxu0
          %v3413 = vadd.f32 0.0, %v3412
          %v3414 = vpop.f32.mrf.mxu0
          %v3415 = vadd.f32 0.0, %v3414
          %3416 = vmatmul.bf16.gmra.mxu0 %v3347
          %v3417 = vpop.f32.mrf.mxu0
          %v3418 = vadd.f32 0.0, %v3417
          %v3419 = vpop.f32.mrf.mxu0
          %v3420 = vadd.f32 0.0, %v3419
          %3421 = vmatmul.bf16.gmra.mxu0 %v3350
          %v3422 = vpop.f32.mrf.mxu0
          %v3423 = vadd.f32 0.0, %v3422
          %v3424 = vpop.f32.mrf.mxu0
          %v3425 = vadd.f32 0.0, %v3424
          %3426 = vmatmul.bf16.gmra.mxu0 %v3353
          %v3427 = vpop.f32.mrf.mxu0
          %v3428 = vadd.f32 0.0, %v3427
          %v3429 = vpop.f32.mrf.mxu0
          %v3430 = vadd.f32 0.0, %v3429
          %3431 = vmatmul.bf16.gmra.mxu0 %v3356
          %v3432 = vpop.f32.mrf.mxu0
          %v3433 = vadd.f32 0.0, %v3432
          %v3434 = vpop.f32.mrf.mxu0
          %v3435 = vadd.f32 0.0, %v3434
          %3436 = vmatmul.bf16.gmra.mxu0 %v3359
          %v3437 = vpop.f32.mrf.mxu0
          %v3438 = vadd.f32 0.0, %v3437
          %v3439 = vpop.f32.mrf.mxu0
          %v3440 = vadd.f32 0.0, %v3439
          %3441 = vmatmul.bf16.gmra.mxu0 %v3362
          %v3442 = vpop.f32.mrf.mxu0
          %v3443 = vadd.f32 0.0, %v3442
          %v3444 = vpop.f32.mrf.mxu0
          %v3445 = vadd.f32 0.0, %v3444
          %3446 = vmatmul.bf16.gmra.mxu0 %v3365
          %v3447 = vpop.f32.mrf.mxu0
          %v3448 = vadd.f32 0.0, %v3447
          %v3449 = vpop.f32.mrf.mxu0
          %v3450 = vadd.f32 0.0, %v3449
          %3451 = vmatmul.bf16.gmra.mxu0 %v3368
          %v3452 = vpop.f32.mrf.mxu0
          %v3453 = vadd.f32 0.0, %v3452
          %v3454 = vpop.f32.mrf.mxu0
          %v3455 = vadd.f32 0.0, %v3454
          %3456 = vmatmul.bf16.gmra.mxu0 %v3371
          %v3457 = vpop.f32.mrf.mxu0
          %v3458 = vadd.f32 0.0, %v3457
          %v3459 = vpop.f32.mrf.mxu0
          %v3460 = vadd.f32 0.0, %v3459
          %3461 = vdwg.mxu0
          %v3462 = vadd.f32 %v3182, %v3383
          %v3463 = vadd.f32 %v3184, %v3385
          %v3464 = vadd.f32 %v3187, %v3388
          %v3465 = vadd.f32 %v3189, %v3390
          %v3466 = vadd.f32 %v3192, %v3393
          %v3467 = vadd.f32 %v3194, %v3395
          %v3468 = vadd.f32 %v3197, %v3398
          %v3469 = vadd.f32 %v3199, %v3400
          %v3470 = vadd.f32 %v3202, %v3403
          %v3471 = vadd.f32 %v3204, %v3405
          %v3472 = vadd.f32 %v3207, %v3408
          %v3473 = vadd.f32 %v3209, %v3410
          %v3474 = vadd.f32 %v3212, %v3413
          %v3475 = vadd.f32 %v3214, %v3415
          %v3476 = vadd.f32 %v3217, %v3418
          %v3477 = vadd.f32 %v3219, %v3420
          %v3478 = vadd.f32 %v3222, %v3423
          %v3479 = vadd.f32 %v3224, %v3425
          %v3480 = vadd.f32 %v3227, %v3428
          %v3481 = vadd.f32 %v3229, %v3430
          %v3482 = vadd.f32 %v3232, %v3433
          %v3483 = vadd.f32 %v3234, %v3435
          %v3484 = vadd.f32 %v3237, %v3438
          %v3485 = vadd.f32 %v3239, %v3440
          %v3486 = vadd.f32 %v3242, %v3443
          %v3487 = vadd.f32 %v3244, %v3445
          %v3488 = vadd.f32 %v3247, %v3448
          %v3489 = vadd.f32 %v3249, %v3450
          %v3490 = vadd.f32 %v3252, %v3453
          %v3491 = vadd.f32 %v3254, %v3455
          %v3492 = vadd.f32 %v3257, %v3458
          %v3493 = vadd.f32 %v3259, %v3460
          %v3494 = vld [vmem:[%s2826 + $0x7] sm:$0xff]
          %v3495 = vld [vmem:[%s2826 + $0xf] sm:$0xff]
          %v3496 = vld [vmem:[%s2826 + $0x27] sm:$0xff]
          %v3497 = vld [vmem:[%s2826 + $0x2f] sm:$0xff]
          %v3498 = vld [vmem:[%s2826 + $0x47] sm:$0xff]
          %v3499 = vld [vmem:[%s2826 + $0x4f] sm:$0xff]
          %v3500 = vld [vmem:[%s2826 + $0x67] sm:$0xff]
          %v3501 = vld [vmem:[%s2826 + $0x6f] sm:$0xff]
          %v3502 = vld [vmem:[%s2826 + $0x87] sm:$0xff]
          %v3503 = vld [vmem:[%s2826 + $0x8f] sm:$0xff]
          %v3504 = vld [vmem:[%s2826 + $0xa7] sm:$0xff]
          %v3505 = vld [vmem:[%s2826 + $0xaf] sm:$0xff]
          %v3506 = vld [vmem:[%s2826 + $0xc7] sm:$0xff]
          %v3507 = vld [vmem:[%s2826 + $0xcf] sm:$0xff]
          %v3508 = vld [vmem:[%s2826 + $0xe7] sm:$0xff]
          %v3509 = vld [vmem:[%s2826 + $0xef] sm:$0xff]
          %v3510 = vld [vmem:[%s2826 + $0x107] sm:$0xff]
          %v3511 = vld [vmem:[%s2826 + $0x10f] sm:$0xff]
          %v3512 = vld [vmem:[%s2826 + $0x127] sm:$0xff]
          %v3513 = vld [vmem:[%s2826 + $0x12f] sm:$0xff]
          %v3514 = vld [vmem:[%s2826 + $0x147] sm:$0xff]
          %v3515 = vld [vmem:[%s2826 + $0x14f] sm:$0xff]
          %v3516 = vld [vmem:[%s2826 + $0x167] sm:$0xff]
          %v3517 = vld [vmem:[%s2826 + $0x16f] sm:$0xff]
          %v3518 = vld [vmem:[%s2826 + $0x187] sm:$0xff]
          %v3519 = vld [vmem:[%s2826 + $0x18f] sm:$0xff]
          %v3520 = vld [vmem:[%s2826 + $0x1a7] sm:$0xff]
          %v3521 = vld [vmem:[%s2826 + $0x1af] sm:$0xff]
          %v3522 = vld [vmem:[%s2826 + $0x1c7] sm:$0xff]
          %v3523 = vld [vmem:[%s2826 + $0x1cf] sm:$0xff]
          %v3524 = vld [vmem:[%s2826 + $0x1e7] sm:$0xff]
          %v3525 = vld [vmem:[%s2826 + $0x1ef] sm:$0xff]
          %v3526 = vpack.c.bf16 %v3495, %v3494
          %v3527 = vpack.c.bf16 %v3497, %v3496
          %v3528 = vpack.c.bf16 %v3499, %v3498
          %v3529 = vpack.c.bf16 %v3501, %v3500
          %v3530 = vpack.c.bf16 %v3503, %v3502
          %v3531 = vpack.c.bf16 %v3505, %v3504
          %v3532 = vpack.c.bf16 %v3507, %v3506
          %v3533 = vpack.c.bf16 %v3509, %v3508
          %v3534 = vpack.c.bf16 %v3511, %v3510
          %v3535 = vpack.c.bf16 %v3513, %v3512
          %v3536 = vpack.c.bf16 %v3515, %v3514
          %v3537 = vpack.c.bf16 %v3517, %v3516
          %v3538 = vpack.c.bf16 %v3519, %v3518
          %v3539 = vpack.c.bf16 %v3521, %v3520
          %v3540 = vpack.c.bf16 %v3523, %v3522
          %v3541 = vpack.c.bf16 %v3525, %v3524
          %v3542 = vld [vmem:[%s517 + $0x30] sm:$0xf]
          %v3543 = vld [vmem:[%s517 + $0x34] sm:$0xf]
          %v3544 = vld [vmem:[%s517 + $0x38] sm:$0xf]
          %v3545 = vld [vmem:[%s517 + $0x3c] sm:$0xf]
          %v3550 = vunpack.c.l.b16 %v3542
          %v3551 = vunpack.c.l.b16 %v3543
          %v3552 = vunpack.c.l.b16 %v3544
          %v3553 = vunpack.c.l.b16 %v3545
          %v3554 = vpack.c.b16 %v3551, %v3550
          %v3555 = vpack.c.b16 %v3553, %v3552
          %v3559 = vsel %vm838, %v3526, 0
          %v3562 = vsel %vm838, %v3527, 0
          %v3565 = vsel %vm838, %v3528, 0
          %v3568 = vsel %vm838, %v3529, 0
          %v3571 = vsel %vm838, %v3530, 0
          %v3574 = vsel %vm838, %v3531, 0
          %v3577 = vsel %vm838, %v3532, 0
          %v3580 = vsel %vm838, %v3533, 0
          %v3583 = vsel %vm838, %v3534, 0
          %v3586 = vsel %vm838, %v3535, 0
          %v3589 = vsel %vm838, %v3536, 0
          %v3592 = vsel %vm838, %v3537, 0
          %v3595 = vsel %vm838, %v3538, 0
          %v3598 = vsel %vm838, %v3539, 0
          %v3601 = vsel %vm838, %v3540, 0
          %v3604 = vsel %vm838, %v3541, 0
          %3606 = vmatpush.bf16.msra.mxu0 0
          %3607 = vmatpush.bf16.msra.mxu0 0
          %3608 = vmatpush.bf16.msra.mxu0 0
          %3609 = vmatpush.bf16.msra.mxu0 0
          %3610 = vmatpush.bf16.msra.mxu0 0
          %3611 = vmatpush.bf16.msra.mxu0 0
          %3612 = vmatpush.bf16.msra.mxu0 %v3555
          %3613 = vmatpush.bf16.msra.mxu0 %v3554
          %3614 = vmatmul.bf16.gmra.mxu0 %v3559
          %v3615 = vpop.f32.mrf.mxu0
          %v3616 = vadd.f32 0.0, %v3615
          %v3617 = vpop.f32.mrf.mxu0
          %v3618 = vadd.f32 0.0, %v3617
          %3619 = vmatmul.bf16.gmra.mxu0 %v3562
          %v3620 = vpop.f32.mrf.mxu0
          %v3621 = vadd.f32 0.0, %v3620
          %v3622 = vpop.f32.mrf.mxu0
          %v3623 = vadd.f32 0.0, %v3622
          %3624 = vmatmul.bf16.gmra.mxu0 %v3565
          %v3625 = vpop.f32.mrf.mxu0
          %v3626 = vadd.f32 0.0, %v3625
          %v3627 = vpop.f32.mrf.mxu0
          %v3628 = vadd.f32 0.0, %v3627
          %3629 = vmatmul.bf16.gmra.mxu0 %v3568
          %v3630 = vpop.f32.mrf.mxu0
          %v3631 = vadd.f32 0.0, %v3630
          %v3632 = vpop.f32.mrf.mxu0
          %v3633 = vadd.f32 0.0, %v3632
          %3634 = vmatmul.bf16.gmra.mxu0 %v3571
          %v3635 = vpop.f32.mrf.mxu0
          %v3636 = vadd.f32 0.0, %v3635
          %v3637 = vpop.f32.mrf.mxu0
          %v3638 = vadd.f32 0.0, %v3637
          %3639 = vmatmul.bf16.gmra.mxu0 %v3574
          %v3640 = vpop.f32.mrf.mxu0
          %v3641 = vadd.f32 0.0, %v3640
          %v3642 = vpop.f32.mrf.mxu0
          %v3643 = vadd.f32 0.0, %v3642
          %3644 = vmatmul.bf16.gmra.mxu0 %v3577
          %v3645 = vpop.f32.mrf.mxu0
          %v3646 = vadd.f32 0.0, %v3645
          %v3647 = vpop.f32.mrf.mxu0
          %v3648 = vadd.f32 0.0, %v3647
          %3649 = vmatmul.bf16.gmra.mxu0 %v3580
          %v3650 = vpop.f32.mrf.mxu0
          %v3651 = vadd.f32 0.0, %v3650
          %v3652 = vpop.f32.mrf.mxu0
          %v3653 = vadd.f32 0.0, %v3652
          %3654 = vmatmul.bf16.gmra.mxu0 %v3583
          %v3655 = vpop.f32.mrf.mxu0
          %v3656 = vadd.f32 0.0, %v3655
          %v3657 = vpop.f32.mrf.mxu0
          %v3658 = vadd.f32 0.0, %v3657
          %3659 = vmatmul.bf16.gmra.mxu0 %v3586
          %v3660 = vpop.f32.mrf.mxu0
          %v3661 = vadd.f32 0.0, %v3660
          %v3662 = vpop.f32.mrf.mxu0
          %v3663 = vadd.f32 0.0, %v3662
          %3664 = vmatmul.bf16.gmra.mxu0 %v3589
          %v3665 = vpop.f32.mrf.mxu0
          %v3666 = vadd.f32 0.0, %v3665
          %v3667 = vpop.f32.mrf.mxu0
          %v3668 = vadd.f32 0.0, %v3667
          %3669 = vmatmul.bf16.gmra.mxu0 %v3592
          %v3670 = vpop.f32.mrf.mxu0
          %v3671 = vadd.f32 0.0, %v3670
          %v3672 = vpop.f32.mrf.mxu0
          %v3673 = vadd.f32 0.0, %v3672
          %3674 = vmatmul.bf16.gmra.mxu0 %v3595
          %v3675 = vpop.f32.mrf.mxu0
          %v3676 = vadd.f32 0.0, %v3675
          %v3677 = vpop.f32.mrf.mxu0
          %v3678 = vadd.f32 0.0, %v3677
          %3679 = vmatmul.bf16.gmra.mxu0 %v3598
          %v3680 = vpop.f32.mrf.mxu0
          %v3681 = vadd.f32 0.0, %v3680
          %v3682 = vpop.f32.mrf.mxu0
          %v3683 = vadd.f32 0.0, %v3682
          %3684 = vmatmul.bf16.gmra.mxu0 %v3601
          %v3685 = vpop.f32.mrf.mxu0
          %v3686 = vadd.f32 0.0, %v3685
          %v3687 = vpop.f32.mrf.mxu0
          %v3688 = vadd.f32 0.0, %v3687
          %3689 = vmatmul.bf16.gmra.mxu0 %v3604
          %v3690 = vpop.f32.mrf.mxu0
          %v3691 = vadd.f32 0.0, %v3690
          %v3692 = vpop.f32.mrf.mxu0
          %v3693 = vadd.f32 0.0, %v3692
          %3694 = vdwg.mxu0
          %v3695 = vadd.f32 %v3462, %v3616
          %v3696 = vadd.f32 %v3463, %v3618
          %v3697 = vadd.f32 %v3464, %v3621
          %v3698 = vadd.f32 %v3465, %v3623
          %v3699 = vadd.f32 %v3466, %v3626
          %v3700 = vadd.f32 %v3467, %v3628
          %v3701 = vadd.f32 %v3468, %v3631
          %v3702 = vadd.f32 %v3469, %v3633
          %v3703 = vadd.f32 %v3470, %v3636
          %v3704 = vadd.f32 %v3471, %v3638
          %v3705 = vadd.f32 %v3472, %v3641
          %v3706 = vadd.f32 %v3473, %v3643
          %v3707 = vadd.f32 %v3474, %v3646
          %v3708 = vadd.f32 %v3475, %v3648
          %v3709 = vadd.f32 %v3476, %v3651
          %v3710 = vadd.f32 %v3477, %v3653
          %v3711 = vadd.f32 %v3478, %v3656
          %v3712 = vadd.f32 %v3479, %v3658
          %v3713 = vadd.f32 %v3480, %v3661
          %v3714 = vadd.f32 %v3481, %v3663
          %v3715 = vadd.f32 %v3482, %v3666
          %v3716 = vadd.f32 %v3483, %v3668
          %v3717 = vadd.f32 %v3484, %v3671
          %v3718 = vadd.f32 %v3485, %v3673
          %v3719 = vadd.f32 %v3486, %v3676
          %v3720 = vadd.f32 %v3487, %v3678
          %v3721 = vadd.f32 %v3488, %v3681
          %v3722 = vadd.f32 %v3489, %v3683
          %v3723 = vadd.f32 %v3490, %v3686
          %v3724 = vadd.f32 %v3491, %v3688
          %v3725 = vadd.f32 %v3492, %v3691
          %v3726 = vadd.f32 %v3493, %v3693
          %v3727 = vld [vmem:[%s2826 + $0x8] sm:$0xff]
          %v3728 = vld [vmem:[%s2826 + $0x10] sm:$0xff]
          %v3729 = vld [vmem:[%s2826 + $0x28] sm:$0xff]
          %v3730 = vld [vmem:[%s2826 + $0x30] sm:$0xff]
          %v3731 = vld [vmem:[%s2826 + $0x48] sm:$0xff]
          %v3732 = vld [vmem:[%s2826 + $0x50] sm:$0xff]
          %v3733 = vld [vmem:[%s2826 + $0x68] sm:$0xff]
          %v3734 = vld [vmem:[%s2826 + $0x70] sm:$0xff]
          %v3735 = vld [vmem:[%s2826 + $0x88] sm:$0xff]
          %v3736 = vld [vmem:[%s2826 + $0x90] sm:$0xff]
          %v3737 = vld [vmem:[%s2826 + $0xa8] sm:$0xff]
          %v3738 = vld [vmem:[%s2826 + $0xb0] sm:$0xff]
          %v3739 = vld [vmem:[%s2826 + $0xc8] sm:$0xff]
          %v3740 = vld [vmem:[%s2826 + $0xd0] sm:$0xff]
          %v3741 = vld [vmem:[%s2826 + $0xe8] sm:$0xff]
          %v3742 = vld [vmem:[%s2826 + $0xf0] sm:$0xff]
          %v3743 = vld [vmem:[%s2826 + $0x108] sm:$0xff]
          %v3744 = vld [vmem:[%s2826 + $0x110] sm:$0xff]
          %v3745 = vld [vmem:[%s2826 + $0x128] sm:$0xff]
          %v3746 = vld [vmem:[%s2826 + $0x130] sm:$0xff]
          %v3747 = vld [vmem:[%s2826 + $0x148] sm:$0xff]
          %v3748 = vld [vmem:[%s2826 + $0x150] sm:$0xff]
          %v3749 = vld [vmem:[%s2826 + $0x168] sm:$0xff]
          %v3750 = vld [vmem:[%s2826 + $0x170] sm:$0xff]
          %v3751 = vld [vmem:[%s2826 + $0x188] sm:$0xff]
          %v3752 = vld [vmem:[%s2826 + $0x190] sm:$0xff]
          %v3753 = vld [vmem:[%s2826 + $0x1a8] sm:$0xff]
          %v3754 = vld [vmem:[%s2826 + $0x1b0] sm:$0xff]
          %v3755 = vld [vmem:[%s2826 + $0x1c8] sm:$0xff]
          %v3756 = vld [vmem:[%s2826 + $0x1d0] sm:$0xff]
          %v3757 = vld [vmem:[%s2826 + $0x1e8] sm:$0xff]
          %v3758 = vld [vmem:[%s2826 + $0x1f0] sm:$0xff]
          %v3759 = vpack.c.bf16 %v3728, %v3727
          %v3760 = vpack.c.bf16 %v3730, %v3729
          %v3761 = vpack.c.bf16 %v3732, %v3731
          %v3762 = vpack.c.bf16 %v3734, %v3733
          %v3763 = vpack.c.bf16 %v3736, %v3735
          %v3764 = vpack.c.bf16 %v3738, %v3737
          %v3765 = vpack.c.bf16 %v3740, %v3739
          %v3766 = vpack.c.bf16 %v3742, %v3741
          %v3767 = vpack.c.bf16 %v3744, %v3743
          %v3768 = vpack.c.bf16 %v3746, %v3745
          %v3769 = vpack.c.bf16 %v3748, %v3747
          %v3770 = vpack.c.bf16 %v3750, %v3749
          %v3771 = vpack.c.bf16 %v3752, %v3751
          %v3772 = vpack.c.bf16 %v3754, %v3753
          %v3773 = vpack.c.bf16 %v3756, %v3755
          %v3774 = vpack.c.bf16 %v3758, %v3757
          %v3775 = vld [vmem:[%s517 + $0x40] sm:$0xf]
          %v3776 = vld [vmem:[%s517 + $0x44] sm:$0xf]
          %v3777 = vld [vmem:[%s517 + $0x48] sm:$0xf]
          %v3778 = vld [vmem:[%s517 + $0x4c] sm:$0xf]
          %v3783 = vunpack.c.l.b16 %v3775
          %v3784 = vunpack.c.l.b16 %v3776
          %v3785 = vunpack.c.l.b16 %v3777
          %v3786 = vunpack.c.l.b16 %v3778
          %v3787 = vpack.c.b16 %v3784, %v3783
          %v3788 = vpack.c.b16 %v3786, %v3785
          %v3792 = vsel %vm838, %v3759, 0
          %v3795 = vsel %vm838, %v3760, 0
          %v3798 = vsel %vm838, %v3761, 0
          %v3801 = vsel %vm838, %v3762, 0
          %v3804 = vsel %vm838, %v3763, 0
          %v3807 = vsel %vm838, %v3764, 0
          %v3810 = vsel %vm838, %v3765, 0
          %v3813 = vsel %vm838, %v3766, 0
          %v3816 = vsel %vm838, %v3767, 0
          %v3819 = vsel %vm838, %v3768, 0
          %v3822 = vsel %vm838, %v3769, 0
          %v3825 = vsel %vm838, %v3770, 0
          %v3828 = vsel %vm838, %v3771, 0
          %v3831 = vsel %vm838, %v3772, 0
          %v3834 = vsel %vm838, %v3773, 0
          %v3837 = vsel %vm838, %v3774, 0
          %3839 = vmatpush.bf16.msra.mxu0 0
          %3840 = vmatpush.bf16.msra.mxu0 0
          %3841 = vmatpush.bf16.msra.mxu0 0
          %3842 = vmatpush.bf16.msra.mxu0 0
          %3843 = vmatpush.bf16.msra.mxu0 0
          %3844 = vmatpush.bf16.msra.mxu0 0
          %3845 = vmatpush.bf16.msra.mxu0 %v3788
          %3846 = vmatpush.bf16.msra.mxu0 %v3787
          %3847 = vmatmul.bf16.gmra.mxu0 %v3792
          %v3848 = vpop.f32.mrf.mxu0
          %v3849 = vadd.f32 0.0, %v3848
          %v3850 = vpop.f32.mrf.mxu0
          %v3851 = vadd.f32 0.0, %v3850
          %3852 = vmatmul.bf16.gmra.mxu0 %v3795
          %v3853 = vpop.f32.mrf.mxu0
          %v3854 = vadd.f32 0.0, %v3853
          %v3855 = vpop.f32.mrf.mxu0
          %v3856 = vadd.f32 0.0, %v3855
          %3857 = vmatmul.bf16.gmra.mxu0 %v3798
          %v3858 = vpop.f32.mrf.mxu0
          %v3859 = vadd.f32 0.0, %v3858
          %v3860 = vpop.f32.mrf.mxu0
          %v3861 = vadd.f32 0.0, %v3860
          %3862 = vmatmul.bf16.gmra.mxu0 %v3801
          %v3863 = vpop.f32.mrf.mxu0
          %v3864 = vadd.f32 0.0, %v3863
          %v3865 = vpop.f32.mrf.mxu0
          %v3866 = vadd.f32 0.0, %v3865
          %3867 = vmatmul.bf16.gmra.mxu0 %v3804
          %v3868 = vpop.f32.mrf.mxu0
          %v3869 = vadd.f32 0.0, %v3868
          %v3870 = vpop.f32.mrf.mxu0
          %v3871 = vadd.f32 0.0, %v3870
          %3872 = vmatmul.bf16.gmra.mxu0 %v3807
          %v3873 = vpop.f32.mrf.mxu0
          %v3874 = vadd.f32 0.0, %v3873
          %v3875 = vpop.f32.mrf.mxu0
          %v3876 = vadd.f32 0.0, %v3875
          %3877 = vmatmul.bf16.gmra.mxu0 %v3810
          %v3878 = vpop.f32.mrf.mxu0
          %v3879 = vadd.f32 0.0, %v3878
          %v3880 = vpop.f32.mrf.mxu0
          %v3881 = vadd.f32 0.0, %v3880
          %3882 = vmatmul.bf16.gmra.mxu0 %v3813
          %v3883 = vpop.f32.mrf.mxu0
          %v3884 = vadd.f32 0.0, %v3883
          %v3885 = vpop.f32.mrf.mxu0
          %v3886 = vadd.f32 0.0, %v3885
          %3887 = vmatmul.bf16.gmra.mxu0 %v3816
          %v3888 = vpop.f32.mrf.mxu0
          %v3889 = vadd.f32 0.0, %v3888
          %v3890 = vpop.f32.mrf.mxu0
          %v3891 = vadd.f32 0.0, %v3890
          %3892 = vmatmul.bf16.gmra.mxu0 %v3819
          %v3893 = vpop.f32.mrf.mxu0
          %v3894 = vadd.f32 0.0, %v3893
          %v3895 = vpop.f32.mrf.mxu0
          %v3896 = vadd.f32 0.0, %v3895
          %3897 = vmatmul.bf16.gmra.mxu0 %v3822
          %v3898 = vpop.f32.mrf.mxu0
          %v3899 = vadd.f32 0.0, %v3898
          %v3900 = vpop.f32.mrf.mxu0
          %v3901 = vadd.f32 0.0, %v3900
          %3902 = vmatmul.bf16.gmra.mxu0 %v3825
          %v3903 = vpop.f32.mrf.mxu0
          %v3904 = vadd.f32 0.0, %v3903
          %v3905 = vpop.f32.mrf.mxu0
          %v3906 = vadd.f32 0.0, %v3905
          %3907 = vmatmul.bf16.gmra.mxu0 %v3828
          %v3908 = vpop.f32.mrf.mxu0
          %v3909 = vadd.f32 0.0, %v3908
          %v3910 = vpop.f32.mrf.mxu0
          %v3911 = vadd.f32 0.0, %v3910
          %3912 = vmatmul.bf16.gmra.mxu0 %v3831
          %v3913 = vpop.f32.mrf.mxu0
          %v3914 = vadd.f32 0.0, %v3913
          %v3915 = vpop.f32.mrf.mxu0
          %v3916 = vadd.f32 0.0, %v3915
          %3917 = vmatmul.bf16.gmra.mxu0 %v3834
          %v3918 = vpop.f32.mrf.mxu0
          %v3919 = vadd.f32 0.0, %v3918
          %v3920 = vpop.f32.mrf.mxu0
          %v3921 = vadd.f32 0.0, %v3920
          %3922 = vmatmul.bf16.gmra.mxu0 %v3837
          %v3923 = vpop.f32.mrf.mxu0
          %v3924 = vadd.f32 0.0, %v3923
          %v3925 = vpop.f32.mrf.mxu0
          %v3926 = vadd.f32 0.0, %v3925
          %3927 = vdwg.mxu0
          %v3928 = vadd.f32 %v3695, %v3849
          %v3929 = vadd.f32 %v3696, %v3851
          %v3930 = vadd.f32 %v3697, %v3854
          %v3931 = vadd.f32 %v3698, %v3856
          %v3932 = vadd.f32 %v3699, %v3859
          %v3933 = vadd.f32 %v3700, %v3861
          %v3934 = vadd.f32 %v3701, %v3864
          %v3935 = vadd.f32 %v3702, %v3866
          %v3936 = vadd.f32 %v3703, %v3869
          %v3937 = vadd.f32 %v3704, %v3871
          %v3938 = vadd.f32 %v3705, %v3874
          %v3939 = vadd.f32 %v3706, %v3876
          %v3940 = vadd.f32 %v3707, %v3879
          %v3941 = vadd.f32 %v3708, %v3881
          %v3942 = vadd.f32 %v3709, %v3884
          %v3943 = vadd.f32 %v3710, %v3886
          %v3944 = vadd.f32 %v3711, %v3889
          %v3945 = vadd.f32 %v3712, %v3891
          %v3946 = vadd.f32 %v3713, %v3894
          %v3947 = vadd.f32 %v3714, %v3896
          %v3948 = vadd.f32 %v3715, %v3899
          %v3949 = vadd.f32 %v3716, %v3901
          %v3950 = vadd.f32 %v3717, %v3904
          %v3951 = vadd.f32 %v3718, %v3906
          %v3952 = vadd.f32 %v3719, %v3909
          %v3953 = vadd.f32 %v3720, %v3911
          %v3954 = vadd.f32 %v3721, %v3914
          %v3955 = vadd.f32 %v3722, %v3916
          %v3956 = vadd.f32 %v3723, %v3919
          %v3957 = vadd.f32 %v3724, %v3921
          %v3958 = vadd.f32 %v3725, %v3924
          %v3959 = vadd.f32 %v3726, %v3926
          %v3960 = vld [vmem:[%s2826 + $0x9] sm:$0xff]
          %v3961 = vld [vmem:[%s2826 + $0x11] sm:$0xff]
          %v3962 = vld [vmem:[%s2826 + $0x29] sm:$0xff]
          %v3963 = vld [vmem:[%s2826 + $0x31] sm:$0xff]
          %v3964 = vld [vmem:[%s2826 + $0x49] sm:$0xff]
          %v3965 = vld [vmem:[%s2826 + $0x51] sm:$0xff]
          %v3966 = vld [vmem:[%s2826 + $0x69] sm:$0xff]
          %v3967 = vld [vmem:[%s2826 + $0x71] sm:$0xff]
          %v3968 = vld [vmem:[%s2826 + $0x89] sm:$0xff]
          %v3969 = vld [vmem:[%s2826 + $0x91] sm:$0xff]
          %v3970 = vld [vmem:[%s2826 + $0xa9] sm:$0xff]
          %v3971 = vld [vmem:[%s2826 + $0xb1] sm:$0xff]
          %v3972 = vld [vmem:[%s2826 + $0xc9] sm:$0xff]
          %v3973 = vld [vmem:[%s2826 + $0xd1] sm:$0xff]
          %v3974 = vld [vmem:[%s2826 + $0xe9] sm:$0xff]
          %v3975 = vld [vmem:[%s2826 + $0xf1] sm:$0xff]
          %v3976 = vld [vmem:[%s2826 + $0x109] sm:$0xff]
          %v3977 = vld [vmem:[%s2826 + $0x111] sm:$0xff]
          %v3978 = vld [vmem:[%s2826 + $0x129] sm:$0xff]
          %v3979 = vld [vmem:[%s2826 + $0x131] sm:$0xff]
          %v3980 = vld [vmem:[%s2826 + $0x149] sm:$0xff]
          %v3981 = vld [vmem:[%s2826 + $0x151] sm:$0xff]
          %v3982 = vld [vmem:[%s2826 + $0x169] sm:$0xff]
          %v3983 = vld [vmem:[%s2826 + $0x171] sm:$0xff]
          %v3984 = vld [vmem:[%s2826 + $0x189] sm:$0xff]
          %v3985 = vld [vmem:[%s2826 + $0x191] sm:$0xff]
          %v3986 = vld [vmem:[%s2826 + $0x1a9] sm:$0xff]
          %v3987 = vld [vmem:[%s2826 + $0x1b1] sm:$0xff]
          %v3988 = vld [vmem:[%s2826 + $0x1c9] sm:$0xff]
          %v3989 = vld [vmem:[%s2826 + $0x1d1] sm:$0xff]
          %v3990 = vld [vmem:[%s2826 + $0x1e9] sm:$0xff]
          %v3991 = vld [vmem:[%s2826 + $0x1f1] sm:$0xff]
          %v3992 = vpack.c.bf16 %v3961, %v3960
          %v3993 = vpack.c.bf16 %v3963, %v3962
          %v3994 = vpack.c.bf16 %v3965, %v3964
          %v3995 = vpack.c.bf16 %v3967, %v3966
          %v3996 = vpack.c.bf16 %v3969, %v3968
          %v3997 = vpack.c.bf16 %v3971, %v3970
          %v3998 = vpack.c.bf16 %v3973, %v3972
          %v3999 = vpack.c.bf16 %v3975, %v3974
          %v4000 = vpack.c.bf16 %v3977, %v3976
          %v4001 = vpack.c.bf16 %v3979, %v3978
          %v4002 = vpack.c.bf16 %v3981, %v3980
          %v4003 = vpack.c.bf16 %v3983, %v3982
          %v4004 = vpack.c.bf16 %v3985, %v3984
          %v4005 = vpack.c.bf16 %v3987, %v3986
          %v4006 = vpack.c.bf16 %v3989, %v3988
          %v4007 = vpack.c.bf16 %v3991, %v3990
          %v4008 = vld [vmem:[%s517 + $0x50] sm:$0xf]
          %v4009 = vld [vmem:[%s517 + $0x54] sm:$0xf]
          %v4010 = vld [vmem:[%s517 + $0x58] sm:$0xf]
          %v4011 = vld [vmem:[%s517 + $0x5c] sm:$0xf]
          %v4016 = vunpack.c.l.b16 %v4008
          %v4017 = vunpack.c.l.b16 %v4009
          %v4018 = vunpack.c.l.b16 %v4010
          %v4019 = vunpack.c.l.b16 %v4011
          %v4020 = vpack.c.b16 %v4017, %v4016
          %v4021 = vpack.c.b16 %v4019, %v4018
          %v4025 = vsel %vm838, %v3992, 0
          %v4028 = vsel %vm838, %v3993, 0
          %v4031 = vsel %vm838, %v3994, 0
          %v4034 = vsel %vm838, %v3995, 0
          %v4037 = vsel %vm838, %v3996, 0
          %v4040 = vsel %vm838, %v3997, 0
          %v4043 = vsel %vm838, %v3998, 0
          %v4046 = vsel %vm838, %v3999, 0
          %v4049 = vsel %vm838, %v4000, 0
          %v4052 = vsel %vm838, %v4001, 0
          %v4055 = vsel %vm838, %v4002, 0
          %v4058 = vsel %vm838, %v4003, 0
          %v4061 = vsel %vm838, %v4004, 0
          %v4064 = vsel %vm838, %v4005, 0
          %v4067 = vsel %vm838, %v4006, 0
          %v4070 = vsel %vm838, %v4007, 0
          %4072 = vmatpush.bf16.msra.mxu0 0
          %4073 = vmatpush.bf16.msra.mxu0 0
          %4074 = vmatpush.bf16.msra.mxu0 0
          %4075 = vmatpush.bf16.msra.mxu0 0
          %4076 = vmatpush.bf16.msra.mxu0 0
          %4077 = vmatpush.bf16.msra.mxu0 0
          %4078 = vmatpush.bf16.msra.mxu0 %v4021
          %4079 = vmatpush.bf16.msra.mxu0 %v4020
          %4080 = vmatmul.bf16.gmra.mxu0 %v4025
          %v4081 = vpop.f32.mrf.mxu0
          %v4082 = vadd.f32 0.0, %v4081
          %v4083 = vpop.f32.mrf.mxu0
          %v4084 = vadd.f32 0.0, %v4083
          %4085 = vmatmul.bf16.gmra.mxu0 %v4028
          %v4086 = vpop.f32.mrf.mxu0
          %v4087 = vadd.f32 0.0, %v4086
          %v4088 = vpop.f32.mrf.mxu0
          %v4089 = vadd.f32 0.0, %v4088
          %4090 = vmatmul.bf16.gmra.mxu0 %v4031
          %v4091 = vpop.f32.mrf.mxu0
          %v4092 = vadd.f32 0.0, %v4091
          %v4093 = vpop.f32.mrf.mxu0
          %v4094 = vadd.f32 0.0, %v4093
          %4095 = vmatmul.bf16.gmra.mxu0 %v4034
          %v4096 = vpop.f32.mrf.mxu0
          %v4097 = vadd.f32 0.0, %v4096
          %v4098 = vpop.f32.mrf.mxu0
          %v4099 = vadd.f32 0.0, %v4098
          %4100 = vmatmul.bf16.gmra.mxu0 %v4037
          %v4101 = vpop.f32.mrf.mxu0
          %v4102 = vadd.f32 0.0, %v4101
          %v4103 = vpop.f32.mrf.mxu0
          %v4104 = vadd.f32 0.0, %v4103
          %4105 = vmatmul.bf16.gmra.mxu0 %v4040
          %v4106 = vpop.f32.mrf.mxu0
          %v4107 = vadd.f32 0.0, %v4106
          %v4108 = vpop.f32.mrf.mxu0
          %v4109 = vadd.f32 0.0, %v4108
          %4110 = vmatmul.bf16.gmra.mxu0 %v4043
          %v4111 = vpop.f32.mrf.mxu0
          %v4112 = vadd.f32 0.0, %v4111
          %v4113 = vpop.f32.mrf.mxu0
          %v4114 = vadd.f32 0.0, %v4113
          %4115 = vmatmul.bf16.gmra.mxu0 %v4046
          %v4116 = vpop.f32.mrf.mxu0
          %v4117 = vadd.f32 0.0, %v4116
          %v4118 = vpop.f32.mrf.mxu0
          %v4119 = vadd.f32 0.0, %v4118
          %4120 = vmatmul.bf16.gmra.mxu0 %v4049
          %v4121 = vpop.f32.mrf.mxu0
          %v4122 = vadd.f32 0.0, %v4121
          %v4123 = vpop.f32.mrf.mxu0
          %v4124 = vadd.f32 0.0, %v4123
          %4125 = vmatmul.bf16.gmra.mxu0 %v4052
          %v4126 = vpop.f32.mrf.mxu0
          %v4127 = vadd.f32 0.0, %v4126
          %v4128 = vpop.f32.mrf.mxu0
          %v4129 = vadd.f32 0.0, %v4128
          %4130 = vmatmul.bf16.gmra.mxu0 %v4055
          %v4131 = vpop.f32.mrf.mxu0
          %v4132 = vadd.f32 0.0, %v4131
          %v4133 = vpop.f32.mrf.mxu0
          %v4134 = vadd.f32 0.0, %v4133
          %4135 = vmatmul.bf16.gmra.mxu0 %v4058
          %v4136 = vpop.f32.mrf.mxu0
          %v4137 = vadd.f32 0.0, %v4136
          %v4138 = vpop.f32.mrf.mxu0
          %v4139 = vadd.f32 0.0, %v4138
          %4140 = vmatmul.bf16.gmra.mxu0 %v4061
          %v4141 = vpop.f32.mrf.mxu0
          %v4142 = vadd.f32 0.0, %v4141
          %v4143 = vpop.f32.mrf.mxu0
          %v4144 = vadd.f32 0.0, %v4143
          %4145 = vmatmul.bf16.gmra.mxu0 %v4064
          %v4146 = vpop.f32.mrf.mxu0
          %v4147 = vadd.f32 0.0, %v4146
          %v4148 = vpop.f32.mrf.mxu0
          %v4149 = vadd.f32 0.0, %v4148
          %4150 = vmatmul.bf16.gmra.mxu0 %v4067
          %v4151 = vpop.f32.mrf.mxu0
          %v4152 = vadd.f32 0.0, %v4151
          %v4153 = vpop.f32.mrf.mxu0
          %v4154 = vadd.f32 0.0, %v4153
          %4155 = vmatmul.bf16.gmra.mxu0 %v4070
          %v4156 = vpop.f32.mrf.mxu0
          %v4157 = vadd.f32 0.0, %v4156
          %v4158 = vpop.f32.mrf.mxu0
          %v4159 = vadd.f32 0.0, %v4158
          %4160 = vdwg.mxu0
          %v4161 = vadd.f32 %v3928, %v4082
          %v4162 = vadd.f32 %v3929, %v4084
          %v4163 = vadd.f32 %v3930, %v4087
          %v4164 = vadd.f32 %v3931, %v4089
          %v4165 = vadd.f32 %v3932, %v4092
          %v4166 = vadd.f32 %v3933, %v4094
          %v4167 = vadd.f32 %v3934, %v4097
          %v4168 = vadd.f32 %v3935, %v4099
          %v4169 = vadd.f32 %v3936, %v4102
          %v4170 = vadd.f32 %v3937, %v4104
          %v4171 = vadd.f32 %v3938, %v4107
          %v4172 = vadd.f32 %v3939, %v4109
          %v4173 = vadd.f32 %v3940, %v4112
          %v4174 = vadd.f32 %v3941, %v4114
          %v4175 = vadd.f32 %v3942, %v4117
          %v4176 = vadd.f32 %v3943, %v4119
          %v4177 = vadd.f32 %v3944, %v4122
          %v4178 = vadd.f32 %v3945, %v4124
          %v4179 = vadd.f32 %v3946, %v4127
          %v4180 = vadd.f32 %v3947, %v4129
          %v4181 = vadd.f32 %v3948, %v4132
          %v4182 = vadd.f32 %v3949, %v4134
          %v4183 = vadd.f32 %v3950, %v4137
          %v4184 = vadd.f32 %v3951, %v4139
          %v4185 = vadd.f32 %v3952, %v4142
          %v4186 = vadd.f32 %v3953, %v4144
          %v4187 = vadd.f32 %v3954, %v4147
          %v4188 = vadd.f32 %v3955, %v4149
          %v4189 = vadd.f32 %v3956, %v4152
          %v4190 = vadd.f32 %v3957, %v4154
          %v4191 = vadd.f32 %v3958, %v4157
          %v4192 = vadd.f32 %v3959, %v4159
          %s4193 = scalar_lea.vmem [#allocation3], 64
          %v4194 = vld [vmem:[%s4193 + $0x7] sm:$0xff]
          %v4195 = vld [vmem:[%s4193 + $0xf] sm:$0xff]
          %v4196 = vld [vmem:[%s4193 + $0x27] sm:$0xff]
          %v4197 = vld [vmem:[%s4193 + $0x2f] sm:$0xff]
          %v4198 = vld [vmem:[%s4193 + $0x47] sm:$0xff]
          %v4199 = vld [vmem:[%s4193 + $0x4f] sm:$0xff]
          %v4200 = vld [vmem:[%s4193 + $0x67] sm:$0xff]
          %v4201 = vld [vmem:[%s4193 + $0x6f] sm:$0xff]
          %v4202 = vld [vmem:[%s4193 + $0x87] sm:$0xff]
          %v4203 = vld [vmem:[%s4193 + $0x8f] sm:$0xff]
          %v4204 = vld [vmem:[%s4193 + $0xa7] sm:$0xff]
          %v4205 = vld [vmem:[%s4193 + $0xaf] sm:$0xff]
          %v4206 = vld [vmem:[%s4193 + $0xc7] sm:$0xff]
          %v4207 = vld [vmem:[%s4193 + $0xcf] sm:$0xff]
          %v4208 = vld [vmem:[%s4193 + $0xe7] sm:$0xff]
          %v4209 = vld [vmem:[%s4193 + $0xef] sm:$0xff]
          %v4210 = vld [vmem:[%s4193 + $0x107] sm:$0xff]
          %v4211 = vld [vmem:[%s4193 + $0x10f] sm:$0xff]
          %v4212 = vld [vmem:[%s4193 + $0x127] sm:$0xff]
          %v4213 = vld [vmem:[%s4193 + $0x12f] sm:$0xff]
          %v4214 = vld [vmem:[%s4193 + $0x147] sm:$0xff]
          %v4215 = vld [vmem:[%s4193 + $0x14f] sm:$0xff]
          %v4216 = vld [vmem:[%s4193 + $0x167] sm:$0xff]
          %v4217 = vld [vmem:[%s4193 + $0x16f] sm:$0xff]
          %v4218 = vld [vmem:[%s4193 + $0x187] sm:$0xff]
          %v4219 = vld [vmem:[%s4193 + $0x18f] sm:$0xff]
          %v4220 = vld [vmem:[%s4193 + $0x1a7] sm:$0xff]
          %v4221 = vld [vmem:[%s4193 + $0x1af] sm:$0xff]
          %v4222 = vld [vmem:[%s4193 + $0x1c7] sm:$0xff]
          %v4223 = vld [vmem:[%s4193 + $0x1cf] sm:$0xff]
          %v4224 = vld [vmem:[%s4193 + $0x1e7] sm:$0xff]
          %v4225 = vld [vmem:[%s4193 + $0x1ef] sm:$0xff]
          %v4226 = vpack.c.bf16 %v4195, %v4194
          %v4227 = vpack.c.bf16 %v4197, %v4196
          %v4228 = vpack.c.bf16 %v4199, %v4198
          %v4229 = vpack.c.bf16 %v4201, %v4200
          %v4230 = vpack.c.bf16 %v4203, %v4202
          %v4231 = vpack.c.bf16 %v4205, %v4204
          %v4232 = vpack.c.bf16 %v4207, %v4206
          %v4233 = vpack.c.bf16 %v4209, %v4208
          %v4234 = vpack.c.bf16 %v4211, %v4210
          %v4235 = vpack.c.bf16 %v4213, %v4212
          %v4236 = vpack.c.bf16 %v4215, %v4214
          %v4237 = vpack.c.bf16 %v4217, %v4216
          %v4238 = vpack.c.bf16 %v4219, %v4218
          %v4239 = vpack.c.bf16 %v4221, %v4220
          %v4240 = vpack.c.bf16 %v4223, %v4222
          %v4241 = vpack.c.bf16 %v4225, %v4224
          %v4242 = vld [vmem:[%s517 + $0x60] sm:$0xf]
          %v4243 = vld [vmem:[%s517 + $0x64] sm:$0xf]
          %v4244 = vld [vmem:[%s517 + $0x68] sm:$0xf]
          %v4245 = vld [vmem:[%s517 + $0x6c] sm:$0xf]
          %v4250 = vunpack.c.l.b16 %v4242
          %v4251 = vunpack.c.l.b16 %v4243
          %v4252 = vunpack.c.l.b16 %v4244
          %v4253 = vunpack.c.l.b16 %v4245
          %v4254 = vpack.c.b16 %v4251, %v4250
          %v4255 = vpack.c.b16 %v4253, %v4252
          %v4259 = vsel %vm838, %v4226, 0
          %v4262 = vsel %vm838, %v4227, 0
          %v4265 = vsel %vm838, %v4228, 0
          %v4268 = vsel %vm838, %v4229, 0
          %v4271 = vsel %vm838, %v4230, 0
          %v4274 = vsel %vm838, %v4231, 0
          %v4277 = vsel %vm838, %v4232, 0
          %v4280 = vsel %vm838, %v4233, 0
          %v4283 = vsel %vm838, %v4234, 0
          %v4286 = vsel %vm838, %v4235, 0
          %v4289 = vsel %vm838, %v4236, 0
          %v4292 = vsel %vm838, %v4237, 0
          %v4295 = vsel %vm838, %v4238, 0
          %v4298 = vsel %vm838, %v4239, 0
          %v4301 = vsel %vm838, %v4240, 0
          %v4304 = vsel %vm838, %v4241, 0
          %4306 = vmatpush.bf16.msra.mxu0 0
          %4307 = vmatpush.bf16.msra.mxu0 0
          %4308 = vmatpush.bf16.msra.mxu0 0
          %4309 = vmatpush.bf16.msra.mxu0 0
          %4310 = vmatpush.bf16.msra.mxu0 0
          %4311 = vmatpush.bf16.msra.mxu0 0
          %4312 = vmatpush.bf16.msra.mxu0 %v4255
          %4313 = vmatpush.bf16.msra.mxu0 %v4254
          %4314 = vmatmul.bf16.gmra.mxu0 %v4259
          %v4315 = vpop.f32.mrf.mxu0
          %v4316 = vadd.f32 0.0, %v4315
          %v4317 = vpop.f32.mrf.mxu0
          %v4318 = vadd.f32 0.0, %v4317
          %4319 = vmatmul.bf16.gmra.mxu0 %v4262
          %v4320 = vpop.f32.mrf.mxu0
          %v4321 = vadd.f32 0.0, %v4320
          %v4322 = vpop.f32.mrf.mxu0
          %v4323 = vadd.f32 0.0, %v4322
          %4324 = vmatmul.bf16.gmra.mxu0 %v4265
          %v4325 = vpop.f32.mrf.mxu0
          %v4326 = vadd.f32 0.0, %v4325
          %v4327 = vpop.f32.mrf.mxu0
          %v4328 = vadd.f32 0.0, %v4327
          %4329 = vmatmul.bf16.gmra.mxu0 %v4268
          %v4330 = vpop.f32.mrf.mxu0
          %v4331 = vadd.f32 0.0, %v4330
          %v4332 = vpop.f32.mrf.mxu0
          %v4333 = vadd.f32 0.0, %v4332
          %4334 = vmatmul.bf16.gmra.mxu0 %v4271
          %v4335 = vpop.f32.mrf.mxu0
          %v4336 = vadd.f32 0.0, %v4335
          %v4337 = vpop.f32.mrf.mxu0
          %v4338 = vadd.f32 0.0, %v4337
          %4339 = vmatmul.bf16.gmra.mxu0 %v4274
          %v4340 = vpop.f32.mrf.mxu0
          %v4341 = vadd.f32 0.0, %v4340
          %v4342 = vpop.f32.mrf.mxu0
          %v4343 = vadd.f32 0.0, %v4342
          %4344 = vmatmul.bf16.gmra.mxu0 %v4277
          %v4345 = vpop.f32.mrf.mxu0
          %v4346 = vadd.f32 0.0, %v4345
          %v4347 = vpop.f32.mrf.mxu0
          %v4348 = vadd.f32 0.0, %v4347
          %4349 = vmatmul.bf16.gmra.mxu0 %v4280
          %v4350 = vpop.f32.mrf.mxu0
          %v4351 = vadd.f32 0.0, %v4350
          %v4352 = vpop.f32.mrf.mxu0
          %v4353 = vadd.f32 0.0, %v4352
          %4354 = vmatmul.bf16.gmra.mxu0 %v4283
          %v4355 = vpop.f32.mrf.mxu0
          %v4356 = vadd.f32 0.0, %v4355
          %v4357 = vpop.f32.mrf.mxu0
          %v4358 = vadd.f32 0.0, %v4357
          %4359 = vmatmul.bf16.gmra.mxu0 %v4286
          %v4360 = vpop.f32.mrf.mxu0
          %v4361 = vadd.f32 0.0, %v4360
          %v4362 = vpop.f32.mrf.mxu0
          %v4363 = vadd.f32 0.0, %v4362
          %4364 = vmatmul.bf16.gmra.mxu0 %v4289
          %v4365 = vpop.f32.mrf.mxu0
          %v4366 = vadd.f32 0.0, %v4365
          %v4367 = vpop.f32.mrf.mxu0
          %v4368 = vadd.f32 0.0, %v4367
          %4369 = vmatmul.bf16.gmra.mxu0 %v4292
          %v4370 = vpop.f32.mrf.mxu0
          %v4371 = vadd.f32 0.0, %v4370
          %v4372 = vpop.f32.mrf.mxu0
          %v4373 = vadd.f32 0.0, %v4372
          %4374 = vmatmul.bf16.gmra.mxu0 %v4295
          %v4375 = vpop.f32.mrf.mxu0
          %v4376 = vadd.f32 0.0, %v4375
          %v4377 = vpop.f32.mrf.mxu0
          %v4378 = vadd.f32 0.0, %v4377
          %4379 = vmatmul.bf16.gmra.mxu0 %v4298
          %v4380 = vpop.f32.mrf.mxu0
          %v4381 = vadd.f32 0.0, %v4380
          %v4382 = vpop.f32.mrf.mxu0
          %v4383 = vadd.f32 0.0, %v4382
          %4384 = vmatmul.bf16.gmra.mxu0 %v4301
          %v4385 = vpop.f32.mrf.mxu0
          %v4386 = vadd.f32 0.0, %v4385
          %v4387 = vpop.f32.mrf.mxu0
          %v4388 = vadd.f32 0.0, %v4387
          %4389 = vmatmul.bf16.gmra.mxu0 %v4304
          %v4390 = vpop.f32.mrf.mxu0
          %v4391 = vadd.f32 0.0, %v4390
          %v4392 = vpop.f32.mrf.mxu0
          %v4393 = vadd.f32 0.0, %v4392
          %4394 = vdwg.mxu0
          %v4395 = vadd.f32 %v4161, %v4316
          %v4396 = vadd.f32 %v4162, %v4318
          %v4397 = vadd.f32 %v4163, %v4321
          %v4398 = vadd.f32 %v4164, %v4323
          %v4399 = vadd.f32 %v4165, %v4326
          %v4400 = vadd.f32 %v4166, %v4328
          %v4401 = vadd.f32 %v4167, %v4331
          %v4402 = vadd.f32 %v4168, %v4333
          %v4403 = vadd.f32 %v4169, %v4336
          %v4404 = vadd.f32 %v4170, %v4338
          %v4405 = vadd.f32 %v4171, %v4341
          %v4406 = vadd.f32 %v4172, %v4343
          %v4407 = vadd.f32 %v4173, %v4346
          %v4408 = vadd.f32 %v4174, %v4348
          %v4409 = vadd.f32 %v4175, %v4351
          %v4410 = vadd.f32 %v4176, %v4353
          %v4411 = vadd.f32 %v4177, %v4356
          %v4412 = vadd.f32 %v4178, %v4358
          %v4413 = vadd.f32 %v4179, %v4361
          %v4414 = vadd.f32 %v4180, %v4363
          %v4415 = vadd.f32 %v4181, %v4366
          %v4416 = vadd.f32 %v4182, %v4368
          %v4417 = vadd.f32 %v4183, %v4371
          %v4418 = vadd.f32 %v4184, %v4373
          %v4419 = vadd.f32 %v4185, %v4376
          %v4420 = vadd.f32 %v4186, %v4378
          %v4421 = vadd.f32 %v4187, %v4381
          %v4422 = vadd.f32 %v4188, %v4383
          %v4423 = vadd.f32 %v4189, %v4386
          %v4424 = vadd.f32 %v4190, %v4388
          %v4425 = vadd.f32 %v4191, %v4391
          %v4426 = vadd.f32 %v4192, %v4393
          %v4427 = vld [vmem:[%s4193 + $0x8] sm:$0xff]
          %v4428 = vld [vmem:[%s4193 + $0x10] sm:$0xff]
          %v4429 = vld [vmem:[%s4193 + $0x28] sm:$0xff]
          %v4430 = vld [vmem:[%s4193 + $0x30] sm:$0xff]
          %v4431 = vld [vmem:[%s4193 + $0x48] sm:$0xff]
          %v4432 = vld [vmem:[%s4193 + $0x50] sm:$0xff]
          %v4433 = vld [vmem:[%s4193 + $0x68] sm:$0xff]
          %v4434 = vld [vmem:[%s4193 + $0x70] sm:$0xff]
          %v4435 = vld [vmem:[%s4193 + $0x88] sm:$0xff]
          %v4436 = vld [vmem:[%s4193 + $0x90] sm:$0xff]
          %v4437 = vld [vmem:[%s4193 + $0xa8] sm:$0xff]
          %v4438 = vld [vmem:[%s4193 + $0xb0] sm:$0xff]
          %v4439 = vld [vmem:[%s4193 + $0xc8] sm:$0xff]
          %v4440 = vld [vmem:[%s4193 + $0xd0] sm:$0xff]
          %v4441 = vld [vmem:[%s4193 + $0xe8] sm:$0xff]
          %v4442 = vld [vmem:[%s4193 + $0xf0] sm:$0xff]
          %v4443 = vld [vmem:[%s4193 + $0x108] sm:$0xff]
          %v4444 = vld [vmem:[%s4193 + $0x110] sm:$0xff]
          %v4445 = vld [vmem:[%s4193 + $0x128] sm:$0xff]
          %v4446 = vld [vmem:[%s4193 + $0x130] sm:$0xff]
          %v4447 = vld [vmem:[%s4193 + $0x148] sm:$0xff]
          %v4448 = vld [vmem:[%s4193 + $0x150] sm:$0xff]
          %v4449 = vld [vmem:[%s4193 + $0x168] sm:$0xff]
          %v4450 = vld [vmem:[%s4193 + $0x170] sm:$0xff]
          %v4451 = vld [vmem:[%s4193 + $0x188] sm:$0xff]
          %v4452 = vld [vmem:[%s4193 + $0x190] sm:$0xff]
          %v4453 = vld [vmem:[%s4193 + $0x1a8] sm:$0xff]
          %v4454 = vld [vmem:[%s4193 + $0x1b0] sm:$0xff]
          %v4455 = vld [vmem:[%s4193 + $0x1c8] sm:$0xff]
          %v4456 = vld [vmem:[%s4193 + $0x1d0] sm:$0xff]
          %v4457 = vld [vmem:[%s4193 + $0x1e8] sm:$0xff]
          %v4458 = vld [vmem:[%s4193 + $0x1f0] sm:$0xff]
          %v4459 = vpack.c.bf16 %v4428, %v4427
          %v4460 = vpack.c.bf16 %v4430, %v4429
          %v4461 = vpack.c.bf16 %v4432, %v4431
          %v4462 = vpack.c.bf16 %v4434, %v4433
          %v4463 = vpack.c.bf16 %v4436, %v4435
          %v4464 = vpack.c.bf16 %v4438, %v4437
          %v4465 = vpack.c.bf16 %v4440, %v4439
          %v4466 = vpack.c.bf16 %v4442, %v4441
          %v4467 = vpack.c.bf16 %v4444, %v4443
          %v4468 = vpack.c.bf16 %v4446, %v4445
          %v4469 = vpack.c.bf16 %v4448, %v4447
          %v4470 = vpack.c.bf16 %v4450, %v4449
          %v4471 = vpack.c.bf16 %v4452, %v4451
          %v4472 = vpack.c.bf16 %v4454, %v4453
          %v4473 = vpack.c.bf16 %v4456, %v4455
          %v4474 = vpack.c.bf16 %v4458, %v4457
          %v4475 = vld [vmem:[%s517 + $0x70] sm:$0xf]
          %v4476 = vld [vmem:[%s517 + $0x74] sm:$0xf]
          %v4477 = vld [vmem:[%s517 + $0x78] sm:$0xf]
          %v4478 = vld [vmem:[%s517 + $0x7c] sm:$0xf]
          %v4483 = vunpack.c.l.b16 %v4475
          %v4484 = vunpack.c.l.b16 %v4476
          %v4485 = vunpack.c.l.b16 %v4477
          %v4486 = vunpack.c.l.b16 %v4478
          %v4487 = vpack.c.b16 %v4484, %v4483
          %v4488 = vpack.c.b16 %v4486, %v4485
          %v4492 = vsel %vm838, %v4459, 0
          %v4495 = vsel %vm838, %v4460, 0
          %v4498 = vsel %vm838, %v4461, 0
          %v4501 = vsel %vm838, %v4462, 0
          %v4504 = vsel %vm838, %v4463, 0
          %v4507 = vsel %vm838, %v4464, 0
          %v4510 = vsel %vm838, %v4465, 0
          %v4513 = vsel %vm838, %v4466, 0
          %v4516 = vsel %vm838, %v4467, 0
          %v4519 = vsel %vm838, %v4468, 0
          %v4522 = vsel %vm838, %v4469, 0
          %v4525 = vsel %vm838, %v4470, 0
          %v4528 = vsel %vm838, %v4471, 0
          %v4531 = vsel %vm838, %v4472, 0
          %v4534 = vsel %vm838, %v4473, 0
          %v4537 = vsel %vm838, %v4474, 0
          %4539 = vmatpush.bf16.msra.mxu0 0
          %4540 = vmatpush.bf16.msra.mxu0 0
          %4541 = vmatpush.bf16.msra.mxu0 0
          %4542 = vmatpush.bf16.msra.mxu0 0
          %4543 = vmatpush.bf16.msra.mxu0 0
          %4544 = vmatpush.bf16.msra.mxu0 0
          %4545 = vmatpush.bf16.msra.mxu0 %v4488
          %4546 = vmatpush.bf16.msra.mxu0 %v4487
          %4547 = vmatmul.bf16.gmra.mxu0 %v4492
          %v4548 = vpop.f32.mrf.mxu0
          %v4549 = vadd.f32 0.0, %v4548
          %v4550 = vpop.f32.mrf.mxu0
          %v4551 = vadd.f32 0.0, %v4550
          %4552 = vmatmul.bf16.gmra.mxu0 %v4495
          %v4553 = vpop.f32.mrf.mxu0
          %v4554 = vadd.f32 0.0, %v4553
          %v4555 = vpop.f32.mrf.mxu0
          %v4556 = vadd.f32 0.0, %v4555
          %4557 = vmatmul.bf16.gmra.mxu0 %v4498
          %v4558 = vpop.f32.mrf.mxu0
          %v4559 = vadd.f32 0.0, %v4558
          %v4560 = vpop.f32.mrf.mxu0
          %v4561 = vadd.f32 0.0, %v4560
          %4562 = vmatmul.bf16.gmra.mxu0 %v4501
          %v4563 = vpop.f32.mrf.mxu0
          %v4564 = vadd.f32 0.0, %v4563
          %v4565 = vpop.f32.mrf.mxu0
          %v4566 = vadd.f32 0.0, %v4565
          %4567 = vmatmul.bf16.gmra.mxu0 %v4504
          %v4568 = vpop.f32.mrf.mxu0
          %v4569 = vadd.f32 0.0, %v4568
          %v4570 = vpop.f32.mrf.mxu0
          %v4571 = vadd.f32 0.0, %v4570
          %4572 = vmatmul.bf16.gmra.mxu0 %v4507
          %v4573 = vpop.f32.mrf.mxu0
          %v4574 = vadd.f32 0.0, %v4573
          %v4575 = vpop.f32.mrf.mxu0
          %v4576 = vadd.f32 0.0, %v4575
          %4577 = vmatmul.bf16.gmra.mxu0 %v4510
          %v4578 = vpop.f32.mrf.mxu0
          %v4579 = vadd.f32 0.0, %v4578
          %v4580 = vpop.f32.mrf.mxu0
          %v4581 = vadd.f32 0.0, %v4580
          %4582 = vmatmul.bf16.gmra.mxu0 %v4513
          %v4583 = vpop.f32.mrf.mxu0
          %v4584 = vadd.f32 0.0, %v4583
          %v4585 = vpop.f32.mrf.mxu0
          %v4586 = vadd.f32 0.0, %v4585
          %4587 = vmatmul.bf16.gmra.mxu0 %v4516
          %v4588 = vpop.f32.mrf.mxu0
          %v4589 = vadd.f32 0.0, %v4588
          %v4590 = vpop.f32.mrf.mxu0
          %v4591 = vadd.f32 0.0, %v4590
          %4592 = vmatmul.bf16.gmra.mxu0 %v4519
          %v4593 = vpop.f32.mrf.mxu0
          %v4594 = vadd.f32 0.0, %v4593
          %v4595 = vpop.f32.mrf.mxu0
          %v4596 = vadd.f32 0.0, %v4595
          %4597 = vmatmul.bf16.gmra.mxu0 %v4522
          %v4598 = vpop.f32.mrf.mxu0
          %v4599 = vadd.f32 0.0, %v4598
          %v4600 = vpop.f32.mrf.mxu0
          %v4601 = vadd.f32 0.0, %v4600
          %4602 = vmatmul.bf16.gmra.mxu0 %v4525
          %v4603 = vpop.f32.mrf.mxu0
          %v4604 = vadd.f32 0.0, %v4603
          %v4605 = vpop.f32.mrf.mxu0
          %v4606 = vadd.f32 0.0, %v4605
          %4607 = vmatmul.bf16.gmra.mxu0 %v4528
          %v4608 = vpop.f32.mrf.mxu0
          %v4609 = vadd.f32 0.0, %v4608
          %v4610 = vpop.f32.mrf.mxu0
          %v4611 = vadd.f32 0.0, %v4610
          %4612 = vmatmul.bf16.gmra.mxu0 %v4531
          %v4613 = vpop.f32.mrf.mxu0
          %v4614 = vadd.f32 0.0, %v4613
          %v4615 = vpop.f32.mrf.mxu0
          %v4616 = vadd.f32 0.0, %v4615
          %4617 = vmatmul.bf16.gmra.mxu0 %v4534
          %v4618 = vpop.f32.mrf.mxu0
          %v4619 = vadd.f32 0.0, %v4618
          %v4620 = vpop.f32.mrf.mxu0
          %v4621 = vadd.f32 0.0, %v4620
          %4622 = vmatmul.bf16.gmra.mxu0 %v4537
          %v4623 = vpop.f32.mrf.mxu0
          %v4624 = vadd.f32 0.0, %v4623
          %v4625 = vpop.f32.mrf.mxu0
          %v4626 = vadd.f32 0.0, %v4625
          %4627 = vdwg.mxu0
          %v4628 = vadd.f32 %v4395, %v4549
          %v4629 = vadd.f32 %v4396, %v4551
          %v4630 = vadd.f32 %v4397, %v4554
          %v4631 = vadd.f32 %v4398, %v4556
          %v4632 = vadd.f32 %v4399, %v4559
          %v4633 = vadd.f32 %v4400, %v4561
          %v4634 = vadd.f32 %v4401, %v4564
          %v4635 = vadd.f32 %v4402, %v4566
          %v4636 = vadd.f32 %v4403, %v4569
          %v4637 = vadd.f32 %v4404, %v4571
          %v4638 = vadd.f32 %v4405, %v4574
          %v4639 = vadd.f32 %v4406, %v4576
          %v4640 = vadd.f32 %v4407, %v4579
          %v4641 = vadd.f32 %v4408, %v4581
          %v4642 = vadd.f32 %v4409, %v4584
          %v4643 = vadd.f32 %v4410, %v4586
          %v4644 = vadd.f32 %v4411, %v4589
          %v4645 = vadd.f32 %v4412, %v4591
          %v4646 = vadd.f32 %v4413, %v4594
          %v4647 = vadd.f32 %v4414, %v4596
          %v4648 = vadd.f32 %v4415, %v4599
          %v4649 = vadd.f32 %v4416, %v4601
          %v4650 = vadd.f32 %v4417, %v4604
          %v4651 = vadd.f32 %v4418, %v4606
          %v4652 = vadd.f32 %v4419, %v4609
          %v4653 = vadd.f32 %v4420, %v4611
          %v4654 = vadd.f32 %v4421, %v4614
          %v4655 = vadd.f32 %v4422, %v4616
          %v4656 = vadd.f32 %v4423, %v4619
          %v4657 = vadd.f32 %v4424, %v4621
          %v4658 = vadd.f32 %v4425, %v4624
          %v4659 = vadd.f32 %v4426, %v4626
          %v4660 = vld [vmem:[%s4193 + $0x9] sm:$0xff]
          %v4661 = vld [vmem:[%s4193 + $0x11] sm:$0xff]
          %v4662 = vld [vmem:[%s4193 + $0x29] sm:$0xff]
          %v4663 = vld [vmem:[%s4193 + $0x31] sm:$0xff]
          %v4664 = vld [vmem:[%s4193 + $0x49] sm:$0xff]
          %v4665 = vld [vmem:[%s4193 + $0x51] sm:$0xff]
          %v4666 = vld [vmem:[%s4193 + $0x69] sm:$0xff]
          %v4667 = vld [vmem:[%s4193 + $0x71] sm:$0xff]
          %v4668 = vld [vmem:[%s4193 + $0x89] sm:$0xff]
          %v4669 = vld [vmem:[%s4193 + $0x91] sm:$0xff]
          %v4670 = vld [vmem:[%s4193 + $0xa9] sm:$0xff]
          %v4671 = vld [vmem:[%s4193 + $0xb1] sm:$0xff]
          %v4672 = vld [vmem:[%s4193 + $0xc9] sm:$0xff]
          %v4673 = vld [vmem:[%s4193 + $0xd1] sm:$0xff]
          %v4674 = vld [vmem:[%s4193 + $0xe9] sm:$0xff]
          %v4675 = vld [vmem:[%s4193 + $0xf1] sm:$0xff]
          %v4676 = vld [vmem:[%s4193 + $0x109] sm:$0xff]
          %v4677 = vld [vmem:[%s4193 + $0x111] sm:$0xff]
          %v4678 = vld [vmem:[%s4193 + $0x129] sm:$0xff]
          %v4679 = vld [vmem:[%s4193 + $0x131] sm:$0xff]
          %v4680 = vld [vmem:[%s4193 + $0x149] sm:$0xff]
          %v4681 = vld [vmem:[%s4193 + $0x151] sm:$0xff]
          %v4682 = vld [vmem:[%s4193 + $0x169] sm:$0xff]
          %v4683 = vld [vmem:[%s4193 + $0x171] sm:$0xff]
          %v4684 = vld [vmem:[%s4193 + $0x189] sm:$0xff]
          %v4685 = vld [vmem:[%s4193 + $0x191] sm:$0xff]
          %v4686 = vld [vmem:[%s4193 + $0x1a9] sm:$0xff]
          %v4687 = vld [vmem:[%s4193 + $0x1b1] sm:$0xff]
          %v4688 = vld [vmem:[%s4193 + $0x1c9] sm:$0xff]
          %v4689 = vld [vmem:[%s4193 + $0x1d1] sm:$0xff]
          %v4690 = vld [vmem:[%s4193 + $0x1e9] sm:$0xff]
          %v4691 = vld [vmem:[%s4193 + $0x1f1] sm:$0xff]
          %v4692 = vpack.c.bf16 %v4661, %v4660
          %v4693 = vpack.c.bf16 %v4663, %v4662
          %v4694 = vpack.c.bf16 %v4665, %v4664
          %v4695 = vpack.c.bf16 %v4667, %v4666
          %v4696 = vpack.c.bf16 %v4669, %v4668
          %v4697 = vpack.c.bf16 %v4671, %v4670
          %v4698 = vpack.c.bf16 %v4673, %v4672
          %v4699 = vpack.c.bf16 %v4675, %v4674
          %v4700 = vpack.c.bf16 %v4677, %v4676
          %v4701 = vpack.c.bf16 %v4679, %v4678
          %v4702 = vpack.c.bf16 %v4681, %v4680
          %v4703 = vpack.c.bf16 %v4683, %v4682
          %v4704 = vpack.c.bf16 %v4685, %v4684
          %v4705 = vpack.c.bf16 %v4687, %v4686
          %v4706 = vpack.c.bf16 %v4689, %v4688
          %v4707 = vpack.c.bf16 %v4691, %v4690
          %v4708 = vld [vmem:[%s517 + $0x80] sm:$0xf]
          %v4709 = vld [vmem:[%s517 + $0x84] sm:$0xf]
          %v4710 = vld [vmem:[%s517 + $0x88] sm:$0xf]
          %v4711 = vld [vmem:[%s517 + $0x8c] sm:$0xf]
          %v4716 = vunpack.c.l.b16 %v4708
          %v4717 = vunpack.c.l.b16 %v4709
          %v4718 = vunpack.c.l.b16 %v4710
          %v4719 = vunpack.c.l.b16 %v4711
          %v4720 = vpack.c.b16 %v4717, %v4716
          %v4721 = vpack.c.b16 %v4719, %v4718
          %v4725 = vsel %vm838, %v4692, 0
          %v4728 = vsel %vm838, %v4693, 0
          %v4731 = vsel %vm838, %v4694, 0
          %v4734 = vsel %vm838, %v4695, 0
          %v4737 = vsel %vm838, %v4696, 0
          %v4740 = vsel %vm838, %v4697, 0
          %v4743 = vsel %vm838, %v4698, 0
          %v4746 = vsel %vm838, %v4699, 0
          %v4749 = vsel %vm838, %v4700, 0
          %v4752 = vsel %vm838, %v4701, 0
          %v4755 = vsel %vm838, %v4702, 0
          %v4758 = vsel %vm838, %v4703, 0
          %v4761 = vsel %vm838, %v4704, 0
          %v4764 = vsel %vm838, %v4705, 0
          %v4767 = vsel %vm838, %v4706, 0
          %v4770 = vsel %vm838, %v4707, 0
          %4772 = vmatpush.bf16.msra.mxu0 0
          %4773 = vmatpush.bf16.msra.mxu0 0
          %4774 = vmatpush.bf16.msra.mxu0 0
          %4775 = vmatpush.bf16.msra.mxu0 0
          %4776 = vmatpush.bf16.msra.mxu0 0
          %4777 = vmatpush.bf16.msra.mxu0 0
          %4778 = vmatpush.bf16.msra.mxu0 %v4721
          %4779 = vmatpush.bf16.msra.mxu0 %v4720
          %4780 = vmatmul.bf16.gmra.mxu0 %v4725
          %v4781 = vpop.f32.mrf.mxu0
          %v4782 = vadd.f32 0.0, %v4781
          %v4783 = vpop.f32.mrf.mxu0
          %v4784 = vadd.f32 0.0, %v4783
          %4785 = vmatmul.bf16.gmra.mxu0 %v4728
          %v4786 = vpop.f32.mrf.mxu0
          %v4787 = vadd.f32 0.0, %v4786
          %v4788 = vpop.f32.mrf.mxu0
          %v4789 = vadd.f32 0.0, %v4788
          %4790 = vmatmul.bf16.gmra.mxu0 %v4731
          %v4791 = vpop.f32.mrf.mxu0
          %v4792 = vadd.f32 0.0, %v4791
          %v4793 = vpop.f32.mrf.mxu0
          %v4794 = vadd.f32 0.0, %v4793
          %4795 = vmatmul.bf16.gmra.mxu0 %v4734
          %v4796 = vpop.f32.mrf.mxu0
          %v4797 = vadd.f32 0.0, %v4796
          %v4798 = vpop.f32.mrf.mxu0
          %v4799 = vadd.f32 0.0, %v4798
          %4800 = vmatmul.bf16.gmra.mxu0 %v4737
          %v4801 = vpop.f32.mrf.mxu0
          %v4802 = vadd.f32 0.0, %v4801
          %v4803 = vpop.f32.mrf.mxu0
          %v4804 = vadd.f32 0.0, %v4803
          %4805 = vmatmul.bf16.gmra.mxu0 %v4740
          %v4806 = vpop.f32.mrf.mxu0
          %v4807 = vadd.f32 0.0, %v4806
          %v4808 = vpop.f32.mrf.mxu0
          %v4809 = vadd.f32 0.0, %v4808
          %4810 = vmatmul.bf16.gmra.mxu0 %v4743
          %v4811 = vpop.f32.mrf.mxu0
          %v4812 = vadd.f32 0.0, %v4811
          %v4813 = vpop.f32.mrf.mxu0
          %v4814 = vadd.f32 0.0, %v4813
          %4815 = vmatmul.bf16.gmra.mxu0 %v4746
          %v4816 = vpop.f32.mrf.mxu0
          %v4817 = vadd.f32 0.0, %v4816
          %v4818 = vpop.f32.mrf.mxu0
          %v4819 = vadd.f32 0.0, %v4818
          %4820 = vmatmul.bf16.gmra.mxu0 %v4749
          %v4821 = vpop.f32.mrf.mxu0
          %v4822 = vadd.f32 0.0, %v4821
          %v4823 = vpop.f32.mrf.mxu0
          %v4824 = vadd.f32 0.0, %v4823
          %4825 = vmatmul.bf16.gmra.mxu0 %v4752
          %v4826 = vpop.f32.mrf.mxu0
          %v4827 = vadd.f32 0.0, %v4826
          %v4828 = vpop.f32.mrf.mxu0
          %v4829 = vadd.f32 0.0, %v4828
          %4830 = vmatmul.bf16.gmra.mxu0 %v4755
          %v4831 = vpop.f32.mrf.mxu0
          %v4832 = vadd.f32 0.0, %v4831
          %v4833 = vpop.f32.mrf.mxu0
          %v4834 = vadd.f32 0.0, %v4833
          %4835 = vmatmul.bf16.gmra.mxu0 %v4758
          %v4836 = vpop.f32.mrf.mxu0
          %v4837 = vadd.f32 0.0, %v4836
          %v4838 = vpop.f32.mrf.mxu0
          %v4839 = vadd.f32 0.0, %v4838
          %4840 = vmatmul.bf16.gmra.mxu0 %v4761
          %v4841 = vpop.f32.mrf.mxu0
          %v4842 = vadd.f32 0.0, %v4841
          %v4843 = vpop.f32.mrf.mxu0
          %v4844 = vadd.f32 0.0, %v4843
          %4845 = vmatmul.bf16.gmra.mxu0 %v4764
          %v4846 = vpop.f32.mrf.mxu0
          %v4847 = vadd.f32 0.0, %v4846
          %v4848 = vpop.f32.mrf.mxu0
          %v4849 = vadd.f32 0.0, %v4848
          %4850 = vmatmul.bf16.gmra.mxu0 %v4767
          %v4851 = vpop.f32.mrf.mxu0
          %v4852 = vadd.f32 0.0, %v4851
          %v4853 = vpop.f32.mrf.mxu0
          %v4854 = vadd.f32 0.0, %v4853
          %4855 = vmatmul.bf16.gmra.mxu0 %v4770
          %v4856 = vpop.f32.mrf.mxu0
          %v4857 = vadd.f32 0.0, %v4856
          %v4858 = vpop.f32.mrf.mxu0
          %v4859 = vadd.f32 0.0, %v4858
          %4860 = vdwg.mxu0
          %v4861 = vadd.f32 %v4628, %v4782
          %v4862 = vadd.f32 %v4629, %v4784
          %v4863 = vadd.f32 %v4630, %v4787
          %v4864 = vadd.f32 %v4631, %v4789
          %v4865 = vadd.f32 %v4632, %v4792
          %v4866 = vadd.f32 %v4633, %v4794
          %v4867 = vadd.f32 %v4634, %v4797
          %v4868 = vadd.f32 %v4635, %v4799
          %v4869 = vadd.f32 %v4636, %v4802
          %v4870 = vadd.f32 %v4637, %v4804
          %v4871 = vadd.f32 %v4638, %v4807
          %v4872 = vadd.f32 %v4639, %v4809
          %v4873 = vadd.f32 %v4640, %v4812
          %v4874 = vadd.f32 %v4641, %v4814
          %v4875 = vadd.f32 %v4642, %v4817
          %v4876 = vadd.f32 %v4643, %v4819
          %v4877 = vadd.f32 %v4644, %v4822
          %v4878 = vadd.f32 %v4645, %v4824
          %v4879 = vadd.f32 %v4646, %v4827
          %v4880 = vadd.f32 %v4647, %v4829
          %v4881 = vadd.f32 %v4648, %v4832
          %v4882 = vadd.f32 %v4649, %v4834
          %v4883 = vadd.f32 %v4650, %v4837
          %v4884 = vadd.f32 %v4651, %v4839
          %v4885 = vadd.f32 %v4652, %v4842
          %v4886 = vadd.f32 %v4653, %v4844
          %v4887 = vadd.f32 %v4654, %v4847
          %v4888 = vadd.f32 %v4655, %v4849
          %v4889 = vadd.f32 %v4656, %v4852
          %v4890 = vadd.f32 %v4657, %v4854
          %v4891 = vadd.f32 %v4658, %v4857
          %v4892 = vadd.f32 %v4659, %v4859
          %v4893 = vld [vmem:[%s524] sm:$0x1]
          %v4895 = vperm.slane %v4893, 0
          %v4897 = vadd.f32 %v4861, %v4895
          %v4898 = vadd.f32 %v4862, %v4895
          %v4899 = vadd.f32 %v4863, %v4895
          %v4900 = vadd.f32 %v4864, %v4895
          %v4901 = vadd.f32 %v4865, %v4895
          %v4902 = vadd.f32 %v4866, %v4895
          %v4903 = vadd.f32 %v4867, %v4895
          %v4904 = vadd.f32 %v4868, %v4895
          %v4905 = vadd.f32 %v4869, %v4895
          %v4906 = vadd.f32 %v4870, %v4895
          %v4907 = vadd.f32 %v4871, %v4895
          %v4908 = vadd.f32 %v4872, %v4895
          %v4909 = vadd.f32 %v4873, %v4895
          %v4910 = vadd.f32 %v4874, %v4895
          %v4911 = vadd.f32 %v4875, %v4895
          %v4912 = vadd.f32 %v4876, %v4895
          %v4913 = vadd.f32 %v4877, %v4895
          %v4914 = vadd.f32 %v4878, %v4895
          %v4915 = vadd.f32 %v4879, %v4895
          %v4916 = vadd.f32 %v4880, %v4895
          %v4917 = vadd.f32 %v4881, %v4895
          %v4918 = vadd.f32 %v4882, %v4895
          %v4919 = vadd.f32 %v4883, %v4895
          %v4920 = vadd.f32 %v4884, %v4895
          %v4921 = vadd.f32 %v4885, %v4895
          %v4922 = vadd.f32 %v4886, %v4895
          %v4923 = vadd.f32 %v4887, %v4895
          %v4924 = vadd.f32 %v4888, %v4895
          %v4925 = vadd.f32 %v4889, %v4895
          %v4926 = vadd.f32 %v4890, %v4895
          %v4927 = vadd.f32 %v4891, %v4895
          %v4928 = vadd.f32 %v4892, %v4895
          %v4929 = vsel %vm838, %v4897, 0.0
          %v4930 = vsel %vm838, %v4898, 0.0
          %v4931 = vadd.f32 %v4929, %v4930
          %v4932 = vsel %vm838, %v4899, 0.0
          %v4933 = vadd.f32 %v4931, %v4932
          %v4934 = vsel %vm838, %v4900, 0.0
          %v4935 = vadd.f32 %v4933, %v4934
          %v4936 = vsel %vm838, %v4901, 0.0
          %v4937 = vadd.f32 %v4935, %v4936
          %v4938 = vsel %vm838, %v4902, 0.0
          %v4939 = vadd.f32 %v4937, %v4938
          %v4940 = vsel %vm838, %v4903, 0.0
          %v4941 = vadd.f32 %v4939, %v4940
          %v4942 = vsel %vm838, %v4904, 0.0
          %v4943 = vadd.f32 %v4941, %v4942
          %v4944 = vsel %vm838, %v4905, 0.0
          %v4945 = vadd.f32 %v4943, %v4944
          %v4946 = vsel %vm838, %v4906, 0.0
          %v4947 = vadd.f32 %v4945, %v4946
          %v4948 = vsel %vm838, %v4907, 0.0
          %v4949 = vadd.f32 %v4947, %v4948
          %v4950 = vsel %vm838, %v4908, 0.0
          %v4951 = vadd.f32 %v4949, %v4950
          %v4952 = vsel %vm838, %v4909, 0.0
          %v4953 = vadd.f32 %v4951, %v4952
          %v4954 = vsel %vm838, %v4910, 0.0
          %v4955 = vadd.f32 %v4953, %v4954
          %v4956 = vsel %vm838, %v4911, 0.0
          %v4957 = vadd.f32 %v4955, %v4956
          %v4958 = vsel %vm838, %v4912, 0.0
          %v4959 = vadd.f32 %v4957, %v4958
          %v4960 = vsel %vm838, %v4913, 0.0
          %v4961 = vadd.f32 %v4959, %v4960
          %v4962 = vsel %vm838, %v4914, 0.0
          %v4963 = vadd.f32 %v4961, %v4962
          %v4964 = vsel %vm838, %v4915, 0.0
          %v4965 = vadd.f32 %v4963, %v4964
          %v4966 = vsel %vm838, %v4916, 0.0
          %v4967 = vadd.f32 %v4965, %v4966
          %v4968 = vsel %vm838, %v4917, 0.0
          %v4969 = vadd.f32 %v4967, %v4968
          %v4970 = vsel %vm838, %v4918, 0.0
          %v4971 = vadd.f32 %v4969, %v4970
          %v4972 = vsel %vm838, %v4919, 0.0
          %v4973 = vadd.f32 %v4971, %v4972
          %v4974 = vsel %vm838, %v4920, 0.0
          %v4975 = vadd.f32 %v4973, %v4974
          %v4976 = vsel %vm838, %v4921, 0.0
          %v4977 = vadd.f32 %v4975, %v4976
          %v4978 = vsel %vm838, %v4922, 0.0
          %v4979 = vadd.f32 %v4977, %v4978
          %v4980 = vsel %vm838, %v4923, 0.0
          %v4981 = vadd.f32 %v4979, %v4980
          %v4982 = vsel %vm838, %v4924, 0.0
          %v4983 = vadd.f32 %v4981, %v4982
          %v4984 = vsel %vm838, %v4925, 0.0
          %v4985 = vadd.f32 %v4983, %v4984
          %v4986 = vsel %vm838, %v4926, 0.0
          %v4987 = vadd.f32 %v4985, %v4986
          %v4988 = vsel %vm838, %v4927, 0.0
          %v4989 = vadd.f32 %v4987, %v4988
          %v4990 = vsel %vm838, %v4928, 0.0
          %v4991 = vadd.f32 %v4989, %v4990
          %v4992 = vrot.slane %v4991, 4
          %v4993 = vadd.f32 %v4991, %v4992
          %v4994 = vrot.slane %v4993, 2
          %v4995 = vadd.f32 %v4993, %v4994
          %v4996 = vrot.slane %v4995, 1
          %v4997 = vadd.f32 %v4995, %v4996
          %v4998 = vmul.f32 %v4997, 0.00390625
          %v4999 = vpack.c.bf16 %v4998, %v4998
          %v5000 = vld [vmem:[%s533] sm:$0xf]
          %v5001 = vld [vmem:[%s533 + $0x4] sm:$0xf]
          %v5002 = vld [vmem:[%s533 + $0x8] sm:$0xf]
          %v5003 = vld [vmem:[%s533 + $0xc] sm:$0xf]
          %v5004 = vld [vmem:[%s540] sm:$0x1]
          %v5009 = vunpack.c.l.b16 %v5000
          %v5010 = vunpack.c.l.b16 %v5001
          %v5011 = vunpack.c.l.b16 %v5002
          %v5012 = vunpack.c.l.b16 %v5003
          %v5013 = vpack.c.b16 %v5010, %v5009
          %v5014 = vpack.c.b16 %v5012, %v5011
          %v5018 = vsel %vm838, %v4999, 0
          %5020 = vmatpush.bf16.msra.mxu0 0
          %5021 = vmatpush.bf16.msra.mxu0 0
          %5022 = vmatpush.bf16.msra.mxu0 0
          %5023 = vmatpush.bf16.msra.mxu0 0
          %5024 = vmatpush.bf16.msra.mxu0 0
          %5025 = vmatpush.bf16.msra.mxu0 0
          %5026 = vmatpush.bf16.msra.mxu0 %v5014
          %5027 = vmatpush.bf16.msra.mxu0 %v5013
          %5028 = vmatmul.bf16.gmra.mxu0 %v5018
          %v5029 = vpop.f32.mrf.mxu0
          %v5030 = vadd.f32 %v5004, %v5029
          %v5031 = vpop.f32.mrf.mxu0
          %5032 = vdwg.mxu0
          %v5033 = vmax.f32 %v5030, 0.0
          %v5034 = vpack.c.bf16 %v5033, %v5033
          %v5035 = vld [vmem:[%s547] sm:$0x1]
          %v5036 = vld [vmem:[%s554] sm:$0x1]
          %vm5037 = vcmask 15360
          %v5039 = vsel %vm5037, %v5034, 0
          %vm5041 = vcmask 1040384
          %v5043 = vsel %vm5041, %v5035, 0
          %5045 = vmatpush.bf16.msra.mxu0 0
          %5046 = vmatpush.bf16.msra.mxu0 0
          %5047 = vmatpush.bf16.msra.mxu0 0
          %5048 = vmatpush.bf16.msra.mxu0 0
          %5049 = vmatpush.bf16.msra.mxu0 0
          %5050 = vmatpush.bf16.msra.mxu0 0
          %5051 = vmatpush.bf16.msra.mxu0 0
          %5052 = vmatpush.bf16.msra.mxu0 %v5043
          %5053 = vmatmul.bf16.gmra.mxu0 %v5039
          %v5054 = vpop.f32.mrf.mxu0
          %v5055 = vadd.f32 %v5036, %v5054
          %v5056 = vpop.f32.mrf.mxu0
          %5057 = vdwg.mxu0
          %v5058 = vxor.u32 %v5055, 2147483648
          %v5059 = vmul.f32 %v5058, 1.442695
          %v5060 = vpow.pop %v5059
          %v5061 = vadd.f32 %v5060, 1.0
          %v5062 = vrcp.pop %v5061
          %v5063 = vmul.f32 %v5061, %v5062
          %v5064 = vsub.f32 1.0, %v5063
          %v5065 = vmul.f32 %v5062, %v5064
          %v5066 = vadd.f32 %v5062, %v5065
          %vm5067 = vweird.f32 %v5061
          %vm5068 = vweird.f32 %v5062
          %vm5069 = vmor %vm5067, %vm5068
          %v5070 = vsel %vm5069, %v5062, %v5066
          %v5071 = vand.u32 2147483647, %v5061
          %vm5072 = vcmp.eq.f32.partialorder %v5071, 8.507059e+37
          %v5073 = vand.u32 %v5061, 2147483648
          %v5074 = vor.u32 1.1754944e-38, %v5073
          %v5075 = vsel %vm5072, %v5074, %v5070
          %v5076 = vmul.f32 1.0, %v5075
          %v5077 = vld [vmem:[%s1358 + $0x8] sm:$0xff]
          %v5078 = vld [vmem:[%s1358 + $0x10] sm:$0xff]
          %v5079 = vld [vmem:[%s1358 + $0x28] sm:$0xff]
          %v5080 = vld [vmem:[%s1358 + $0x30] sm:$0xff]
          %v5081 = vld [vmem:[%s1358 + $0x48] sm:$0xff]
          %v5082 = vld [vmem:[%s1358 + $0x50] sm:$0xff]
          %v5083 = vld [vmem:[%s1358 + $0x68] sm:$0xff]
          %v5084 = vld [vmem:[%s1358 + $0x70] sm:$0xff]
          %v5085 = vld [vmem:[%s1358 + $0x88] sm:$0xff]
          %v5086 = vld [vmem:[%s1358 + $0x90] sm:$0xff]
          %v5087 = vld [vmem:[%s1358 + $0xa8] sm:$0xff]
          %v5088 = vld [vmem:[%s1358 + $0xb0] sm:$0xff]
          %v5089 = vld [vmem:[%s1358 + $0xc8] sm:$0xff]
          %v5090 = vld [vmem:[%s1358 + $0xd0] sm:$0xff]
          %v5091 = vld [vmem:[%s1358 + $0xe8] sm:$0xff]
          %v5092 = vld [vmem:[%s1358 + $0xf0] sm:$0xff]
          %v5093 = vld [vmem:[%s1358 + $0x108] sm:$0xff]
          %v5094 = vld [vmem:[%s1358 + $0x110] sm:$0xff]
          %v5095 = vld [vmem:[%s1358 + $0x128] sm:$0xff]
          %v5096 = vld [vmem:[%s1358 + $0x130] sm:$0xff]
          %v5097 = vld [vmem:[%s1358 + $0x148] sm:$0xff]
          %v5098 = vld [vmem:[%s1358 + $0x150] sm:$0xff]
          %v5099 = vld [vmem:[%s1358 + $0x168] sm:$0xff]
          %v5100 = vld [vmem:[%s1358 + $0x170] sm:$0xff]
          %v5101 = vld [vmem:[%s1358 + $0x188] sm:$0xff]
          %v5102 = vld [vmem:[%s1358 + $0x190] sm:$0xff]
          %v5103 = vld [vmem:[%s1358 + $0x1a8] sm:$0xff]
          %v5104 = vld [vmem:[%s1358 + $0x1b0] sm:$0xff]
          %v5105 = vld [vmem:[%s1358 + $0x1c8] sm:$0xff]
          %v5106 = vld [vmem:[%s1358 + $0x1d0] sm:$0xff]
          %v5107 = vld [vmem:[%s1358 + $0x1e8] sm:$0xff]
          %v5108 = vld [vmem:[%s1358 + $0x1f0] sm:$0xff]
          %v5109 = vperm.slane %v5076, 0
          %v5110 = vmul.f32 %v4897, %v5109
          %v5111 = vmul.f32 %v4898, %v5109
          %v5112 = vmul.f32 %v4899, %v5109
          %v5113 = vmul.f32 %v4900, %v5109
          %v5114 = vmul.f32 %v4901, %v5109
          %v5115 = vmul.f32 %v4902, %v5109
          %v5116 = vmul.f32 %v4903, %v5109
          %v5117 = vmul.f32 %v4904, %v5109
          %v5118 = vmul.f32 %v4905, %v5109
          %v5119 = vmul.f32 %v4906, %v5109
          %v5120 = vmul.f32 %v4907, %v5109
          %v5121 = vmul.f32 %v4908, %v5109
          %v5122 = vmul.f32 %v4909, %v5109
          %v5123 = vmul.f32 %v4910, %v5109
          %v5124 = vmul.f32 %v4911, %v5109
          %v5125 = vmul.f32 %v4912, %v5109
          %v5126 = vmul.f32 %v4913, %v5109
          %v5127 = vmul.f32 %v4914, %v5109
          %v5128 = vmul.f32 %v4915, %v5109
          %v5129 = vmul.f32 %v4916, %v5109
          %v5130 = vmul.f32 %v4917, %v5109
          %v5131 = vmul.f32 %v4918, %v5109
          %v5132 = vmul.f32 %v4919, %v5109
          %v5133 = vmul.f32 %v4920, %v5109
          %v5134 = vmul.f32 %v4921, %v5109
          %v5135 = vmul.f32 %v4922, %v5109
          %v5136 = vmul.f32 %v4923, %v5109
          %v5137 = vmul.f32 %v4924, %v5109
          %v5138 = vmul.f32 %v4925, %v5109
          %v5139 = vmul.f32 %v4926, %v5109
          %v5140 = vmul.f32 %v4927, %v5109
          %v5141 = vmul.f32 %v4928, %v5109
          %v5142 = vadd.f32 %v5110, %v5077
          %v5143 = vadd.f32 %v5111, %v5078
          %v5144 = vadd.f32 %v5112, %v5079
          %v5145 = vadd.f32 %v5113, %v5080
          %v5146 = vadd.f32 %v5114, %v5081
          %v5147 = vadd.f32 %v5115, %v5082
          %v5148 = vadd.f32 %v5116, %v5083
          %v5149 = vadd.f32 %v5117, %v5084
          %v5150 = vadd.f32 %v5118, %v5085
          %v5151 = vadd.f32 %v5119, %v5086
          %v5152 = vadd.f32 %v5120, %v5087
          %v5153 = vadd.f32 %v5121, %v5088
          %v5154 = vadd.f32 %v5122, %v5089
          %v5155 = vadd.f32 %v5123, %v5090
          %v5156 = vadd.f32 %v5124, %v5091
          %v5157 = vadd.f32 %v5125, %v5092
          %v5158 = vadd.f32 %v5126, %v5093
          %v5159 = vadd.f32 %v5127, %v5094
          %v5160 = vadd.f32 %v5128, %v5095
          %v5161 = vadd.f32 %v5129, %v5096
          %v5162 = vadd.f32 %v5130, %v5097
          %v5163 = vadd.f32 %v5131, %v5098
          %v5164 = vadd.f32 %v5132, %v5099
          %v5165 = vadd.f32 %v5133, %v5100
          %v5166 = vadd.f32 %v5134, %v5101
          %v5167 = vadd.f32 %v5135, %v5102
          %v5168 = vadd.f32 %v5136, %v5103
          %v5169 = vadd.f32 %v5137, %v5104
          %v5170 = vadd.f32 %v5138, %v5105
          %v5171 = vadd.f32 %v5139, %v5106
          %v5172 = vadd.f32 %v5140, %v5107
          %v5173 = vadd.f32 %v5141, %v5108
          %5174 = vst.msk [vmem:[%s1358 + $0x8] sm:$0xff] %vm838, %v5142
          %5175 = vst.msk [vmem:[%s1358 + $0x10] sm:$0xff] %vm838, %v5143
          %5176 = vst.msk [vmem:[%s1358 + $0x28] sm:$0xff] %vm838, %v5144
          %5177 = vst.msk [vmem:[%s1358 + $0x30] sm:$0xff] %vm838, %v5145
          %5178 = vst.msk [vmem:[%s1358 + $0x48] sm:$0xff] %vm838, %v5146
          %5179 = vst.msk [vmem:[%s1358 + $0x50] sm:$0xff] %vm838, %v5147
          %5180 = vst.msk [vmem:[%s1358 + $0x68] sm:$0xff] %vm838, %v5148
          %5181 = vst.msk [vmem:[%s1358 + $0x70] sm:$0xff] %vm838, %v5149
          %5182 = vst.msk [vmem:[%s1358 + $0x88] sm:$0xff] %vm838, %v5150
          %5183 = vst.msk [vmem:[%s1358 + $0x90] sm:$0xff] %vm838, %v5151
          %5184 = vst.msk [vmem:[%s1358 + $0xa8] sm:$0xff] %vm838, %v5152
          %5185 = vst.msk [vmem:[%s1358 + $0xb0] sm:$0xff] %vm838, %v5153
          %5186 = vst.msk [vmem:[%s1358 + $0xc8] sm:$0xff] %vm838, %v5154
          %5187 = vst.msk [vmem:[%s1358 + $0xd0] sm:$0xff] %vm838, %v5155
          %5188 = vst.msk [vmem:[%s1358 + $0xe8] sm:$0xff] %vm838, %v5156
          %5189 = vst.msk [vmem:[%s1358 + $0xf0] sm:$0xff] %vm838, %v5157
          %5190 = vst.msk [vmem:[%s1358 + $0x108] sm:$0xff] %vm838, %v5158
          %5191 = vst.msk [vmem:[%s1358 + $0x110] sm:$0xff] %vm838, %v5159
          %5192 = vst.msk [vmem:[%s1358 + $0x128] sm:$0xff] %vm838, %v5160
          %5193 = vst.msk [vmem:[%s1358 + $0x130] sm:$0xff] %vm838, %v5161
          %5194 = vst.msk [vmem:[%s1358 + $0x148] sm:$0xff] %vm838, %v5162
          %5195 = vst.msk [vmem:[%s1358 + $0x150] sm:$0xff] %vm838, %v5163
          %5196 = vst.msk [vmem:[%s1358 + $0x168] sm:$0xff] %vm838, %v5164
          %5197 = vst.msk [vmem:[%s1358 + $0x170] sm:$0xff] %vm838, %v5165
          %5198 = vst.msk [vmem:[%s1358 + $0x188] sm:$0xff] %vm838, %v5166
          %5199 = vst.msk [vmem:[%s1358 + $0x190] sm:$0xff] %vm838, %v5167
          %5200 = vst.msk [vmem:[%s1358 + $0x1a8] sm:$0xff] %vm838, %v5168
          %5201 = vst.msk [vmem:[%s1358 + $0x1b0] sm:$0xff] %vm838, %v5169
          %5202 = vst.msk [vmem:[%s1358 + $0x1c8] sm:$0xff] %vm838, %v5170
          %5203 = vst.msk [vmem:[%s1358 + $0x1d0] sm:$0xff] %vm838, %v5171
          %5204 = vst.msk [vmem:[%s1358 + $0x1e8] sm:$0xff] %vm838, %v5172
          %5205 = vst.msk [vmem:[%s1358 + $0x1f0] sm:$0xff] %vm838, %v5173
        $region64: #{tpu_custom_call.1} parent=55 // pred_fallthru
          _
        %p5206 = scmp.eq.s32.totalorder %s28, 2
        // Predicated region
        $region65: #{tpu_custom_call.1} parent=55 // pred_check
          %p5207 = pneg %p5206
        $region66: #{tpu_custom_call.1} parent=55 // pred_check_branch
          %5209 = sbr.rel (%p5207) target = $region68
        $region67: #{tpu_custom_call.1} parent=55 // pred_region
          %v5210 = vld [vmem:[#allocation2 + $0x7] sm:$0xff]
          %v5211 = vld [vmem:[#allocation2 + $0xf] sm:$0xff]
          %v5212 = vld [vmem:[#allocation2 + $0x27] sm:$0xff]
          %v5213 = vld [vmem:[#allocation2 + $0x2f] sm:$0xff]
          %v5214 = vld [vmem:[#allocation2 + $0x47] sm:$0xff]
          %v5215 = vld [vmem:[#allocation2 + $0x4f] sm:$0xff]
          %v5216 = vld [vmem:[#allocation2 + $0x67] sm:$0xff]
          %v5217 = vld [vmem:[#allocation2 + $0x6f] sm:$0xff]
          %v5218 = vld [vmem:[#allocation2 + $0x87] sm:$0xff]
          %v5219 = vld [vmem:[#allocation2 + $0x8f] sm:$0xff]
          %v5220 = vld [vmem:[#allocation2 + $0xa7] sm:$0xff]
          %v5221 = vld [vmem:[#allocation2 + $0xaf] sm:$0xff]
          %v5222 = vld [vmem:[#allocation2 + $0xc7] sm:$0xff]
          %v5223 = vld [vmem:[#allocation2 + $0xcf] sm:$0xff]
          %v5224 = vld [vmem:[#allocation2 + $0xe7] sm:$0xff]
          %v5225 = vld [vmem:[#allocation2 + $0xef] sm:$0xff]
          %v5226 = vld [vmem:[#allocation2 + $0x107] sm:$0xff]
          %v5227 = vld [vmem:[#allocation2 + $0x10f] sm:$0xff]
          %v5228 = vld [vmem:[#allocation2 + $0x127] sm:$0xff]
          %v5229 = vld [vmem:[#allocation2 + $0x12f] sm:$0xff]
          %v5230 = vld [vmem:[#allocation2 + $0x147] sm:$0xff]
          %v5231 = vld [vmem:[#allocation2 + $0x14f] sm:$0xff]
          %v5232 = vld [vmem:[#allocation2 + $0x167] sm:$0xff]
          %v5233 = vld [vmem:[#allocation2 + $0x16f] sm:$0xff]
          %v5234 = vld [vmem:[#allocation2 + $0x187] sm:$0xff]
          %v5235 = vld [vmem:[#allocation2 + $0x18f] sm:$0xff]
          %v5236 = vld [vmem:[#allocation2 + $0x1a7] sm:$0xff]
          %v5237 = vld [vmem:[#allocation2 + $0x1af] sm:$0xff]
          %v5238 = vld [vmem:[#allocation2 + $0x1c7] sm:$0xff]
          %v5239 = vld [vmem:[#allocation2 + $0x1cf] sm:$0xff]
          %v5240 = vld [vmem:[#allocation2 + $0x1e7] sm:$0xff]
          %v5241 = vld [vmem:[#allocation2 + $0x1ef] sm:$0xff]
          %v5242 = vpack.c.bf16 %v5211, %v5210
          %v5243 = vpack.c.bf16 %v5213, %v5212
          %v5244 = vpack.c.bf16 %v5215, %v5214
          %v5245 = vpack.c.bf16 %v5217, %v5216
          %v5246 = vpack.c.bf16 %v5219, %v5218
          %v5247 = vpack.c.bf16 %v5221, %v5220
          %v5248 = vpack.c.bf16 %v5223, %v5222
          %v5249 = vpack.c.bf16 %v5225, %v5224
          %v5250 = vpack.c.bf16 %v5227, %v5226
          %v5251 = vpack.c.bf16 %v5229, %v5228
          %v5252 = vpack.c.bf16 %v5231, %v5230
          %v5253 = vpack.c.bf16 %v5233, %v5232
          %v5254 = vpack.c.bf16 %v5235, %v5234
          %v5255 = vpack.c.bf16 %v5237, %v5236
          %v5256 = vpack.c.bf16 %v5239, %v5238
          %v5257 = vpack.c.bf16 %v5241, %v5240
          %v5258 = vld [vmem:[%s507] sm:$0xf]
          %v5259 = vld [vmem:[%s507 + $0x4] sm:$0xf]
          %v5260 = vld [vmem:[%s507 + $0x8] sm:$0xf]
          %v5261 = vld [vmem:[%s507 + $0xc] sm:$0xf]
          %v5262 = vld [vmem:[#allocation2 + $0x8] sm:$0xff]
          %v5263 = vld [vmem:[#allocation2 + $0x10] sm:$0xff]
          %v5264 = vld [vmem:[#allocation2 + $0x28] sm:$0xff]
          %v5265 = vld [vmem:[#allocation2 + $0x30] sm:$0xff]
          %v5266 = vld [vmem:[#allocation2 + $0x48] sm:$0xff]
          %v5267 = vld [vmem:[#allocation2 + $0x50] sm:$0xff]
          %v5268 = vld [vmem:[#allocation2 + $0x68] sm:$0xff]
          %v5269 = vld [vmem:[#allocation2 + $0x70] sm:$0xff]
          %v5270 = vld [vmem:[#allocation2 + $0x88] sm:$0xff]
          %v5271 = vld [vmem:[#allocation2 + $0x90] sm:$0xff]
          %v5272 = vld [vmem:[#allocation2 + $0xa8] sm:$0xff]
          %v5273 = vld [vmem:[#allocation2 + $0xb0] sm:$0xff]
          %v5274 = vld [vmem:[#allocation2 + $0xc8] sm:$0xff]
          %v5275 = vld [vmem:[#allocation2 + $0xd0] sm:$0xff]
          %v5276 = vld [vmem:[#allocation2 + $0xe8] sm:$0xff]
          %v5277 = vld [vmem:[#allocation2 + $0xf0] sm:$0xff]
          %v5278 = vld [vmem:[#allocation2 + $0x108] sm:$0xff]
          %v5279 = vld [vmem:[#allocation2 + $0x110] sm:$0xff]
          %v5280 = vld [vmem:[#allocation2 + $0x128] sm:$0xff]
          %v5281 = vld [vmem:[#allocation2 + $0x130] sm:$0xff]
          %v5282 = vld [vmem:[#allocation2 + $0x148] sm:$0xff]
          %v5283 = vld [vmem:[#allocation2 + $0x150] sm:$0xff]
          %v5284 = vld [vmem:[#allocation2 + $0x168] sm:$0xff]
          %v5285 = vld [vmem:[#allocation2 + $0x170] sm:$0xff]
          %v5286 = vld [vmem:[#allocation2 + $0x188] sm:$0xff]
          %v5287 = vld [vmem:[#allocation2 + $0x190] sm:$0xff]
          %v5288 = vld [vmem:[#allocation2 + $0x1a8] sm:$0xff]
          %v5289 = vld [vmem:[#allocation2 + $0x1b0] sm:$0xff]
          %v5290 = vld [vmem:[#allocation2 + $0x1c8] sm:$0xff]
          %v5291 = vld [vmem:[#allocation2 + $0x1d0] sm:$0xff]
          %v5292 = vld [vmem:[#allocation2 + $0x1e8] sm:$0xff]
          %v5293 = vld [vmem:[#allocation2 + $0x1f0] sm:$0xff]
          %v5294 = vpack.c.bf16 %v5263, %v5262
          %v5295 = vpack.c.bf16 %v5265, %v5264
          %v5296 = vpack.c.bf16 %v5267, %v5266
          %v5297 = vpack.c.bf16 %v5269, %v5268
          %v5298 = vpack.c.bf16 %v5271, %v5270
          %v5299 = vpack.c.bf16 %v5273, %v5272
          %v5300 = vpack.c.bf16 %v5275, %v5274
          %v5301 = vpack.c.bf16 %v5277, %v5276
          %v5302 = vpack.c.bf16 %v5279, %v5278
          %v5303 = vpack.c.bf16 %v5281, %v5280
          %v5304 = vpack.c.bf16 %v5283, %v5282
          %v5305 = vpack.c.bf16 %v5285, %v5284
          %v5306 = vpack.c.bf16 %v5287, %v5286
          %v5307 = vpack.c.bf16 %v5289, %v5288
          %v5308 = vpack.c.bf16 %v5291, %v5290
          %v5309 = vpack.c.bf16 %v5293, %v5292
          %v5310 = vld [vmem:[%s507 + $0x10] sm:$0xf]
          %v5311 = vld [vmem:[%s507 + $0x14] sm:$0xf]
          %v5312 = vld [vmem:[%s507 + $0x18] sm:$0xf]
          %v5313 = vld [vmem:[%s507 + $0x1c] sm:$0xf]
          %v5318 = vunpack.c.l.b16 %v5310
          %v5319 = vunpack.c.l.b16 %v5311
          %v5320 = vunpack.c.l.b16 %v5312
          %v5321 = vunpack.c.l.b16 %v5313
          %v5322 = vpack.c.b16 %v5319, %v5318
          %v5323 = vpack.c.b16 %v5321, %v5320
          %vm5326 = vcmask 261120
          %v5328 = vsel %vm5326, %v5294, 0
          %v5331 = vsel %vm5326, %v5295, 0
          %v5334 = vsel %vm5326, %v5296, 0
          %v5337 = vsel %vm5326, %v5297, 0
          %v5340 = vsel %vm5326, %v5298, 0
          %v5343 = vsel %vm5326, %v5299, 0
          %v5346 = vsel %vm5326, %v5300, 0
          %v5349 = vsel %vm5326, %v5301, 0
          %v5352 = vsel %vm5326, %v5302, 0
          %v5355 = vsel %vm5326, %v5303, 0
          %v5358 = vsel %vm5326, %v5304, 0
          %v5361 = vsel %vm5326, %v5305, 0
          %v5364 = vsel %vm5326, %v5306, 0
          %v5367 = vsel %vm5326, %v5307, 0
          %v5370 = vsel %vm5326, %v5308, 0
          %v5373 = vsel %vm5326, %v5309, 0
          %5375 = vmatpush.bf16.msra.mxu0 0
          %5376 = vmatpush.bf16.msra.mxu0 0
          %5377 = vmatpush.bf16.msra.mxu0 0
          %5378 = vmatpush.bf16.msra.mxu0 0
          %5379 = vmatpush.bf16.msra.mxu0 0
          %5380 = vmatpush.bf16.msra.mxu0 0
          %5381 = vmatpush.bf16.msra.mxu0 %v5323
          %5382 = vmatpush.bf16.msra.mxu0 %v5322
          %5383 = vmatmul.bf16.gmra.mxu0 %v5328
          %v5384 = vpop.f32.mrf.mxu0
          %v5385 = vadd.f32 0.0, %v5384
          %v5386 = vpop.f32.mrf.mxu0
          %v5387 = vadd.f32 0.0, %v5386
          %5388 = vmatmul.bf16.gmra.mxu0 %v5331
          %v5389 = vpop.f32.mrf.mxu0
          %v5390 = vadd.f32 0.0, %v5389
          %v5391 = vpop.f32.mrf.mxu0
          %v5392 = vadd.f32 0.0, %v5391
          %5393 = vmatmul.bf16.gmra.mxu0 %v5334
          %v5394 = vpop.f32.mrf.mxu0
          %v5395 = vadd.f32 0.0, %v5394
          %v5396 = vpop.f32.mrf.mxu0
          %v5397 = vadd.f32 0.0, %v5396
          %5398 = vmatmul.bf16.gmra.mxu0 %v5337
          %v5399 = vpop.f32.mrf.mxu0
          %v5400 = vadd.f32 0.0, %v5399
          %v5401 = vpop.f32.mrf.mxu0
          %v5402 = vadd.f32 0.0, %v5401
          %5403 = vmatmul.bf16.gmra.mxu0 %v5340
          %v5404 = vpop.f32.mrf.mxu0
          %v5405 = vadd.f32 0.0, %v5404
          %v5406 = vpop.f32.mrf.mxu0
          %v5407 = vadd.f32 0.0, %v5406
          %5408 = vmatmul.bf16.gmra.mxu0 %v5343
          %v5409 = vpop.f32.mrf.mxu0
          %v5410 = vadd.f32 0.0, %v5409
          %v5411 = vpop.f32.mrf.mxu0
          %v5412 = vadd.f32 0.0, %v5411
          %5413 = vmatmul.bf16.gmra.mxu0 %v5346
          %v5414 = vpop.f32.mrf.mxu0
          %v5415 = vadd.f32 0.0, %v5414
          %v5416 = vpop.f32.mrf.mxu0
          %v5417 = vadd.f32 0.0, %v5416
          %5418 = vmatmul.bf16.gmra.mxu0 %v5349
          %v5419 = vpop.f32.mrf.mxu0
          %v5420 = vadd.f32 0.0, %v5419
          %v5421 = vpop.f32.mrf.mxu0
          %v5422 = vadd.f32 0.0, %v5421
          %5423 = vmatmul.bf16.gmra.mxu0 %v5352
          %v5424 = vpop.f32.mrf.mxu0
          %v5425 = vadd.f32 0.0, %v5424
          %v5426 = vpop.f32.mrf.mxu0
          %v5427 = vadd.f32 0.0, %v5426
          %5428 = vmatmul.bf16.gmra.mxu0 %v5355
          %v5429 = vpop.f32.mrf.mxu0
          %v5430 = vadd.f32 0.0, %v5429
          %v5431 = vpop.f32.mrf.mxu0
          %v5432 = vadd.f32 0.0, %v5431
          %5433 = vmatmul.bf16.gmra.mxu0 %v5358
          %v5434 = vpop.f32.mrf.mxu0
          %v5435 = vadd.f32 0.0, %v5434
          %v5436 = vpop.f32.mrf.mxu0
          %v5437 = vadd.f32 0.0, %v5436
          %5438 = vmatmul.bf16.gmra.mxu0 %v5361
          %v5439 = vpop.f32.mrf.mxu0
          %v5440 = vadd.f32 0.0, %v5439
          %v5441 = vpop.f32.mrf.mxu0
          %v5442 = vadd.f32 0.0, %v5441
          %5443 = vmatmul.bf16.gmra.mxu0 %v5364
          %v5444 = vpop.f32.mrf.mxu0
          %v5445 = vadd.f32 0.0, %v5444
          %v5446 = vpop.f32.mrf.mxu0
          %v5447 = vadd.f32 0.0, %v5446
          %5448 = vmatmul.bf16.gmra.mxu0 %v5367
          %v5449 = vpop.f32.mrf.mxu0
          %v5450 = vadd.f32 0.0, %v5449
          %v5451 = vpop.f32.mrf.mxu0
          %v5452 = vadd.f32 0.0, %v5451
          %5453 = vmatmul.bf16.gmra.mxu0 %v5370
          %v5454 = vpop.f32.mrf.mxu0
          %v5455 = vadd.f32 0.0, %v5454
          %v5456 = vpop.f32.mrf.mxu0
          %v5457 = vadd.f32 0.0, %v5456
          %5458 = vmatmul.bf16.gmra.mxu0 %v5373
          %v5459 = vpop.f32.mrf.mxu0
          %v5460 = vadd.f32 0.0, %v5459
          %v5461 = vpop.f32.mrf.mxu0
          %v5462 = vadd.f32 0.0, %v5461
          %5463 = vdwg.mxu0
          %v5468 = vunpack.c.l.b16 %v5258
          %v5469 = vunpack.c.l.b16 %v5259
          %v5470 = vunpack.c.l.b16 %v5260
          %v5471 = vunpack.c.l.b16 %v5261
          %v5472 = vpack.c.b16 %v5469, %v5468
          %v5473 = vpack.c.b16 %v5471, %v5470
          %v5477 = vsel %vm5326, %v5242, 0
          %v5480 = vsel %vm5326, %v5243, 0
          %v5483 = vsel %vm5326, %v5244, 0
          %v5486 = vsel %vm5326, %v5245, 0
          %v5489 = vsel %vm5326, %v5246, 0
          %v5492 = vsel %vm5326, %v5247, 0
          %v5495 = vsel %vm5326, %v5248, 0
          %v5498 = vsel %vm5326, %v5249, 0
          %v5501 = vsel %vm5326, %v5250, 0
          %v5504 = vsel %vm5326, %v5251, 0
          %v5507 = vsel %vm5326, %v5252, 0
          %v5510 = vsel %vm5326, %v5253, 0
          %v5513 = vsel %vm5326, %v5254, 0
          %v5516 = vsel %vm5326, %v5255, 0
          %v5519 = vsel %vm5326, %v5256, 0
          %v5522 = vsel %vm5326, %v5257, 0
          %5524 = vmatpush.bf16.msra.mxu0 0
          %5525 = vmatpush.bf16.msra.mxu0 0
          %5526 = vmatpush.bf16.msra.mxu0 0
          %5527 = vmatpush.bf16.msra.mxu0 0
          %5528 = vmatpush.bf16.msra.mxu0 0
          %5529 = vmatpush.bf16.msra.mxu0 0
          %5530 = vmatpush.bf16.msra.mxu0 %v5473
          %5531 = vmatpush.bf16.msra.mxu0 %v5472
          %5532 = vmatmul.bf16.gmra.mxu0 %v5477
          %v5533 = vpop.f32.mrf.mxu0
          %v5534 = vadd.f32 %v5385, %v5533
          %v5535 = vpop.f32.mrf.mxu0
          %v5536 = vadd.f32 %v5387, %v5535
          %5537 = vmatmul.bf16.gmra.mxu0 %v5480
          %v5538 = vpop.f32.mrf.mxu0
          %v5539 = vadd.f32 %v5390, %v5538
          %v5540 = vpop.f32.mrf.mxu0
          %v5541 = vadd.f32 %v5392, %v5540
          %5542 = vmatmul.bf16.gmra.mxu0 %v5483
          %v5543 = vpop.f32.mrf.mxu0
          %v5544 = vadd.f32 %v5395, %v5543
          %v5545 = vpop.f32.mrf.mxu0
          %v5546 = vadd.f32 %v5397, %v5545
          %5547 = vmatmul.bf16.gmra.mxu0 %v5486
          %v5548 = vpop.f32.mrf.mxu0
          %v5549 = vadd.f32 %v5400, %v5548
          %v5550 = vpop.f32.mrf.mxu0
          %v5551 = vadd.f32 %v5402, %v5550
          %5552 = vmatmul.bf16.gmra.mxu0 %v5489
          %v5553 = vpop.f32.mrf.mxu0
          %v5554 = vadd.f32 %v5405, %v5553
          %v5555 = vpop.f32.mrf.mxu0
          %v5556 = vadd.f32 %v5407, %v5555
          %5557 = vmatmul.bf16.gmra.mxu0 %v5492
          %v5558 = vpop.f32.mrf.mxu0
          %v5559 = vadd.f32 %v5410, %v5558
          %v5560 = vpop.f32.mrf.mxu0
          %v5561 = vadd.f32 %v5412, %v5560
          %5562 = vmatmul.bf16.gmra.mxu0 %v5495
          %v5563 = vpop.f32.mrf.mxu0
          %v5564 = vadd.f32 %v5415, %v5563
          %v5565 = vpop.f32.mrf.mxu0
          %v5566 = vadd.f32 %v5417, %v5565
          %5567 = vmatmul.bf16.gmra.mxu0 %v5498
          %v5568 = vpop.f32.mrf.mxu0
          %v5569 = vadd.f32 %v5420, %v5568
          %v5570 = vpop.f32.mrf.mxu0
          %v5571 = vadd.f32 %v5422, %v5570
          %5572 = vmatmul.bf16.gmra.mxu0 %v5501
          %v5573 = vpop.f32.mrf.mxu0
          %v5574 = vadd.f32 %v5425, %v5573
          %v5575 = vpop.f32.mrf.mxu0
          %v5576 = vadd.f32 %v5427, %v5575
          %5577 = vmatmul.bf16.gmra.mxu0 %v5504
          %v5578 = vpop.f32.mrf.mxu0
          %v5579 = vadd.f32 %v5430, %v5578
          %v5580 = vpop.f32.mrf.mxu0
          %v5581 = vadd.f32 %v5432, %v5580
          %5582 = vmatmul.bf16.gmra.mxu0 %v5507
          %v5583 = vpop.f32.mrf.mxu0
          %v5584 = vadd.f32 %v5435, %v5583
          %v5585 = vpop.f32.mrf.mxu0
          %v5586 = vadd.f32 %v5437, %v5585
          %5587 = vmatmul.bf16.gmra.mxu0 %v5510
          %v5588 = vpop.f32.mrf.mxu0
          %v5589 = vadd.f32 %v5440, %v5588
          %v5590 = vpop.f32.mrf.mxu0
          %v5591 = vadd.f32 %v5442, %v5590
          %5592 = vmatmul.bf16.gmra.mxu0 %v5513
          %v5593 = vpop.f32.mrf.mxu0
          %v5594 = vadd.f32 %v5445, %v5593
          %v5595 = vpop.f32.mrf.mxu0
          %v5596 = vadd.f32 %v5447, %v5595
          %5597 = vmatmul.bf16.gmra.mxu0 %v5516
          %v5598 = vpop.f32.mrf.mxu0
          %v5599 = vadd.f32 %v5450, %v5598
          %v5600 = vpop.f32.mrf.mxu0
          %v5601 = vadd.f32 %v5452, %v5600
          %5602 = vmatmul.bf16.gmra.mxu0 %v5519
          %v5603 = vpop.f32.mrf.mxu0
          %v5604 = vadd.f32 %v5455, %v5603
          %v5605 = vpop.f32.mrf.mxu0
          %v5606 = vadd.f32 %v5457, %v5605
          %5607 = vmatmul.bf16.gmra.mxu0 %v5522
          %v5608 = vpop.f32.mrf.mxu0
          %v5609 = vadd.f32 %v5460, %v5608
          %v5610 = vpop.f32.mrf.mxu0
          %v5611 = vadd.f32 %v5462, %v5610
          %5612 = vdwg.mxu0
          %v5613 = vld [vmem:[#allocation2 + $0x9] sm:$0xff]
          %v5614 = vld [vmem:[#allocation2 + $0x11] sm:$0xff]
          %v5615 = vld [vmem:[#allocation2 + $0x29] sm:$0xff]
          %v5616 = vld [vmem:[#allocation2 + $0x31] sm:$0xff]
          %v5617 = vld [vmem:[#allocation2 + $0x49] sm:$0xff]
          %v5618 = vld [vmem:[#allocation2 + $0x51] sm:$0xff]
          %v5619 = vld [vmem:[#allocation2 + $0x69] sm:$0xff]
          %v5620 = vld [vmem:[#allocation2 + $0x71] sm:$0xff]
          %v5621 = vld [vmem:[#allocation2 + $0x89] sm:$0xff]
          %v5622 = vld [vmem:[#allocation2 + $0x91] sm:$0xff]
          %v5623 = vld [vmem:[#allocation2 + $0xa9] sm:$0xff]
          %v5624 = vld [vmem:[#allocation2 + $0xb1] sm:$0xff]
          %v5625 = vld [vmem:[#allocation2 + $0xc9] sm:$0xff]
          %v5626 = vld [vmem:[#allocation2 + $0xd1] sm:$0xff]
          %v5627 = vld [vmem:[#allocation2 + $0xe9] sm:$0xff]
          %v5628 = vld [vmem:[#allocation2 + $0xf1] sm:$0xff]
          %v5629 = vld [vmem:[#allocation2 + $0x109] sm:$0xff]
          %v5630 = vld [vmem:[#allocation2 + $0x111] sm:$0xff]
          %v5631 = vld [vmem:[#allocation2 + $0x129] sm:$0xff]
          %v5632 = vld [vmem:[#allocation2 + $0x131] sm:$0xff]
          %v5633 = vld [vmem:[#allocation2 + $0x149] sm:$0xff]
          %v5634 = vld [vmem:[#allocation2 + $0x151] sm:$0xff]
          %v5635 = vld [vmem:[#allocation2 + $0x169] sm:$0xff]
          %v5636 = vld [vmem:[#allocation2 + $0x171] sm:$0xff]
          %v5637 = vld [vmem:[#allocation2 + $0x189] sm:$0xff]
          %v5638 = vld [vmem:[#allocation2 + $0x191] sm:$0xff]
          %v5639 = vld [vmem:[#allocation2 + $0x1a9] sm:$0xff]
          %v5640 = vld [vmem:[#allocation2 + $0x1b1] sm:$0xff]
          %v5641 = vld [vmem:[#allocation2 + $0x1c9] sm:$0xff]
          %v5642 = vld [vmem:[#allocation2 + $0x1d1] sm:$0xff]
          %v5643 = vld [vmem:[#allocation2 + $0x1e9] sm:$0xff]
          %v5644 = vld [vmem:[#allocation2 + $0x1f1] sm:$0xff]
          %v5645 = vpack.c.bf16 %v5614, %v5613
          %v5646 = vpack.c.bf16 %v5616, %v5615
          %v5647 = vpack.c.bf16 %v5618, %v5617
          %v5648 = vpack.c.bf16 %v5620, %v5619
          %v5649 = vpack.c.bf16 %v5622, %v5621
          %v5650 = vpack.c.bf16 %v5624, %v5623
          %v5651 = vpack.c.bf16 %v5626, %v5625
          %v5652 = vpack.c.bf16 %v5628, %v5627
          %v5653 = vpack.c.bf16 %v5630, %v5629
          %v5654 = vpack.c.bf16 %v5632, %v5631
          %v5655 = vpack.c.bf16 %v5634, %v5633
          %v5656 = vpack.c.bf16 %v5636, %v5635
          %v5657 = vpack.c.bf16 %v5638, %v5637
          %v5658 = vpack.c.bf16 %v5640, %v5639
          %v5659 = vpack.c.bf16 %v5642, %v5641
          %v5660 = vpack.c.bf16 %v5644, %v5643
          %v5661 = vld [vmem:[%s507 + $0x20] sm:$0xf]
          %v5662 = vld [vmem:[%s507 + $0x24] sm:$0xf]
          %v5663 = vld [vmem:[%s507 + $0x28] sm:$0xf]
          %v5664 = vld [vmem:[%s507 + $0x2c] sm:$0xf]
          %v5669 = vunpack.c.l.b16 %v5661
          %v5670 = vunpack.c.l.b16 %v5662
          %v5671 = vunpack.c.l.b16 %v5663
          %v5672 = vunpack.c.l.b16 %v5664
          %v5673 = vpack.c.b16 %v5670, %v5669
          %v5674 = vpack.c.b16 %v5672, %v5671
          %v5678 = vsel %vm5326, %v5645, 0
          %v5681 = vsel %vm5326, %v5646, 0
          %v5684 = vsel %vm5326, %v5647, 0
          %v5687 = vsel %vm5326, %v5648, 0
          %v5690 = vsel %vm5326, %v5649, 0
          %v5693 = vsel %vm5326, %v5650, 0
          %v5696 = vsel %vm5326, %v5651, 0
          %v5699 = vsel %vm5326, %v5652, 0
          %v5702 = vsel %vm5326, %v5653, 0
          %v5705 = vsel %vm5326, %v5654, 0
          %v5708 = vsel %vm5326, %v5655, 0
          %v5711 = vsel %vm5326, %v5656, 0
          %v5714 = vsel %vm5326, %v5657, 0
          %v5717 = vsel %vm5326, %v5658, 0
          %v5720 = vsel %vm5326, %v5659, 0
          %v5723 = vsel %vm5326, %v5660, 0
          %5725 = vmatpush.bf16.msra.mxu0 0
          %5726 = vmatpush.bf16.msra.mxu0 0
          %5727 = vmatpush.bf16.msra.mxu0 0
          %5728 = vmatpush.bf16.msra.mxu0 0
          %5729 = vmatpush.bf16.msra.mxu0 0
          %5730 = vmatpush.bf16.msra.mxu0 0
          %5731 = vmatpush.bf16.msra.mxu0 %v5674
          %5732 = vmatpush.bf16.msra.mxu0 %v5673
          %5733 = vmatmul.bf16.gmra.mxu0 %v5678
          %v5734 = vpop.f32.mrf.mxu0
          %v5735 = vadd.f32 0.0, %v5734
          %v5736 = vpop.f32.mrf.mxu0
          %v5737 = vadd.f32 0.0, %v5736
          %5738 = vmatmul.bf16.gmra.mxu0 %v5681
          %v5739 = vpop.f32.mrf.mxu0
          %v5740 = vadd.f32 0.0, %v5739
          %v5741 = vpop.f32.mrf.mxu0
          %v5742 = vadd.f32 0.0, %v5741
          %5743 = vmatmul.bf16.gmra.mxu0 %v5684
          %v5744 = vpop.f32.mrf.mxu0
          %v5745 = vadd.f32 0.0, %v5744
          %v5746 = vpop.f32.mrf.mxu0
          %v5747 = vadd.f32 0.0, %v5746
          %5748 = vmatmul.bf16.gmra.mxu0 %v5687
          %v5749 = vpop.f32.mrf.mxu0
          %v5750 = vadd.f32 0.0, %v5749
          %v5751 = vpop.f32.mrf.mxu0
          %v5752 = vadd.f32 0.0, %v5751
          %5753 = vmatmul.bf16.gmra.mxu0 %v5690
          %v5754 = vpop.f32.mrf.mxu0
          %v5755 = vadd.f32 0.0, %v5754
          %v5756 = vpop.f32.mrf.mxu0
          %v5757 = vadd.f32 0.0, %v5756
          %5758 = vmatmul.bf16.gmra.mxu0 %v5693
          %v5759 = vpop.f32.mrf.mxu0
          %v5760 = vadd.f32 0.0, %v5759
          %v5761 = vpop.f32.mrf.mxu0
          %v5762 = vadd.f32 0.0, %v5761
          %5763 = vmatmul.bf16.gmra.mxu0 %v5696
          %v5764 = vpop.f32.mrf.mxu0
          %v5765 = vadd.f32 0.0, %v5764
          %v5766 = vpop.f32.mrf.mxu0
          %v5767 = vadd.f32 0.0, %v5766
          %5768 = vmatmul.bf16.gmra.mxu0 %v5699
          %v5769 = vpop.f32.mrf.mxu0
          %v5770 = vadd.f32 0.0, %v5769
          %v5771 = vpop.f32.mrf.mxu0
          %v5772 = vadd.f32 0.0, %v5771
          %5773 = vmatmul.bf16.gmra.mxu0 %v5702
          %v5774 = vpop.f32.mrf.mxu0
          %v5775 = vadd.f32 0.0, %v5774
          %v5776 = vpop.f32.mrf.mxu0
          %v5777 = vadd.f32 0.0, %v5776
          %5778 = vmatmul.bf16.gmra.mxu0 %v5705
          %v5779 = vpop.f32.mrf.mxu0
          %v5780 = vadd.f32 0.0, %v5779
          %v5781 = vpop.f32.mrf.mxu0
          %v5782 = vadd.f32 0.0, %v5781
          %5783 = vmatmul.bf16.gmra.mxu0 %v5708
          %v5784 = vpop.f32.mrf.mxu0
          %v5785 = vadd.f32 0.0, %v5784
          %v5786 = vpop.f32.mrf.mxu0
          %v5787 = vadd.f32 0.0, %v5786
          %5788 = vmatmul.bf16.gmra.mxu0 %v5711
          %v5789 = vpop.f32.mrf.mxu0
          %v5790 = vadd.f32 0.0, %v5789
          %v5791 = vpop.f32.mrf.mxu0
          %v5792 = vadd.f32 0.0, %v5791
          %5793 = vmatmul.bf16.gmra.mxu0 %v5714
          %v5794 = vpop.f32.mrf.mxu0
          %v5795 = vadd.f32 0.0, %v5794
          %v5796 = vpop.f32.mrf.mxu0
          %v5797 = vadd.f32 0.0, %v5796
          %5798 = vmatmul.bf16.gmra.mxu0 %v5717
          %v5799 = vpop.f32.mrf.mxu0
          %v5800 = vadd.f32 0.0, %v5799
          %v5801 = vpop.f32.mrf.mxu0
          %v5802 = vadd.f32 0.0, %v5801
          %5803 = vmatmul.bf16.gmra.mxu0 %v5720
          %v5804 = vpop.f32.mrf.mxu0
          %v5805 = vadd.f32 0.0, %v5804
          %v5806 = vpop.f32.mrf.mxu0
          %v5807 = vadd.f32 0.0, %v5806
          %5808 = vmatmul.bf16.gmra.mxu0 %v5723
          %v5809 = vpop.f32.mrf.mxu0
          %v5810 = vadd.f32 0.0, %v5809
          %v5811 = vpop.f32.mrf.mxu0
          %v5812 = vadd.f32 0.0, %v5811
          %5813 = vdwg.mxu0
          %v5814 = vadd.f32 %v5534, %v5735
          %v5815 = vadd.f32 %v5536, %v5737
          %v5816 = vadd.f32 %v5539, %v5740
          %v5817 = vadd.f32 %v5541, %v5742
          %v5818 = vadd.f32 %v5544, %v5745
          %v5819 = vadd.f32 %v5546, %v5747
          %v5820 = vadd.f32 %v5549, %v5750
          %v5821 = vadd.f32 %v5551, %v5752
          %v5822 = vadd.f32 %v5554, %v5755
          %v5823 = vadd.f32 %v5556, %v5757
          %v5824 = vadd.f32 %v5559, %v5760
          %v5825 = vadd.f32 %v5561, %v5762
          %v5826 = vadd.f32 %v5564, %v5765
          %v5827 = vadd.f32 %v5566, %v5767
          %v5828 = vadd.f32 %v5569, %v5770
          %v5829 = vadd.f32 %v5571, %v5772
          %v5830 = vadd.f32 %v5574, %v5775
          %v5831 = vadd.f32 %v5576, %v5777
          %v5832 = vadd.f32 %v5579, %v5780
          %v5833 = vadd.f32 %v5581, %v5782
          %v5834 = vadd.f32 %v5584, %v5785
          %v5835 = vadd.f32 %v5586, %v5787
          %v5836 = vadd.f32 %v5589, %v5790
          %v5837 = vadd.f32 %v5591, %v5792
          %v5838 = vadd.f32 %v5594, %v5795
          %v5839 = vadd.f32 %v5596, %v5797
          %v5840 = vadd.f32 %v5599, %v5800
          %v5841 = vadd.f32 %v5601, %v5802
          %v5842 = vadd.f32 %v5604, %v5805
          %v5843 = vadd.f32 %v5606, %v5807
          %v5844 = vadd.f32 %v5609, %v5810
          %v5845 = vadd.f32 %v5611, %v5812
          %s5846 = scalar_lea.vmem [#allocation2], 32
          %v5847 = vld [vmem:[%s5846 + $0x7] sm:$0xff]
          %v5848 = vld [vmem:[%s5846 + $0xf] sm:$0xff]
          %v5849 = vld [vmem:[%s5846 + $0x27] sm:$0xff]
          %v5850 = vld [vmem:[%s5846 + $0x2f] sm:$0xff]
          %v5851 = vld [vmem:[%s5846 + $0x47] sm:$0xff]
          %v5852 = vld [vmem:[%s5846 + $0x4f] sm:$0xff]
          %v5853 = vld [vmem:[%s5846 + $0x67] sm:$0xff]
          %v5854 = vld [vmem:[%s5846 + $0x6f] sm:$0xff]
          %v5855 = vld [vmem:[%s5846 + $0x87] sm:$0xff]
          %v5856 = vld [vmem:[%s5846 + $0x8f] sm:$0xff]
          %v5857 = vld [vmem:[%s5846 + $0xa7] sm:$0xff]
          %v5858 = vld [vmem:[%s5846 + $0xaf] sm:$0xff]
          %v5859 = vld [vmem:[%s5846 + $0xc7] sm:$0xff]
          %v5860 = vld [vmem:[%s5846 + $0xcf] sm:$0xff]
          %v5861 = vld [vmem:[%s5846 + $0xe7] sm:$0xff]
          %v5862 = vld [vmem:[%s5846 + $0xef] sm:$0xff]
          %v5863 = vld [vmem:[%s5846 + $0x107] sm:$0xff]
          %v5864 = vld [vmem:[%s5846 + $0x10f] sm:$0xff]
          %v5865 = vld [vmem:[%s5846 + $0x127] sm:$0xff]
          %v5866 = vld [vmem:[%s5846 + $0x12f] sm:$0xff]
          %v5867 = vld [vmem:[%s5846 + $0x147] sm:$0xff]
          %v5868 = vld [vmem:[%s5846 + $0x14f] sm:$0xff]
          %v5869 = vld [vmem:[%s5846 + $0x167] sm:$0xff]
          %v5870 = vld [vmem:[%s5846 + $0x16f] sm:$0xff]
          %v5871 = vld [vmem:[%s5846 + $0x187] sm:$0xff]
          %v5872 = vld [vmem:[%s5846 + $0x18f] sm:$0xff]
          %v5873 = vld [vmem:[%s5846 + $0x1a7] sm:$0xff]
          %v5874 = vld [vmem:[%s5846 + $0x1af] sm:$0xff]
          %v5875 = vld [vmem:[%s5846 + $0x1c7] sm:$0xff]
          %v5876 = vld [vmem:[%s5846 + $0x1cf] sm:$0xff]
          %v5877 = vld [vmem:[%s5846 + $0x1e7] sm:$0xff]
          %v5878 = vld [vmem:[%s5846 + $0x1ef] sm:$0xff]
          %v5879 = vpack.c.bf16 %v5848, %v5847
          %v5880 = vpack.c.bf16 %v5850, %v5849
          %v5881 = vpack.c.bf16 %v5852, %v5851
          %v5882 = vpack.c.bf16 %v5854, %v5853
          %v5883 = vpack.c.bf16 %v5856, %v5855
          %v5884 = vpack.c.bf16 %v5858, %v5857
          %v5885 = vpack.c.bf16 %v5860, %v5859
          %v5886 = vpack.c.bf16 %v5862, %v5861
          %v5887 = vpack.c.bf16 %v5864, %v5863
          %v5888 = vpack.c.bf16 %v5866, %v5865
          %v5889 = vpack.c.bf16 %v5868, %v5867
          %v5890 = vpack.c.bf16 %v5870, %v5869
          %v5891 = vpack.c.bf16 %v5872, %v5871
          %v5892 = vpack.c.bf16 %v5874, %v5873
          %v5893 = vpack.c.bf16 %v5876, %v5875
          %v5894 = vpack.c.bf16 %v5878, %v5877
          %v5895 = vld [vmem:[%s507 + $0x30] sm:$0xf]
          %v5896 = vld [vmem:[%s507 + $0x34] sm:$0xf]
          %v5897 = vld [vmem:[%s507 + $0x38] sm:$0xf]
          %v5898 = vld [vmem:[%s507 + $0x3c] sm:$0xf]
          %v5903 = vunpack.c.l.b16 %v5895
          %v5904 = vunpack.c.l.b16 %v5896
          %v5905 = vunpack.c.l.b16 %v5897
          %v5906 = vunpack.c.l.b16 %v5898
          %v5907 = vpack.c.b16 %v5904, %v5903
          %v5908 = vpack.c.b16 %v5906, %v5905
          %v5912 = vsel %vm5326, %v5879, 0
          %v5915 = vsel %vm5326, %v5880, 0
          %v5918 = vsel %vm5326, %v5881, 0
          %v5921 = vsel %vm5326, %v5882, 0
          %v5924 = vsel %vm5326, %v5883, 0
          %v5927 = vsel %vm5326, %v5884, 0
          %v5930 = vsel %vm5326, %v5885, 0
          %v5933 = vsel %vm5326, %v5886, 0
          %v5936 = vsel %vm5326, %v5887, 0
          %v5939 = vsel %vm5326, %v5888, 0
          %v5942 = vsel %vm5326, %v5889, 0
          %v5945 = vsel %vm5326, %v5890, 0
          %v5948 = vsel %vm5326, %v5891, 0
          %v5951 = vsel %vm5326, %v5892, 0
          %v5954 = vsel %vm5326, %v5893, 0
          %v5957 = vsel %vm5326, %v5894, 0
          %5959 = vmatpush.bf16.msra.mxu0 0
          %5960 = vmatpush.bf16.msra.mxu0 0
          %5961 = vmatpush.bf16.msra.mxu0 0
          %5962 = vmatpush.bf16.msra.mxu0 0
          %5963 = vmatpush.bf16.msra.mxu0 0
          %5964 = vmatpush.bf16.msra.mxu0 0
          %5965 = vmatpush.bf16.msra.mxu0 %v5908
          %5966 = vmatpush.bf16.msra.mxu0 %v5907
          %5967 = vmatmul.bf16.gmra.mxu0 %v5912
          %v5968 = vpop.f32.mrf.mxu0
          %v5969 = vadd.f32 0.0, %v5968
          %v5970 = vpop.f32.mrf.mxu0
          %v5971 = vadd.f32 0.0, %v5970
          %5972 = vmatmul.bf16.gmra.mxu0 %v5915
          %v5973 = vpop.f32.mrf.mxu0
          %v5974 = vadd.f32 0.0, %v5973
          %v5975 = vpop.f32.mrf.mxu0
          %v5976 = vadd.f32 0.0, %v5975
          %5977 = vmatmul.bf16.gmra.mxu0 %v5918
          %v5978 = vpop.f32.mrf.mxu0
          %v5979 = vadd.f32 0.0, %v5978
          %v5980 = vpop.f32.mrf.mxu0
          %v5981 = vadd.f32 0.0, %v5980
          %5982 = vmatmul.bf16.gmra.mxu0 %v5921
          %v5983 = vpop.f32.mrf.mxu0
          %v5984 = vadd.f32 0.0, %v5983
          %v5985 = vpop.f32.mrf.mxu0
          %v5986 = vadd.f32 0.0, %v5985
          %5987 = vmatmul.bf16.gmra.mxu0 %v5924
          %v5988 = vpop.f32.mrf.mxu0
          %v5989 = vadd.f32 0.0, %v5988
          %v5990 = vpop.f32.mrf.mxu0
          %v5991 = vadd.f32 0.0, %v5990
          %5992 = vmatmul.bf16.gmra.mxu0 %v5927
          %v5993 = vpop.f32.mrf.mxu0
          %v5994 = vadd.f32 0.0, %v5993
          %v5995 = vpop.f32.mrf.mxu0
          %v5996 = vadd.f32 0.0, %v5995
          %5997 = vmatmul.bf16.gmra.mxu0 %v5930
          %v5998 = vpop.f32.mrf.mxu0
          %v5999 = vadd.f32 0.0, %v5998
          %v6000 = vpop.f32.mrf.mxu0
          %v6001 = vadd.f32 0.0, %v6000
          %6002 = vmatmul.bf16.gmra.mxu0 %v5933
          %v6003 = vpop.f32.mrf.mxu0
          %v6004 = vadd.f32 0.0, %v6003
          %v6005 = vpop.f32.mrf.mxu0
          %v6006 = vadd.f32 0.0, %v6005
          %6007 = vmatmul.bf16.gmra.mxu0 %v5936
          %v6008 = vpop.f32.mrf.mxu0
          %v6009 = vadd.f32 0.0, %v6008
          %v6010 = vpop.f32.mrf.mxu0
          %v6011 = vadd.f32 0.0, %v6010
          %6012 = vmatmul.bf16.gmra.mxu0 %v5939
          %v6013 = vpop.f32.mrf.mxu0
          %v6014 = vadd.f32 0.0, %v6013
          %v6015 = vpop.f32.mrf.mxu0
          %v6016 = vadd.f32 0.0, %v6015
          %6017 = vmatmul.bf16.gmra.mxu0 %v5942
          %v6018 = vpop.f32.mrf.mxu0
          %v6019 = vadd.f32 0.0, %v6018
          %v6020 = vpop.f32.mrf.mxu0
          %v6021 = vadd.f32 0.0, %v6020
          %6022 = vmatmul.bf16.gmra.mxu0 %v5945
          %v6023 = vpop.f32.mrf.mxu0
          %v6024 = vadd.f32 0.0, %v6023
          %v6025 = vpop.f32.mrf.mxu0
          %v6026 = vadd.f32 0.0, %v6025
          %6027 = vmatmul.bf16.gmra.mxu0 %v5948
          %v6028 = vpop.f32.mrf.mxu0
          %v6029 = vadd.f32 0.0, %v6028
          %v6030 = vpop.f32.mrf.mxu0
          %v6031 = vadd.f32 0.0, %v6030
          %6032 = vmatmul.bf16.gmra.mxu0 %v5951
          %v6033 = vpop.f32.mrf.mxu0
          %v6034 = vadd.f32 0.0, %v6033
          %v6035 = vpop.f32.mrf.mxu0
          %v6036 = vadd.f32 0.0, %v6035
          %6037 = vmatmul.bf16.gmra.mxu0 %v5954
          %v6038 = vpop.f32.mrf.mxu0
          %v6039 = vadd.f32 0.0, %v6038
          %v6040 = vpop.f32.mrf.mxu0
          %v6041 = vadd.f32 0.0, %v6040
          %6042 = vmatmul.bf16.gmra.mxu0 %v5957
          %v6043 = vpop.f32.mrf.mxu0
          %v6044 = vadd.f32 0.0, %v6043
          %v6045 = vpop.f32.mrf.mxu0
          %v6046 = vadd.f32 0.0, %v6045
          %6047 = vdwg.mxu0
          %v6048 = vadd.f32 %v5814, %v5969
          %v6049 = vadd.f32 %v5815, %v5971
          %v6050 = vadd.f32 %v5816, %v5974
          %v6051 = vadd.f32 %v5817, %v5976
          %v6052 = vadd.f32 %v5818, %v5979
          %v6053 = vadd.f32 %v5819, %v5981
          %v6054 = vadd.f32 %v5820, %v5984
          %v6055 = vadd.f32 %v5821, %v5986
          %v6056 = vadd.f32 %v5822, %v5989
          %v6057 = vadd.f32 %v5823, %v5991
          %v6058 = vadd.f32 %v5824, %v5994
          %v6059 = vadd.f32 %v5825, %v5996
          %v6060 = vadd.f32 %v5826, %v5999
          %v6061 = vadd.f32 %v5827, %v6001
          %v6062 = vadd.f32 %v5828, %v6004
          %v6063 = vadd.f32 %v5829, %v6006
          %v6064 = vadd.f32 %v5830, %v6009
          %v6065 = vadd.f32 %v5831, %v6011
          %v6066 = vadd.f32 %v5832, %v6014
          %v6067 = vadd.f32 %v5833, %v6016
          %v6068 = vadd.f32 %v5834, %v6019
          %v6069 = vadd.f32 %v5835, %v6021
          %v6070 = vadd.f32 %v5836, %v6024
          %v6071 = vadd.f32 %v5837, %v6026
          %v6072 = vadd.f32 %v5838, %v6029
          %v6073 = vadd.f32 %v5839, %v6031
          %v6074 = vadd.f32 %v5840, %v6034
          %v6075 = vadd.f32 %v5841, %v6036
          %v6076 = vadd.f32 %v5842, %v6039
          %v6077 = vadd.f32 %v5843, %v6041
          %v6078 = vadd.f32 %v5844, %v6044
          %v6079 = vadd.f32 %v5845, %v6046
          %v6080 = vld [vmem:[%s5846 + $0x8] sm:$0xff]
          %v6081 = vld [vmem:[%s5846 + $0x10] sm:$0xff]
          %v6082 = vld [vmem:[%s5846 + $0x28] sm:$0xff]
          %v6083 = vld [vmem:[%s5846 + $0x30] sm:$0xff]
          %v6084 = vld [vmem:[%s5846 + $0x48] sm:$0xff]
          %v6085 = vld [vmem:[%s5846 + $0x50] sm:$0xff]
          %v6086 = vld [vmem:[%s5846 + $0x68] sm:$0xff]
          %v6087 = vld [vmem:[%s5846 + $0x70] sm:$0xff]
          %v6088 = vld [vmem:[%s5846 + $0x88] sm:$0xff]
          %v6089 = vld [vmem:[%s5846 + $0x90] sm:$0xff]
          %v6090 = vld [vmem:[%s5846 + $0xa8] sm:$0xff]
          %v6091 = vld [vmem:[%s5846 + $0xb0] sm:$0xff]
          %v6092 = vld [vmem:[%s5846 + $0xc8] sm:$0xff]
          %v6093 = vld [vmem:[%s5846 + $0xd0] sm:$0xff]
          %v6094 = vld [vmem:[%s5846 + $0xe8] sm:$0xff]
          %v6095 = vld [vmem:[%s5846 + $0xf0] sm:$0xff]
          %v6096 = vld [vmem:[%s5846 + $0x108] sm:$0xff]
          %v6097 = vld [vmem:[%s5846 + $0x110] sm:$0xff]
          %v6098 = vld [vmem:[%s5846 + $0x128] sm:$0xff]
          %v6099 = vld [vmem:[%s5846 + $0x130] sm:$0xff]
          %v6100 = vld [vmem:[%s5846 + $0x148] sm:$0xff]
          %v6101 = vld [vmem:[%s5846 + $0x150] sm:$0xff]
          %v6102 = vld [vmem:[%s5846 + $0x168] sm:$0xff]
          %v6103 = vld [vmem:[%s5846 + $0x170] sm:$0xff]
          %v6104 = vld [vmem:[%s5846 + $0x188] sm:$0xff]
          %v6105 = vld [vmem:[%s5846 + $0x190] sm:$0xff]
          %v6106 = vld [vmem:[%s5846 + $0x1a8] sm:$0xff]
          %v6107 = vld [vmem:[%s5846 + $0x1b0] sm:$0xff]
          %v6108 = vld [vmem:[%s5846 + $0x1c8] sm:$0xff]
          %v6109 = vld [vmem:[%s5846 + $0x1d0] sm:$0xff]
          %v6110 = vld [vmem:[%s5846 + $0x1e8] sm:$0xff]
          %v6111 = vld [vmem:[%s5846 + $0x1f0] sm:$0xff]
          %v6112 = vpack.c.bf16 %v6081, %v6080
          %v6113 = vpack.c.bf16 %v6083, %v6082
          %v6114 = vpack.c.bf16 %v6085, %v6084
          %v6115 = vpack.c.bf16 %v6087, %v6086
          %v6116 = vpack.c.bf16 %v6089, %v6088
          %v6117 = vpack.c.bf16 %v6091, %v6090
          %v6118 = vpack.c.bf16 %v6093, %v6092
          %v6119 = vpack.c.bf16 %v6095, %v6094
          %v6120 = vpack.c.bf16 %v6097, %v6096
          %v6121 = vpack.c.bf16 %v6099, %v6098
          %v6122 = vpack.c.bf16 %v6101, %v6100
          %v6123 = vpack.c.bf16 %v6103, %v6102
          %v6124 = vpack.c.bf16 %v6105, %v6104
          %v6125 = vpack.c.bf16 %v6107, %v6106
          %v6126 = vpack.c.bf16 %v6109, %v6108
          %v6127 = vpack.c.bf16 %v6111, %v6110
          %v6128 = vld [vmem:[%s507 + $0x40] sm:$0xf]
          %v6129 = vld [vmem:[%s507 + $0x44] sm:$0xf]
          %v6130 = vld [vmem:[%s507 + $0x48] sm:$0xf]
          %v6131 = vld [vmem:[%s507 + $0x4c] sm:$0xf]
          %v6136 = vunpack.c.l.b16 %v6128
          %v6137 = vunpack.c.l.b16 %v6129
          %v6138 = vunpack.c.l.b16 %v6130
          %v6139 = vunpack.c.l.b16 %v6131
          %v6140 = vpack.c.b16 %v6137, %v6136
          %v6141 = vpack.c.b16 %v6139, %v6138
          %v6145 = vsel %vm5326, %v6112, 0
          %v6148 = vsel %vm5326, %v6113, 0
          %v6151 = vsel %vm5326, %v6114, 0
          %v6154 = vsel %vm5326, %v6115, 0
          %v6157 = vsel %vm5326, %v6116, 0
          %v6160 = vsel %vm5326, %v6117, 0
          %v6163 = vsel %vm5326, %v6118, 0
          %v6166 = vsel %vm5326, %v6119, 0
          %v6169 = vsel %vm5326, %v6120, 0
          %v6172 = vsel %vm5326, %v6121, 0
          %v6175 = vsel %vm5326, %v6122, 0
          %v6178 = vsel %vm5326, %v6123, 0
          %v6181 = vsel %vm5326, %v6124, 0
          %v6184 = vsel %vm5326, %v6125, 0
          %v6187 = vsel %vm5326, %v6126, 0
          %v6190 = vsel %vm5326, %v6127, 0
          %6192 = vmatpush.bf16.msra.mxu0 0
          %6193 = vmatpush.bf16.msra.mxu0 0
          %6194 = vmatpush.bf16.msra.mxu0 0
          %6195 = vmatpush.bf16.msra.mxu0 0
          %6196 = vmatpush.bf16.msra.mxu0 0
          %6197 = vmatpush.bf16.msra.mxu0 0
          %6198 = vmatpush.bf16.msra.mxu0 %v6141
          %6199 = vmatpush.bf16.msra.mxu0 %v6140
          %6200 = vmatmul.bf16.gmra.mxu0 %v6145
          %v6201 = vpop.f32.mrf.mxu0
          %v6202 = vadd.f32 0.0, %v6201
          %v6203 = vpop.f32.mrf.mxu0
          %v6204 = vadd.f32 0.0, %v6203
          %6205 = vmatmul.bf16.gmra.mxu0 %v6148
          %v6206 = vpop.f32.mrf.mxu0
          %v6207 = vadd.f32 0.0, %v6206
          %v6208 = vpop.f32.mrf.mxu0
          %v6209 = vadd.f32 0.0, %v6208
          %6210 = vmatmul.bf16.gmra.mxu0 %v6151
          %v6211 = vpop.f32.mrf.mxu0
          %v6212 = vadd.f32 0.0, %v6211
          %v6213 = vpop.f32.mrf.mxu0
          %v6214 = vadd.f32 0.0, %v6213
          %6215 = vmatmul.bf16.gmra.mxu0 %v6154
          %v6216 = vpop.f32.mrf.mxu0
          %v6217 = vadd.f32 0.0, %v6216
          %v6218 = vpop.f32.mrf.mxu0
          %v6219 = vadd.f32 0.0, %v6218
          %6220 = vmatmul.bf16.gmra.mxu0 %v6157
          %v6221 = vpop.f32.mrf.mxu0
          %v6222 = vadd.f32 0.0, %v6221
          %v6223 = vpop.f32.mrf.mxu0
          %v6224 = vadd.f32 0.0, %v6223
          %6225 = vmatmul.bf16.gmra.mxu0 %v6160
          %v6226 = vpop.f32.mrf.mxu0
          %v6227 = vadd.f32 0.0, %v6226
          %v6228 = vpop.f32.mrf.mxu0
          %v6229 = vadd.f32 0.0, %v6228
          %6230 = vmatmul.bf16.gmra.mxu0 %v6163
          %v6231 = vpop.f32.mrf.mxu0
          %v6232 = vadd.f32 0.0, %v6231
          %v6233 = vpop.f32.mrf.mxu0
          %v6234 = vadd.f32 0.0, %v6233
          %6235 = vmatmul.bf16.gmra.mxu0 %v6166
          %v6236 = vpop.f32.mrf.mxu0
          %v6237 = vadd.f32 0.0, %v6236
          %v6238 = vpop.f32.mrf.mxu0
          %v6239 = vadd.f32 0.0, %v6238
          %6240 = vmatmul.bf16.gmra.mxu0 %v6169
          %v6241 = vpop.f32.mrf.mxu0
          %v6242 = vadd.f32 0.0, %v6241
          %v6243 = vpop.f32.mrf.mxu0
          %v6244 = vadd.f32 0.0, %v6243
          %6245 = vmatmul.bf16.gmra.mxu0 %v6172
          %v6246 = vpop.f32.mrf.mxu0
          %v6247 = vadd.f32 0.0, %v6246
          %v6248 = vpop.f32.mrf.mxu0
          %v6249 = vadd.f32 0.0, %v6248
          %6250 = vmatmul.bf16.gmra.mxu0 %v6175
          %v6251 = vpop.f32.mrf.mxu0
          %v6252 = vadd.f32 0.0, %v6251
          %v6253 = vpop.f32.mrf.mxu0
          %v6254 = vadd.f32 0.0, %v6253
          %6255 = vmatmul.bf16.gmra.mxu0 %v6178
          %v6256 = vpop.f32.mrf.mxu0
          %v6257 = vadd.f32 0.0, %v6256
          %v6258 = vpop.f32.mrf.mxu0
          %v6259 = vadd.f32 0.0, %v6258
          %6260 = vmatmul.bf16.gmra.mxu0 %v6181
          %v6261 = vpop.f32.mrf.mxu0
          %v6262 = vadd.f32 0.0, %v6261
          %v6263 = vpop.f32.mrf.mxu0
          %v6264 = vadd.f32 0.0, %v6263
          %6265 = vmatmul.bf16.gmra.mxu0 %v6184
          %v6266 = vpop.f32.mrf.mxu0
          %v6267 = vadd.f32 0.0, %v6266
          %v6268 = vpop.f32.mrf.mxu0
          %v6269 = vadd.f32 0.0, %v6268
          %6270 = vmatmul.bf16.gmra.mxu0 %v6187
          %v6271 = vpop.f32.mrf.mxu0
          %v6272 = vadd.f32 0.0, %v6271
          %v6273 = vpop.f32.mrf.mxu0
          %v6274 = vadd.f32 0.0, %v6273
          %6275 = vmatmul.bf16.gmra.mxu0 %v6190
          %v6276 = vpop.f32.mrf.mxu0
          %v6277 = vadd.f32 0.0, %v6276
          %v6278 = vpop.f32.mrf.mxu0
          %v6279 = vadd.f32 0.0, %v6278
          %6280 = vdwg.mxu0
          %v6281 = vadd.f32 %v6048, %v6202
          %v6282 = vadd.f32 %v6049, %v6204
          %v6283 = vadd.f32 %v6050, %v6207
          %v6284 = vadd.f32 %v6051, %v6209
          %v6285 = vadd.f32 %v6052, %v6212
          %v6286 = vadd.f32 %v6053, %v6214
          %v6287 = vadd.f32 %v6054, %v6217
          %v6288 = vadd.f32 %v6055, %v6219
          %v6289 = vadd.f32 %v6056, %v6222
          %v6290 = vadd.f32 %v6057, %v6224
          %v6291 = vadd.f32 %v6058, %v6227
          %v6292 = vadd.f32 %v6059, %v6229
          %v6293 = vadd.f32 %v6060, %v6232
          %v6294 = vadd.f32 %v6061, %v6234
          %v6295 = vadd.f32 %v6062, %v6237
          %v6296 = vadd.f32 %v6063, %v6239
          %v6297 = vadd.f32 %v6064, %v6242
          %v6298 = vadd.f32 %v6065, %v6244
          %v6299 = vadd.f32 %v6066, %v6247
          %v6300 = vadd.f32 %v6067, %v6249
          %v6301 = vadd.f32 %v6068, %v6252
          %v6302 = vadd.f32 %v6069, %v6254
          %v6303 = vadd.f32 %v6070, %v6257
          %v6304 = vadd.f32 %v6071, %v6259
          %v6305 = vadd.f32 %v6072, %v6262
          %v6306 = vadd.f32 %v6073, %v6264
          %v6307 = vadd.f32 %v6074, %v6267
          %v6308 = vadd.f32 %v6075, %v6269
          %v6309 = vadd.f32 %v6076, %v6272
          %v6310 = vadd.f32 %v6077, %v6274
          %v6311 = vadd.f32 %v6078, %v6277
          %v6312 = vadd.f32 %v6079, %v6279
          %v6313 = vld [vmem:[%s5846 + $0x9] sm:$0xff]
          %v6314 = vld [vmem:[%s5846 + $0x11] sm:$0xff]
          %v6315 = vld [vmem:[%s5846 + $0x29] sm:$0xff]
          %v6316 = vld [vmem:[%s5846 + $0x31] sm:$0xff]
          %v6317 = vld [vmem:[%s5846 + $0x49] sm:$0xff]
          %v6318 = vld [vmem:[%s5846 + $0x51] sm:$0xff]
          %v6319 = vld [vmem:[%s5846 + $0x69] sm:$0xff]
          %v6320 = vld [vmem:[%s5846 + $0x71] sm:$0xff]
          %v6321 = vld [vmem:[%s5846 + $0x89] sm:$0xff]
          %v6322 = vld [vmem:[%s5846 + $0x91] sm:$0xff]
          %v6323 = vld [vmem:[%s5846 + $0xa9] sm:$0xff]
          %v6324 = vld [vmem:[%s5846 + $0xb1] sm:$0xff]
          %v6325 = vld [vmem:[%s5846 + $0xc9] sm:$0xff]
          %v6326 = vld [vmem:[%s5846 + $0xd1] sm:$0xff]
          %v6327 = vld [vmem:[%s5846 + $0xe9] sm:$0xff]
          %v6328 = vld [vmem:[%s5846 + $0xf1] sm:$0xff]
          %v6329 = vld [vmem:[%s5846 + $0x109] sm:$0xff]
          %v6330 = vld [vmem:[%s5846 + $0x111] sm:$0xff]
          %v6331 = vld [vmem:[%s5846 + $0x129] sm:$0xff]
          %v6332 = vld [vmem:[%s5846 + $0x131] sm:$0xff]
          %v6333 = vld [vmem:[%s5846 + $0x149] sm:$0xff]
          %v6334 = vld [vmem:[%s5846 + $0x151] sm:$0xff]
          %v6335 = vld [vmem:[%s5846 + $0x169] sm:$0xff]
          %v6336 = vld [vmem:[%s5846 + $0x171] sm:$0xff]
          %v6337 = vld [vmem:[%s5846 + $0x189] sm:$0xff]
          %v6338 = vld [vmem:[%s5846 + $0x191] sm:$0xff]
          %v6339 = vld [vmem:[%s5846 + $0x1a9] sm:$0xff]
          %v6340 = vld [vmem:[%s5846 + $0x1b1] sm:$0xff]
          %v6341 = vld [vmem:[%s5846 + $0x1c9] sm:$0xff]
          %v6342 = vld [vmem:[%s5846 + $0x1d1] sm:$0xff]
          %v6343 = vld [vmem:[%s5846 + $0x1e9] sm:$0xff]
          %v6344 = vld [vmem:[%s5846 + $0x1f1] sm:$0xff]
          %v6345 = vpack.c.bf16 %v6314, %v6313
          %v6346 = vpack.c.bf16 %v6316, %v6315
          %v6347 = vpack.c.bf16 %v6318, %v6317
          %v6348 = vpack.c.bf16 %v6320, %v6319
          %v6349 = vpack.c.bf16 %v6322, %v6321
          %v6350 = vpack.c.bf16 %v6324, %v6323
          %v6351 = vpack.c.bf16 %v6326, %v6325
          %v6352 = vpack.c.bf16 %v6328, %v6327
          %v6353 = vpack.c.bf16 %v6330, %v6329
          %v6354 = vpack.c.bf16 %v6332, %v6331
          %v6355 = vpack.c.bf16 %v6334, %v6333
          %v6356 = vpack.c.bf16 %v6336, %v6335
          %v6357 = vpack.c.bf16 %v6338, %v6337
          %v6358 = vpack.c.bf16 %v6340, %v6339
          %v6359 = vpack.c.bf16 %v6342, %v6341
          %v6360 = vpack.c.bf16 %v6344, %v6343
          %v6361 = vld [vmem:[%s507 + $0x50] sm:$0xf]
          %v6362 = vld [vmem:[%s507 + $0x54] sm:$0xf]
          %v6363 = vld [vmem:[%s507 + $0x58] sm:$0xf]
          %v6364 = vld [vmem:[%s507 + $0x5c] sm:$0xf]
          %v6369 = vunpack.c.l.b16 %v6361
          %v6370 = vunpack.c.l.b16 %v6362
          %v6371 = vunpack.c.l.b16 %v6363
          %v6372 = vunpack.c.l.b16 %v6364
          %v6373 = vpack.c.b16 %v6370, %v6369
          %v6374 = vpack.c.b16 %v6372, %v6371
          %v6378 = vsel %vm5326, %v6345, 0
          %v6381 = vsel %vm5326, %v6346, 0
          %v6384 = vsel %vm5326, %v6347, 0
          %v6387 = vsel %vm5326, %v6348, 0
          %v6390 = vsel %vm5326, %v6349, 0
          %v6393 = vsel %vm5326, %v6350, 0
          %v6396 = vsel %vm5326, %v6351, 0
          %v6399 = vsel %vm5326, %v6352, 0
          %v6402 = vsel %vm5326, %v6353, 0
          %v6405 = vsel %vm5326, %v6354, 0
          %v6408 = vsel %vm5326, %v6355, 0
          %v6411 = vsel %vm5326, %v6356, 0
          %v6414 = vsel %vm5326, %v6357, 0
          %v6417 = vsel %vm5326, %v6358, 0
          %v6420 = vsel %vm5326, %v6359, 0
          %v6423 = vsel %vm5326, %v6360, 0
          %6425 = vmatpush.bf16.msra.mxu0 0
          %6426 = vmatpush.bf16.msra.mxu0 0
          %6427 = vmatpush.bf16.msra.mxu0 0
          %6428 = vmatpush.bf16.msra.mxu0 0
          %6429 = vmatpush.bf16.msra.mxu0 0
          %6430 = vmatpush.bf16.msra.mxu0 0
          %6431 = vmatpush.bf16.msra.mxu0 %v6374
          %6432 = vmatpush.bf16.msra.mxu0 %v6373
          %6433 = vmatmul.bf16.gmra.mxu0 %v6378
          %v6434 = vpop.f32.mrf.mxu0
          %v6435 = vadd.f32 0.0, %v6434
          %v6436 = vpop.f32.mrf.mxu0
          %v6437 = vadd.f32 0.0, %v6436
          %6438 = vmatmul.bf16.gmra.mxu0 %v6381
          %v6439 = vpop.f32.mrf.mxu0
          %v6440 = vadd.f32 0.0, %v6439
          %v6441 = vpop.f32.mrf.mxu0
          %v6442 = vadd.f32 0.0, %v6441
          %6443 = vmatmul.bf16.gmra.mxu0 %v6384
          %v6444 = vpop.f32.mrf.mxu0
          %v6445 = vadd.f32 0.0, %v6444
          %v6446 = vpop.f32.mrf.mxu0
          %v6447 = vadd.f32 0.0, %v6446
          %6448 = vmatmul.bf16.gmra.mxu0 %v6387
          %v6449 = vpop.f32.mrf.mxu0
          %v6450 = vadd.f32 0.0, %v6449
          %v6451 = vpop.f32.mrf.mxu0
          %v6452 = vadd.f32 0.0, %v6451
          %6453 = vmatmul.bf16.gmra.mxu0 %v6390
          %v6454 = vpop.f32.mrf.mxu0
          %v6455 = vadd.f32 0.0, %v6454
          %v6456 = vpop.f32.mrf.mxu0
          %v6457 = vadd.f32 0.0, %v6456
          %6458 = vmatmul.bf16.gmra.mxu0 %v6393
          %v6459 = vpop.f32.mrf.mxu0
          %v6460 = vadd.f32 0.0, %v6459
          %v6461 = vpop.f32.mrf.mxu0
          %v6462 = vadd.f32 0.0, %v6461
          %6463 = vmatmul.bf16.gmra.mxu0 %v6396
          %v6464 = vpop.f32.mrf.mxu0
          %v6465 = vadd.f32 0.0, %v6464
          %v6466 = vpop.f32.mrf.mxu0
          %v6467 = vadd.f32 0.0, %v6466
          %6468 = vmatmul.bf16.gmra.mxu0 %v6399
          %v6469 = vpop.f32.mrf.mxu0
          %v6470 = vadd.f32 0.0, %v6469
          %v6471 = vpop.f32.mrf.mxu0
          %v6472 = vadd.f32 0.0, %v6471
          %6473 = vmatmul.bf16.gmra.mxu0 %v6402
          %v6474 = vpop.f32.mrf.mxu0
          %v6475 = vadd.f32 0.0, %v6474
          %v6476 = vpop.f32.mrf.mxu0
          %v6477 = vadd.f32 0.0, %v6476
          %6478 = vmatmul.bf16.gmra.mxu0 %v6405
          %v6479 = vpop.f32.mrf.mxu0
          %v6480 = vadd.f32 0.0, %v6479
          %v6481 = vpop.f32.mrf.mxu0
          %v6482 = vadd.f32 0.0, %v6481
          %6483 = vmatmul.bf16.gmra.mxu0 %v6408
          %v6484 = vpop.f32.mrf.mxu0
          %v6485 = vadd.f32 0.0, %v6484
          %v6486 = vpop.f32.mrf.mxu0
          %v6487 = vadd.f32 0.0, %v6486
          %6488 = vmatmul.bf16.gmra.mxu0 %v6411
          %v6489 = vpop.f32.mrf.mxu0
          %v6490 = vadd.f32 0.0, %v6489
          %v6491 = vpop.f32.mrf.mxu0
          %v6492 = vadd.f32 0.0, %v6491
          %6493 = vmatmul.bf16.gmra.mxu0 %v6414
          %v6494 = vpop.f32.mrf.mxu0
          %v6495 = vadd.f32 0.0, %v6494
          %v6496 = vpop.f32.mrf.mxu0
          %v6497 = vadd.f32 0.0, %v6496
          %6498 = vmatmul.bf16.gmra.mxu0 %v6417
          %v6499 = vpop.f32.mrf.mxu0
          %v6500 = vadd.f32 0.0, %v6499
          %v6501 = vpop.f32.mrf.mxu0
          %v6502 = vadd.f32 0.0, %v6501
          %6503 = vmatmul.bf16.gmra.mxu0 %v6420
          %v6504 = vpop.f32.mrf.mxu0
          %v6505 = vadd.f32 0.0, %v6504
          %v6506 = vpop.f32.mrf.mxu0
          %v6507 = vadd.f32 0.0, %v6506
          %6508 = vmatmul.bf16.gmra.mxu0 %v6423
          %v6509 = vpop.f32.mrf.mxu0
          %v6510 = vadd.f32 0.0, %v6509
          %v6511 = vpop.f32.mrf.mxu0
          %v6512 = vadd.f32 0.0, %v6511
          %6513 = vdwg.mxu0
          %v6514 = vadd.f32 %v6281, %v6435
          %v6515 = vadd.f32 %v6282, %v6437
          %v6516 = vadd.f32 %v6283, %v6440
          %v6517 = vadd.f32 %v6284, %v6442
          %v6518 = vadd.f32 %v6285, %v6445
          %v6519 = vadd.f32 %v6286, %v6447
          %v6520 = vadd.f32 %v6287, %v6450
          %v6521 = vadd.f32 %v6288, %v6452
          %v6522 = vadd.f32 %v6289, %v6455
          %v6523 = vadd.f32 %v6290, %v6457
          %v6524 = vadd.f32 %v6291, %v6460
          %v6525 = vadd.f32 %v6292, %v6462
          %v6526 = vadd.f32 %v6293, %v6465
          %v6527 = vadd.f32 %v6294, %v6467
          %v6528 = vadd.f32 %v6295, %v6470
          %v6529 = vadd.f32 %v6296, %v6472
          %v6530 = vadd.f32 %v6297, %v6475
          %v6531 = vadd.f32 %v6298, %v6477
          %v6532 = vadd.f32 %v6299, %v6480
          %v6533 = vadd.f32 %v6300, %v6482
          %v6534 = vadd.f32 %v6301, %v6485
          %v6535 = vadd.f32 %v6302, %v6487
          %v6536 = vadd.f32 %v6303, %v6490
          %v6537 = vadd.f32 %v6304, %v6492
          %v6538 = vadd.f32 %v6305, %v6495
          %v6539 = vadd.f32 %v6306, %v6497
          %v6540 = vadd.f32 %v6307, %v6500
          %v6541 = vadd.f32 %v6308, %v6502
          %v6542 = vadd.f32 %v6309, %v6505
          %v6543 = vadd.f32 %v6310, %v6507
          %v6544 = vadd.f32 %v6311, %v6510
          %v6545 = vadd.f32 %v6312, %v6512
          %s6546 = scalar_lea.vmem [#allocation2], 64
          %v6547 = vld [vmem:[%s6546 + $0x7] sm:$0xff]
          %v6548 = vld [vmem:[%s6546 + $0xf] sm:$0xff]
          %v6549 = vld [vmem:[%s6546 + $0x27] sm:$0xff]
          %v6550 = vld [vmem:[%s6546 + $0x2f] sm:$0xff]
          %v6551 = vld [vmem:[%s6546 + $0x47] sm:$0xff]
          %v6552 = vld [vmem:[%s6546 + $0x4f] sm:$0xff]
          %v6553 = vld [vmem:[%s6546 + $0x67] sm:$0xff]
          %v6554 = vld [vmem:[%s6546 + $0x6f] sm:$0xff]
          %v6555 = vld [vmem:[%s6546 + $0x87] sm:$0xff]
          %v6556 = vld [vmem:[%s6546 + $0x8f] sm:$0xff]
          %v6557 = vld [vmem:[%s6546 + $0xa7] sm:$0xff]
          %v6558 = vld [vmem:[%s6546 + $0xaf] sm:$0xff]
          %v6559 = vld [vmem:[%s6546 + $0xc7] sm:$0xff]
          %v6560 = vld [vmem:[%s6546 + $0xcf] sm:$0xff]
          %v6561 = vld [vmem:[%s6546 + $0xe7] sm:$0xff]
          %v6562 = vld [vmem:[%s6546 + $0xef] sm:$0xff]
          %v6563 = vld [vmem:[%s6546 + $0x107] sm:$0xff]
          %v6564 = vld [vmem:[%s6546 + $0x10f] sm:$0xff]
          %v6565 = vld [vmem:[%s6546 + $0x127] sm:$0xff]
          %v6566 = vld [vmem:[%s6546 + $0x12f] sm:$0xff]
          %v6567 = vld [vmem:[%s6546 + $0x147] sm:$0xff]
          %v6568 = vld [vmem:[%s6546 + $0x14f] sm:$0xff]
          %v6569 = vld [vmem:[%s6546 + $0x167] sm:$0xff]
          %v6570 = vld [vmem:[%s6546 + $0x16f] sm:$0xff]
          %v6571 = vld [vmem:[%s6546 + $0x187] sm:$0xff]
          %v6572 = vld [vmem:[%s6546 + $0x18f] sm:$0xff]
          %v6573 = vld [vmem:[%s6546 + $0x1a7] sm:$0xff]
          %v6574 = vld [vmem:[%s6546 + $0x1af] sm:$0xff]
          %v6575 = vld [vmem:[%s6546 + $0x1c7] sm:$0xff]
          %v6576 = vld [vmem:[%s6546 + $0x1cf] sm:$0xff]
          %v6577 = vld [vmem:[%s6546 + $0x1e7] sm:$0xff]
          %v6578 = vld [vmem:[%s6546 + $0x1ef] sm:$0xff]
          %v6579 = vpack.c.bf16 %v6548, %v6547
          %v6580 = vpack.c.bf16 %v6550, %v6549
          %v6581 = vpack.c.bf16 %v6552, %v6551
          %v6582 = vpack.c.bf16 %v6554, %v6553
          %v6583 = vpack.c.bf16 %v6556, %v6555
          %v6584 = vpack.c.bf16 %v6558, %v6557
          %v6585 = vpack.c.bf16 %v6560, %v6559
          %v6586 = vpack.c.bf16 %v6562, %v6561
          %v6587 = vpack.c.bf16 %v6564, %v6563
          %v6588 = vpack.c.bf16 %v6566, %v6565
          %v6589 = vpack.c.bf16 %v6568, %v6567
          %v6590 = vpack.c.bf16 %v6570, %v6569
          %v6591 = vpack.c.bf16 %v6572, %v6571
          %v6592 = vpack.c.bf16 %v6574, %v6573
          %v6593 = vpack.c.bf16 %v6576, %v6575
          %v6594 = vpack.c.bf16 %v6578, %v6577
          %v6595 = vld [vmem:[%s507 + $0x60] sm:$0xf]
          %v6596 = vld [vmem:[%s507 + $0x64] sm:$0xf]
          %v6597 = vld [vmem:[%s507 + $0x68] sm:$0xf]
          %v6598 = vld [vmem:[%s507 + $0x6c] sm:$0xf]
          %v6603 = vunpack.c.l.b16 %v6595
          %v6604 = vunpack.c.l.b16 %v6596
          %v6605 = vunpack.c.l.b16 %v6597
          %v6606 = vunpack.c.l.b16 %v6598
          %v6607 = vpack.c.b16 %v6604, %v6603
          %v6608 = vpack.c.b16 %v6606, %v6605
          %v6612 = vsel %vm5326, %v6579, 0
          %v6615 = vsel %vm5326, %v6580, 0
          %v6618 = vsel %vm5326, %v6581, 0
          %v6621 = vsel %vm5326, %v6582, 0
          %v6624 = vsel %vm5326, %v6583, 0
          %v6627 = vsel %vm5326, %v6584, 0
          %v6630 = vsel %vm5326, %v6585, 0
          %v6633 = vsel %vm5326, %v6586, 0
          %v6636 = vsel %vm5326, %v6587, 0
          %v6639 = vsel %vm5326, %v6588, 0
          %v6642 = vsel %vm5326, %v6589, 0
          %v6645 = vsel %vm5326, %v6590, 0
          %v6648 = vsel %vm5326, %v6591, 0
          %v6651 = vsel %vm5326, %v6592, 0
          %v6654 = vsel %vm5326, %v6593, 0
          %v6657 = vsel %vm5326, %v6594, 0
          %6659 = vmatpush.bf16.msra.mxu0 0
          %6660 = vmatpush.bf16.msra.mxu0 0
          %6661 = vmatpush.bf16.msra.mxu0 0
          %6662 = vmatpush.bf16.msra.mxu0 0
          %6663 = vmatpush.bf16.msra.mxu0 0
          %6664 = vmatpush.bf16.msra.mxu0 0
          %6665 = vmatpush.bf16.msra.mxu0 %v6608
          %6666 = vmatpush.bf16.msra.mxu0 %v6607
          %6667 = vmatmul.bf16.gmra.mxu0 %v6612
          %v6668 = vpop.f32.mrf.mxu0
          %v6669 = vadd.f32 0.0, %v6668
          %v6670 = vpop.f32.mrf.mxu0
          %v6671 = vadd.f32 0.0, %v6670
          %6672 = vmatmul.bf16.gmra.mxu0 %v6615
          %v6673 = vpop.f32.mrf.mxu0
          %v6674 = vadd.f32 0.0, %v6673
          %v6675 = vpop.f32.mrf.mxu0
          %v6676 = vadd.f32 0.0, %v6675
          %6677 = vmatmul.bf16.gmra.mxu0 %v6618
          %v6678 = vpop.f32.mrf.mxu0
          %v6679 = vadd.f32 0.0, %v6678
          %v6680 = vpop.f32.mrf.mxu0
          %v6681 = vadd.f32 0.0, %v6680
          %6682 = vmatmul.bf16.gmra.mxu0 %v6621
          %v6683 = vpop.f32.mrf.mxu0
          %v6684 = vadd.f32 0.0, %v6683
          %v6685 = vpop.f32.mrf.mxu0
          %v6686 = vadd.f32 0.0, %v6685
          %6687 = vmatmul.bf16.gmra.mxu0 %v6624
          %v6688 = vpop.f32.mrf.mxu0
          %v6689 = vadd.f32 0.0, %v6688
          %v6690 = vpop.f32.mrf.mxu0
          %v6691 = vadd.f32 0.0, %v6690
          %6692 = vmatmul.bf16.gmra.mxu0 %v6627
          %v6693 = vpop.f32.mrf.mxu0
          %v6694 = vadd.f32 0.0, %v6693
          %v6695 = vpop.f32.mrf.mxu0
          %v6696 = vadd.f32 0.0, %v6695
          %6697 = vmatmul.bf16.gmra.mxu0 %v6630
          %v6698 = vpop.f32.mrf.mxu0
          %v6699 = vadd.f32 0.0, %v6698
          %v6700 = vpop.f32.mrf.mxu0
          %v6701 = vadd.f32 0.0, %v6700
          %6702 = vmatmul.bf16.gmra.mxu0 %v6633
          %v6703 = vpop.f32.mrf.mxu0
          %v6704 = vadd.f32 0.0, %v6703
          %v6705 = vpop.f32.mrf.mxu0
          %v6706 = vadd.f32 0.0, %v6705
          %6707 = vmatmul.bf16.gmra.mxu0 %v6636
          %v6708 = vpop.f32.mrf.mxu0
          %v6709 = vadd.f32 0.0, %v6708
          %v6710 = vpop.f32.mrf.mxu0
          %v6711 = vadd.f32 0.0, %v6710
          %6712 = vmatmul.bf16.gmra.mxu0 %v6639
          %v6713 = vpop.f32.mrf.mxu0
          %v6714 = vadd.f32 0.0, %v6713
          %v6715 = vpop.f32.mrf.mxu0
          %v6716 = vadd.f32 0.0, %v6715
          %6717 = vmatmul.bf16.gmra.mxu0 %v6642
          %v6718 = vpop.f32.mrf.mxu0
          %v6719 = vadd.f32 0.0, %v6718
          %v6720 = vpop.f32.mrf.mxu0
          %v6721 = vadd.f32 0.0, %v6720
          %6722 = vmatmul.bf16.gmra.mxu0 %v6645
          %v6723 = vpop.f32.mrf.mxu0
          %v6724 = vadd.f32 0.0, %v6723
          %v6725 = vpop.f32.mrf.mxu0
          %v6726 = vadd.f32 0.0, %v6725
          %6727 = vmatmul.bf16.gmra.mxu0 %v6648
          %v6728 = vpop.f32.mrf.mxu0
          %v6729 = vadd.f32 0.0, %v6728
          %v6730 = vpop.f32.mrf.mxu0
          %v6731 = vadd.f32 0.0, %v6730
          %6732 = vmatmul.bf16.gmra.mxu0 %v6651
          %v6733 = vpop.f32.mrf.mxu0
          %v6734 = vadd.f32 0.0, %v6733
          %v6735 = vpop.f32.mrf.mxu0
          %v6736 = vadd.f32 0.0, %v6735
          %6737 = vmatmul.bf16.gmra.mxu0 %v6654
          %v6738 = vpop.f32.mrf.mxu0
          %v6739 = vadd.f32 0.0, %v6738
          %v6740 = vpop.f32.mrf.mxu0
          %v6741 = vadd.f32 0.0, %v6740
          %6742 = vmatmul.bf16.gmra.mxu0 %v6657
          %v6743 = vpop.f32.mrf.mxu0
          %v6744 = vadd.f32 0.0, %v6743
          %v6745 = vpop.f32.mrf.mxu0
          %v6746 = vadd.f32 0.0, %v6745
          %6747 = vdwg.mxu0
          %v6748 = vadd.f32 %v6514, %v6669
          %v6749 = vadd.f32 %v6515, %v6671
          %v6750 = vadd.f32 %v6516, %v6674
          %v6751 = vadd.f32 %v6517, %v6676
          %v6752 = vadd.f32 %v6518, %v6679
          %v6753 = vadd.f32 %v6519, %v6681
          %v6754 = vadd.f32 %v6520, %v6684
          %v6755 = vadd.f32 %v6521, %v6686
          %v6756 = vadd.f32 %v6522, %v6689
          %v6757 = vadd.f32 %v6523, %v6691
          %v6758 = vadd.f32 %v6524, %v6694
          %v6759 = vadd.f32 %v6525, %v6696
          %v6760 = vadd.f32 %v6526, %v6699
          %v6761 = vadd.f32 %v6527, %v6701
          %v6762 = vadd.f32 %v6528, %v6704
          %v6763 = vadd.f32 %v6529, %v6706
          %v6764 = vadd.f32 %v6530, %v6709
          %v6765 = vadd.f32 %v6531, %v6711
          %v6766 = vadd.f32 %v6532, %v6714
          %v6767 = vadd.f32 %v6533, %v6716
          %v6768 = vadd.f32 %v6534, %v6719
          %v6769 = vadd.f32 %v6535, %v6721
          %v6770 = vadd.f32 %v6536, %v6724
          %v6771 = vadd.f32 %v6537, %v6726
          %v6772 = vadd.f32 %v6538, %v6729
          %v6773 = vadd.f32 %v6539, %v6731
          %v6774 = vadd.f32 %v6540, %v6734
          %v6775 = vadd.f32 %v6541, %v6736
          %v6776 = vadd.f32 %v6542, %v6739
          %v6777 = vadd.f32 %v6543, %v6741
          %v6778 = vadd.f32 %v6544, %v6744
          %v6779 = vadd.f32 %v6545, %v6746
          %v6780 = vld [vmem:[%s6546 + $0x8] sm:$0xff]
          %v6781 = vld [vmem:[%s6546 + $0x10] sm:$0xff]
          %v6782 = vld [vmem:[%s6546 + $0x28] sm:$0xff]
          %v6783 = vld [vmem:[%s6546 + $0x30] sm:$0xff]
          %v6784 = vld [vmem:[%s6546 + $0x48] sm:$0xff]
          %v6785 = vld [vmem:[%s6546 + $0x50] sm:$0xff]
          %v6786 = vld [vmem:[%s6546 + $0x68] sm:$0xff]
          %v6787 = vld [vmem:[%s6546 + $0x70] sm:$0xff]
          %v6788 = vld [vmem:[%s6546 + $0x88] sm:$0xff]
          %v6789 = vld [vmem:[%s6546 + $0x90] sm:$0xff]
          %v6790 = vld [vmem:[%s6546 + $0xa8] sm:$0xff]
          %v6791 = vld [vmem:[%s6546 + $0xb0] sm:$0xff]
          %v6792 = vld [vmem:[%s6546 + $0xc8] sm:$0xff]
          %v6793 = vld [vmem:[%s6546 + $0xd0] sm:$0xff]
          %v6794 = vld [vmem:[%s6546 + $0xe8] sm:$0xff]
          %v6795 = vld [vmem:[%s6546 + $0xf0] sm:$0xff]
          %v6796 = vld [vmem:[%s6546 + $0x108] sm:$0xff]
          %v6797 = vld [vmem:[%s6546 + $0x110] sm:$0xff]
          %v6798 = vld [vmem:[%s6546 + $0x128] sm:$0xff]
          %v6799 = vld [vmem:[%s6546 + $0x130] sm:$0xff]
          %v6800 = vld [vmem:[%s6546 + $0x148] sm:$0xff]
          %v6801 = vld [vmem:[%s6546 + $0x150] sm:$0xff]
          %v6802 = vld [vmem:[%s6546 + $0x168] sm:$0xff]
          %v6803 = vld [vmem:[%s6546 + $0x170] sm:$0xff]
          %v6804 = vld [vmem:[%s6546 + $0x188] sm:$0xff]
          %v6805 = vld [vmem:[%s6546 + $0x190] sm:$0xff]
          %v6806 = vld [vmem:[%s6546 + $0x1a8] sm:$0xff]
          %v6807 = vld [vmem:[%s6546 + $0x1b0] sm:$0xff]
          %v6808 = vld [vmem:[%s6546 + $0x1c8] sm:$0xff]
          %v6809 = vld [vmem:[%s6546 + $0x1d0] sm:$0xff]
          %v6810 = vld [vmem:[%s6546 + $0x1e8] sm:$0xff]
          %v6811 = vld [vmem:[%s6546 + $0x1f0] sm:$0xff]
          %v6812 = vpack.c.bf16 %v6781, %v6780
          %v6813 = vpack.c.bf16 %v6783, %v6782
          %v6814 = vpack.c.bf16 %v6785, %v6784
          %v6815 = vpack.c.bf16 %v6787, %v6786
          %v6816 = vpack.c.bf16 %v6789, %v6788
          %v6817 = vpack.c.bf16 %v6791, %v6790
          %v6818 = vpack.c.bf16 %v6793, %v6792
          %v6819 = vpack.c.bf16 %v6795, %v6794
          %v6820 = vpack.c.bf16 %v6797, %v6796
          %v6821 = vpack.c.bf16 %v6799, %v6798
          %v6822 = vpack.c.bf16 %v6801, %v6800
          %v6823 = vpack.c.bf16 %v6803, %v6802
          %v6824 = vpack.c.bf16 %v6805, %v6804
          %v6825 = vpack.c.bf16 %v6807, %v6806
          %v6826 = vpack.c.bf16 %v6809, %v6808
          %v6827 = vpack.c.bf16 %v6811, %v6810
          %v6828 = vld [vmem:[%s507 + $0x70] sm:$0xf]
          %v6829 = vld [vmem:[%s507 + $0x74] sm:$0xf]
          %v6830 = vld [vmem:[%s507 + $0x78] sm:$0xf]
          %v6831 = vld [vmem:[%s507 + $0x7c] sm:$0xf]
          %v6836 = vunpack.c.l.b16 %v6828
          %v6837 = vunpack.c.l.b16 %v6829
          %v6838 = vunpack.c.l.b16 %v6830
          %v6839 = vunpack.c.l.b16 %v6831
          %v6840 = vpack.c.b16 %v6837, %v6836
          %v6841 = vpack.c.b16 %v6839, %v6838
          %v6845 = vsel %vm5326, %v6812, 0
          %v6848 = vsel %vm5326, %v6813, 0
          %v6851 = vsel %vm5326, %v6814, 0
          %v6854 = vsel %vm5326, %v6815, 0
          %v6857 = vsel %vm5326, %v6816, 0
          %v6860 = vsel %vm5326, %v6817, 0
          %v6863 = vsel %vm5326, %v6818, 0
          %v6866 = vsel %vm5326, %v6819, 0
          %v6869 = vsel %vm5326, %v6820, 0
          %v6872 = vsel %vm5326, %v6821, 0
          %v6875 = vsel %vm5326, %v6822, 0
          %v6878 = vsel %vm5326, %v6823, 0
          %v6881 = vsel %vm5326, %v6824, 0
          %v6884 = vsel %vm5326, %v6825, 0
          %v6887 = vsel %vm5326, %v6826, 0
          %v6890 = vsel %vm5326, %v6827, 0
          %6892 = vmatpush.bf16.msra.mxu0 0
          %6893 = vmatpush.bf16.msra.mxu0 0
          %6894 = vmatpush.bf16.msra.mxu0 0
          %6895 = vmatpush.bf16.msra.mxu0 0
          %6896 = vmatpush.bf16.msra.mxu0 0
          %6897 = vmatpush.bf16.msra.mxu0 0
          %6898 = vmatpush.bf16.msra.mxu0 %v6841
          %6899 = vmatpush.bf16.msra.mxu0 %v6840
          %6900 = vmatmul.bf16.gmra.mxu0 %v6845
          %v6901 = vpop.f32.mrf.mxu0
          %v6902 = vadd.f32 0.0, %v6901
          %v6903 = vpop.f32.mrf.mxu0
          %v6904 = vadd.f32 0.0, %v6903
          %6905 = vmatmul.bf16.gmra.mxu0 %v6848
          %v6906 = vpop.f32.mrf.mxu0
          %v6907 = vadd.f32 0.0, %v6906
          %v6908 = vpop.f32.mrf.mxu0
          %v6909 = vadd.f32 0.0, %v6908
          %6910 = vmatmul.bf16.gmra.mxu0 %v6851
          %v6911 = vpop.f32.mrf.mxu0
          %v6912 = vadd.f32 0.0, %v6911
          %v6913 = vpop.f32.mrf.mxu0
          %v6914 = vadd.f32 0.0, %v6913
          %6915 = vmatmul.bf16.gmra.mxu0 %v6854
          %v6916 = vpop.f32.mrf.mxu0
          %v6917 = vadd.f32 0.0, %v6916
          %v6918 = vpop.f32.mrf.mxu0
          %v6919 = vadd.f32 0.0, %v6918
          %6920 = vmatmul.bf16.gmra.mxu0 %v6857
          %v6921 = vpop.f32.mrf.mxu0
          %v6922 = vadd.f32 0.0, %v6921
          %v6923 = vpop.f32.mrf.mxu0
          %v6924 = vadd.f32 0.0, %v6923
          %6925 = vmatmul.bf16.gmra.mxu0 %v6860
          %v6926 = vpop.f32.mrf.mxu0
          %v6927 = vadd.f32 0.0, %v6926
          %v6928 = vpop.f32.mrf.mxu0
          %v6929 = vadd.f32 0.0, %v6928
          %6930 = vmatmul.bf16.gmra.mxu0 %v6863
          %v6931 = vpop.f32.mrf.mxu0
          %v6932 = vadd.f32 0.0, %v6931
          %v6933 = vpop.f32.mrf.mxu0
          %v6934 = vadd.f32 0.0, %v6933
          %6935 = vmatmul.bf16.gmra.mxu0 %v6866
          %v6936 = vpop.f32.mrf.mxu0
          %v6937 = vadd.f32 0.0, %v6936
          %v6938 = vpop.f32.mrf.mxu0
          %v6939 = vadd.f32 0.0, %v6938
          %6940 = vmatmul.bf16.gmra.mxu0 %v6869
          %v6941 = vpop.f32.mrf.mxu0
          %v6942 = vadd.f32 0.0, %v6941
          %v6943 = vpop.f32.mrf.mxu0
          %v6944 = vadd.f32 0.0, %v6943
          %6945 = vmatmul.bf16.gmra.mxu0 %v6872
          %v6946 = vpop.f32.mrf.mxu0
          %v6947 = vadd.f32 0.0, %v6946
          %v6948 = vpop.f32.mrf.mxu0
          %v6949 = vadd.f32 0.0, %v6948
          %6950 = vmatmul.bf16.gmra.mxu0 %v6875
          %v6951 = vpop.f32.mrf.mxu0
          %v6952 = vadd.f32 0.0, %v6951
          %v6953 = vpop.f32.mrf.mxu0
          %v6954 = vadd.f32 0.0, %v6953
          %6955 = vmatmul.bf16.gmra.mxu0 %v6878
          %v6956 = vpop.f32.mrf.mxu0
          %v6957 = vadd.f32 0.0, %v6956
          %v6958 = vpop.f32.mrf.mxu0
          %v6959 = vadd.f32 0.0, %v6958
          %6960 = vmatmul.bf16.gmra.mxu0 %v6881
          %v6961 = vpop.f32.mrf.mxu0
          %v6962 = vadd.f32 0.0, %v6961
          %v6963 = vpop.f32.mrf.mxu0
          %v6964 = vadd.f32 0.0, %v6963
          %6965 = vmatmul.bf16.gmra.mxu0 %v6884
          %v6966 = vpop.f32.mrf.mxu0
          %v6967 = vadd.f32 0.0, %v6966
          %v6968 = vpop.f32.mrf.mxu0
          %v6969 = vadd.f32 0.0, %v6968
          %6970 = vmatmul.bf16.gmra.mxu0 %v6887
          %v6971 = vpop.f32.mrf.mxu0
          %v6972 = vadd.f32 0.0, %v6971
          %v6973 = vpop.f32.mrf.mxu0
          %v6974 = vadd.f32 0.0, %v6973
          %6975 = vmatmul.bf16.gmra.mxu0 %v6890
          %v6976 = vpop.f32.mrf.mxu0
          %v6977 = vadd.f32 0.0, %v6976
          %v6978 = vpop.f32.mrf.mxu0
          %v6979 = vadd.f32 0.0, %v6978
          %6980 = vdwg.mxu0
          %v6981 = vadd.f32 %v6748, %v6902
          %v6982 = vadd.f32 %v6749, %v6904
          %v6983 = vadd.f32 %v6750, %v6907
          %v6984 = vadd.f32 %v6751, %v6909
          %v6985 = vadd.f32 %v6752, %v6912
          %v6986 = vadd.f32 %v6753, %v6914
          %v6987 = vadd.f32 %v6754, %v6917
          %v6988 = vadd.f32 %v6755, %v6919
          %v6989 = vadd.f32 %v6756, %v6922
          %v6990 = vadd.f32 %v6757, %v6924
          %v6991 = vadd.f32 %v6758, %v6927
          %v6992 = vadd.f32 %v6759, %v6929
          %v6993 = vadd.f32 %v6760, %v6932
          %v6994 = vadd.f32 %v6761, %v6934
          %v6995 = vadd.f32 %v6762, %v6937
          %v6996 = vadd.f32 %v6763, %v6939
          %v6997 = vadd.f32 %v6764, %v6942
          %v6998 = vadd.f32 %v6765, %v6944
          %v6999 = vadd.f32 %v6766, %v6947
          %v7000 = vadd.f32 %v6767, %v6949
          %v7001 = vadd.f32 %v6768, %v6952
          %v7002 = vadd.f32 %v6769, %v6954
          %v7003 = vadd.f32 %v6770, %v6957
          %v7004 = vadd.f32 %v6771, %v6959
          %v7005 = vadd.f32 %v6772, %v6962
          %v7006 = vadd.f32 %v6773, %v6964
          %v7007 = vadd.f32 %v6774, %v6967
          %v7008 = vadd.f32 %v6775, %v6969
          %v7009 = vadd.f32 %v6776, %v6972
          %v7010 = vadd.f32 %v6777, %v6974
          %v7011 = vadd.f32 %v6778, %v6977
          %v7012 = vadd.f32 %v6779, %v6979
          %v7013 = vld [vmem:[%s6546 + $0x9] sm:$0xff]
          %v7014 = vld [vmem:[%s6546 + $0x11] sm:$0xff]
          %v7015 = vld [vmem:[%s6546 + $0x29] sm:$0xff]
          %v7016 = vld [vmem:[%s6546 + $0x31] sm:$0xff]
          %v7017 = vld [vmem:[%s6546 + $0x49] sm:$0xff]
          %v7018 = vld [vmem:[%s6546 + $0x51] sm:$0xff]
          %v7019 = vld [vmem:[%s6546 + $0x69] sm:$0xff]
          %v7020 = vld [vmem:[%s6546 + $0x71] sm:$0xff]
          %v7021 = vld [vmem:[%s6546 + $0x89] sm:$0xff]
          %v7022 = vld [vmem:[%s6546 + $0x91] sm:$0xff]
          %v7023 = vld [vmem:[%s6546 + $0xa9] sm:$0xff]
          %v7024 = vld [vmem:[%s6546 + $0xb1] sm:$0xff]
          %v7025 = vld [vmem:[%s6546 + $0xc9] sm:$0xff]
          %v7026 = vld [vmem:[%s6546 + $0xd1] sm:$0xff]
          %v7027 = vld [vmem:[%s6546 + $0xe9] sm:$0xff]
          %v7028 = vld [vmem:[%s6546 + $0xf1] sm:$0xff]
          %v7029 = vld [vmem:[%s6546 + $0x109] sm:$0xff]
          %v7030 = vld [vmem:[%s6546 + $0x111] sm:$0xff]
          %v7031 = vld [vmem:[%s6546 + $0x129] sm:$0xff]
          %v7032 = vld [vmem:[%s6546 + $0x131] sm:$0xff]
          %v7033 = vld [vmem:[%s6546 + $0x149] sm:$0xff]
          %v7034 = vld [vmem:[%s6546 + $0x151] sm:$0xff]
          %v7035 = vld [vmem:[%s6546 + $0x169] sm:$0xff]
          %v7036 = vld [vmem:[%s6546 + $0x171] sm:$0xff]
          %v7037 = vld [vmem:[%s6546 + $0x189] sm:$0xff]
          %v7038 = vld [vmem:[%s6546 + $0x191] sm:$0xff]
          %v7039 = vld [vmem:[%s6546 + $0x1a9] sm:$0xff]
          %v7040 = vld [vmem:[%s6546 + $0x1b1] sm:$0xff]
          %v7041 = vld [vmem:[%s6546 + $0x1c9] sm:$0xff]
          %v7042 = vld [vmem:[%s6546 + $0x1d1] sm:$0xff]
          %v7043 = vld [vmem:[%s6546 + $0x1e9] sm:$0xff]
          %v7044 = vld [vmem:[%s6546 + $0x1f1] sm:$0xff]
          %v7045 = vpack.c.bf16 %v7014, %v7013
          %v7046 = vpack.c.bf16 %v7016, %v7015
          %v7047 = vpack.c.bf16 %v7018, %v7017
          %v7048 = vpack.c.bf16 %v7020, %v7019
          %v7049 = vpack.c.bf16 %v7022, %v7021
          %v7050 = vpack.c.bf16 %v7024, %v7023
          %v7051 = vpack.c.bf16 %v7026, %v7025
          %v7052 = vpack.c.bf16 %v7028, %v7027
          %v7053 = vpack.c.bf16 %v7030, %v7029
          %v7054 = vpack.c.bf16 %v7032, %v7031
          %v7055 = vpack.c.bf16 %v7034, %v7033
          %v7056 = vpack.c.bf16 %v7036, %v7035
          %v7057 = vpack.c.bf16 %v7038, %v7037
          %v7058 = vpack.c.bf16 %v7040, %v7039
          %v7059 = vpack.c.bf16 %v7042, %v7041
          %v7060 = vpack.c.bf16 %v7044, %v7043
          %v7061 = vld [vmem:[%s507 + $0x80] sm:$0xf]
          %v7062 = vld [vmem:[%s507 + $0x84] sm:$0xf]
          %v7063 = vld [vmem:[%s507 + $0x88] sm:$0xf]
          %v7064 = vld [vmem:[%s507 + $0x8c] sm:$0xf]
          %v7069 = vunpack.c.l.b16 %v7061
          %v7070 = vunpack.c.l.b16 %v7062
          %v7071 = vunpack.c.l.b16 %v7063
          %v7072 = vunpack.c.l.b16 %v7064
          %v7073 = vpack.c.b16 %v7070, %v7069
          %v7074 = vpack.c.b16 %v7072, %v7071
          %v7078 = vsel %vm5326, %v7045, 0
          %v7081 = vsel %vm5326, %v7046, 0
          %v7084 = vsel %vm5326, %v7047, 0
          %v7087 = vsel %vm5326, %v7048, 0
          %v7090 = vsel %vm5326, %v7049, 0
          %v7093 = vsel %vm5326, %v7050, 0
          %v7096 = vsel %vm5326, %v7051, 0
          %v7099 = vsel %vm5326, %v7052, 0
          %v7102 = vsel %vm5326, %v7053, 0
          %v7105 = vsel %vm5326, %v7054, 0
          %v7108 = vsel %vm5326, %v7055, 0
          %v7111 = vsel %vm5326, %v7056, 0
          %v7114 = vsel %vm5326, %v7057, 0
          %v7117 = vsel %vm5326, %v7058, 0
          %v7120 = vsel %vm5326, %v7059, 0
          %v7123 = vsel %vm5326, %v7060, 0
          %7125 = vmatpush.bf16.msra.mxu0 0
          %7126 = vmatpush.bf16.msra.mxu0 0
          %7127 = vmatpush.bf16.msra.mxu0 0
          %7128 = vmatpush.bf16.msra.mxu0 0
          %7129 = vmatpush.bf16.msra.mxu0 0
          %7130 = vmatpush.bf16.msra.mxu0 0
          %7131 = vmatpush.bf16.msra.mxu0 %v7074
          %7132 = vmatpush.bf16.msra.mxu0 %v7073
          %7133 = vmatmul.bf16.gmra.mxu0 %v7078
          %v7134 = vpop.f32.mrf.mxu0
          %v7135 = vadd.f32 0.0, %v7134
          %v7136 = vpop.f32.mrf.mxu0
          %v7137 = vadd.f32 0.0, %v7136
          %7138 = vmatmul.bf16.gmra.mxu0 %v7081
          %v7139 = vpop.f32.mrf.mxu0
          %v7140 = vadd.f32 0.0, %v7139
          %v7141 = vpop.f32.mrf.mxu0
          %v7142 = vadd.f32 0.0, %v7141
          %7143 = vmatmul.bf16.gmra.mxu0 %v7084
          %v7144 = vpop.f32.mrf.mxu0
          %v7145 = vadd.f32 0.0, %v7144
          %v7146 = vpop.f32.mrf.mxu0
          %v7147 = vadd.f32 0.0, %v7146
          %7148 = vmatmul.bf16.gmra.mxu0 %v7087
          %v7149 = vpop.f32.mrf.mxu0
          %v7150 = vadd.f32 0.0, %v7149
          %v7151 = vpop.f32.mrf.mxu0
          %v7152 = vadd.f32 0.0, %v7151
          %7153 = vmatmul.bf16.gmra.mxu0 %v7090
          %v7154 = vpop.f32.mrf.mxu0
          %v7155 = vadd.f32 0.0, %v7154
          %v7156 = vpop.f32.mrf.mxu0
          %v7157 = vadd.f32 0.0, %v7156
          %7158 = vmatmul.bf16.gmra.mxu0 %v7093
          %v7159 = vpop.f32.mrf.mxu0
          %v7160 = vadd.f32 0.0, %v7159
          %v7161 = vpop.f32.mrf.mxu0
          %v7162 = vadd.f32 0.0, %v7161
          %7163 = vmatmul.bf16.gmra.mxu0 %v7096
          %v7164 = vpop.f32.mrf.mxu0
          %v7165 = vadd.f32 0.0, %v7164
          %v7166 = vpop.f32.mrf.mxu0
          %v7167 = vadd.f32 0.0, %v7166
          %7168 = vmatmul.bf16.gmra.mxu0 %v7099
          %v7169 = vpop.f32.mrf.mxu0
          %v7170 = vadd.f32 0.0, %v7169
          %v7171 = vpop.f32.mrf.mxu0
          %v7172 = vadd.f32 0.0, %v7171
          %7173 = vmatmul.bf16.gmra.mxu0 %v7102
          %v7174 = vpop.f32.mrf.mxu0
          %v7175 = vadd.f32 0.0, %v7174
          %v7176 = vpop.f32.mrf.mxu0
          %v7177 = vadd.f32 0.0, %v7176
          %7178 = vmatmul.bf16.gmra.mxu0 %v7105
          %v7179 = vpop.f32.mrf.mxu0
          %v7180 = vadd.f32 0.0, %v7179
          %v7181 = vpop.f32.mrf.mxu0
          %v7182 = vadd.f32 0.0, %v7181
          %7183 = vmatmul.bf16.gmra.mxu0 %v7108
          %v7184 = vpop.f32.mrf.mxu0
          %v7185 = vadd.f32 0.0, %v7184
          %v7186 = vpop.f32.mrf.mxu0
          %v7187 = vadd.f32 0.0, %v7186
          %7188 = vmatmul.bf16.gmra.mxu0 %v7111
          %v7189 = vpop.f32.mrf.mxu0
          %v7190 = vadd.f32 0.0, %v7189
          %v7191 = vpop.f32.mrf.mxu0
          %v7192 = vadd.f32 0.0, %v7191
          %7193 = vmatmul.bf16.gmra.mxu0 %v7114
          %v7194 = vpop.f32.mrf.mxu0
          %v7195 = vadd.f32 0.0, %v7194
          %v7196 = vpop.f32.mrf.mxu0
          %v7197 = vadd.f32 0.0, %v7196
          %7198 = vmatmul.bf16.gmra.mxu0 %v7117
          %v7199 = vpop.f32.mrf.mxu0
          %v7200 = vadd.f32 0.0, %v7199
          %v7201 = vpop.f32.mrf.mxu0
          %v7202 = vadd.f32 0.0, %v7201
          %7203 = vmatmul.bf16.gmra.mxu0 %v7120
          %v7204 = vpop.f32.mrf.mxu0
          %v7205 = vadd.f32 0.0, %v7204
          %v7206 = vpop.f32.mrf.mxu0
          %v7207 = vadd.f32 0.0, %v7206
          %7208 = vmatmul.bf16.gmra.mxu0 %v7123
          %v7209 = vpop.f32.mrf.mxu0
          %v7210 = vadd.f32 0.0, %v7209
          %v7211 = vpop.f32.mrf.mxu0
          %v7212 = vadd.f32 0.0, %v7211
          %7213 = vdwg.mxu0
          %v7214 = vadd.f32 %v6981, %v7135
          %v7215 = vadd.f32 %v6982, %v7137
          %v7216 = vadd.f32 %v6983, %v7140
          %v7217 = vadd.f32 %v6984, %v7142
          %v7218 = vadd.f32 %v6985, %v7145
          %v7219 = vadd.f32 %v6986, %v7147
          %v7220 = vadd.f32 %v6987, %v7150
          %v7221 = vadd.f32 %v6988, %v7152
          %v7222 = vadd.f32 %v6989, %v7155
          %v7223 = vadd.f32 %v6990, %v7157
          %v7224 = vadd.f32 %v6991, %v7160
          %v7225 = vadd.f32 %v6992, %v7162
          %v7226 = vadd.f32 %v6993, %v7165
          %v7227 = vadd.f32 %v6994, %v7167
          %v7228 = vadd.f32 %v6995, %v7170
          %v7229 = vadd.f32 %v6996, %v7172
          %v7230 = vadd.f32 %v6997, %v7175
          %v7231 = vadd.f32 %v6998, %v7177
          %v7232 = vadd.f32 %v6999, %v7180
          %v7233 = vadd.f32 %v7000, %v7182
          %v7234 = vadd.f32 %v7001, %v7185
          %v7235 = vadd.f32 %v7002, %v7187
          %v7236 = vadd.f32 %v7003, %v7190
          %v7237 = vadd.f32 %v7004, %v7192
          %v7238 = vadd.f32 %v7005, %v7195
          %v7239 = vadd.f32 %v7006, %v7197
          %v7240 = vadd.f32 %v7007, %v7200
          %v7241 = vadd.f32 %v7008, %v7202
          %v7242 = vadd.f32 %v7009, %v7205
          %v7243 = vadd.f32 %v7010, %v7207
          %v7244 = vadd.f32 %v7011, %v7210
          %v7245 = vadd.f32 %v7012, %v7212
          %v7246 = vld [vmem:[%s510] sm:$0x1]
          %v7248 = vperm.slane %v7246, 0
          %v7250 = vadd.f32 %v7214, %v7248
          %v7251 = vadd.f32 %v7215, %v7248
          %v7252 = vadd.f32 %v7216, %v7248
          %v7253 = vadd.f32 %v7217, %v7248
          %v7254 = vadd.f32 %v7218, %v7248
          %v7255 = vadd.f32 %v7219, %v7248
          %v7256 = vadd.f32 %v7220, %v7248
          %v7257 = vadd.f32 %v7221, %v7248
          %v7258 = vadd.f32 %v7222, %v7248
          %v7259 = vadd.f32 %v7223, %v7248
          %v7260 = vadd.f32 %v7224, %v7248
          %v7261 = vadd.f32 %v7225, %v7248
          %v7262 = vadd.f32 %v7226, %v7248
          %v7263 = vadd.f32 %v7227, %v7248
          %v7264 = vadd.f32 %v7228, %v7248
          %v7265 = vadd.f32 %v7229, %v7248
          %v7266 = vadd.f32 %v7230, %v7248
          %v7267 = vadd.f32 %v7231, %v7248
          %v7268 = vadd.f32 %v7232, %v7248
          %v7269 = vadd.f32 %v7233, %v7248
          %v7270 = vadd.f32 %v7234, %v7248
          %v7271 = vadd.f32 %v7235, %v7248
          %v7272 = vadd.f32 %v7236, %v7248
          %v7273 = vadd.f32 %v7237, %v7248
          %v7274 = vadd.f32 %v7238, %v7248
          %v7275 = vadd.f32 %v7239, %v7248
          %v7276 = vadd.f32 %v7240, %v7248
          %v7277 = vadd.f32 %v7241, %v7248
          %v7278 = vadd.f32 %v7242, %v7248
          %v7279 = vadd.f32 %v7243, %v7248
          %v7280 = vadd.f32 %v7244, %v7248
          %v7281 = vadd.f32 %v7245, %v7248
          %v7282 = vld [vmem:[%s502] sm:$0xff]
          %v7283 = vld [vmem:[%s502 + $0x8] sm:$0xff]
          %v7284 = vld [vmem:[%s502 + $0x10] sm:$0xff]
          %v7285 = vld [vmem:[%s502 + $0x18] sm:$0xff]
          %v7286 = vld [vmem:[%s502 + $0x20] sm:$0xff]
          %v7287 = vld [vmem:[%s502 + $0x28] sm:$0xff]
          %v7288 = vld [vmem:[%s502 + $0x30] sm:$0xff]
          %v7289 = vld [vmem:[%s502 + $0x38] sm:$0xff]
          %v7290 = vld [vmem:[%s502 + $0x40] sm:$0xff]
          %v7291 = vld [vmem:[%s502 + $0x48] sm:$0xff]
          %v7292 = vld [vmem:[%s502 + $0x50] sm:$0xff]
          %v7293 = vld [vmem:[%s502 + $0x58] sm:$0xff]
          %v7294 = vld [vmem:[%s502 + $0x60] sm:$0xff]
          %v7295 = vld [vmem:[%s502 + $0x68] sm:$0xff]
          %v7296 = vld [vmem:[%s502 + $0x70] sm:$0xff]
          %v7297 = vld [vmem:[%s502 + $0x78] sm:$0xff]
          %v7298 = vld [vmem:[%s502 + $0x80] sm:$0xff]
          %v7299 = vld [vmem:[%s502 + $0x88] sm:$0xff]
          %v7300 = vld [vmem:[%s502 + $0x90] sm:$0xff]
          %v7301 = vld [vmem:[%s502 + $0x98] sm:$0xff]
          %v7302 = vld [vmem:[%s502 + $0xa0] sm:$0xff]
          %v7303 = vld [vmem:[%s502 + $0xa8] sm:$0xff]
          %v7304 = vld [vmem:[%s502 + $0xb0] sm:$0xff]
          %v7305 = vld [vmem:[%s502 + $0xb8] sm:$0xff]
          %v7306 = vld [vmem:[%s502 + $0xc0] sm:$0xff]
          %v7307 = vld [vmem:[%s502 + $0xc8] sm:$0xff]
          %v7308 = vld [vmem:[%s502 + $0xd0] sm:$0xff]
          %v7309 = vld [vmem:[%s502 + $0xd8] sm:$0xff]
          %v7310 = vld [vmem:[%s502 + $0xe0] sm:$0xff]
          %v7311 = vld [vmem:[%s502 + $0xe8] sm:$0xff]
          %v7312 = vld [vmem:[%s502 + $0xf0] sm:$0xff]
          %v7313 = vld [vmem:[%s502 + $0xf8] sm:$0xff]
          %v7314 = vadd.f32 %v7250, %v7282
          %v7315 = vadd.f32 %v7251, %v7283
          %v7316 = vadd.f32 %v7252, %v7284
          %v7317 = vadd.f32 %v7253, %v7285
          %v7318 = vadd.f32 %v7254, %v7286
          %v7319 = vadd.f32 %v7255, %v7287
          %v7320 = vadd.f32 %v7256, %v7288
          %v7321 = vadd.f32 %v7257, %v7289
          %v7322 = vadd.f32 %v7258, %v7290
          %v7323 = vadd.f32 %v7259, %v7291
          %v7324 = vadd.f32 %v7260, %v7292
          %v7325 = vadd.f32 %v7261, %v7293
          %v7326 = vadd.f32 %v7262, %v7294
          %v7327 = vadd.f32 %v7263, %v7295
          %v7328 = vadd.f32 %v7264, %v7296
          %v7329 = vadd.f32 %v7265, %v7297
          %v7330 = vadd.f32 %v7266, %v7298
          %v7331 = vadd.f32 %v7267, %v7299
          %v7332 = vadd.f32 %v7268, %v7300
          %v7333 = vadd.f32 %v7269, %v7301
          %v7334 = vadd.f32 %v7270, %v7302
          %v7335 = vadd.f32 %v7271, %v7303
          %v7336 = vadd.f32 %v7272, %v7304
          %v7337 = vadd.f32 %v7273, %v7305
          %v7338 = vadd.f32 %v7274, %v7306
          %v7339 = vadd.f32 %v7275, %v7307
          %v7340 = vadd.f32 %v7276, %v7308
          %v7341 = vadd.f32 %v7277, %v7309
          %v7342 = vadd.f32 %v7278, %v7310
          %v7343 = vadd.f32 %v7279, %v7311
          %v7344 = vadd.f32 %v7280, %v7312
          %v7345 = vadd.f32 %v7281, %v7313
          %7346 = vst.msk [vmem:[%s497] sm:$0xff] %vm5326, %v7314
          %7347 = vst.msk [vmem:[%s497 + $0x8] sm:$0xff] %vm5326, %v7315
          %7348 = vst.msk [vmem:[%s497 + $0x10] sm:$0xff] %vm5326, %v7316
          %7349 = vst.msk [vmem:[%s497 + $0x18] sm:$0xff] %vm5326, %v7317
          %7350 = vst.msk [vmem:[%s497 + $0x20] sm:$0xff] %vm5326, %v7318
          %7351 = vst.msk [vmem:[%s497 + $0x28] sm:$0xff] %vm5326, %v7319
          %7352 = vst.msk [vmem:[%s497 + $0x30] sm:$0xff] %vm5326, %v7320
          %7353 = vst.msk [vmem:[%s497 + $0x38] sm:$0xff] %vm5326, %v7321
          %7354 = vst.msk [vmem:[%s497 + $0x40] sm:$0xff] %vm5326, %v7322
          %7355 = vst.msk [vmem:[%s497 + $0x48] sm:$0xff] %vm5326, %v7323
          %7356 = vst.msk [vmem:[%s497 + $0x50] sm:$0xff] %vm5326, %v7324
          %7357 = vst.msk [vmem:[%s497 + $0x58] sm:$0xff] %vm5326, %v7325
          %7358 = vst.msk [vmem:[%s497 + $0x60] sm:$0xff] %vm5326, %v7326
          %7359 = vst.msk [vmem:[%s497 + $0x68] sm:$0xff] %vm5326, %v7327
          %7360 = vst.msk [vmem:[%s497 + $0x70] sm:$0xff] %vm5326, %v7328
          %7361 = vst.msk [vmem:[%s497 + $0x78] sm:$0xff] %vm5326, %v7329
          %7362 = vst.msk [vmem:[%s497 + $0x80] sm:$0xff] %vm5326, %v7330
          %7363 = vst.msk [vmem:[%s497 + $0x88] sm:$0xff] %vm5326, %v7331
          %7364 = vst.msk [vmem:[%s497 + $0x90] sm:$0xff] %vm5326, %v7332
          %7365 = vst.msk [vmem:[%s497 + $0x98] sm:$0xff] %vm5326, %v7333
          %7366 = vst.msk [vmem:[%s497 + $0xa0] sm:$0xff] %vm5326, %v7334
          %7367 = vst.msk [vmem:[%s497 + $0xa8] sm:$0xff] %vm5326, %v7335
          %7368 = vst.msk [vmem:[%s497 + $0xb0] sm:$0xff] %vm5326, %v7336
          %7369 = vst.msk [vmem:[%s497 + $0xb8] sm:$0xff] %vm5326, %v7337
          %7370 = vst.msk [vmem:[%s497 + $0xc0] sm:$0xff] %vm5326, %v7338
          %7371 = vst.msk [vmem:[%s497 + $0xc8] sm:$0xff] %vm5326, %v7339
          %7372 = vst.msk [vmem:[%s497 + $0xd0] sm:$0xff] %vm5326, %v7340
          %7373 = vst.msk [vmem:[%s497 + $0xd8] sm:$0xff] %vm5326, %v7341
          %7374 = vst.msk [vmem:[%s497 + $0xe0] sm:$0xff] %vm5326, %v7342
          %7375 = vst.msk [vmem:[%s497 + $0xe8] sm:$0xff] %vm5326, %v7343
          %7376 = vst.msk [vmem:[%s497 + $0xf0] sm:$0xff] %vm5326, %v7344
          %7377 = vst.msk [vmem:[%s497 + $0xf8] sm:$0xff] %vm5326, %v7345
        $region68: #{tpu_custom_call.1} parent=55 // pred_fallthru
          _
        %s7378 = sand.u32 %s301, 1
        %s7379 = scalar_lea.sflag [#allocation5], %s7378
        %s7380 = sand.u32 %s301, 1
        %s7381 = smul.addr %s7380, 256
        %s7382 = scalar_lea.vmem [#allocation4], %s7381
        // Predicated region
        $region69: #{tpu_custom_call.1} parent=55 // pred_check
          %p7383 = pneg %p311
        $region70: #{tpu_custom_call.1} parent=55 // pred_check_branch
          %7385 = sbr.rel (%p7383) target = $region72
        $region71: #{tpu_custom_call.1} parent=55 // pred_region
          %7387 = vsyncadd %s7379, 0
          %s7388 = smul.addr %s27, 32
          %s7389 = smul.addr %s7388, 8
          %s7390 = scalar_lea.hbm %s9, %s7389
          %s7391 = sshll.u32 %s7382, 4
          %s7392 = int_to_ptr.vmem [resolvable:$true] %s7391
          %s7393 = sshll.u32 %s7390, 4
          %s7394 = int_to_ptr.hbm [resolvable:$true] %s7393
          %7399 = dma.vmem_to_hbm [thread:$0]  %s7392, 4096, %s7394, %s7379, 128, 128, 8
        $region72: #{tpu_custom_call.1} parent=55 // pred_fallthru
          _
      $region56: #{tpu_custom_call.1} parent=5 // pred_fallthru
        _
      %p7400 = scmp.le.s32.totalorder 2, %s18
      // Predicated region
      $region73: #{tpu_custom_call.1} parent=5 // pred_check
        %p7401 = pneg %p7400
      $region74: #{tpu_custom_call.1} parent=5 // pred_check_branch
        %7403 = sbr.rel (%p7401) target = $region76
      $region75: #{tpu_custom_call.1} parent=5 // pred_region
        %s7404 = ssub.s32 %s18, 2
        // Predicated region
        $region77: #{tpu_custom_call.1} parent=75 // pred_check
          %p7405 = pneg %p317
        $region78: #{tpu_custom_call.1} parent=75 // pred_check_branch
          %7407 = sbr.rel (%p7405) target = $region80
        $region79: #{tpu_custom_call.1} parent=75 // pred_region
          %s7408 = sand.u32 %s302, 1
          %s7409 = scalar_lea.sflag [#allocation5], %s7408
          %s7410 = sand.u32 %s302, 1
          %s7411 = smul.addr %s7410, 256
          %s7412 = scalar_lea.vmem [#allocation4], %s7411
          %7414 = dma.done %s7409, 4096
        $region80: #{tpu_custom_call.1} parent=75 // pred_fallthru
          _
      $region76: #{tpu_custom_call.1} parent=5 // pred_fallthru
        _
    $region6: #{tpu_custom_call.1} parent=1 // loop_footer
      %s22 = sadd.s32 1, %s18
    $region7: #{tpu_custom_call.1} parent=1 // loop_footer_branch
      %17 = sbr.rel target = $region3
    $region8: #{tpu_custom_call.1} parent=1 // loop_exit
      _
    %7415 = vsyncpa [#allocation5], 1
    %s7416 = scalar_lea.sflag [#allocation5], 1
    %7417 = vsyncpa %s7416, 1

</llo_original>
